<compile_context>
chip_gen: v7x
topology: tpu7x:2x2x1
jax: 0.10.0
libtpu: 0.0.40
codegen_flags: <defaults>
</compile_context>

<pallas_src>
import functools

import jax
import jax.numpy as jnp
from jax import lax
from jax.experimental import pallas as pl
from jax.experimental.pallas import tpu as pltpu

# Cast the recurrent-chain matmul operands to bf16 (single-pass MXU).  The
# non-recurrent matmuls and all gate / LayerNorm math stay f32.
_RECURRENT_BF16 = True


# ----------------------------------------------------------------------------
# shared math helpers
# ----------------------------------------------------------------------------
def _layer_norm(x, gamma, beta, eps=1e-8):      # nn.LayerNorm([C], eps=1e-08)
    mu = jnp.mean(x, axis=-1, keepdims=True)
    var = jnp.mean((x - mu) ** 2, axis=-1, keepdims=True)
    return (x - mu) * lax.rsqrt(var + eps) * gamma + beta


# ----------------------------------------------------------------------------
# fused Pallas kernel
# ----------------------------------------------------------------------------
def dprnn_kernel(x_ref,
                 wih6f_ref, wih6b_ref, bih6_ref, whh6_ref, bhhn6_ref,
                 wfc1_ref, bfc1_ref, g1_ref, b1_ref,
                 wih3_ref, bih3_ref, whh3_ref, bhhn3_ref,
                 wfc2_ref, bfc2_ref, g2_ref, b2_ref,
                 out_ref, h_ref,
                 xrev_scr, gi1_scr, hcat_scr, y1_scr, gi2_scr, y1i_scr, hs_scr):
    """Fused DPRNN block for one batch block.

    x_ref: [W, Bb, L, C] time-major over the width axis (intra stage).
    Intra gate/column layout is [r_f, r_b, z_f, z_b, n_f, n_b] (each H wide)
    with the backward columns of the input projection stored time-reversed,
    so one [N,2H]x[2H,6H] matmul and full-tile gate math drive both
    directions per step.  The inter stage reads the intra-ordered slab with
    stride-L row slices (the in-VMEM [W,B*L,C] -> [L,B*W,C] relayout).
    """
    w_steps, bb, l_steps, c = x_ref.shape
    hd = whh6_ref.shape[0] // 2          # intra per-direction hidden
    hi = whh3_ref.shape[0]               # inter hidden
    n1 = bb * l_steps                    # intra sequences per block
    n2 = bb * w_steps                    # inter sequences per block
    r = w_steps * n1                     # total positions per block

    # ---- time-reversed copy of the input (feeds the backward projection) ----
    for t in range(w_steps):
        xrev_scr[t] = x_ref[w_steps - 1 - t]

    x2 = x_ref[...].reshape(r, c)
    x2r = xrev_scr[...].reshape(r, c)

    # ---- intra: fused input projection, fwd natural time / bwd reversed ----
    gi1_scr[...] = (
        jnp.dot(x2, wih6f_ref[...], preferred_element_type=jnp.float32)
        + jnp.dot(x2r, wih6b_ref[...], preferred_element_type=jnp.float32)
        + bih6_ref[...])

    whh6 = whh6_ref[...]                 # [2H, 6H] block-diag (bf16)
    bhhn6 = bhhn6_ref[...]               # [1, 2H]  (b_hn fwd|bwd)

    # ---- intra bidirectional recurrence: one MXU matmul per step ----
    h_cat = jnp.zeros((n1, 2 * hd), jnp.float32)
    for t in range(w_steps):
        gi = gi1_scr[t * n1:(t + 1) * n1, :]                       # [N1, 6H]
        gh = jnp.dot(h_cat.astype(whh6.dtype), whh6,
                     preferred_element_type=jnp.float32)           # [N1, 6H]
        rz = jax.nn.sigmoid(gi[:, :4 * hd] + gh[:, :4 * hd])
        ng = jnp.tanh(gi[:, 4 * hd:] + rz[:, :2 * hd] * (gh[:, 4 * hd:] + bhhn6))
        h_cat = ng + rz[:, 2 * hd:] * (h_cat - ng)
        tb = w_steps - 1 - t
        hcat_scr[t * n1:(t + 1) * n1, 0:hd] = h_cat[:, 0:hd]       # fwd @ time t
        hcat_scr[tb * n1:(tb + 1) * n1, hd:2 * hd] = h_cat[:, hd:2 * hd]  # bwd @ time tb

    # ---- intra FC + LayerNorm + residual (single batched matmul) ----
    fc1 = (jnp.dot(hcat_scr[...], wfc1_ref[...],
                   preferred_element_type=jnp.float32) + bfc1_ref[...])
    y1 = x2 + _layer_norm(fc1, g1_ref[...], b1_ref[...])
    y1_scr[...] = y1

    # ---- inter: input projection over the whole slab (still intra order) ----
    gi2_scr[...] = (jnp.dot(y1, wih3_ref[...],
                            preferred_element_type=jnp.float32) + bih3_ref[...])

    whh3 = whh3_ref[...]                 # [Hi, 3Hi] (bf16)
    bhhn3 = bhhn3_ref[...]               # [1, Hi]

    # ---- inter unidirectional recurrence over frames ----
    h2 = jnp.zeros((n2, hi), jnp.float32)
    for t in range(l_steps):
        rows = pl.ds(t, n2, stride=l_steps)       # all (w, b) positions @ frame t
        gi = gi2_scr[rows, :]                                      # [N2, 3Hi]
        y1i_scr[t * n2:(t + 1) * n2, :] = y1_scr[rows, :]          # residual relayout
        gh = jnp.dot(h2.astype(whh3.dtype), whh3,
                     preferred_element_type=jnp.float32)
        rz = jax.nn.sigmoid(gi[:, :2 * hi] + gh[:, :2 * hi])
        ng = jnp.tanh(gi[:, 2 * hi:] + rz[:, :hi] * (gh[:, 2 * hi:] + bhhn3))
        h2 = ng + rz[:, hi:] * (h2 - ng)
        hs_scr[t * n2:(t + 1) * n2, :] = h2

    # ---- inter FC + LayerNorm + residual, outputs in frame-major order ----
    fc2 = (jnp.dot(hs_scr[...], wfc2_ref[...],
                   preferred_element_type=jnp.float32) + bfc2_ref[...])
    y2 = y1i_scr[...] + _layer_norm(fc2, g2_ref[...], b2_ref[...])
    out_ref[...] = y2.reshape(out_ref.shape)
    h_ref[...] = h2.reshape(h_ref.shape)


# ----------------------------------------------------------------------------
# pallas_call wrapper
# ----------------------------------------------------------------------------
_W_ORDER = ("wih6f", "wih6b", "bih6", "whh6", "bhhn6",
            "wfc1", "bfc1", "g1", "b1",
            "wih3", "bih3", "whh3", "bhhn3",
            "wfc2", "bfc2", "g2", "b2")


def _w_spec(arr):
    """Whole (small) parameter array resident in VMEM for every grid step."""
    nd = arr.ndim
    return pl.BlockSpec(arr.shape, lambda i, _n=nd: (0,) * _n)


def _prefer_batch_grid(batch):
    """Use a batch-sharded grid only on 2-TensorCore chips (v7x)."""
    if batch < 2:
        return False
    try:
        kind = jax.devices()[0].device_kind.lower()
    except Exception:  # pragma: no cover - defensive
        return False
    return ("v7" in kind) or ("7x" in kind)


def _fused_dprnn_call(x_wblc, kp, batch_grid):
    w, b, l, c = x_wblc.shape
    hd = kp["whh6"].shape[0] // 2
    hi = kp["whh3"].shape[0]
    use_grid = bool(batch_grid) and b > 1

    if use_grid:
        # v7x: one batch element per grid step, sharded across TensorCores.
        grid, bb = (b,), 1
        out_shapes = (jax.ShapeDtypeStruct((b, l * w, c), jnp.float32),
                      jax.ShapeDtypeStruct((b, w, hi), jnp.float32))
        out_specs = (pl.BlockSpec((1, l * w, c), lambda i: (i, 0, 0)),
                     pl.BlockSpec((1, w, hi), lambda i: (i, 0, 0)))
    else:
        # single TensorCore: one grid step, all sequences batched together.
        grid, bb = (1,), b
        out_shapes = (jax.ShapeDtypeStruct((l, w * b, c), jnp.float32),
                      jax.ShapeDtypeStruct((w * b, hi), jnp.float32))
        out_specs = (pl.BlockSpec((l, w * b, c), lambda i: (0, 0, 0)),
                     pl.BlockSpec((w * b, hi), lambda i: (0, 0)))

    n1 = bb * l
    r = w * n1
    weights = [kp[k] for k in _W_ORDER]
    in_specs = ([pl.BlockSpec((w, bb, l, c), lambda i: (0, i, 0, 0))]
                + [_w_spec(a) for a in weights])

    return pl.pallas_call(
        dprnn_kernel,
        out_shape=out_shapes,
        grid_spec=pltpu.PrefetchScalarGridSpec(
            num_scalar_prefetch=0,
            grid=grid,
            in_specs=in_specs,
            out_specs=out_specs,
            scratch_shapes=[
                pltpu.VMEM((w, bb, l, c), jnp.float32),     # time-reversed x
                pltpu.VMEM((r, 6 * hd), jnp.float32),       # intra gi (fwd|bwd)
                pltpu.VMEM((r, 2 * hd), jnp.float32),       # intra hidden states
                pltpu.VMEM((r, c), jnp.float32),            # intra output (intra order)
                pltpu.VMEM((r, 3 * hi), jnp.float32),       # inter gi
                pltpu.VMEM((r, c), jnp.float32),            # intra output (inter order)
                pltpu.VMEM((r, hi), jnp.float32),           # inter hidden states
            ]),
        compiler_params=pltpu.CompilerParams(
            dimension_semantics=("parallel",)),
    )(x_wblc, *weights)


@functools.partial(jax.jit, static_argnames=("batch_grid",))
def dprnn_block(x, kp, batch_grid=False):
    """x: [B, C, L, W] (NCHW, like the PyTorch module).
    Returns (out [B, C, L, W], h_inter [1, B*W, inter_hidden])."""
    # TODO(synk): the module's optional initial hidden state `h` is not
    # exposed; only the default h=None (zero-init) path is implemented.
    b, c, l, w = x.shape
    hi = kp["whh3"].shape[0]
    x_wblc = jnp.transpose(x, (3, 0, 2, 1))          # [W, B, L, C]
    out_k, h_k = _fused_dprnn_call(x_wblc, kp, batch_grid)
    if bool(batch_grid) and b > 1:
        out = jnp.transpose(out_k.reshape(b, l, w, c), (0, 3, 1, 2))
        h_inter = h_k.reshape(1, b * w, hi)
    else:
        out = jnp.transpose(out_k.reshape(l, w, b, c), (2, 3, 0, 1))
        h_inter = jnp.transpose(h_k.reshape(w, b, hi), (1, 0, 2)).reshape(1, b * w, hi)
    return out, h_inter


# ----------------------------------------------------------------------------
# parameters: natural (PyTorch-like) init + fused kernel layout prep
# ----------------------------------------------------------------------------
def init_params(key, c, intra_hidden, inter_hidden):
    hd = intra_hidden // 2
    hi = inter_hidden
    ks = jax.random.split(key, 16)

    def u(k, shape, fan):
        s = float(fan) ** -0.5
        return jax.random.uniform(k, shape, jnp.float32, -s, s)

    return {
        # intra bidirectional GRU, per-direction natural layout (gates r|z|n)
        "intra_wih_f": u(ks[0], (c, 3 * hd), hd),
        "intra_bih_f": u(ks[1], (3 * hd,), hd),
        "intra_whh_f": u(ks[2], (hd, 3 * hd), hd),
        "intra_bhh_f": u(ks[3], (3 * hd,), hd),
        "intra_wih_b": u(ks[4], (c, 3 * hd), hd),
        "intra_bih_b": u(ks[5], (3 * hd,), hd),
        "intra_whh_b": u(ks[6], (hd, 3 * hd), hd),
        "intra_bhh_b": u(ks[7], (3 * hd,), hd),
        "intra_fc_w": u(ks[8], (2 * hd, c), 2 * hd),
        "intra_fc_b": u(ks[9], (c,), 2 * hd),
        "intra_gamma": jnp.ones((c,), jnp.float32),
        "intra_beta": jnp.zeros((c,), jnp.float32),
        # inter unidirectional GRU
        "inter_wih": u(ks[10], (c, 3 * hi), hi),
        "inter_bih": u(ks[11], (3 * hi,), hi),
        "inter_whh": u(ks[12], (hi, 3 * hi), hi),
        "inter_bhh": u(ks[13], (3 * hi,), hi),
        "inter_fc_w": u(ks[14], (hi, c), hi),
        "inter_fc_b": u(ks[15], (c,), hi),
        "inter_gamma": jnp.ones((c,), jnp.float32),
        "inter_beta": jnp.zeros((c,), jnp.float32),
    }


def prep_kernel_params(p):
    """Build the fused/interleaved weight layouts consumed by the kernel."""
    hd = p["intra_whh_f"].shape[0]
    hi = p["inter_whh"].shape[0]
    rdt = jnp.bfloat16 if _RECURRENT_BF16 else jnp.float32

    def spread(w3, d):
        # [.., 3H] natural (r|z|n) -> [.., 6H] merged cols [r_f,r_b,z_f,z_b,n_f,n_b]
        out = jnp.zeros(w3.shape[:-1] + (6 * hd,), jnp.float32)
        for g in range(3):
            c0 = (2 * g + d) * hd
            out = out.at[..., c0:c0 + hd].set(w3[..., g * hd:(g + 1) * hd])
        return out

    rz_mask = jnp.concatenate([jnp.ones((2 * hd,), jnp.float32),
                               jnp.zeros((hd,), jnp.float32)])
    # fold the hidden r/z biases into the input-side bias (b_hn must stay
    # inside the r*(.) term, so it is kept separately as bhhn*).
    bi_f = p["intra_bih_f"] + p["intra_bhh_f"] * rz_mask
    bi_b = p["intra_bih_b"] + p["intra_bhh_b"] * rz_mask
    whh6 = jnp.concatenate([spread(p["intra_whh_f"], 0),
                            spread(p["intra_whh_b"], 1)], axis=0)

    rz_mask_i = jnp.concatenate([jnp.ones((2 * hi,), jnp.float32),
                                 jnp.zeros((hi,), jnp.float32)])
    return {
        "wih6f": spread(p["intra_wih_f"], 0),
        "wih6b": spread(p["intra_wih_b"], 1),
        "bih6": spread(bi_f[None, :], 0) + spread(bi_b[None, :], 1),
        "whh6": whh6.astype(rdt),
        "bhhn6": jnp.concatenate([p["intra_bhh_f"][2 * hd:],
                                  p["intra_bhh_b"][2 * hd:]])[None, :],
        "wfc1": p["intra_fc_w"],
        "bfc1": p["intra_fc_b"][None, :],
        "g1": p["intra_gamma"][None, :],
        "b1": p["intra_beta"][None, :],
        "wih3": p["inter_wih"],
        "bih3": (p["inter_bih"] + p["inter_bhh"] * rz_mask_i)[None, :],
        "whh3": p["inter_whh"].astype(rdt),
        "bhhn3": p["inter_bhh"][2 * hi:][None, :],
        "wfc2": p["inter_fc_w"],
        "bfc2": p["inter_fc_b"][None, :],
        "g2": p["inter_gamma"][None, :],
        "b2": p["inter_beta"][None, :],
    }


# ----------------------------------------------------------------------------
# pure-JAX reference (numerical sanity check)
# ----------------------------------------------------------------------------
def _ref_gru(x_seq, wih, bih, whh, bhh, reverse=False):
    n, _, _ = x_seq.shape
    hdim = whh.shape[0]
    hp = lax.Precision.HIGHEST
    gi = jnp.einsum("ntc,ch->nth", x_seq, wih, precision=hp) + bih

    def step(h, gi_t):
        gh = jnp.dot(h, whh, precision=hp) + bhh
        r = jax.nn.sigmoid(gi_t[:, :hdim] + gh[:, :hdim])
        z = jax.nn.sigmoid(gi_t[:, hdim:2 * hdim] + gh[:, hdim:2 * hdim])
        nn_ = jnp.tanh(gi_t[:, 2 * hdim:] + r * gh[:, 2 * hdim:])
        h_new = (1.0 - z) * nn_ + z * h
        return h_new, h_new

    h0 = jnp.zeros((n, hdim), jnp.float32)
    h_last, hs = lax.scan(step, h0, jnp.swapaxes(gi, 0, 1), reverse=reverse)
    return jnp.swapaxes(hs, 0, 1), h_last


def ref_dprnn(x, p):
    hp = lax.Precision.HIGHEST
    b, c, l, w = x.shape
    intra_in = jnp.transpose(x, (0, 2, 3, 1)).reshape(b * l, w, c)
    hf, _ = _ref_gru(intra_in, p["intra_wih_f"], p["intra_bih_f"],
                     p["intra_whh_f"], p["intra_bhh_f"], reverse=False)
    hb, _ = _ref_gru(intra_in, p["intra_wih_b"], p["intra_bih_b"],
                     p["intra_whh_b"], p["intra_bhh_b"], reverse=True)
    fc = (jnp.einsum("nth,hc->ntc", jnp.concatenate([hf, hb], -1),
                     p["intra_fc_w"], precision=hp) + p["intra_fc_b"])
    intra_out = intra_in + _layer_norm(fc, p["intra_gamma"], p["intra_beta"])

    inter_in = jnp.transpose(intra_out.reshape(b, l, w, c),
                             (0, 2, 1, 3)).reshape(b * w, l, c)
    hs, h_last = _ref_gru(inter_in, p["inter_wih"], p["inter_bih"],
                          p["inter_whh"], p["inter_bhh"], reverse=False)
    fc2 = (jnp.einsum("nth,hc->ntc", hs, p["inter_fc_w"], precision=hp)
           + p["inter_fc_b"])
    inter_out = inter_in + _layer_norm(fc2, p["inter_gamma"], p["inter_beta"])
    out = jnp.transpose(
        jnp.transpose(inter_out.reshape(b, w, l, c), (0, 2, 1, 3)), (0, 3, 1, 2))
    return out, h_last[None]


# ----------------------------------------------------------------------------
if __name__ == "__main__":
    B, C, L, W = 2, 16, 8, 16                 # batch, channel, frames, width
    INTRA_HIDDEN, INTER_HIDDEN = 32, 32

    key = jax.random.PRNGKey(0)
    kx, kparam = jax.random.split(key)
    x = jax.random.normal(kx, (B, C, L, W), jnp.float32)
    params = init_params(kparam, C, INTRA_HIDDEN, INTER_HIDDEN)
    kparams = prep_kernel_params(params)

    batch_grid = _prefer_batch_grid(B)        # 2-way TC sharding only on v7x
    out, h_inter = dprnn_block(x, kparams, batch_grid=batch_grid)
    out = jax.block_until_ready(out)
    h_inter = jax.block_until_ready(h_inter)

    assert out.shape == (B, C, L, W)
    assert h_inter.shape == (1, B * W, INTER_HIDDEN)

    ref_out, ref_h = ref_dprnn(x, params)
    err = max(float(jnp.max(jnp.abs(out - ref_out))),
              float(jnp.max(jnp.abs(h_inter - ref_h))))
    # The recurrent matmuls use bf16 operands (f32 accumulate) for single-pass
    # MXU lowering; that error compounds over the 16+8 serialized GRU steps
    # and the LayerNorms, so the check is looser than the pure-f32 variant.
    tol = 1e-1 if _RECURRENT_BF16 else 2e-3
    if err > tol:
        raise AssertionError(f"kernel/reference mismatch, max abs err = {err}")

    print("KERNEL_OK")
</pallas_src>

<mosaic_0001>
module attributes {stable_mosaic.version = 11 : i64} {
  func.func @dprnn_kernel(%arg0: i32, %arg1: memref<16x2x8x16xf32, #tpu.memory_space<vmem>>, %arg2: memref<16x96xf32, #tpu.memory_space<vmem>>, %arg3: memref<16x96xf32, #tpu.memory_space<vmem>>, %arg4: memref<1x96xf32, #tpu.memory_space<vmem>>, %arg5: memref<32x96xbf16, #tpu.memory_space<vmem>>, %arg6: memref<1x32xf32, #tpu.memory_space<vmem>>, %arg7: memref<32x16xf32, #tpu.memory_space<vmem>>, %arg8: memref<1x16xf32, #tpu.memory_space<vmem>>, %arg9: memref<1x16xf32, #tpu.memory_space<vmem>>, %arg10: memref<1x16xf32, #tpu.memory_space<vmem>>, %arg11: memref<16x96xf32, #tpu.memory_space<vmem>>, %arg12: memref<1x96xf32, #tpu.memory_space<vmem>>, %arg13: memref<32x96xbf16, #tpu.memory_space<vmem>>, %arg14: memref<1x32xf32, #tpu.memory_space<vmem>>, %arg15: memref<32x16xf32, #tpu.memory_space<vmem>>, %arg16: memref<1x16xf32, #tpu.memory_space<vmem>>, %arg17: memref<1x16xf32, #tpu.memory_space<vmem>>, %arg18: memref<1x16xf32, #tpu.memory_space<vmem>>, %arg19: memref<8x32x16xf32, #tpu.memory_space<vmem>>, %arg20: memref<32x32xf32, #tpu.memory_space<vmem>>, %arg21: memref<16x2x8x16xf32, #tpu.memory_space<vmem>>, %arg22: memref<256x96xf32, #tpu.memory_space<vmem>>, %arg23: memref<256x32xf32, #tpu.memory_space<vmem>>, %arg24: memref<256x16xf32, #tpu.memory_space<vmem>>, %arg25: memref<256x96xf32, #tpu.memory_space<vmem>>, %arg26: memref<256x16xf32, #tpu.memory_space<vmem>>, %arg27: memref<256x32xf32, #tpu.memory_space<vmem>>) attributes {dimension_semantics = [#tpu.dimension_semantics<parallel>], iteration_bounds = array<i64: 1>, scalar_prefetch = 0 : i64, scratch_operands = 7 : i64, tpu.core_type = #tpu.core_type<tc>, window_params = [{transform_indices = @transform_0, window_bounds = array<i64: 16, 2, 8, 16>}, {pipeline_mode = #tpu.pipeline_mode<synchronous>, transform_indices = @transform_1, window_bounds = array<i64: 16, 96>}, {pipeline_mode = #tpu.pipeline_mode<synchronous>, transform_indices = @transform_2, window_bounds = array<i64: 16, 96>}, {pipeline_mode = #tpu.pipeline_mode<synchronous>, transform_indices = @transform_3, window_bounds = array<i64: 1, 96>}, {pipeline_mode = #tpu.pipeline_mode<synchronous>, transform_indices = @transform_4, window_bounds = array<i64: 32, 96>}, {pipeline_mode = #tpu.pipeline_mode<synchronous>, transform_indices = @transform_5, window_bounds = array<i64: 1, 32>}, {pipeline_mode = #tpu.pipeline_mode<synchronous>, transform_indices = @transform_6, window_bounds = array<i64: 32, 16>}, {pipeline_mode = #tpu.pipeline_mode<synchronous>, transform_indices = @transform_7, window_bounds = array<i64: 1, 16>}, {pipeline_mode = #tpu.pipeline_mode<synchronous>, transform_indices = @transform_8, window_bounds = array<i64: 1, 16>}, {pipeline_mode = #tpu.pipeline_mode<synchronous>, transform_indices = @transform_9, window_bounds = array<i64: 1, 16>}, {pipeline_mode = #tpu.pipeline_mode<synchronous>, transform_indices = @transform_10, window_bounds = array<i64: 16, 96>}, {pipeline_mode = #tpu.pipeline_mode<synchronous>, transform_indices = @transform_11, window_bounds = array<i64: 1, 96>}, {pipeline_mode = #tpu.pipeline_mode<synchronous>, transform_indices = @transform_12, window_bounds = array<i64: 32, 96>}, {pipeline_mode = #tpu.pipeline_mode<synchronous>, transform_indices = @transform_13, window_bounds = array<i64: 1, 32>}, {pipeline_mode = #tpu.pipeline_mode<synchronous>, transform_indices = @transform_14, window_bounds = array<i64: 32, 16>}, {pipeline_mode = #tpu.pipeline_mode<synchronous>, transform_indices = @transform_15, window_bounds = array<i64: 1, 16>}, {pipeline_mode = #tpu.pipeline_mode<synchronous>, transform_indices = @transform_16, window_bounds = array<i64: 1, 16>}, {pipeline_mode = #tpu.pipeline_mode<synchronous>, transform_indices = @transform_17, window_bounds = array<i64: 1, 16>}, {pipeline_mode = #tpu.pipeline_mode<synchronous>, transform_indices = @transform_18, window_bounds = array<i64: 8, 32, 16>}, {pipeline_mode = #tpu.pipeline_mode<synchronous>, transform_indices = @transform_19, window_bounds = array<i64: 32, 32>}]} {
    %c15 = arith.constant 15 : index
    %c0 = arith.constant 0 : index
    %c0_0 = arith.constant 0 : index
    %c0_1 = arith.constant 0 : index
    %0 = vector.load %arg1[%c15, %c0, %c0_0, %c0_1] : memref<16x2x8x16xf32, #tpu.memory_space<vmem>>, vector<1x2x8x16xf32>
    %1 = vector.shape_cast %0 : vector<1x2x8x16xf32> to vector<2x8x16xf32>
    %c0_2 = arith.constant 0 : index
    %c0_3 = arith.constant 0 : index
    %c0_4 = arith.constant 0 : index
    %c0_5 = arith.constant 0 : index
    %2 = vector.load %arg21[%c0_2, %c0_3, %c0_4, %c0_5] : memref<16x2x8x16xf32, #tpu.memory_space<vmem>>, vector<1x2x8x16xf32>
    %3 = vector.shape_cast %2 : vector<1x2x8x16xf32> to vector<2x8x16xf32>
    %4 = vector.shape_cast %1 : vector<2x8x16xf32> to vector<1x2x8x16xf32>
    tpu.vector_store %arg21[%c0_2, %c0_3, %c0_4, %c0_5], %4 {strides = array<i32>} : memref<16x2x8x16xf32, #tpu.memory_space<vmem>>, vector<1x2x8x16xf32>,
    %c14 = arith.constant 14 : index
    %c0_6 = arith.constant 0 : index
    %c0_7 = arith.constant 0 : index
    %c0_8 = arith.constant 0 : index
    %5 = vector.load %arg1[%c14, %c0_6, %c0_7, %c0_8] : memref<16x2x8x16xf32, #tpu.memory_space<vmem>>, vector<1x2x8x16xf32>
    %6 = vector.shape_cast %5 : vector<1x2x8x16xf32> to vector<2x8x16xf32>
    %c1 = arith.constant 1 : index
    %c0_9 = arith.constant 0 : index
    %c0_10 = arith.constant 0 : index
    %c0_11 = arith.constant 0 : index
    %7 = vector.load %arg21[%c1, %c0_9, %c0_10, %c0_11] : memref<16x2x8x16xf32, #tpu.memory_space<vmem>>, vector<1x2x8x16xf32>
    %8 = vector.shape_cast %7 : vector<1x2x8x16xf32> to vector<2x8x16xf32>
    %9 = vector.shape_cast %6 : vector<2x8x16xf32> to vector<1x2x8x16xf32>
    tpu.vector_store %arg21[%c1, %c0_9, %c0_10, %c0_11], %9 {strides = array<i32>} : memref<16x2x8x16xf32, #tpu.memory_space<vmem>>, vector<1x2x8x16xf32>,
    %c13 = arith.constant 13 : index
    %c0_12 = arith.constant 0 : index
    %c0_13 = arith.constant 0 : index
    %c0_14 = arith.constant 0 : index
    %10 = vector.load %arg1[%c13, %c0_12, %c0_13, %c0_14] : memref<16x2x8x16xf32, #tpu.memory_space<vmem>>, vector<1x2x8x16xf32>
    %11 = vector.shape_cast %10 : vector<1x2x8x16xf32> to vector<2x8x16xf32>
    %c2 = arith.constant 2 : index
    %c0_15 = arith.constant 0 : index
    %c0_16 = arith.constant 0 : index
    %c0_17 = arith.constant 0 : index
    %12 = vector.load %arg21[%c2, %c0_15, %c0_16, %c0_17] : memref<16x2x8x16xf32, #tpu.memory_space<vmem>>, vector<1x2x8x16xf32>
    %13 = vector.shape_cast %12 : vector<1x2x8x16xf32> to vector<2x8x16xf32>
    %14 = vector.shape_cast %11 : vector<2x8x16xf32> to vector<1x2x8x16xf32>
    tpu.vector_store %arg21[%c2, %c0_15, %c0_16, %c0_17], %14 {strides = array<i32>} : memref<16x2x8x16xf32, #tpu.memory_space<vmem>>, vector<1x2x8x16xf32>,
    %c12 = arith.constant 12 : index
    %c0_18 = arith.constant 0 : index
    %c0_19 = arith.constant 0 : index
    %c0_20 = arith.constant 0 : index
    %15 = vector.load %arg1[%c12, %c0_18, %c0_19, %c0_20] : memref<16x2x8x16xf32, #tpu.memory_space<vmem>>, vector<1x2x8x16xf32>
    %16 = vector.shape_cast %15 : vector<1x2x8x16xf32> to vector<2x8x16xf32>
    %c3 = arith.constant 3 : index
    %c0_21 = arith.constant 0 : index
    %c0_22 = arith.constant 0 : index
    %c0_23 = arith.constant 0 : index
    %17 = vector.load %arg21[%c3, %c0_21, %c0_22, %c0_23] : memref<16x2x8x16xf32, #tpu.memory_space<vmem>>, vector<1x2x8x16xf32>
    %18 = vector.shape_cast %17 : vector<1x2x8x16xf32> to vector<2x8x16xf32>
    %19 = vector.shape_cast %16 : vector<2x8x16xf32> to vector<1x2x8x16xf32>
    tpu.vector_store %arg21[%c3, %c0_21, %c0_22, %c0_23], %19 {strides = array<i32>} : memref<16x2x8x16xf32, #tpu.memory_space<vmem>>, vector<1x2x8x16xf32>,
    %c11 = arith.constant 11 : index
    %c0_24 = arith.constant 0 : index
    %c0_25 = arith.constant 0 : index
    %c0_26 = arith.constant 0 : index
    %20 = vector.load %arg1[%c11, %c0_24, %c0_25, %c0_26] : memref<16x2x8x16xf32, #tpu.memory_space<vmem>>, vector<1x2x8x16xf32>
    %21 = vector.shape_cast %20 : vector<1x2x8x16xf32> to vector<2x8x16xf32>
    %c4 = arith.constant 4 : index
    %c0_27 = arith.constant 0 : index
    %c0_28 = arith.constant 0 : index
    %c0_29 = arith.constant 0 : index
    %22 = vector.load %arg21[%c4, %c0_27, %c0_28, %c0_29] : memref<16x2x8x16xf32, #tpu.memory_space<vmem>>, vector<1x2x8x16xf32>
    %23 = vector.shape_cast %22 : vector<1x2x8x16xf32> to vector<2x8x16xf32>
    %24 = vector.shape_cast %21 : vector<2x8x16xf32> to vector<1x2x8x16xf32>
    tpu.vector_store %arg21[%c4, %c0_27, %c0_28, %c0_29], %24 {strides = array<i32>} : memref<16x2x8x16xf32, #tpu.memory_space<vmem>>, vector<1x2x8x16xf32>,
    %c10 = arith.constant 10 : index
    %c0_30 = arith.constant 0 : index
    %c0_31 = arith.constant 0 : index
    %c0_32 = arith.constant 0 : index
    %25 = vector.load %arg1[%c10, %c0_30, %c0_31, %c0_32] : memref<16x2x8x16xf32, #tpu.memory_space<vmem>>, vector<1x2x8x16xf32>
    %26 = vector.shape_cast %25 : vector<1x2x8x16xf32> to vector<2x8x16xf32>
    %c5 = arith.constant 5 : index
    %c0_33 = arith.constant 0 : index
    %c0_34 = arith.constant 0 : index
    %c0_35 = arith.constant 0 : index
    %27 = vector.load %arg21[%c5, %c0_33, %c0_34, %c0_35] : memref<16x2x8x16xf32, #tpu.memory_space<vmem>>, vector<1x2x8x16xf32>
    %28 = vector.shape_cast %27 : vector<1x2x8x16xf32> to vector<2x8x16xf32>
    %29 = vector.shape_cast %26 : vector<2x8x16xf32> to vector<1x2x8x16xf32>
    tpu.vector_store %arg21[%c5, %c0_33, %c0_34, %c0_35], %29 {strides = array<i32>} : memref<16x2x8x16xf32, #tpu.memory_space<vmem>>, vector<1x2x8x16xf32>,
    %c9 = arith.constant 9 : index
    %c0_36 = arith.constant 0 : index
    %c0_37 = arith.constant 0 : index
    %c0_38 = arith.constant 0 : index
    %30 = vector.load %arg1[%c9, %c0_36, %c0_37, %c0_38] : memref<16x2x8x16xf32, #tpu.memory_space<vmem>>, vector<1x2x8x16xf32>
    %31 = vector.shape_cast %30 : vector<1x2x8x16xf32> to vector<2x8x16xf32>
    %c6 = arith.constant 6 : index
    %c0_39 = arith.constant 0 : index
    %c0_40 = arith.constant 0 : index
    %c0_41 = arith.constant 0 : index
    %32 = vector.load %arg21[%c6, %c0_39, %c0_40, %c0_41] : memref<16x2x8x16xf32, #tpu.memory_space<vmem>>, vector<1x2x8x16xf32>
    %33 = vector.shape_cast %32 : vector<1x2x8x16xf32> to vector<2x8x16xf32>
    %34 = vector.shape_cast %31 : vector<2x8x16xf32> to vector<1x2x8x16xf32>
    tpu.vector_store %arg21[%c6, %c0_39, %c0_40, %c0_41], %34 {strides = array<i32>} : memref<16x2x8x16xf32, #tpu.memory_space<vmem>>, vector<1x2x8x16xf32>,
    %c8 = arith.constant 8 : index
    %c0_42 = arith.constant 0 : index
    %c0_43 = arith.constant 0 : index
    %c0_44 = arith.constant 0 : index
    %35 = vector.load %arg1[%c8, %c0_42, %c0_43, %c0_44] : memref<16x2x8x16xf32, #tpu.memory_space<vmem>>, vector<1x2x8x16xf32>
    %36 = vector.shape_cast %35 : vector<1x2x8x16xf32> to vector<2x8x16xf32>
    %c7 = arith.constant 7 : index
    %c0_45 = arith.constant 0 : index
    %c0_46 = arith.constant 0 : index
    %c0_47 = arith.constant 0 : index
    %37 = vector.load %arg21[%c7, %c0_45, %c0_46, %c0_47] : memref<16x2x8x16xf32, #tpu.memory_space<vmem>>, vector<1x2x8x16xf32>
    %38 = vector.shape_cast %37 : vector<1x2x8x16xf32> to vector<2x8x16xf32>
    %39 = vector.shape_cast %36 : vector<2x8x16xf32> to vector<1x2x8x16xf32>
    tpu.vector_store %arg21[%c7, %c0_45, %c0_46, %c0_47], %39 {strides = array<i32>} : memref<16x2x8x16xf32, #tpu.memory_space<vmem>>, vector<1x2x8x16xf32>,
    %c7_48 = arith.constant 7 : index
    %c0_49 = arith.constant 0 : index
    %c0_50 = arith.constant 0 : index
    %c0_51 = arith.constant 0 : index
    %40 = vector.load %arg1[%c7_48, %c0_49, %c0_50, %c0_51] : memref<16x2x8x16xf32, #tpu.memory_space<vmem>>, vector<1x2x8x16xf32>
    %41 = vector.shape_cast %40 : vector<1x2x8x16xf32> to vector<2x8x16xf32>
    %c8_52 = arith.constant 8 : index
    %c0_53 = arith.constant 0 : index
    %c0_54 = arith.constant 0 : index
    %c0_55 = arith.constant 0 : index
    %42 = vector.load %arg21[%c8_52, %c0_53, %c0_54, %c0_55] : memref<16x2x8x16xf32, #tpu.memory_space<vmem>>, vector<1x2x8x16xf32>
    %43 = vector.shape_cast %42 : vector<1x2x8x16xf32> to vector<2x8x16xf32>
    %44 = vector.shape_cast %41 : vector<2x8x16xf32> to vector<1x2x8x16xf32>
    tpu.vector_store %arg21[%c8_52, %c0_53, %c0_54, %c0_55], %44 {strides = array<i32>} : memref<16x2x8x16xf32, #tpu.memory_space<vmem>>, vector<1x2x8x16xf32>,
    %c6_56 = arith.constant 6 : index
    %c0_57 = arith.constant 0 : index
    %c0_58 = arith.constant 0 : index
    %c0_59 = arith.constant 0 : index
    %45 = vector.load %arg1[%c6_56, %c0_57, %c0_58, %c0_59] : memref<16x2x8x16xf32, #tpu.memory_space<vmem>>, vector<1x2x8x16xf32>
    %46 = vector.shape_cast %45 : vector<1x2x8x16xf32> to vector<2x8x16xf32>
    %c9_60 = arith.constant 9 : index
    %c0_61 = arith.constant 0 : index
    %c0_62 = arith.constant 0 : index
    %c0_63 = arith.constant 0 : index
    %47 = vector.load %arg21[%c9_60, %c0_61, %c0_62, %c0_63] : memref<16x2x8x16xf32, #tpu.memory_space<vmem>>, vector<1x2x8x16xf32>
    %48 = vector.shape_cast %47 : vector<1x2x8x16xf32> to vector<2x8x16xf32>
    %49 = vector.shape_cast %46 : vector<2x8x16xf32> to vector<1x2x8x16xf32>
    tpu.vector_store %arg21[%c9_60, %c0_61, %c0_62, %c0_63], %49 {strides = array<i32>} : memref<16x2x8x16xf32, #tpu.memory_space<vmem>>, vector<1x2x8x16xf32>,
    %c5_64 = arith.constant 5 : index
    %c0_65 = arith.constant 0 : index
    %c0_66 = arith.constant 0 : index
    %c0_67 = arith.constant 0 : index
    %50 = vector.load %arg1[%c5_64, %c0_65, %c0_66, %c0_67] : memref<16x2x8x16xf32, #tpu.memory_space<vmem>>, vector<1x2x8x16xf32>
    %51 = vector.shape_cast %50 : vector<1x2x8x16xf32> to vector<2x8x16xf32>
    %c10_68 = arith.constant 10 : index
    %c0_69 = arith.constant 0 : index
    %c0_70 = arith.constant 0 : index
    %c0_71 = arith.constant 0 : index
    %52 = vector.load %arg21[%c10_68, %c0_69, %c0_70, %c0_71] : memref<16x2x8x16xf32, #tpu.memory_space<vmem>>, vector<1x2x8x16xf32>
    %53 = vector.shape_cast %52 : vector<1x2x8x16xf32> to vector<2x8x16xf32>
    %54 = vector.shape_cast %51 : vector<2x8x16xf32> to vector<1x2x8x16xf32>
    tpu.vector_store %arg21[%c10_68, %c0_69, %c0_70, %c0_71], %54 {strides = array<i32>} : memref<16x2x8x16xf32, #tpu.memory_space<vmem>>, vector<1x2x8x16xf32>,
    %c4_72 = arith.constant 4 : index
    %c0_73 = arith.constant 0 : index
    %c0_74 = arith.constant 0 : index
    %c0_75 = arith.constant 0 : index
    %55 = vector.load %arg1[%c4_72, %c0_73, %c0_74, %c0_75] : memref<16x2x8x16xf32, #tpu.memory_space<vmem>>, vector<1x2x8x16xf32>
    %56 = vector.shape_cast %55 : vector<1x2x8x16xf32> to vector<2x8x16xf32>
    %c11_76 = arith.constant 11 : index
    %c0_77 = arith.constant 0 : index
    %c0_78 = arith.constant 0 : index
    %c0_79 = arith.constant 0 : index
    %57 = vector.load %arg21[%c11_76, %c0_77, %c0_78, %c0_79] : memref<16x2x8x16xf32, #tpu.memory_space<vmem>>, vector<1x2x8x16xf32>
    %58 = vector.shape_cast %57 : vector<1x2x8x16xf32> to vector<2x8x16xf32>
    %59 = vector.shape_cast %56 : vector<2x8x16xf32> to vector<1x2x8x16xf32>
    tpu.vector_store %arg21[%c11_76, %c0_77, %c0_78, %c0_79], %59 {strides = array<i32>} : memref<16x2x8x16xf32, #tpu.memory_space<vmem>>, vector<1x2x8x16xf32>,
    %c3_80 = arith.constant 3 : index
    %c0_81 = arith.constant 0 : index
    %c0_82 = arith.constant 0 : index
    %c0_83 = arith.constant 0 : index
    %60 = vector.load %arg1[%c3_80, %c0_81, %c0_82, %c0_83] : memref<16x2x8x16xf32, #tpu.memory_space<vmem>>, vector<1x2x8x16xf32>
    %61 = vector.shape_cast %60 : vector<1x2x8x16xf32> to vector<2x8x16xf32>
    %c12_84 = arith.constant 12 : index
    %c0_85 = arith.constant 0 : index
    %c0_86 = arith.constant 0 : index
    %c0_87 = arith.constant 0 : index
    %62 = vector.load %arg21[%c12_84, %c0_85, %c0_86, %c0_87] : memref<16x2x8x16xf32, #tpu.memory_space<vmem>>, vector<1x2x8x16xf32>
    %63 = vector.shape_cast %62 : vector<1x2x8x16xf32> to vector<2x8x16xf32>
    %64 = vector.shape_cast %61 : vector<2x8x16xf32> to vector<1x2x8x16xf32>
    tpu.vector_store %arg21[%c12_84, %c0_85, %c0_86, %c0_87], %64 {strides = array<i32>} : memref<16x2x8x16xf32, #tpu.memory_space<vmem>>, vector<1x2x8x16xf32>,
    %c2_88 = arith.constant 2 : index
    %c0_89 = arith.constant 0 : index
    %c0_90 = arith.constant 0 : index
    %c0_91 = arith.constant 0 : index
    %65 = vector.load %arg1[%c2_88, %c0_89, %c0_90, %c0_91] : memref<16x2x8x16xf32, #tpu.memory_space<vmem>>, vector<1x2x8x16xf32>
    %66 = vector.shape_cast %65 : vector<1x2x8x16xf32> to vector<2x8x16xf32>
    %c13_92 = arith.constant 13 : index
    %c0_93 = arith.constant 0 : index
    %c0_94 = arith.constant 0 : index
    %c0_95 = arith.constant 0 : index
    %67 = vector.load %arg21[%c13_92, %c0_93, %c0_94, %c0_95] : memref<16x2x8x16xf32, #tpu.memory_space<vmem>>, vector<1x2x8x16xf32>
    %68 = vector.shape_cast %67 : vector<1x2x8x16xf32> to vector<2x8x16xf32>
    %69 = vector.shape_cast %66 : vector<2x8x16xf32> to vector<1x2x8x16xf32>
    tpu.vector_store %arg21[%c13_92, %c0_93, %c0_94, %c0_95], %69 {strides = array<i32>} : memref<16x2x8x16xf32, #tpu.memory_space<vmem>>, vector<1x2x8x16xf32>,
    %c1_96 = arith.constant 1 : index
    %c0_97 = arith.constant 0 : index
    %c0_98 = arith.constant 0 : index
    %c0_99 = arith.constant 0 : index
    %70 = vector.load %arg1[%c1_96, %c0_97, %c0_98, %c0_99] : memref<16x2x8x16xf32, #tpu.memory_space<vmem>>, vector<1x2x8x16xf32>
    %71 = vector.shape_cast %70 : vector<1x2x8x16xf32> to vector<2x8x16xf32>
    %c14_100 = arith.constant 14 : index
    %c0_101 = arith.constant 0 : index
    %c0_102 = arith.constant 0 : index
    %c0_103 = arith.constant 0 : index
    %72 = vector.load %arg21[%c14_100, %c0_101, %c0_102, %c0_103] : memref<16x2x8x16xf32, #tpu.memory_space<vmem>>, vector<1x2x8x16xf32>
    %73 = vector.shape_cast %72 : vector<1x2x8x16xf32> to vector<2x8x16xf32>
    %74 = vector.shape_cast %71 : vector<2x8x16xf32> to vector<1x2x8x16xf32>
    tpu.vector_store %arg21[%c14_100, %c0_101, %c0_102, %c0_103], %74 {strides = array<i32>} : memref<16x2x8x16xf32, #tpu.memory_space<vmem>>, vector<1x2x8x16xf32>,
    %c0_104 = arith.constant 0 : index
    %c0_105 = arith.constant 0 : index
    %c0_106 = arith.constant 0 : index
    %c0_107 = arith.constant 0 : index
    %75 = vector.load %arg1[%c0_104, %c0_105, %c0_106, %c0_107] : memref<16x2x8x16xf32, #tpu.memory_space<vmem>>, vector<1x2x8x16xf32>
    %76 = vector.shape_cast %75 : vector<1x2x8x16xf32> to vector<2x8x16xf32>
    %c15_108 = arith.constant 15 : index
    %c0_109 = arith.constant 0 : index
    %c0_110 = arith.constant 0 : index
    %c0_111 = arith.constant 0 : index
    %77 = vector.load %arg21[%c15_108, %c0_109, %c0_110, %c0_111] : memref<16x2x8x16xf32, #tpu.memory_space<vmem>>, vector<1x2x8x16xf32>
    %78 = vector.shape_cast %77 : vector<1x2x8x16xf32> to vector<2x8x16xf32>
    %79 = vector.shape_cast %76 : vector<2x8x16xf32> to vector<1x2x8x16xf32>
    tpu.vector_store %arg21[%c15_108, %c0_109, %c0_110, %c0_111], %79 {strides = array<i32>} : memref<16x2x8x16xf32, #tpu.memory_space<vmem>>, vector<1x2x8x16xf32>,
    %c0_112 = arith.constant 0 : index
    %c0_113 = arith.constant 0 : index
    %c0_114 = arith.constant 0 : index
    %c0_115 = arith.constant 0 : index
    %80 = vector.load %arg1[%c0_112, %c0_113, %c0_114, %c0_115] : memref<16x2x8x16xf32, #tpu.memory_space<vmem>>, vector<16x2x8x16xf32>
    %81 = vector.shape_cast %80 : vector<16x2x8x16xf32> to vector<256x16xf32>
    %c0_116 = arith.constant 0 : index
    %c0_117 = arith.constant 0 : index
    %c0_118 = arith.constant 0 : index
    %c0_119 = arith.constant 0 : index
    %82 = vector.load %arg21[%c0_116, %c0_117, %c0_118, %c0_119] : memref<16x2x8x16xf32, #tpu.memory_space<vmem>>, vector<16x2x8x16xf32>
    %83 = vector.shape_cast %82 : vector<16x2x8x16xf32> to vector<256x16xf32>
    %c0_120 = arith.constant 0 : index
    %c0_121 = arith.constant 0 : index
    %84 = vector.load %arg2[%c0_120, %c0_121] : memref<16x96xf32, #tpu.memory_space<vmem>>, vector<16x96xf32>
    %cst = arith.constant dense<0.000000e+00> : vector<256x96xf32>
    %85 = tpu.matmul %81, %84, %cst {dimension_numbers = #tpu.dot_dimension_numbers<[1], [0], [0], [1], [0, 0, 1, 1], [], []>} : vector<256x16xf32>, vector<16x96xf32>, vector<256x96xf32> -> vector<256x96xf32>
    %c0_122 = arith.constant 0 : index
    %c0_123 = arith.constant 0 : index
    %86 = vector.load %arg3[%c0_122, %c0_123] : memref<16x96xf32, #tpu.memory_space<vmem>>, vector<16x96xf32>
    %cst_124 = arith.constant dense<0.000000e+00> : vector<256x96xf32>
    %87 = tpu.matmul %83, %86, %cst_124 {dimension_numbers = #tpu.dot_dimension_numbers<[1], [0], [0], [1], [0, 0, 1, 1], [], []>} : vector<256x16xf32>, vector<16x96xf32>, vector<256x96xf32> -> vector<256x96xf32>
    %88 = arith.addf %85, %87 : vector<256x96xf32>
    %c0_125 = arith.constant 0 : index
    %c0_126 = arith.constant 0 : index
    %89 = vector.load %arg4[%c0_125, %c0_126] : memref<1x96xf32, #tpu.memory_space<vmem>>, vector<1x96xf32>
    %90 = vector.broadcast %89 : vector<1x96xf32> to vector<256x96xf32>
    %91 = arith.addf %88, %90 : vector<256x96xf32>
    %c0_127 = arith.constant 0 : index
    %c0_128 = arith.constant 0 : index
    %92 = vector.load %arg22[%c0_127, %c0_128] : memref<256x96xf32, #tpu.memory_space<vmem>>, vector<256x96xf32>
    tpu.vector_store %arg22[%c0_127, %c0_128], %91 {strides = array<i32>} : memref<256x96xf32, #tpu.memory_space<vmem>>, vector<256x96xf32>,
    %c0_129 = arith.constant 0 : index
    %c0_130 = arith.constant 0 : index
    %93 = vector.load %arg5[%c0_129, %c0_130] : memref<32x96xbf16, #tpu.memory_space<vmem>>, vector<32x96xbf16>
    %c0_131 = arith.constant 0 : index
    %c0_132 = arith.constant 0 : index
    %94 = vector.load %arg6[%c0_131, %c0_132] : memref<1x32xf32, #tpu.memory_space<vmem>>, vector<1x32xf32>
    %cst_133 = arith.constant 0.000000e+00 : f32
    %95 = vector.broadcast %cst_133 : f32 to vector<16x32xf32>
    %c0_134 = arith.constant 0 : index
    %c0_135 = arith.constant 0 : index
    %96 = vector.load %arg22[%c0_134, %c0_135] : memref<256x96xf32, #tpu.memory_space<vmem>>, vector<16x96xf32>
    %97 = arith.truncf %95 : vector<16x32xf32> to vector<16x32xbf16>
    %cst_136 = arith.constant dense<0.000000e+00> : vector<16x96xf32>
    %98 = tpu.matmul %97, %93, %cst_136 {dimension_numbers = #tpu.dot_dimension_numbers<[1], [0], [0], [1], [0, 0, 1, 1], [], []>} : vector<16x32xbf16>, vector<32x96xbf16>, vector<16x96xf32> -> vector<16x96xf32>
    %99 = vector.extract_strided_slice %96 {offsets = [0, 0], sizes = [16, 64], strides = [1, 1]} : vector<16x96xf32> to vector<16x64xf32>
    %100 = vector.extract_strided_slice %98 {offsets = [0, 0], sizes = [16, 64], strides = [1, 1]} : vector<16x96xf32> to vector<16x64xf32>
    %101 = arith.addf %99, %100 : vector<16x64xf32>
    %102 = arith.negf %101 : vector<16x64xf32>
    %103 = math.exp %102 : vector<16x64xf32>
    %cst_137 = arith.constant 1.000000e+00 : f32
    %104 = vector.broadcast %cst_137 : f32 to vector<16x64xf32>
    %105 = arith.addf %104, %103 : vector<16x64xf32>
    %106 = arith.divf %104, %105 : vector<16x64xf32>
    %107 = vector.extract_strided_slice %96 {offsets = [0, 64], sizes = [16, 32], strides = [1, 1]} : vector<16x96xf32> to vector<16x32xf32>
    %108 = vector.extract_strided_slice %106 {offsets = [0, 0], sizes = [16, 32], strides = [1, 1]} : vector<16x64xf32> to vector<16x32xf32>
    %109 = vector.extract_strided_slice %98 {offsets = [0, 64], sizes = [16, 32], strides = [1, 1]} : vector<16x96xf32> to vector<16x32xf32>
    %110 = vector.broadcast %94 : vector<1x32xf32> to vector<16x32xf32>
    %111 = arith.addf %109, %110 : vector<16x32xf32>
    %112 = arith.mulf %108, %111 : vector<16x32xf32>
    %113 = arith.addf %107, %112 : vector<16x32xf32>
    %114 = math.tanh %113 : vector<16x32xf32>
    %115 = vector.extract_strided_slice %106 {offsets = [0, 32], sizes = [16, 32], strides = [1, 1]} : vector<16x64xf32> to vector<16x32xf32>
    %116 = arith.subf %95, %114 : vector<16x32xf32>
    %117 = arith.mulf %115, %116 : vector<16x32xf32>
    %118 = arith.addf %114, %117 : vector<16x32xf32>
    %119 = vector.extract_strided_slice %118 {offsets = [0, 0], sizes = [16, 16], strides = [1, 1]} : vector<16x32xf32> to vector<16x16xf32>
    %c0_138 = arith.constant 0 : index
    %c0_139 = arith.constant 0 : index
    %120 = vector.load %arg23[%c0_138, %c0_139] : memref<256x32xf32, #tpu.memory_space<vmem>>, vector<16x16xf32>
    tpu.vector_store %arg23[%c0_138, %c0_139], %119 {strides = array<i32>} : memref<256x32xf32, #tpu.memory_space<vmem>>, vector<16x16xf32>,
    %121 = vector.extract_strided_slice %118 {offsets = [0, 16], sizes = [16, 16], strides = [1, 1]} : vector<16x32xf32> to vector<16x16xf32>
    %c240 = arith.constant 240 : index
    %c16 = arith.constant 16 : index
    %122 = vector.load %arg23[%c240, %c16] : memref<256x32xf32, #tpu.memory_space<vmem>>, vector<16x16xf32>
    tpu.vector_store %arg23[%c240, %c16], %121 {strides = array<i32>} : memref<256x32xf32, #tpu.memory_space<vmem>>, vector<16x16xf32>,
    %c16_140 = arith.constant 16 : index
    %c0_141 = arith.constant 0 : index
    %123 = vector.load %arg22[%c16_140, %c0_141] : memref<256x96xf32, #tpu.memory_space<vmem>>, vector<16x96xf32>
    %124 = arith.truncf %118 : vector<16x32xf32> to vector<16x32xbf16>
    %cst_142 = arith.constant dense<0.000000e+00> : vector<16x96xf32>
    %125 = tpu.matmul %124, %93, %cst_142 {dimension_numbers = #tpu.dot_dimension_numbers<[1], [0], [0], [1], [0, 0, 1, 1], [], []>} : vector<16x32xbf16>, vector<32x96xbf16>, vector<16x96xf32> -> vector<16x96xf32>
    %126 = vector.extract_strided_slice %123 {offsets = [0, 0], sizes = [16, 64], strides = [1, 1]} : vector<16x96xf32> to vector<16x64xf32>
    %127 = vector.extract_strided_slice %125 {offsets = [0, 0], sizes = [16, 64], strides = [1, 1]} : vector<16x96xf32> to vector<16x64xf32>
    %128 = arith.addf %126, %127 : vector<16x64xf32>
    %129 = arith.negf %128 : vector<16x64xf32>
    %130 = math.exp %129 : vector<16x64xf32>
    %cst_143 = arith.constant 1.000000e+00 : f32
    %131 = vector.broadcast %cst_143 : f32 to vector<16x64xf32>
    %132 = arith.addf %131, %130 : vector<16x64xf32>
    %133 = arith.divf %131, %132 : vector<16x64xf32>
    %134 = vector.extract_strided_slice %123 {offsets = [0, 64], sizes = [16, 32], strides = [1, 1]} : vector<16x96xf32> to vector<16x32xf32>
    %135 = vector.extract_strided_slice %133 {offsets = [0, 0], sizes = [16, 32], strides = [1, 1]} : vector<16x64xf32> to vector<16x32xf32>
    %136 = vector.extract_strided_slice %125 {offsets = [0, 64], sizes = [16, 32], strides = [1, 1]} : vector<16x96xf32> to vector<16x32xf32>
    %137 = vector.broadcast %94 : vector<1x32xf32> to vector<16x32xf32>
    %138 = arith.addf %136, %137 : vector<16x32xf32>
    %139 = arith.mulf %135, %138 : vector<16x32xf32>
    %140 = arith.addf %134, %139 : vector<16x32xf32>
    %141 = math.tanh %140 : vector<16x32xf32>
    %142 = vector.extract_strided_slice %133 {offsets = [0, 32], sizes = [16, 32], strides = [1, 1]} : vector<16x64xf32> to vector<16x32xf32>
    %143 = arith.subf %118, %141 : vector<16x32xf32>
    %144 = arith.mulf %142, %143 : vector<16x32xf32>
    %145 = arith.addf %141, %144 : vector<16x32xf32>
    %146 = vector.extract_strided_slice %145 {offsets = [0, 0], sizes = [16, 16], strides = [1, 1]} : vector<16x32xf32> to vector<16x16xf32>
    %c16_144 = arith.constant 16 : index
    %c0_145 = arith.constant 0 : index
    %147 = vector.load %arg23[%c16_144, %c0_145] : memref<256x32xf32, #tpu.memory_space<vmem>>, vector<16x16xf32>
    tpu.vector_store %arg23[%c16_144, %c0_145], %146 {strides = array<i32>} : memref<256x32xf32, #tpu.memory_space<vmem>>, vector<16x16xf32>,
    %148 = vector.extract_strided_slice %145 {offsets = [0, 16], sizes = [16, 16], strides = [1, 1]} : vector<16x32xf32> to vector<16x16xf32>
    %c224 = arith.constant 224 : index
    %c16_146 = arith.constant 16 : index
    %149 = vector.load %arg23[%c224, %c16_146] : memref<256x32xf32, #tpu.memory_space<vmem>>, vector<16x16xf32>
    tpu.vector_store %arg23[%c224, %c16_146], %148 {strides = array<i32>} : memref<256x32xf32, #tpu.memory_space<vmem>>, vector<16x16xf32>,
    %c32 = arith.constant 32 : index
    %c0_147 = arith.constant 0 : index
    %150 = vector.load %arg22[%c32, %c0_147] : memref<256x96xf32, #tpu.memory_space<vmem>>, vector<16x96xf32>
    %151 = arith.truncf %145 : vector<16x32xf32> to vector<16x32xbf16>
    %cst_148 = arith.constant dense<0.000000e+00> : vector<16x96xf32>
    %152 = tpu.matmul %151, %93, %cst_148 {dimension_numbers = #tpu.dot_dimension_numbers<[1], [0], [0], [1], [0, 0, 1, 1], [], []>} : vector<16x32xbf16>, vector<32x96xbf16>, vector<16x96xf32> -> vector<16x96xf32>
    %153 = vector.extract_strided_slice %150 {offsets = [0, 0], sizes = [16, 64], strides = [1, 1]} : vector<16x96xf32> to vector<16x64xf32>
    %154 = vector.extract_strided_slice %152 {offsets = [0, 0], sizes = [16, 64], strides = [1, 1]} : vector<16x96xf32> to vector<16x64xf32>
    %155 = arith.addf %153, %154 : vector<16x64xf32>
    %156 = arith.negf %155 : vector<16x64xf32>
    %157 = math.exp %156 : vector<16x64xf32>
    %cst_149 = arith.constant 1.000000e+00 : f32
    %158 = vector.broadcast %cst_149 : f32 to vector<16x64xf32>
    %159 = arith.addf %158, %157 : vector<16x64xf32>
    %160 = arith.divf %158, %159 : vector<16x64xf32>
    %161 = vector.extract_strided_slice %150 {offsets = [0, 64], sizes = [16, 32], strides = [1, 1]} : vector<16x96xf32> to vector<16x32xf32>
    %162 = vector.extract_strided_slice %160 {offsets = [0, 0], sizes = [16, 32], strides = [1, 1]} : vector<16x64xf32> to vector<16x32xf32>
    %163 = vector.extract_strided_slice %152 {offsets = [0, 64], sizes = [16, 32], strides = [1, 1]} : vector<16x96xf32> to vector<16x32xf32>
    %164 = vector.broadcast %94 : vector<1x32xf32> to vector<16x32xf32>
    %165 = arith.addf %163, %164 : vector<16x32xf32>
    %166 = arith.mulf %162, %165 : vector<16x32xf32>
    %167 = arith.addf %161, %166 : vector<16x32xf32>
    %168 = math.tanh %167 : vector<16x32xf32>
    %169 = vector.extract_strided_slice %160 {offsets = [0, 32], sizes = [16, 32], strides = [1, 1]} : vector<16x64xf32> to vector<16x32xf32>
    %170 = arith.subf %145, %168 : vector<16x32xf32>
    %171 = arith.mulf %169, %170 : vector<16x32xf32>
    %172 = arith.addf %168, %171 : vector<16x32xf32>
    %173 = vector.extract_strided_slice %172 {offsets = [0, 0], sizes = [16, 16], strides = [1, 1]} : vector<16x32xf32> to vector<16x16xf32>
    %c32_150 = arith.constant 32 : index
    %c0_151 = arith.constant 0 : index
    %174 = vector.load %arg23[%c32_150, %c0_151] : memref<256x32xf32, #tpu.memory_space<vmem>>, vector<16x16xf32>
    tpu.vector_store %arg23[%c32_150, %c0_151], %173 {strides = array<i32>} : memref<256x32xf32, #tpu.memory_space<vmem>>, vector<16x16xf32>,
    %175 = vector.extract_strided_slice %172 {offsets = [0, 16], sizes = [16, 16], strides = [1, 1]} : vector<16x32xf32> to vector<16x16xf32>
    %c208 = arith.constant 208 : index
    %c16_152 = arith.constant 16 : index
    %176 = vector.load %arg23[%c208, %c16_152] : memref<256x32xf32, #tpu.memory_space<vmem>>, vector<16x16xf32>
    tpu.vector_store %arg23[%c208, %c16_152], %175 {strides = array<i32>} : memref<256x32xf32, #tpu.memory_space<vmem>>, vector<16x16xf32>,
    %c48 = arith.constant 48 : index
    %c0_153 = arith.constant 0 : index
    %177 = vector.load %arg22[%c48, %c0_153] : memref<256x96xf32, #tpu.memory_space<vmem>>, vector<16x96xf32>
    %178 = arith.truncf %172 : vector<16x32xf32> to vector<16x32xbf16>
    %cst_154 = arith.constant dense<0.000000e+00> : vector<16x96xf32>
    %179 = tpu.matmul %178, %93, %cst_154 {dimension_numbers = #tpu.dot_dimension_numbers<[1], [0], [0], [1], [0, 0, 1, 1], [], []>} : vector<16x32xbf16>, vector<32x96xbf16>, vector<16x96xf32> -> vector<16x96xf32>
    %180 = vector.extract_strided_slice %177 {offsets = [0, 0], sizes = [16, 64], strides = [1, 1]} : vector<16x96xf32> to vector<16x64xf32>
    %181 = vector.extract_strided_slice %179 {offsets = [0, 0], sizes = [16, 64], strides = [1, 1]} : vector<16x96xf32> to vector<16x64xf32>
    %182 = arith.addf %180, %181 : vector<16x64xf32>
    %183 = arith.negf %182 : vector<16x64xf32>
    %184 = math.exp %183 : vector<16x64xf32>
    %cst_155 = arith.constant 1.000000e+00 : f32
    %185 = vector.broadcast %cst_155 : f32 to vector<16x64xf32>
    %186 = arith.addf %185, %184 : vector<16x64xf32>
    %187 = arith.divf %185, %186 : vector<16x64xf32>
    %188 = vector.extract_strided_slice %177 {offsets = [0, 64], sizes = [16, 32], strides = [1, 1]} : vector<16x96xf32> to vector<16x32xf32>
    %189 = vector.extract_strided_slice %187 {offsets = [0, 0], sizes = [16, 32], strides = [1, 1]} : vector<16x64xf32> to vector<16x32xf32>
    %190 = vector.extract_strided_slice %179 {offsets = [0, 64], sizes = [16, 32], strides = [1, 1]} : vector<16x96xf32> to vector<16x32xf32>
    %191 = vector.broadcast %94 : vector<1x32xf32> to vector<16x32xf32>
    %192 = arith.addf %190, %191 : vector<16x32xf32>
    %193 = arith.mulf %189, %192 : vector<16x32xf32>
    %194 = arith.addf %188, %193 : vector<16x32xf32>
    %195 = math.tanh %194 : vector<16x32xf32>
    %196 = vector.extract_strided_slice %187 {offsets = [0, 32], sizes = [16, 32], strides = [1, 1]} : vector<16x64xf32> to vector<16x32xf32>
    %197 = arith.subf %172, %195 : vector<16x32xf32>
    %198 = arith.mulf %196, %197 : vector<16x32xf32>
    %199 = arith.addf %195, %198 : vector<16x32xf32>
    %200 = vector.extract_strided_slice %199 {offsets = [0, 0], sizes = [16, 16], strides = [1, 1]} : vector<16x32xf32> to vector<16x16xf32>
    %c48_156 = arith.constant 48 : index
    %c0_157 = arith.constant 0 : index
    %201 = vector.load %arg23[%c48_156, %c0_157] : memref<256x32xf32, #tpu.memory_space<vmem>>, vector<16x16xf32>
    tpu.vector_store %arg23[%c48_156, %c0_157], %200 {strides = array<i32>} : memref<256x32xf32, #tpu.memory_space<vmem>>, vector<16x16xf32>,
    %202 = vector.extract_strided_slice %199 {offsets = [0, 16], sizes = [16, 16], strides = [1, 1]} : vector<16x32xf32> to vector<16x16xf32>
    %c192 = arith.constant 192 : index
    %c16_158 = arith.constant 16 : index
    %203 = vector.load %arg23[%c192, %c16_158] : memref<256x32xf32, #tpu.memory_space<vmem>>, vector<16x16xf32>
    tpu.vector_store %arg23[%c192, %c16_158], %202 {strides = array<i32>} : memref<256x32xf32, #tpu.memory_space<vmem>>, vector<16x16xf32>,
    %c64 = arith.constant 64 : index
    %c0_159 = arith.constant 0 : index
    %204 = vector.load %arg22[%c64, %c0_159] : memref<256x96xf32, #tpu.memory_space<vmem>>, vector<16x96xf32>
    %205 = arith.truncf %199 : vector<16x32xf32> to vector<16x32xbf16>
    %cst_160 = arith.constant dense<0.000000e+00> : vector<16x96xf32>
    %206 = tpu.matmul %205, %93, %cst_160 {dimension_numbers = #tpu.dot_dimension_numbers<[1], [0], [0], [1], [0, 0, 1, 1], [], []>} : vector<16x32xbf16>, vector<32x96xbf16>, vector<16x96xf32> -> vector<16x96xf32>
    %207 = vector.extract_strided_slice %204 {offsets = [0, 0], sizes = [16, 64], strides = [1, 1]} : vector<16x96xf32> to vector<16x64xf32>
    %208 = vector.extract_strided_slice %206 {offsets = [0, 0], sizes = [16, 64], strides = [1, 1]} : vector<16x96xf32> to vector<16x64xf32>
    %209 = arith.addf %207, %208 : vector<16x64xf32>
    %210 = arith.negf %209 : vector<16x64xf32>
    %211 = math.exp %210 : vector<16x64xf32>
    %cst_161 = arith.constant 1.000000e+00 : f32
    %212 = vector.broadcast %cst_161 : f32 to vector<16x64xf32>
    %213 = arith.addf %212, %211 : vector<16x64xf32>
    %214 = arith.divf %212, %213 : vector<16x64xf32>
    %215 = vector.extract_strided_slice %204 {offsets = [0, 64], sizes = [16, 32], strides = [1, 1]} : vector<16x96xf32> to vector<16x32xf32>
    %216 = vector.extract_strided_slice %214 {offsets = [0, 0], sizes = [16, 32], strides = [1, 1]} : vector<16x64xf32> to vector<16x32xf32>
    %217 = vector.extract_strided_slice %206 {offsets = [0, 64], sizes = [16, 32], strides = [1, 1]} : vector<16x96xf32> to vector<16x32xf32>
    %218 = vector.broadcast %94 : vector<1x32xf32> to vector<16x32xf32>
    %219 = arith.addf %217, %218 : vector<16x32xf32>
    %220 = arith.mulf %216, %219 : vector<16x32xf32>
    %221 = arith.addf %215, %220 : vector<16x32xf32>
    %222 = math.tanh %221 : vector<16x32xf32>
    %223 = vector.extract_strided_slice %214 {offsets = [0, 32], sizes = [16, 32], strides = [1, 1]} : vector<16x64xf32> to vector<16x32xf32>
    %224 = arith.subf %199, %222 : vector<16x32xf32>
    %225 = arith.mulf %223, %224 : vector<16x32xf32>
    %226 = arith.addf %222, %225 : vector<16x32xf32>
    %227 = vector.extract_strided_slice %226 {offsets = [0, 0], sizes = [16, 16], strides = [1, 1]} : vector<16x32xf32> to vector<16x16xf32>
    %c64_162 = arith.constant 64 : index
    %c0_163 = arith.constant 0 : index
    %228 = vector.load %arg23[%c64_162, %c0_163] : memref<256x32xf32, #tpu.memory_space<vmem>>, vector<16x16xf32>
    tpu.vector_store %arg23[%c64_162, %c0_163], %227 {strides = array<i32>} : memref<256x32xf32, #tpu.memory_space<vmem>>, vector<16x16xf32>,
    %229 = vector.extract_strided_slice %226 {offsets = [0, 16], sizes = [16, 16], strides = [1, 1]} : vector<16x32xf32> to vector<16x16xf32>
    %c176 = arith.constant 176 : index
    %c16_164 = arith.constant 16 : index
    %230 = vector.load %arg23[%c176, %c16_164] : memref<256x32xf32, #tpu.memory_space<vmem>>, vector<16x16xf32>
    tpu.vector_store %arg23[%c176, %c16_164], %229 {strides = array<i32>} : memref<256x32xf32, #tpu.memory_space<vmem>>, vector<16x16xf32>,
    %c80 = arith.constant 80 : index
    %c0_165 = arith.constant 0 : index
    %231 = vector.load %arg22[%c80, %c0_165] : memref<256x96xf32, #tpu.memory_space<vmem>>, vector<16x96xf32>
    %232 = arith.truncf %226 : vector<16x32xf32> to vector<16x32xbf16>
    %cst_166 = arith.constant dense<0.000000e+00> : vector<16x96xf32>
    %233 = tpu.matmul %232, %93, %cst_166 {dimension_numbers = #tpu.dot_dimension_numbers<[1], [0], [0], [1], [0, 0, 1, 1], [], []>} : vector<16x32xbf16>, vector<32x96xbf16>, vector<16x96xf32> -> vector<16x96xf32>
    %234 = vector.extract_strided_slice %231 {offsets = [0, 0], sizes = [16, 64], strides = [1, 1]} : vector<16x96xf32> to vector<16x64xf32>
    %235 = vector.extract_strided_slice %233 {offsets = [0, 0], sizes = [16, 64], strides = [1, 1]} : vector<16x96xf32> to vector<16x64xf32>
    %236 = arith.addf %234, %235 : vector<16x64xf32>
    %237 = arith.negf %236 : vector<16x64xf32>
    %238 = math.exp %237 : vector<16x64xf32>
    %cst_167 = arith.constant 1.000000e+00 : f32
    %239 = vector.broadcast %cst_167 : f32 to vector<16x64xf32>
    %240 = arith.addf %239, %238 : vector<16x64xf32>
    %241 = arith.divf %239, %240 : vector<16x64xf32>
    %242 = vector.extract_strided_slice %231 {offsets = [0, 64], sizes = [16, 32], strides = [1, 1]} : vector<16x96xf32> to vector<16x32xf32>
    %243 = vector.extract_strided_slice %241 {offsets = [0, 0], sizes = [16, 32], strides = [1, 1]} : vector<16x64xf32> to vector<16x32xf32>
    %244 = vector.extract_strided_slice %233 {offsets = [0, 64], sizes = [16, 32], strides = [1, 1]} : vector<16x96xf32> to vector<16x32xf32>
    %245 = vector.broadcast %94 : vector<1x32xf32> to vector<16x32xf32>
    %246 = arith.addf %244, %245 : vector<16x32xf32>
    %247 = arith.mulf %243, %246 : vector<16x32xf32>
    %248 = arith.addf %242, %247 : vector<16x32xf32>
    %249 = math.tanh %248 : vector<16x32xf32>
    %250 = vector.extract_strided_slice %241 {offsets = [0, 32], sizes = [16, 32], strides = [1, 1]} : vector<16x64xf32> to vector<16x32xf32>
    %251 = arith.subf %226, %249 : vector<16x32xf32>
    %252 = arith.mulf %250, %251 : vector<16x32xf32>
    %253 = arith.addf %249, %252 : vector<16x32xf32>
    %254 = vector.extract_strided_slice %253 {offsets = [0, 0], sizes = [16, 16], strides = [1, 1]} : vector<16x32xf32> to vector<16x16xf32>
    %c80_168 = arith.constant 80 : index
    %c0_169 = arith.constant 0 : index
    %255 = vector.load %arg23[%c80_168, %c0_169] : memref<256x32xf32, #tpu.memory_space<vmem>>, vector<16x16xf32>
    tpu.vector_store %arg23[%c80_168, %c0_169], %254 {strides = array<i32>} : memref<256x32xf32, #tpu.memory_space<vmem>>, vector<16x16xf32>,
    %256 = vector.extract_strided_slice %253 {offsets = [0, 16], sizes = [16, 16], strides = [1, 1]} : vector<16x32xf32> to vector<16x16xf32>
    %c160 = arith.constant 160 : index
    %c16_170 = arith.constant 16 : index
    %257 = vector.load %arg23[%c160, %c16_170] : memref<256x32xf32, #tpu.memory_space<vmem>>, vector<16x16xf32>
    tpu.vector_store %arg23[%c160, %c16_170], %256 {strides = array<i32>} : memref<256x32xf32, #tpu.memory_space<vmem>>, vector<16x16xf32>,
    %c96 = arith.constant 96 : index
    %c0_171 = arith.constant 0 : index
    %258 = vector.load %arg22[%c96, %c0_171] : memref<256x96xf32, #tpu.memory_space<vmem>>, vector<16x96xf32>
    %259 = arith.truncf %253 : vector<16x32xf32> to vector<16x32xbf16>
    %cst_172 = arith.constant dense<0.000000e+00> : vector<16x96xf32>
    %260 = tpu.matmul %259, %93, %cst_172 {dimension_numbers = #tpu.dot_dimension_numbers<[1], [0], [0], [1], [0, 0, 1, 1], [], []>} : vector<16x32xbf16>, vector<32x96xbf16>, vector<16x96xf32> -> vector<16x96xf32>
    %261 = vector.extract_strided_slice %258 {offsets = [0, 0], sizes = [16, 64], strides = [1, 1]} : vector<16x96xf32> to vector<16x64xf32>
    %262 = vector.extract_strided_slice %260 {offsets = [0, 0], sizes = [16, 64], strides = [1, 1]} : vector<16x96xf32> to vector<16x64xf32>
    %263 = arith.addf %261, %262 : vector<16x64xf32>
    %264 = arith.negf %263 : vector<16x64xf32>
    %265 = math.exp %264 : vector<16x64xf32>
    %cst_173 = arith.constant 1.000000e+00 : f32
    %266 = vector.broadcast %cst_173 : f32 to vector<16x64xf32>
    %267 = arith.addf %266, %265 : vector<16x64xf32>
    %268 = arith.divf %266, %267 : vector<16x64xf32>
    %269 = vector.extract_strided_slice %258 {offsets = [0, 64], sizes = [16, 32], strides = [1, 1]} : vector<16x96xf32> to vector<16x32xf32>
    %270 = vector.extract_strided_slice %268 {offsets = [0, 0], sizes = [16, 32], strides = [1, 1]} : vector<16x64xf32> to vector<16x32xf32>
    %271 = vector.extract_strided_slice %260 {offsets = [0, 64], sizes = [16, 32], strides = [1, 1]} : vector<16x96xf32> to vector<16x32xf32>
    %272 = vector.broadcast %94 : vector<1x32xf32> to vector<16x32xf32>
    %273 = arith.addf %271, %272 : vector<16x32xf32>
    %274 = arith.mulf %270, %273 : vector<16x32xf32>
    %275 = arith.addf %269, %274 : vector<16x32xf32>
    %276 = math.tanh %275 : vector<16x32xf32>
    %277 = vector.extract_strided_slice %268 {offsets = [0, 32], sizes = [16, 32], strides = [1, 1]} : vector<16x64xf32> to vector<16x32xf32>
    %278 = arith.subf %253, %276 : vector<16x32xf32>
    %279 = arith.mulf %277, %278 : vector<16x32xf32>
    %280 = arith.addf %276, %279 : vector<16x32xf32>
    %281 = vector.extract_strided_slice %280 {offsets = [0, 0], sizes = [16, 16], strides = [1, 1]} : vector<16x32xf32> to vector<16x16xf32>
    %c96_174 = arith.constant 96 : index
    %c0_175 = arith.constant 0 : index
    %282 = vector.load %arg23[%c96_174, %c0_175] : memref<256x32xf32, #tpu.memory_space<vmem>>, vector<16x16xf32>
    tpu.vector_store %arg23[%c96_174, %c0_175], %281 {strides = array<i32>} : memref<256x32xf32, #tpu.memory_space<vmem>>, vector<16x16xf32>,
    %283 = vector.extract_strided_slice %280 {offsets = [0, 16], sizes = [16, 16], strides = [1, 1]} : vector<16x32xf32> to vector<16x16xf32>
    %c144 = arith.constant 144 : index
    %c16_176 = arith.constant 16 : index
    %284 = vector.load %arg23[%c144, %c16_176] : memref<256x32xf32, #tpu.memory_space<vmem>>, vector<16x16xf32>
    tpu.vector_store %arg23[%c144, %c16_176], %283 {strides = array<i32>} : memref<256x32xf32, #tpu.memory_space<vmem>>, vector<16x16xf32>,
    %c112 = arith.constant 112 : index
    %c0_177 = arith.constant 0 : index
    %285 = vector.load %arg22[%c112, %c0_177] : memref<256x96xf32, #tpu.memory_space<vmem>>, vector<16x96xf32>
    %286 = arith.truncf %280 : vector<16x32xf32> to vector<16x32xbf16>
    %cst_178 = arith.constant dense<0.000000e+00> : vector<16x96xf32>
    %287 = tpu.matmul %286, %93, %cst_178 {dimension_numbers = #tpu.dot_dimension_numbers<[1], [0], [0], [1], [0, 0, 1, 1], [], []>} : vector<16x32xbf16>, vector<32x96xbf16>, vector<16x96xf32> -> vector<16x96xf32>
    %288 = vector.extract_strided_slice %285 {offsets = [0, 0], sizes = [16, 64], strides = [1, 1]} : vector<16x96xf32> to vector<16x64xf32>
    %289 = vector.extract_strided_slice %287 {offsets = [0, 0], sizes = [16, 64], strides = [1, 1]} : vector<16x96xf32> to vector<16x64xf32>
    %290 = arith.addf %288, %289 : vector<16x64xf32>
    %291 = arith.negf %290 : vector<16x64xf32>
    %292 = math.exp %291 : vector<16x64xf32>
    %cst_179 = arith.constant 1.000000e+00 : f32
    %293 = vector.broadcast %cst_179 : f32 to vector<16x64xf32>
    %294 = arith.addf %293, %292 : vector<16x64xf32>
    %295 = arith.divf %293, %294 : vector<16x64xf32>
    %296 = vector.extract_strided_slice %285 {offsets = [0, 64], sizes = [16, 32], strides = [1, 1]} : vector<16x96xf32> to vector<16x32xf32>
    %297 = vector.extract_strided_slice %295 {offsets = [0, 0], sizes = [16, 32], strides = [1, 1]} : vector<16x64xf32> to vector<16x32xf32>
    %298 = vector.extract_strided_slice %287 {offsets = [0, 64], sizes = [16, 32], strides = [1, 1]} : vector<16x96xf32> to vector<16x32xf32>
    %299 = vector.broadcast %94 : vector<1x32xf32> to vector<16x32xf32>
    %300 = arith.addf %298, %299 : vector<16x32xf32>
    %301 = arith.mulf %297, %300 : vector<16x32xf32>
    %302 = arith.addf %296, %301 : vector<16x32xf32>
    %303 = math.tanh %302 : vector<16x32xf32>
    %304 = vector.extract_strided_slice %295 {offsets = [0, 32], sizes = [16, 32], strides = [1, 1]} : vector<16x64xf32> to vector<16x32xf32>
    %305 = arith.subf %280, %303 : vector<16x32xf32>
    %306 = arith.mulf %304, %305 : vector<16x32xf32>
    %307 = arith.addf %303, %306 : vector<16x32xf32>
    %308 = vector.extract_strided_slice %307 {offsets = [0, 0], sizes = [16, 16], strides = [1, 1]} : vector<16x32xf32> to vector<16x16xf32>
    %c112_180 = arith.constant 112 : index
    %c0_181 = arith.constant 0 : index
    %309 = vector.load %arg23[%c112_180, %c0_181] : memref<256x32xf32, #tpu.memory_space<vmem>>, vector<16x16xf32>
    tpu.vector_store %arg23[%c112_180, %c0_181], %308 {strides = array<i32>} : memref<256x32xf32, #tpu.memory_space<vmem>>, vector<16x16xf32>,
    %310 = vector.extract_strided_slice %307 {offsets = [0, 16], sizes = [16, 16], strides = [1, 1]} : vector<16x32xf32> to vector<16x16xf32>
    %c128 = arith.constant 128 : index
    %c16_182 = arith.constant 16 : index
    %311 = vector.load %arg23[%c128, %c16_182] : memref<256x32xf32, #tpu.memory_space<vmem>>, vector<16x16xf32>
    tpu.vector_store %arg23[%c128, %c16_182], %310 {strides = array<i32>} : memref<256x32xf32, #tpu.memory_space<vmem>>, vector<16x16xf32>,
    %c128_183 = arith.constant 128 : index
    %c0_184 = arith.constant 0 : index
    %312 = vector.load %arg22[%c128_183, %c0_184] : memref<256x96xf32, #tpu.memory_space<vmem>>, vector<16x96xf32>
    %313 = arith.truncf %307 : vector<16x32xf32> to vector<16x32xbf16>
    %cst_185 = arith.constant dense<0.000000e+00> : vector<16x96xf32>
    %314 = tpu.matmul %313, %93, %cst_185 {dimension_numbers = #tpu.dot_dimension_numbers<[1], [0], [0], [1], [0, 0, 1, 1], [], []>} : vector<16x32xbf16>, vector<32x96xbf16>, vector<16x96xf32> -> vector<16x96xf32>
    %315 = vector.extract_strided_slice %312 {offsets = [0, 0], sizes = [16, 64], strides = [1, 1]} : vector<16x96xf32> to vector<16x64xf32>
    %316 = vector.extract_strided_slice %314 {offsets = [0, 0], sizes = [16, 64], strides = [1, 1]} : vector<16x96xf32> to vector<16x64xf32>
    %317 = arith.addf %315, %316 : vector<16x64xf32>
    %318 = arith.negf %317 : vector<16x64xf32>
    %319 = math.exp %318 : vector<16x64xf32>
    %cst_186 = arith.constant 1.000000e+00 : f32
    %320 = vector.broadcast %cst_186 : f32 to vector<16x64xf32>
    %321 = arith.addf %320, %319 : vector<16x64xf32>
    %322 = arith.divf %320, %321 : vector<16x64xf32>
    %323 = vector.extract_strided_slice %312 {offsets = [0, 64], sizes = [16, 32], strides = [1, 1]} : vector<16x96xf32> to vector<16x32xf32>
    %324 = vector.extract_strided_slice %322 {offsets = [0, 0], sizes = [16, 32], strides = [1, 1]} : vector<16x64xf32> to vector<16x32xf32>
    %325 = vector.extract_strided_slice %314 {offsets = [0, 64], sizes = [16, 32], strides = [1, 1]} : vector<16x96xf32> to vector<16x32xf32>
    %326 = vector.broadcast %94 : vector<1x32xf32> to vector<16x32xf32>
    %327 = arith.addf %325, %326 : vector<16x32xf32>
    %328 = arith.mulf %324, %327 : vector<16x32xf32>
    %329 = arith.addf %323, %328 : vector<16x32xf32>
    %330 = math.tanh %329 : vector<16x32xf32>
    %331 = vector.extract_strided_slice %322 {offsets = [0, 32], sizes = [16, 32], strides = [1, 1]} : vector<16x64xf32> to vector<16x32xf32>
    %332 = arith.subf %307, %330 : vector<16x32xf32>
    %333 = arith.mulf %331, %332 : vector<16x32xf32>
    %334 = arith.addf %330, %333 : vector<16x32xf32>
    %335 = vector.extract_strided_slice %334 {offsets = [0, 0], sizes = [16, 16], strides = [1, 1]} : vector<16x32xf32> to vector<16x16xf32>
    %c128_187 = arith.constant 128 : index
    %c0_188 = arith.constant 0 : index
    %336 = vector.load %arg23[%c128_187, %c0_188] : memref<256x32xf32, #tpu.memory_space<vmem>>, vector<16x16xf32>
    tpu.vector_store %arg23[%c128_187, %c0_188], %335 {strides = array<i32>} : memref<256x32xf32, #tpu.memory_space<vmem>>, vector<16x16xf32>,
    %337 = vector.extract_strided_slice %334 {offsets = [0, 16], sizes = [16, 16], strides = [1, 1]} : vector<16x32xf32> to vector<16x16xf32>
    %c112_189 = arith.constant 112 : index
    %c16_190 = arith.constant 16 : index
    %338 = vector.load %arg23[%c112_189, %c16_190] : memref<256x32xf32, #tpu.memory_space<vmem>>, vector<16x16xf32>
    tpu.vector_store %arg23[%c112_189, %c16_190], %337 {strides = array<i32>} : memref<256x32xf32, #tpu.memory_space<vmem>>, vector<16x16xf32>,
    %c144_191 = arith.constant 144 : index
    %c0_192 = arith.constant 0 : index
    %339 = vector.load %arg22[%c144_191, %c0_192] : memref<256x96xf32, #tpu.memory_space<vmem>>, vector<16x96xf32>
    %340 = arith.truncf %334 : vector<16x32xf32> to vector<16x32xbf16>
    %cst_193 = arith.constant dense<0.000000e+00> : vector<16x96xf32>
    %341 = tpu.matmul %340, %93, %cst_193 {dimension_numbers = #tpu.dot_dimension_numbers<[1], [0], [0], [1], [0, 0, 1, 1], [], []>} : vector<16x32xbf16>, vector<32x96xbf16>, vector<16x96xf32> -> vector<16x96xf32>
    %342 = vector.extract_strided_slice %339 {offsets = [0, 0], sizes = [16, 64], strides = [1, 1]} : vector<16x96xf32> to vector<16x64xf32>
    %343 = vector.extract_strided_slice %341 {offsets = [0, 0], sizes = [16, 64], strides = [1, 1]} : vector<16x96xf32> to vector<16x64xf32>
    %344 = arith.addf %342, %343 : vector<16x64xf32>
    %345 = arith.negf %344 : vector<16x64xf32>
    %346 = math.exp %345 : vector<16x64xf32>
    %cst_194 = arith.constant 1.000000e+00 : f32
    %347 = vector.broadcast %cst_194 : f32 to vector<16x64xf32>
    %348 = arith.addf %347, %346 : vector<16x64xf32>
    %349 = arith.divf %347, %348 : vector<16x64xf32>
    %350 = vector.extract_strided_slice %339 {offsets = [0, 64], sizes = [16, 32], strides = [1, 1]} : vector<16x96xf32> to vector<16x32xf32>
    %351 = vector.extract_strided_slice %349 {offsets = [0, 0], sizes = [16, 32], strides = [1, 1]} : vector<16x64xf32> to vector<16x32xf32>
    %352 = vector.extract_strided_slice %341 {offsets = [0, 64], sizes = [16, 32], strides = [1, 1]} : vector<16x96xf32> to vector<16x32xf32>
    %353 = vector.broadcast %94 : vector<1x32xf32> to vector<16x32xf32>
    %354 = arith.addf %352, %353 : vector<16x32xf32>
    %355 = arith.mulf %351, %354 : vector<16x32xf32>
    %356 = arith.addf %350, %355 : vector<16x32xf32>
    %357 = math.tanh %356 : vector<16x32xf32>
    %358 = vector.extract_strided_slice %349 {offsets = [0, 32], sizes = [16, 32], strides = [1, 1]} : vector<16x64xf32> to vector<16x32xf32>
    %359 = arith.subf %334, %357 : vector<16x32xf32>
    %360 = arith.mulf %358, %359 : vector<16x32xf32>
    %361 = arith.addf %357, %360 : vector<16x32xf32>
    %362 = vector.extract_strided_slice %361 {offsets = [0, 0], sizes = [16, 16], strides = [1, 1]} : vector<16x32xf32> to vector<16x16xf32>
    %c144_195 = arith.constant 144 : index
    %c0_196 = arith.constant 0 : index
    %363 = vector.load %arg23[%c144_195, %c0_196] : memref<256x32xf32, #tpu.memory_space<vmem>>, vector<16x16xf32>
    tpu.vector_store %arg23[%c144_195, %c0_196], %362 {strides = array<i32>} : memref<256x32xf32, #tpu.memory_space<vmem>>, vector<16x16xf32>,
    %364 = vector.extract_strided_slice %361 {offsets = [0, 16], sizes = [16, 16], strides = [1, 1]} : vector<16x32xf32> to vector<16x16xf32>
    %c96_197 = arith.constant 96 : index
    %c16_198 = arith.constant 16 : index
    %365 = vector.load %arg23[%c96_197, %c16_198] : memref<256x32xf32, #tpu.memory_space<vmem>>, vector<16x16xf32>
    tpu.vector_store %arg23[%c96_197, %c16_198], %364 {strides = array<i32>} : memref<256x32xf32, #tpu.memory_space<vmem>>, vector<16x16xf32>,
    %c160_199 = arith.constant 160 : index
    %c0_200 = arith.constant 0 : index
    %366 = vector.load %arg22[%c160_199, %c0_200] : memref<256x96xf32, #tpu.memory_space<vmem>>, vector<16x96xf32>
    %367 = arith.truncf %361 : vector<16x32xf32> to vector<16x32xbf16>
    %cst_201 = arith.constant dense<0.000000e+00> : vector<16x96xf32>
    %368 = tpu.matmul %367, %93, %cst_201 {dimension_numbers = #tpu.dot_dimension_numbers<[1], [0], [0], [1], [0, 0, 1, 1], [], []>} : vector<16x32xbf16>, vector<32x96xbf16>, vector<16x96xf32> -> vector<16x96xf32>
    %369 = vector.extract_strided_slice %366 {offsets = [0, 0], sizes = [16, 64], strides = [1, 1]} : vector<16x96xf32> to vector<16x64xf32>
    %370 = vector.extract_strided_slice %368 {offsets = [0, 0], sizes = [16, 64], strides = [1, 1]} : vector<16x96xf32> to vector<16x64xf32>
    %371 = arith.addf %369, %370 : vector<16x64xf32>
    %372 = arith.negf %371 : vector<16x64xf32>
    %373 = math.exp %372 : vector<16x64xf32>
    %cst_202 = arith.constant 1.000000e+00 : f32
    %374 = vector.broadcast %cst_202 : f32 to vector<16x64xf32>
    %375 = arith.addf %374, %373 : vector<16x64xf32>
    %376 = arith.divf %374, %375 : vector<16x64xf32>
    %377 = vector.extract_strided_slice %366 {offsets = [0, 64], sizes = [16, 32], strides = [1, 1]} : vector<16x96xf32> to vector<16x32xf32>
    %378 = vector.extract_strided_slice %376 {offsets = [0, 0], sizes = [16, 32], strides = [1, 1]} : vector<16x64xf32> to vector<16x32xf32>
    %379 = vector.extract_strided_slice %368 {offsets = [0, 64], sizes = [16, 32], strides = [1, 1]} : vector<16x96xf32> to vector<16x32xf32>
    %380 = vector.broadcast %94 : vector<1x32xf32> to vector<16x32xf32>
    %381 = arith.addf %379, %380 : vector<16x32xf32>
    %382 = arith.mulf %378, %381 : vector<16x32xf32>
    %383 = arith.addf %377, %382 : vector<16x32xf32>
    %384 = math.tanh %383 : vector<16x32xf32>
    %385 = vector.extract_strided_slice %376 {offsets = [0, 32], sizes = [16, 32], strides = [1, 1]} : vector<16x64xf32> to vector<16x32xf32>
    %386 = arith.subf %361, %384 : vector<16x32xf32>
    %387 = arith.mulf %385, %386 : vector<16x32xf32>
    %388 = arith.addf %384, %387 : vector<16x32xf32>
    %389 = vector.extract_strided_slice %388 {offsets = [0, 0], sizes = [16, 16], strides = [1, 1]} : vector<16x32xf32> to vector<16x16xf32>
    %c160_203 = arith.constant 160 : index
    %c0_204 = arith.constant 0 : index
    %390 = vector.load %arg23[%c160_203, %c0_204] : memref<256x32xf32, #tpu.memory_space<vmem>>, vector<16x16xf32>
    tpu.vector_store %arg23[%c160_203, %c0_204], %389 {strides = array<i32>} : memref<256x32xf32, #tpu.memory_space<vmem>>, vector<16x16xf32>,
    %391 = vector.extract_strided_slice %388 {offsets = [0, 16], sizes = [16, 16], strides = [1, 1]} : vector<16x32xf32> to vector<16x16xf32>
    %c80_205 = arith.constant 80 : index
    %c16_206 = arith.constant 16 : index
    %392 = vector.load %arg23[%c80_205, %c16_206] : memref<256x32xf32, #tpu.memory_space<vmem>>, vector<16x16xf32>
    tpu.vector_store %arg23[%c80_205, %c16_206], %391 {strides = array<i32>} : memref<256x32xf32, #tpu.memory_space<vmem>>, vector<16x16xf32>,
    %c176_207 = arith.constant 176 : index
    %c0_208 = arith.constant 0 : index
    %393 = vector.load %arg22[%c176_207, %c0_208] : memref<256x96xf32, #tpu.memory_space<vmem>>, vector<16x96xf32>
    %394 = arith.truncf %388 : vector<16x32xf32> to vector<16x32xbf16>
    %cst_209 = arith.constant dense<0.000000e+00> : vector<16x96xf32>
    %395 = tpu.matmul %394, %93, %cst_209 {dimension_numbers = #tpu.dot_dimension_numbers<[1], [0], [0], [1], [0, 0, 1, 1], [], []>} : vector<16x32xbf16>, vector<32x96xbf16>, vector<16x96xf32> -> vector<16x96xf32>
    %396 = vector.extract_strided_slice %393 {offsets = [0, 0], sizes = [16, 64], strides = [1, 1]} : vector<16x96xf32> to vector<16x64xf32>
    %397 = vector.extract_strided_slice %395 {offsets = [0, 0], sizes = [16, 64], strides = [1, 1]} : vector<16x96xf32> to vector<16x64xf32>
    %398 = arith.addf %396, %397 : vector<16x64xf32>
    %399 = arith.negf %398 : vector<16x64xf32>
    %400 = math.exp %399 : vector<16x64xf32>
    %cst_210 = arith.constant 1.000000e+00 : f32
    %401 = vector.broadcast %cst_210 : f32 to vector<16x64xf32>
    %402 = arith.addf %401, %400 : vector<16x64xf32>
    %403 = arith.divf %401, %402 : vector<16x64xf32>
    %404 = vector.extract_strided_slice %393 {offsets = [0, 64], sizes = [16, 32], strides = [1, 1]} : vector<16x96xf32> to vector<16x32xf32>
    %405 = vector.extract_strided_slice %403 {offsets = [0, 0], sizes = [16, 32], strides = [1, 1]} : vector<16x64xf32> to vector<16x32xf32>
    %406 = vector.extract_strided_slice %395 {offsets = [0, 64], sizes = [16, 32], strides = [1, 1]} : vector<16x96xf32> to vector<16x32xf32>
    %407 = vector.broadcast %94 : vector<1x32xf32> to vector<16x32xf32>
    %408 = arith.addf %406, %407 : vector<16x32xf32>
    %409 = arith.mulf %405, %408 : vector<16x32xf32>
    %410 = arith.addf %404, %409 : vector<16x32xf32>
    %411 = math.tanh %410 : vector<16x32xf32>
    %412 = vector.extract_strided_slice %403 {offsets = [0, 32], sizes = [16, 32], strides = [1, 1]} : vector<16x64xf32> to vector<16x32xf32>
    %413 = arith.subf %388, %411 : vector<16x32xf32>
    %414 = arith.mulf %412, %413 : vector<16x32xf32>
    %415 = arith.addf %411, %414 : vector<16x32xf32>
    %416 = vector.extract_strided_slice %415 {offsets = [0, 0], sizes = [16, 16], strides = [1, 1]} : vector<16x32xf32> to vector<16x16xf32>
    %c176_211 = arith.constant 176 : index
    %c0_212 = arith.constant 0 : index
    %417 = vector.load %arg23[%c176_211, %c0_212] : memref<256x32xf32, #tpu.memory_space<vmem>>, vector<16x16xf32>
    tpu.vector_store %arg23[%c176_211, %c0_212], %416 {strides = array<i32>} : memref<256x32xf32, #tpu.memory_space<vmem>>, vector<16x16xf32>,
    %418 = vector.extract_strided_slice %415 {offsets = [0, 16], sizes = [16, 16], strides = [1, 1]} : vector<16x32xf32> to vector<16x16xf32>
    %c64_213 = arith.constant 64 : index
    %c16_214 = arith.constant 16 : index
    %419 = vector.load %arg23[%c64_213, %c16_214] : memref<256x32xf32, #tpu.memory_space<vmem>>, vector<16x16xf32>
    tpu.vector_store %arg23[%c64_213, %c16_214], %418 {strides = array<i32>} : memref<256x32xf32, #tpu.memory_space<vmem>>, vector<16x16xf32>,
    %c192_215 = arith.constant 192 : index
    %c0_216 = arith.constant 0 : index
    %420 = vector.load %arg22[%c192_215, %c0_216] : memref<256x96xf32, #tpu.memory_space<vmem>>, vector<16x96xf32>
    %421 = arith.truncf %415 : vector<16x32xf32> to vector<16x32xbf16>
    %cst_217 = arith.constant dense<0.000000e+00> : vector<16x96xf32>
    %422 = tpu.matmul %421, %93, %cst_217 {dimension_numbers = #tpu.dot_dimension_numbers<[1], [0], [0], [1], [0, 0, 1, 1], [], []>} : vector<16x32xbf16>, vector<32x96xbf16>, vector<16x96xf32> -> vector<16x96xf32>
    %423 = vector.extract_strided_slice %420 {offsets = [0, 0], sizes = [16, 64], strides = [1, 1]} : vector<16x96xf32> to vector<16x64xf32>
    %424 = vector.extract_strided_slice %422 {offsets = [0, 0], sizes = [16, 64], strides = [1, 1]} : vector<16x96xf32> to vector<16x64xf32>
    %425 = arith.addf %423, %424 : vector<16x64xf32>
    %426 = arith.negf %425 : vector<16x64xf32>
    %427 = math.exp %426 : vector<16x64xf32>
    %cst_218 = arith.constant 1.000000e+00 : f32
    %428 = vector.broadcast %cst_218 : f32 to vector<16x64xf32>
    %429 = arith.addf %428, %427 : vector<16x64xf32>
    %430 = arith.divf %428, %429 : vector<16x64xf32>
    %431 = vector.extract_strided_slice %420 {offsets = [0, 64], sizes = [16, 32], strides = [1, 1]} : vector<16x96xf32> to vector<16x32xf32>
    %432 = vector.extract_strided_slice %430 {offsets = [0, 0], sizes = [16, 32], strides = [1, 1]} : vector<16x64xf32> to vector<16x32xf32>
    %433 = vector.extract_strided_slice %422 {offsets = [0, 64], sizes = [16, 32], strides = [1, 1]} : vector<16x96xf32> to vector<16x32xf32>
    %434 = vector.broadcast %94 : vector<1x32xf32> to vector<16x32xf32>
    %435 = arith.addf %433, %434 : vector<16x32xf32>
    %436 = arith.mulf %432, %435 : vector<16x32xf32>
    %437 = arith.addf %431, %436 : vector<16x32xf32>
    %438 = math.tanh %437 : vector<16x32xf32>
    %439 = vector.extract_strided_slice %430 {offsets = [0, 32], sizes = [16, 32], strides = [1, 1]} : vector<16x64xf32> to vector<16x32xf32>
    %440 = arith.subf %415, %438 : vector<16x32xf32>
    %441 = arith.mulf %439, %440 : vector<16x32xf32>
    %442 = arith.addf %438, %441 : vector<16x32xf32>
    %443 = vector.extract_strided_slice %442 {offsets = [0, 0], sizes = [16, 16], strides = [1, 1]} : vector<16x32xf32> to vector<16x16xf32>
    %c192_219 = arith.constant 192 : index
    %c0_220 = arith.constant 0 : index
    %444 = vector.load %arg23[%c192_219, %c0_220] : memref<256x32xf32, #tpu.memory_space<vmem>>, vector<16x16xf32>
    tpu.vector_store %arg23[%c192_219, %c0_220], %443 {strides = array<i32>} : memref<256x32xf32, #tpu.memory_space<vmem>>, vector<16x16xf32>,
    %445 = vector.extract_strided_slice %442 {offsets = [0, 16], sizes = [16, 16], strides = [1, 1]} : vector<16x32xf32> to vector<16x16xf32>
    %c48_221 = arith.constant 48 : index
    %c16_222 = arith.constant 16 : index
    %446 = vector.load %arg23[%c48_221, %c16_222] : memref<256x32xf32, #tpu.memory_space<vmem>>, vector<16x16xf32>
    tpu.vector_store %arg23[%c48_221, %c16_222], %445 {strides = array<i32>} : memref<256x32xf32, #tpu.memory_space<vmem>>, vector<16x16xf32>,
    %c208_223 = arith.constant 208 : index
    %c0_224 = arith.constant 0 : index
    %447 = vector.load %arg22[%c208_223, %c0_224] : memref<256x96xf32, #tpu.memory_space<vmem>>, vector<16x96xf32>
    %448 = arith.truncf %442 : vector<16x32xf32> to vector<16x32xbf16>
    %cst_225 = arith.constant dense<0.000000e+00> : vector<16x96xf32>
    %449 = tpu.matmul %448, %93, %cst_225 {dimension_numbers = #tpu.dot_dimension_numbers<[1], [0], [0], [1], [0, 0, 1, 1], [], []>} : vector<16x32xbf16>, vector<32x96xbf16>, vector<16x96xf32> -> vector<16x96xf32>
    %450 = vector.extract_strided_slice %447 {offsets = [0, 0], sizes = [16, 64], strides = [1, 1]} : vector<16x96xf32> to vector<16x64xf32>
    %451 = vector.extract_strided_slice %449 {offsets = [0, 0], sizes = [16, 64], strides = [1, 1]} : vector<16x96xf32> to vector<16x64xf32>
    %452 = arith.addf %450, %451 : vector<16x64xf32>
    %453 = arith.negf %452 : vector<16x64xf32>
    %454 = math.exp %453 : vector<16x64xf32>
    %cst_226 = arith.constant 1.000000e+00 : f32
    %455 = vector.broadcast %cst_226 : f32 to vector<16x64xf32>
    %456 = arith.addf %455, %454 : vector<16x64xf32>
    %457 = arith.divf %455, %456 : vector<16x64xf32>
    %458 = vector.extract_strided_slice %447 {offsets = [0, 64], sizes = [16, 32], strides = [1, 1]} : vector<16x96xf32> to vector<16x32xf32>
    %459 = vector.extract_strided_slice %457 {offsets = [0, 0], sizes = [16, 32], strides = [1, 1]} : vector<16x64xf32> to vector<16x32xf32>
    %460 = vector.extract_strided_slice %449 {offsets = [0, 64], sizes = [16, 32], strides = [1, 1]} : vector<16x96xf32> to vector<16x32xf32>
    %461 = vector.broadcast %94 : vector<1x32xf32> to vector<16x32xf32>
    %462 = arith.addf %460, %461 : vector<16x32xf32>
    %463 = arith.mulf %459, %462 : vector<16x32xf32>
    %464 = arith.addf %458, %463 : vector<16x32xf32>
    %465 = math.tanh %464 : vector<16x32xf32>
    %466 = vector.extract_strided_slice %457 {offsets = [0, 32], sizes = [16, 32], strides = [1, 1]} : vector<16x64xf32> to vector<16x32xf32>
    %467 = arith.subf %442, %465 : vector<16x32xf32>
    %468 = arith.mulf %466, %467 : vector<16x32xf32>
    %469 = arith.addf %465, %468 : vector<16x32xf32>
    %470 = vector.extract_strided_slice %469 {offsets = [0, 0], sizes = [16, 16], strides = [1, 1]} : vector<16x32xf32> to vector<16x16xf32>
    %c208_227 = arith.constant 208 : index
    %c0_228 = arith.constant 0 : index
    %471 = vector.load %arg23[%c208_227, %c0_228] : memref<256x32xf32, #tpu.memory_space<vmem>>, vector<16x16xf32>
    tpu.vector_store %arg23[%c208_227, %c0_228], %470 {strides = array<i32>} : memref<256x32xf32, #tpu.memory_space<vmem>>, vector<16x16xf32>,
    %472 = vector.extract_strided_slice %469 {offsets = [0, 16], sizes = [16, 16], strides = [1, 1]} : vector<16x32xf32> to vector<16x16xf32>
    %c32_229 = arith.constant 32 : index
    %c16_230 = arith.constant 16 : index
    %473 = vector.load %arg23[%c32_229, %c16_230] : memref<256x32xf32, #tpu.memory_space<vmem>>, vector<16x16xf32>
    tpu.vector_store %arg23[%c32_229, %c16_230], %472 {strides = array<i32>} : memref<256x32xf32, #tpu.memory_space<vmem>>, vector<16x16xf32>,
    %c224_231 = arith.constant 224 : index
    %c0_232 = arith.constant 0 : index
    %474 = vector.load %arg22[%c224_231, %c0_232] : memref<256x96xf32, #tpu.memory_space<vmem>>, vector<16x96xf32>
    %475 = arith.truncf %469 : vector<16x32xf32> to vector<16x32xbf16>
    %cst_233 = arith.constant dense<0.000000e+00> : vector<16x96xf32>
    %476 = tpu.matmul %475, %93, %cst_233 {dimension_numbers = #tpu.dot_dimension_numbers<[1], [0], [0], [1], [0, 0, 1, 1], [], []>} : vector<16x32xbf16>, vector<32x96xbf16>, vector<16x96xf32> -> vector<16x96xf32>
    %477 = vector.extract_strided_slice %474 {offsets = [0, 0], sizes = [16, 64], strides = [1, 1]} : vector<16x96xf32> to vector<16x64xf32>
    %478 = vector.extract_strided_slice %476 {offsets = [0, 0], sizes = [16, 64], strides = [1, 1]} : vector<16x96xf32> to vector<16x64xf32>
    %479 = arith.addf %477, %478 : vector<16x64xf32>
    %480 = arith.negf %479 : vector<16x64xf32>
    %481 = math.exp %480 : vector<16x64xf32>
    %cst_234 = arith.constant 1.000000e+00 : f32
    %482 = vector.broadcast %cst_234 : f32 to vector<16x64xf32>
    %483 = arith.addf %482, %481 : vector<16x64xf32>
    %484 = arith.divf %482, %483 : vector<16x64xf32>
    %485 = vector.extract_strided_slice %474 {offsets = [0, 64], sizes = [16, 32], strides = [1, 1]} : vector<16x96xf32> to vector<16x32xf32>
    %486 = vector.extract_strided_slice %484 {offsets = [0, 0], sizes = [16, 32], strides = [1, 1]} : vector<16x64xf32> to vector<16x32xf32>
    %487 = vector.extract_strided_slice %476 {offsets = [0, 64], sizes = [16, 32], strides = [1, 1]} : vector<16x96xf32> to vector<16x32xf32>
    %488 = vector.broadcast %94 : vector<1x32xf32> to vector<16x32xf32>
    %489 = arith.addf %487, %488 : vector<16x32xf32>
    %490 = arith.mulf %486, %489 : vector<16x32xf32>
    %491 = arith.addf %485, %490 : vector<16x32xf32>
    %492 = math.tanh %491 : vector<16x32xf32>
    %493 = vector.extract_strided_slice %484 {offsets = [0, 32], sizes = [16, 32], strides = [1, 1]} : vector<16x64xf32> to vector<16x32xf32>
    %494 = arith.subf %469, %492 : vector<16x32xf32>
    %495 = arith.mulf %493, %494 : vector<16x32xf32>
    %496 = arith.addf %492, %495 : vector<16x32xf32>
    %497 = vector.extract_strided_slice %496 {offsets = [0, 0], sizes = [16, 16], strides = [1, 1]} : vector<16x32xf32> to vector<16x16xf32>
    %c224_235 = arith.constant 224 : index
    %c0_236 = arith.constant 0 : index
    %498 = vector.load %arg23[%c224_235, %c0_236] : memref<256x32xf32, #tpu.memory_space<vmem>>, vector<16x16xf32>
    tpu.vector_store %arg23[%c224_235, %c0_236], %497 {strides = array<i32>} : memref<256x32xf32, #tpu.memory_space<vmem>>, vector<16x16xf32>,
    %499 = vector.extract_strided_slice %496 {offsets = [0, 16], sizes = [16, 16], strides = [1, 1]} : vector<16x32xf32> to vector<16x16xf32>
    %c16_237 = arith.constant 16 : index
    %c16_238 = arith.constant 16 : index
    %500 = vector.load %arg23[%c16_237, %c16_238] : memref<256x32xf32, #tpu.memory_space<vmem>>, vector<16x16xf32>
    tpu.vector_store %arg23[%c16_237, %c16_238], %499 {strides = array<i32>} : memref<256x32xf32, #tpu.memory_space<vmem>>, vector<16x16xf32>,
    %c240_239 = arith.constant 240 : index
    %c0_240 = arith.constant 0 : index
    %501 = vector.load %arg22[%c240_239, %c0_240] : memref<256x96xf32, #tpu.memory_space<vmem>>, vector<16x96xf32>
    %502 = arith.truncf %496 : vector<16x32xf32> to vector<16x32xbf16>
    %cst_241 = arith.constant dense<0.000000e+00> : vector<16x96xf32>
    %503 = tpu.matmul %502, %93, %cst_241 {dimension_numbers = #tpu.dot_dimension_numbers<[1], [0], [0], [1], [0, 0, 1, 1], [], []>} : vector<16x32xbf16>, vector<32x96xbf16>, vector<16x96xf32> -> vector<16x96xf32>
    %504 = vector.extract_strided_slice %501 {offsets = [0, 0], sizes = [16, 64], strides = [1, 1]} : vector<16x96xf32> to vector<16x64xf32>
    %505 = vector.extract_strided_slice %503 {offsets = [0, 0], sizes = [16, 64], strides = [1, 1]} : vector<16x96xf32> to vector<16x64xf32>
    %506 = arith.addf %504, %505 : vector<16x64xf32>
    %507 = arith.negf %506 : vector<16x64xf32>
    %508 = math.exp %507 : vector<16x64xf32>
    %cst_242 = arith.constant 1.000000e+00 : f32
    %509 = vector.broadcast %cst_242 : f32 to vector<16x64xf32>
    %510 = arith.addf %509, %508 : vector<16x64xf32>
    %511 = arith.divf %509, %510 : vector<16x64xf32>
    %512 = vector.extract_strided_slice %501 {offsets = [0, 64], sizes = [16, 32], strides = [1, 1]} : vector<16x96xf32> to vector<16x32xf32>
    %513 = vector.extract_strided_slice %511 {offsets = [0, 0], sizes = [16, 32], strides = [1, 1]} : vector<16x64xf32> to vector<16x32xf32>
    %514 = vector.extract_strided_slice %503 {offsets = [0, 64], sizes = [16, 32], strides = [1, 1]} : vector<16x96xf32> to vector<16x32xf32>
    %515 = vector.broadcast %94 : vector<1x32xf32> to vector<16x32xf32>
    %516 = arith.addf %514, %515 : vector<16x32xf32>
    %517 = arith.mulf %513, %516 : vector<16x32xf32>
    %518 = arith.addf %512, %517 : vector<16x32xf32>
    %519 = math.tanh %518 : vector<16x32xf32>
    %520 = vector.extract_strided_slice %511 {offsets = [0, 32], sizes = [16, 32], strides = [1, 1]} : vector<16x64xf32> to vector<16x32xf32>
    %521 = arith.subf %496, %519 : vector<16x32xf32>
    %522 = arith.mulf %520, %521 : vector<16x32xf32>
    %523 = arith.addf %519, %522 : vector<16x32xf32>
    %524 = vector.extract_strided_slice %523 {offsets = [0, 0], sizes = [16, 16], strides = [1, 1]} : vector<16x32xf32> to vector<16x16xf32>
    %c240_243 = arith.constant 240 : index
    %c0_244 = arith.constant 0 : index
    %525 = vector.load %arg23[%c240_243, %c0_244] : memref<256x32xf32, #tpu.memory_space<vmem>>, vector<16x16xf32>
    tpu.vector_store %arg23[%c240_243, %c0_244], %524 {strides = array<i32>} : memref<256x32xf32, #tpu.memory_space<vmem>>, vector<16x16xf32>,
    %526 = vector.extract_strided_slice %523 {offsets = [0, 16], sizes = [16, 16], strides = [1, 1]} : vector<16x32xf32> to vector<16x16xf32>
    %c0_245 = arith.constant 0 : index
    %c16_246 = arith.constant 16 : index
    %527 = vector.load %arg23[%c0_245, %c16_246] : memref<256x32xf32, #tpu.memory_space<vmem>>, vector<16x16xf32>
    tpu.vector_store %arg23[%c0_245, %c16_246], %526 {strides = array<i32>} : memref<256x32xf32, #tpu.memory_space<vmem>>, vector<16x16xf32>,
    %c0_247 = arith.constant 0 : index
    %c0_248 = arith.constant 0 : index
    %528 = vector.load %arg23[%c0_247, %c0_248] : memref<256x32xf32, #tpu.memory_space<vmem>>, vector<256x32xf32>
    %c0_249 = arith.constant 0 : index
    %c0_250 = arith.constant 0 : index
    %529 = vector.load %arg7[%c0_249, %c0_250] : memref<32x16xf32, #tpu.memory_space<vmem>>, vector<32x16xf32>
    %cst_251 = arith.constant dense<0.000000e+00> : vector<256x16xf32>
    %530 = tpu.matmul %528, %529, %cst_251 {dimension_numbers = #tpu.dot_dimension_numbers<[1], [0], [0], [1], [0, 0, 1, 1], [], []>} : vector<256x32xf32>, vector<32x16xf32>, vector<256x16xf32> -> vector<256x16xf32>
    %c0_252 = arith.constant 0 : index
    %c0_253 = arith.constant 0 : index
    %531 = vector.load %arg8[%c0_252, %c0_253] : memref<1x16xf32, #tpu.memory_space<vmem>>, vector<1x16xf32>
    %532 = vector.broadcast %531 : vector<1x16xf32> to vector<256x16xf32>
    %533 = arith.addf %530, %532 : vector<256x16xf32>
    %c0_254 = arith.constant 0 : index
    %c0_255 = arith.constant 0 : index
    %534 = vector.load %arg9[%c0_254, %c0_255] : memref<1x16xf32, #tpu.memory_space<vmem>>, vector<1x16xf32>
    %c0_256 = arith.constant 0 : index
    %c0_257 = arith.constant 0 : index
    %535 = vector.load %arg10[%c0_256, %c0_257] : memref<1x16xf32, #tpu.memory_space<vmem>>, vector<1x16xf32>
    %cst_258 = arith.constant dense<0.000000e+00> : vector<256xf32>
    %536 = vector.multi_reduction <add>, %533, %cst_258 [1] : vector<256x16xf32> to vector<256xf32>
    %537 = vector.shape_cast %536 : vector<256xf32> to vector<256x1xf32>
    %cst_259 = arith.constant 1.600000e+01 : f32
    %538 = vector.broadcast %cst_259 : f32 to vector<256x1xf32>
    %539 = arith.divf %537, %538 : vector<256x1xf32>
    %540 = vector.broadcast %539 : vector<256x1xf32> to vector<256x16xf32>
    %541 = arith.subf %533, %540 : vector<256x16xf32>
    %542 = arith.mulf %541, %541 : vector<256x16xf32>
    %cst_260 = arith.constant dense<0.000000e+00> : vector<256xf32>
    %543 = vector.multi_reduction <add>, %542, %cst_260 [1] : vector<256x16xf32> to vector<256xf32>
    %544 = vector.shape_cast %543 : vector<256xf32> to vector<256x1xf32>
    %cst_261 = arith.constant 1.600000e+01 : f32
    %545 = vector.broadcast %cst_261 : f32 to vector<256x1xf32>
    %546 = arith.divf %544, %545 : vector<256x1xf32>
    %547 = vector.broadcast %539 : vector<256x1xf32> to vector<256x16xf32>
    %548 = arith.subf %533, %547 : vector<256x16xf32>
    %cst_262 = arith.constant 9.99999993E-9 : f32
    %549 = vector.broadcast %cst_262 : f32 to vector<256x1xf32>
    %550 = arith.addf %546, %549 : vector<256x1xf32>
    %551 = math.rsqrt %550 : vector<256x1xf32>
    %552 = vector.broadcast %551 : vector<256x1xf32> to vector<256x16xf32>
    %553 = arith.mulf %548, %552 : vector<256x16xf32>
    %554 = vector.broadcast %534 : vector<1x16xf32> to vector<256x16xf32>
    %555 = arith.mulf %553, %554 : vector<256x16xf32>
    %556 = vector.broadcast %535 : vector<1x16xf32> to vector<256x16xf32>
    %557 = arith.addf %555, %556 : vector<256x16xf32>
    %558 = arith.addf %81, %557 : vector<256x16xf32>
    %c0_263 = arith.constant 0 : index
    %c0_264 = arith.constant 0 : index
    %559 = vector.load %arg24[%c0_263, %c0_264] : memref<256x16xf32, #tpu.memory_space<vmem>>, vector<256x16xf32>
    tpu.vector_store %arg24[%c0_263, %c0_264], %558 {strides = array<i32>} : memref<256x16xf32, #tpu.memory_space<vmem>>, vector<256x16xf32>,
    %c0_265 = arith.constant 0 : index
    %c0_266 = arith.constant 0 : index
    %560 = vector.load %arg11[%c0_265, %c0_266] : memref<16x96xf32, #tpu.memory_space<vmem>>, vector<16x96xf32>
    %cst_267 = arith.constant dense<0.000000e+00> : vector<256x96xf32>
    %561 = tpu.matmul %558, %560, %cst_267 {dimension_numbers = #tpu.dot_dimension_numbers<[1], [0], [0], [1], [0, 0, 1, 1], [], []>} : vector<256x16xf32>, vector<16x96xf32>, vector<256x96xf32> -> vector<256x96xf32>
    %c0_268 = arith.constant 0 : index
    %c0_269 = arith.constant 0 : index
    %562 = vector.load %arg12[%c0_268, %c0_269] : memref<1x96xf32, #tpu.memory_space<vmem>>, vector<1x96xf32>
    %563 = vector.broadcast %562 : vector<1x96xf32> to vector<256x96xf32>
    %564 = arith.addf %561, %563 : vector<256x96xf32>
    %c0_270 = arith.constant 0 : index
    %c0_271 = arith.constant 0 : index
    %565 = vector.load %arg25[%c0_270, %c0_271] : memref<256x96xf32, #tpu.memory_space<vmem>>, vector<256x96xf32>
    tpu.vector_store %arg25[%c0_270, %c0_271], %564 {strides = array<i32>} : memref<256x96xf32, #tpu.memory_space<vmem>>, vector<256x96xf32>,
    %c0_272 = arith.constant 0 : index
    %c0_273 = arith.constant 0 : index
    %566 = vector.load %arg13[%c0_272, %c0_273] : memref<32x96xbf16, #tpu.memory_space<vmem>>, vector<32x96xbf16>
    %c0_274 = arith.constant 0 : index
    %c0_275 = arith.constant 0 : index
    %567 = vector.load %arg14[%c0_274, %c0_275] : memref<1x32xf32, #tpu.memory_space<vmem>>, vector<1x32xf32>
    %cst_276 = arith.constant 0.000000e+00 : f32
    %568 = vector.broadcast %cst_276 : f32 to vector<32x32xf32>
    %c0_277 = arith.constant 0 : index
    %c0_278 = arith.constant 0 : index
    %569 = tpu.strided_load %arg25[%c0_277, %c0_278] {strides = array<i32: 8, 1>} : memref<256x96xf32, #tpu.memory_space<vmem>>, vector<32x96xf32>
    %c0_279 = arith.constant 0 : index
    %c0_280 = arith.constant 0 : index
    %570 = tpu.strided_load %arg24[%c0_279, %c0_280] {strides = array<i32: 8, 1>} : memref<256x16xf32, #tpu.memory_space<vmem>>, vector<32x16xf32>
    %c0_281 = arith.constant 0 : index
    %c0_282 = arith.constant 0 : index
    %571 = vector.load %arg26[%c0_281, %c0_282] : memref<256x16xf32, #tpu.memory_space<vmem>>, vector<32x16xf32>
    tpu.vector_store %arg26[%c0_281, %c0_282], %570 {strides = array<i32>} : memref<256x16xf32, #tpu.memory_space<vmem>>, vector<32x16xf32>,
    %572 = arith.truncf %568 : vector<32x32xf32> to vector<32x32xbf16>
    %cst_283 = arith.constant dense<0.000000e+00> : vector<32x96xf32>
    %573 = tpu.matmul %572, %566, %cst_283 {dimension_numbers = #tpu.dot_dimension_numbers<[1], [0], [0], [1], [0, 0, 1, 1], [], []>} : vector<32x32xbf16>, vector<32x96xbf16>, vector<32x96xf32> -> vector<32x96xf32>
    %574 = vector.extract_strided_slice %569 {offsets = [0, 0], sizes = [32, 64], strides = [1, 1]} : vector<32x96xf32> to vector<32x64xf32>
    %575 = vector.extract_strided_slice %573 {offsets = [0, 0], sizes = [32, 64], strides = [1, 1]} : vector<32x96xf32> to vector<32x64xf32>
    %576 = arith.addf %574, %575 : vector<32x64xf32>
    %577 = arith.negf %576 : vector<32x64xf32>
    %578 = math.exp %577 : vector<32x64xf32>
    %cst_284 = arith.constant 1.000000e+00 : f32
    %579 = vector.broadcast %cst_284 : f32 to vector<32x64xf32>
    %580 = arith.addf %579, %578 : vector<32x64xf32>
    %581 = arith.divf %579, %580 : vector<32x64xf32>
    %582 = vector.extract_strided_slice %569 {offsets = [0, 64], sizes = [32, 32], strides = [1, 1]} : vector<32x96xf32> to vector<32x32xf32>
    %583 = vector.extract_strided_slice %581 {offsets = [0, 0], sizes = [32, 32], strides = [1, 1]} : vector<32x64xf32> to vector<32x32xf32>
    %584 = vector.extract_strided_slice %573 {offsets = [0, 64], sizes = [32, 32], strides = [1, 1]} : vector<32x96xf32> to vector<32x32xf32>
    %585 = vector.broadcast %567 : vector<1x32xf32> to vector<32x32xf32>
    %586 = arith.addf %584, %585 : vector<32x32xf32>
    %587 = arith.mulf %583, %586 : vector<32x32xf32>
    %588 = arith.addf %582, %587 : vector<32x32xf32>
    %589 = math.tanh %588 : vector<32x32xf32>
    %590 = vector.extract_strided_slice %581 {offsets = [0, 32], sizes = [32, 32], strides = [1, 1]} : vector<32x64xf32> to vector<32x32xf32>
    %591 = arith.subf %568, %589 : vector<32x32xf32>
    %592 = arith.mulf %590, %591 : vector<32x32xf32>
    %593 = arith.addf %589, %592 : vector<32x32xf32>
    %c0_285 = arith.constant 0 : index
    %c0_286 = arith.constant 0 : index
    %594 = vector.load %arg27[%c0_285, %c0_286] : memref<256x32xf32, #tpu.memory_space<vmem>>, vector<32x32xf32>
    tpu.vector_store %arg27[%c0_285, %c0_286], %593 {strides = array<i32>} : memref<256x32xf32, #tpu.memory_space<vmem>>, vector<32x32xf32>,
    %c1_287 = arith.constant 1 : index
    %c0_288 = arith.constant 0 : index
    %595 = tpu.strided_load %arg25[%c1_287, %c0_288] {strides = array<i32: 8, 1>} : memref<256x96xf32, #tpu.memory_space<vmem>>, vector<32x96xf32>
    %c1_289 = arith.constant 1 : index
    %c0_290 = arith.constant 0 : index
    %596 = tpu.strided_load %arg24[%c1_289, %c0_290] {strides = array<i32: 8, 1>} : memref<256x16xf32, #tpu.memory_space<vmem>>, vector<32x16xf32>
    %c32_291 = arith.constant 32 : index
    %c0_292 = arith.constant 0 : index
    %597 = vector.load %arg26[%c32_291, %c0_292] : memref<256x16xf32, #tpu.memory_space<vmem>>, vector<32x16xf32>
    tpu.vector_store %arg26[%c32_291, %c0_292], %596 {strides = array<i32>} : memref<256x16xf32, #tpu.memory_space<vmem>>, vector<32x16xf32>,
    %598 = arith.truncf %593 : vector<32x32xf32> to vector<32x32xbf16>
    %cst_293 = arith.constant dense<0.000000e+00> : vector<32x96xf32>
    %599 = tpu.matmul %598, %566, %cst_293 {dimension_numbers = #tpu.dot_dimension_numbers<[1], [0], [0], [1], [0, 0, 1, 1], [], []>} : vector<32x32xbf16>, vector<32x96xbf16>, vector<32x96xf32> -> vector<32x96xf32>
    %600 = vector.extract_strided_slice %595 {offsets = [0, 0], sizes = [32, 64], strides = [1, 1]} : vector<32x96xf32> to vector<32x64xf32>
    %601 = vector.extract_strided_slice %599 {offsets = [0, 0], sizes = [32, 64], strides = [1, 1]} : vector<32x96xf32> to vector<32x64xf32>
    %602 = arith.addf %600, %601 : vector<32x64xf32>
    %603 = arith.negf %602 : vector<32x64xf32>
    %604 = math.exp %603 : vector<32x64xf32>
    %cst_294 = arith.constant 1.000000e+00 : f32
    %605 = vector.broadcast %cst_294 : f32 to vector<32x64xf32>
    %606 = arith.addf %605, %604 : vector<32x64xf32>
    %607 = arith.divf %605, %606 : vector<32x64xf32>
    %608 = vector.extract_strided_slice %595 {offsets = [0, 64], sizes = [32, 32], strides = [1, 1]} : vector<32x96xf32> to vector<32x32xf32>
    %609 = vector.extract_strided_slice %607 {offsets = [0, 0], sizes = [32, 32], strides = [1, 1]} : vector<32x64xf32> to vector<32x32xf32>
    %610 = vector.extract_strided_slice %599 {offsets = [0, 64], sizes = [32, 32], strides = [1, 1]} : vector<32x96xf32> to vector<32x32xf32>
    %611 = vector.broadcast %567 : vector<1x32xf32> to vector<32x32xf32>
    %612 = arith.addf %610, %611 : vector<32x32xf32>
    %613 = arith.mulf %609, %612 : vector<32x32xf32>
    %614 = arith.addf %608, %613 : vector<32x32xf32>
    %615 = math.tanh %614 : vector<32x32xf32>
    %616 = vector.extract_strided_slice %607 {offsets = [0, 32], sizes = [32, 32], strides = [1, 1]} : vector<32x64xf32> to vector<32x32xf32>
    %617 = arith.subf %593, %615 : vector<32x32xf32>
    %618 = arith.mulf %616, %617 : vector<32x32xf32>
    %619 = arith.addf %615, %618 : vector<32x32xf32>
    %c32_295 = arith.constant 32 : index
    %c0_296 = arith.constant 0 : index
    %620 = vector.load %arg27[%c32_295, %c0_296] : memref<256x32xf32, #tpu.memory_space<vmem>>, vector<32x32xf32>
    tpu.vector_store %arg27[%c32_295, %c0_296], %619 {strides = array<i32>} : memref<256x32xf32, #tpu.memory_space<vmem>>, vector<32x32xf32>,
    %c2_297 = arith.constant 2 : index
    %c0_298 = arith.constant 0 : index
    %621 = tpu.strided_load %arg25[%c2_297, %c0_298] {strides = array<i32: 8, 1>} : memref<256x96xf32, #tpu.memory_space<vmem>>, vector<32x96xf32>
    %c2_299 = arith.constant 2 : index
    %c0_300 = arith.constant 0 : index
    %622 = tpu.strided_load %arg24[%c2_299, %c0_300] {strides = array<i32: 8, 1>} : memref<256x16xf32, #tpu.memory_space<vmem>>, vector<32x16xf32>
    %c64_301 = arith.constant 64 : index
    %c0_302 = arith.constant 0 : index
    %623 = vector.load %arg26[%c64_301, %c0_302] : memref<256x16xf32, #tpu.memory_space<vmem>>, vector<32x16xf32>
    tpu.vector_store %arg26[%c64_301, %c0_302], %622 {strides = array<i32>} : memref<256x16xf32, #tpu.memory_space<vmem>>, vector<32x16xf32>,
    %624 = arith.truncf %619 : vector<32x32xf32> to vector<32x32xbf16>
    %cst_303 = arith.constant dense<0.000000e+00> : vector<32x96xf32>
    %625 = tpu.matmul %624, %566, %cst_303 {dimension_numbers = #tpu.dot_dimension_numbers<[1], [0], [0], [1], [0, 0, 1, 1], [], []>} : vector<32x32xbf16>, vector<32x96xbf16>, vector<32x96xf32> -> vector<32x96xf32>
    %626 = vector.extract_strided_slice %621 {offsets = [0, 0], sizes = [32, 64], strides = [1, 1]} : vector<32x96xf32> to vector<32x64xf32>
    %627 = vector.extract_strided_slice %625 {offsets = [0, 0], sizes = [32, 64], strides = [1, 1]} : vector<32x96xf32> to vector<32x64xf32>
    %628 = arith.addf %626, %627 : vector<32x64xf32>
    %629 = arith.negf %628 : vector<32x64xf32>
    %630 = math.exp %629 : vector<32x64xf32>
    %cst_304 = arith.constant 1.000000e+00 : f32
    %631 = vector.broadcast %cst_304 : f32 to vector<32x64xf32>
    %632 = arith.addf %631, %630 : vector<32x64xf32>
    %633 = arith.divf %631, %632 : vector<32x64xf32>
    %634 = vector.extract_strided_slice %621 {offsets = [0, 64], sizes = [32, 32], strides = [1, 1]} : vector<32x96xf32> to vector<32x32xf32>
    %635 = vector.extract_strided_slice %633 {offsets = [0, 0], sizes = [32, 32], strides = [1, 1]} : vector<32x64xf32> to vector<32x32xf32>
    %636 = vector.extract_strided_slice %625 {offsets = [0, 64], sizes = [32, 32], strides = [1, 1]} : vector<32x96xf32> to vector<32x32xf32>
    %637 = vector.broadcast %567 : vector<1x32xf32> to vector<32x32xf32>
    %638 = arith.addf %636, %637 : vector<32x32xf32>
    %639 = arith.mulf %635, %638 : vector<32x32xf32>
    %640 = arith.addf %634, %639 : vector<32x32xf32>
    %641 = math.tanh %640 : vector<32x32xf32>
    %642 = vector.extract_strided_slice %633 {offsets = [0, 32], sizes = [32, 32], strides = [1, 1]} : vector<32x64xf32> to vector<32x32xf32>
    %643 = arith.subf %619, %641 : vector<32x32xf32>
    %644 = arith.mulf %642, %643 : vector<32x32xf32>
    %645 = arith.addf %641, %644 : vector<32x32xf32>
    %c64_305 = arith.constant 64 : index
    %c0_306 = arith.constant 0 : index
    %646 = vector.load %arg27[%c64_305, %c0_306] : memref<256x32xf32, #tpu.memory_space<vmem>>, vector<32x32xf32>
    tpu.vector_store %arg27[%c64_305, %c0_306], %645 {strides = array<i32>} : memref<256x32xf32, #tpu.memory_space<vmem>>, vector<32x32xf32>,
    %c3_307 = arith.constant 3 : index
    %c0_308 = arith.constant 0 : index
    %647 = tpu.strided_load %arg25[%c3_307, %c0_308] {strides = array<i32: 8, 1>} : memref<256x96xf32, #tpu.memory_space<vmem>>, vector<32x96xf32>
    %c3_309 = arith.constant 3 : index
    %c0_310 = arith.constant 0 : index
    %648 = tpu.strided_load %arg24[%c3_309, %c0_310] {strides = array<i32: 8, 1>} : memref<256x16xf32, #tpu.memory_space<vmem>>, vector<32x16xf32>
    %c96_311 = arith.constant 96 : index
    %c0_312 = arith.constant 0 : index
    %649 = vector.load %arg26[%c96_311, %c0_312] : memref<256x16xf32, #tpu.memory_space<vmem>>, vector<32x16xf32>
    tpu.vector_store %arg26[%c96_311, %c0_312], %648 {strides = array<i32>} : memref<256x16xf32, #tpu.memory_space<vmem>>, vector<32x16xf32>,
    %650 = arith.truncf %645 : vector<32x32xf32> to vector<32x32xbf16>
    %cst_313 = arith.constant dense<0.000000e+00> : vector<32x96xf32>
    %651 = tpu.matmul %650, %566, %cst_313 {dimension_numbers = #tpu.dot_dimension_numbers<[1], [0], [0], [1], [0, 0, 1, 1], [], []>} : vector<32x32xbf16>, vector<32x96xbf16>, vector<32x96xf32> -> vector<32x96xf32>
    %652 = vector.extract_strided_slice %647 {offsets = [0, 0], sizes = [32, 64], strides = [1, 1]} : vector<32x96xf32> to vector<32x64xf32>
    %653 = vector.extract_strided_slice %651 {offsets = [0, 0], sizes = [32, 64], strides = [1, 1]} : vector<32x96xf32> to vector<32x64xf32>
    %654 = arith.addf %652, %653 : vector<32x64xf32>
    %655 = arith.negf %654 : vector<32x64xf32>
    %656 = math.exp %655 : vector<32x64xf32>
    %cst_314 = arith.constant 1.000000e+00 : f32
    %657 = vector.broadcast %cst_314 : f32 to vector<32x64xf32>
    %658 = arith.addf %657, %656 : vector<32x64xf32>
    %659 = arith.divf %657, %658 : vector<32x64xf32>
    %660 = vector.extract_strided_slice %647 {offsets = [0, 64], sizes = [32, 32], strides = [1, 1]} : vector<32x96xf32> to vector<32x32xf32>
    %661 = vector.extract_strided_slice %659 {offsets = [0, 0], sizes = [32, 32], strides = [1, 1]} : vector<32x64xf32> to vector<32x32xf32>
    %662 = vector.extract_strided_slice %651 {offsets = [0, 64], sizes = [32, 32], strides = [1, 1]} : vector<32x96xf32> to vector<32x32xf32>
    %663 = vector.broadcast %567 : vector<1x32xf32> to vector<32x32xf32>
    %664 = arith.addf %662, %663 : vector<32x32xf32>
    %665 = arith.mulf %661, %664 : vector<32x32xf32>
    %666 = arith.addf %660, %665 : vector<32x32xf32>
    %667 = math.tanh %666 : vector<32x32xf32>
    %668 = vector.extract_strided_slice %659 {offsets = [0, 32], sizes = [32, 32], strides = [1, 1]} : vector<32x64xf32> to vector<32x32xf32>
    %669 = arith.subf %645, %667 : vector<32x32xf32>
    %670 = arith.mulf %668, %669 : vector<32x32xf32>
    %671 = arith.addf %667, %670 : vector<32x32xf32>
    %c96_315 = arith.constant 96 : index
    %c0_316 = arith.constant 0 : index
    %672 = vector.load %arg27[%c96_315, %c0_316] : memref<256x32xf32, #tpu.memory_space<vmem>>, vector<32x32xf32>
    tpu.vector_store %arg27[%c96_315, %c0_316], %671 {strides = array<i32>} : memref<256x32xf32, #tpu.memory_space<vmem>>, vector<32x32xf32>,
    %c4_317 = arith.constant 4 : index
    %c0_318 = arith.constant 0 : index
    %673 = tpu.strided_load %arg25[%c4_317, %c0_318] {strides = array<i32: 8, 1>} : memref<256x96xf32, #tpu.memory_space<vmem>>, vector<32x96xf32>
    %c4_319 = arith.constant 4 : index
    %c0_320 = arith.constant 0 : index
    %674 = tpu.strided_load %arg24[%c4_319, %c0_320] {strides = array<i32: 8, 1>} : memref<256x16xf32, #tpu.memory_space<vmem>>, vector<32x16xf32>
    %c128_321 = arith.constant 128 : index
    %c0_322 = arith.constant 0 : index
    %675 = vector.load %arg26[%c128_321, %c0_322] : memref<256x16xf32, #tpu.memory_space<vmem>>, vector<32x16xf32>
    tpu.vector_store %arg26[%c128_321, %c0_322], %674 {strides = array<i32>} : memref<256x16xf32, #tpu.memory_space<vmem>>, vector<32x16xf32>,
    %676 = arith.truncf %671 : vector<32x32xf32> to vector<32x32xbf16>
    %cst_323 = arith.constant dense<0.000000e+00> : vector<32x96xf32>
    %677 = tpu.matmul %676, %566, %cst_323 {dimension_numbers = #tpu.dot_dimension_numbers<[1], [0], [0], [1], [0, 0, 1, 1], [], []>} : vector<32x32xbf16>, vector<32x96xbf16>, vector<32x96xf32> -> vector<32x96xf32>
    %678 = vector.extract_strided_slice %673 {offsets = [0, 0], sizes = [32, 64], strides = [1, 1]} : vector<32x96xf32> to vector<32x64xf32>
    %679 = vector.extract_strided_slice %677 {offsets = [0, 0], sizes = [32, 64], strides = [1, 1]} : vector<32x96xf32> to vector<32x64xf32>
    %680 = arith.addf %678, %679 : vector<32x64xf32>
    %681 = arith.negf %680 : vector<32x64xf32>
    %682 = math.exp %681 : vector<32x64xf32>
    %cst_324 = arith.constant 1.000000e+00 : f32
    %683 = vector.broadcast %cst_324 : f32 to vector<32x64xf32>
    %684 = arith.addf %683, %682 : vector<32x64xf32>
    %685 = arith.divf %683, %684 : vector<32x64xf32>
    %686 = vector.extract_strided_slice %673 {offsets = [0, 64], sizes = [32, 32], strides = [1, 1]} : vector<32x96xf32> to vector<32x32xf32>
    %687 = vector.extract_strided_slice %685 {offsets = [0, 0], sizes = [32, 32], strides = [1, 1]} : vector<32x64xf32> to vector<32x32xf32>
    %688 = vector.extract_strided_slice %677 {offsets = [0, 64], sizes = [32, 32], strides = [1, 1]} : vector<32x96xf32> to vector<32x32xf32>
    %689 = vector.broadcast %567 : vector<1x32xf32> to vector<32x32xf32>
    %690 = arith.addf %688, %689 : vector<32x32xf32>
    %691 = arith.mulf %687, %690 : vector<32x32xf32>
    %692 = arith.addf %686, %691 : vector<32x32xf32>
    %693 = math.tanh %692 : vector<32x32xf32>
    %694 = vector.extract_strided_slice %685 {offsets = [0, 32], sizes = [32, 32], strides = [1, 1]} : vector<32x64xf32> to vector<32x32xf32>
    %695 = arith.subf %671, %693 : vector<32x32xf32>
    %696 = arith.mulf %694, %695 : vector<32x32xf32>
    %697 = arith.addf %693, %696 : vector<32x32xf32>
    %c128_325 = arith.constant 128 : index
    %c0_326 = arith.constant 0 : index
    %698 = vector.load %arg27[%c128_325, %c0_326] : memref<256x32xf32, #tpu.memory_space<vmem>>, vector<32x32xf32>
    tpu.vector_store %arg27[%c128_325, %c0_326], %697 {strides = array<i32>} : memref<256x32xf32, #tpu.memory_space<vmem>>, vector<32x32xf32>,
    %c5_327 = arith.constant 5 : index
    %c0_328 = arith.constant 0 : index
    %699 = tpu.strided_load %arg25[%c5_327, %c0_328] {strides = array<i32: 8, 1>} : memref<256x96xf32, #tpu.memory_space<vmem>>, vector<32x96xf32>
    %c5_329 = arith.constant 5 : index
    %c0_330 = arith.constant 0 : index
    %700 = tpu.strided_load %arg24[%c5_329, %c0_330] {strides = array<i32: 8, 1>} : memref<256x16xf32, #tpu.memory_space<vmem>>, vector<32x16xf32>
    %c160_331 = arith.constant 160 : index
    %c0_332 = arith.constant 0 : index
    %701 = vector.load %arg26[%c160_331, %c0_332] : memref<256x16xf32, #tpu.memory_space<vmem>>, vector<32x16xf32>
    tpu.vector_store %arg26[%c160_331, %c0_332], %700 {strides = array<i32>} : memref<256x16xf32, #tpu.memory_space<vmem>>, vector<32x16xf32>,
    %702 = arith.truncf %697 : vector<32x32xf32> to vector<32x32xbf16>
    %cst_333 = arith.constant dense<0.000000e+00> : vector<32x96xf32>
    %703 = tpu.matmul %702, %566, %cst_333 {dimension_numbers = #tpu.dot_dimension_numbers<[1], [0], [0], [1], [0, 0, 1, 1], [], []>} : vector<32x32xbf16>, vector<32x96xbf16>, vector<32x96xf32> -> vector<32x96xf32>
    %704 = vector.extract_strided_slice %699 {offsets = [0, 0], sizes = [32, 64], strides = [1, 1]} : vector<32x96xf32> to vector<32x64xf32>
    %705 = vector.extract_strided_slice %703 {offsets = [0, 0], sizes = [32, 64], strides = [1, 1]} : vector<32x96xf32> to vector<32x64xf32>
    %706 = arith.addf %704, %705 : vector<32x64xf32>
    %707 = arith.negf %706 : vector<32x64xf32>
    %708 = math.exp %707 : vector<32x64xf32>
    %cst_334 = arith.constant 1.000000e+00 : f32
    %709 = vector.broadcast %cst_334 : f32 to vector<32x64xf32>
    %710 = arith.addf %709, %708 : vector<32x64xf32>
    %711 = arith.divf %709, %710 : vector<32x64xf32>
    %712 = vector.extract_strided_slice %699 {offsets = [0, 64], sizes = [32, 32], strides = [1, 1]} : vector<32x96xf32> to vector<32x32xf32>
    %713 = vector.extract_strided_slice %711 {offsets = [0, 0], sizes = [32, 32], strides = [1, 1]} : vector<32x64xf32> to vector<32x32xf32>
    %714 = vector.extract_strided_slice %703 {offsets = [0, 64], sizes = [32, 32], strides = [1, 1]} : vector<32x96xf32> to vector<32x32xf32>
    %715 = vector.broadcast %567 : vector<1x32xf32> to vector<32x32xf32>
    %716 = arith.addf %714, %715 : vector<32x32xf32>
    %717 = arith.mulf %713, %716 : vector<32x32xf32>
    %718 = arith.addf %712, %717 : vector<32x32xf32>
    %719 = math.tanh %718 : vector<32x32xf32>
    %720 = vector.extract_strided_slice %711 {offsets = [0, 32], sizes = [32, 32], strides = [1, 1]} : vector<32x64xf32> to vector<32x32xf32>
    %721 = arith.subf %697, %719 : vector<32x32xf32>
    %722 = arith.mulf %720, %721 : vector<32x32xf32>
    %723 = arith.addf %719, %722 : vector<32x32xf32>
    %c160_335 = arith.constant 160 : index
    %c0_336 = arith.constant 0 : index
    %724 = vector.load %arg27[%c160_335, %c0_336] : memref<256x32xf32, #tpu.memory_space<vmem>>, vector<32x32xf32>
    tpu.vector_store %arg27[%c160_335, %c0_336], %723 {strides = array<i32>} : memref<256x32xf32, #tpu.memory_space<vmem>>, vector<32x32xf32>,
    %c6_337 = arith.constant 6 : index
    %c0_338 = arith.constant 0 : index
    %725 = tpu.strided_load %arg25[%c6_337, %c0_338] {strides = array<i32: 8, 1>} : memref<256x96xf32, #tpu.memory_space<vmem>>, vector<32x96xf32>
    %c6_339 = arith.constant 6 : index
    %c0_340 = arith.constant 0 : index
    %726 = tpu.strided_load %arg24[%c6_339, %c0_340] {strides = array<i32: 8, 1>} : memref<256x16xf32, #tpu.memory_space<vmem>>, vector<32x16xf32>
    %c192_341 = arith.constant 192 : index
    %c0_342 = arith.constant 0 : index
    %727 = vector.load %arg26[%c192_341, %c0_342] : memref<256x16xf32, #tpu.memory_space<vmem>>, vector<32x16xf32>
    tpu.vector_store %arg26[%c192_341, %c0_342], %726 {strides = array<i32>} : memref<256x16xf32, #tpu.memory_space<vmem>>, vector<32x16xf32>,
    %728 = arith.truncf %723 : vector<32x32xf32> to vector<32x32xbf16>
    %cst_343 = arith.constant dense<0.000000e+00> : vector<32x96xf32>
    %729 = tpu.matmul %728, %566, %cst_343 {dimension_numbers = #tpu.dot_dimension_numbers<[1], [0], [0], [1], [0, 0, 1, 1], [], []>} : vector<32x32xbf16>, vector<32x96xbf16>, vector<32x96xf32> -> vector<32x96xf32>
    %730 = vector.extract_strided_slice %725 {offsets = [0, 0], sizes = [32, 64], strides = [1, 1]} : vector<32x96xf32> to vector<32x64xf32>
    %731 = vector.extract_strided_slice %729 {offsets = [0, 0], sizes = [32, 64], strides = [1, 1]} : vector<32x96xf32> to vector<32x64xf32>
    %732 = arith.addf %730, %731 : vector<32x64xf32>
    %733 = arith.negf %732 : vector<32x64xf32>
    %734 = math.exp %733 : vector<32x64xf32>
    %cst_344 = arith.constant 1.000000e+00 : f32
    %735 = vector.broadcast %cst_344 : f32 to vector<32x64xf32>
    %736 = arith.addf %735, %734 : vector<32x64xf32>
    %737 = arith.divf %735, %736 : vector<32x64xf32>
    %738 = vector.extract_strided_slice %725 {offsets = [0, 64], sizes = [32, 32], strides = [1, 1]} : vector<32x96xf32> to vector<32x32xf32>
    %739 = vector.extract_strided_slice %737 {offsets = [0, 0], sizes = [32, 32], strides = [1, 1]} : vector<32x64xf32> to vector<32x32xf32>
    %740 = vector.extract_strided_slice %729 {offsets = [0, 64], sizes = [32, 32], strides = [1, 1]} : vector<32x96xf32> to vector<32x32xf32>
    %741 = vector.broadcast %567 : vector<1x32xf32> to vector<32x32xf32>
    %742 = arith.addf %740, %741 : vector<32x32xf32>
    %743 = arith.mulf %739, %742 : vector<32x32xf32>
    %744 = arith.addf %738, %743 : vector<32x32xf32>
    %745 = math.tanh %744 : vector<32x32xf32>
    %746 = vector.extract_strided_slice %737 {offsets = [0, 32], sizes = [32, 32], strides = [1, 1]} : vector<32x64xf32> to vector<32x32xf32>
    %747 = arith.subf %723, %745 : vector<32x32xf32>
    %748 = arith.mulf %746, %747 : vector<32x32xf32>
    %749 = arith.addf %745, %748 : vector<32x32xf32>
    %c192_345 = arith.constant 192 : index
    %c0_346 = arith.constant 0 : index
    %750 = vector.load %arg27[%c192_345, %c0_346] : memref<256x32xf32, #tpu.memory_space<vmem>>, vector<32x32xf32>
    tpu.vector_store %arg27[%c192_345, %c0_346], %749 {strides = array<i32>} : memref<256x32xf32, #tpu.memory_space<vmem>>, vector<32x32xf32>,
    %c7_347 = arith.constant 7 : index
    %c0_348 = arith.constant 0 : index
    %751 = tpu.strided_load %arg25[%c7_347, %c0_348] {strides = array<i32: 8, 1>} : memref<256x96xf32, #tpu.memory_space<vmem>>, vector<32x96xf32>
    %c7_349 = arith.constant 7 : index
    %c0_350 = arith.constant 0 : index
    %752 = tpu.strided_load %arg24[%c7_349, %c0_350] {strides = array<i32: 8, 1>} : memref<256x16xf32, #tpu.memory_space<vmem>>, vector<32x16xf32>
    %c224_351 = arith.constant 224 : index
    %c0_352 = arith.constant 0 : index
    %753 = vector.load %arg26[%c224_351, %c0_352] : memref<256x16xf32, #tpu.memory_space<vmem>>, vector<32x16xf32>
    tpu.vector_store %arg26[%c224_351, %c0_352], %752 {strides = array<i32>} : memref<256x16xf32, #tpu.memory_space<vmem>>, vector<32x16xf32>,
    %754 = arith.truncf %749 : vector<32x32xf32> to vector<32x32xbf16>
    %cst_353 = arith.constant dense<0.000000e+00> : vector<32x96xf32>
    %755 = tpu.matmul %754, %566, %cst_353 {dimension_numbers = #tpu.dot_dimension_numbers<[1], [0], [0], [1], [0, 0, 1, 1], [], []>} : vector<32x32xbf16>, vector<32x96xbf16>, vector<32x96xf32> -> vector<32x96xf32>
    %756 = vector.extract_strided_slice %751 {offsets = [0, 0], sizes = [32, 64], strides = [1, 1]} : vector<32x96xf32> to vector<32x64xf32>
    %757 = vector.extract_strided_slice %755 {offsets = [0, 0], sizes = [32, 64], strides = [1, 1]} : vector<32x96xf32> to vector<32x64xf32>
    %758 = arith.addf %756, %757 : vector<32x64xf32>
    %759 = arith.negf %758 : vector<32x64xf32>
    %760 = math.exp %759 : vector<32x64xf32>
    %cst_354 = arith.constant 1.000000e+00 : f32
    %761 = vector.broadcast %cst_354 : f32 to vector<32x64xf32>
    %762 = arith.addf %761, %760 : vector<32x64xf32>
    %763 = arith.divf %761, %762 : vector<32x64xf32>
    %764 = vector.extract_strided_slice %751 {offsets = [0, 64], sizes = [32, 32], strides = [1, 1]} : vector<32x96xf32> to vector<32x32xf32>
    %765 = vector.extract_strided_slice %763 {offsets = [0, 0], sizes = [32, 32], strides = [1, 1]} : vector<32x64xf32> to vector<32x32xf32>
    %766 = vector.extract_strided_slice %755 {offsets = [0, 64], sizes = [32, 32], strides = [1, 1]} : vector<32x96xf32> to vector<32x32xf32>
    %767 = vector.broadcast %567 : vector<1x32xf32> to vector<32x32xf32>
    %768 = arith.addf %766, %767 : vector<32x32xf32>
    %769 = arith.mulf %765, %768 : vector<32x32xf32>
    %770 = arith.addf %764, %769 : vector<32x32xf32>
    %771 = math.tanh %770 : vector<32x32xf32>
    %772 = vector.extract_strided_slice %763 {offsets = [0, 32], sizes = [32, 32], strides = [1, 1]} : vector<32x64xf32> to vector<32x32xf32>
    %773 = arith.subf %749, %771 : vector<32x32xf32>
    %774 = arith.mulf %772, %773 : vector<32x32xf32>
    %775 = arith.addf %771, %774 : vector<32x32xf32>
    %c224_355 = arith.constant 224 : index
    %c0_356 = arith.constant 0 : index
    %776 = vector.load %arg27[%c224_355, %c0_356] : memref<256x32xf32, #tpu.memory_space<vmem>>, vector<32x32xf32>
    tpu.vector_store %arg27[%c224_355, %c0_356], %775 {strides = array<i32>} : memref<256x32xf32, #tpu.memory_space<vmem>>, vector<32x32xf32>,
    %c0_357 = arith.constant 0 : index
    %c0_358 = arith.constant 0 : index
    %777 = vector.load %arg27[%c0_357, %c0_358] : memref<256x32xf32, #tpu.memory_space<vmem>>, vector<256x32xf32>
    %c0_359 = arith.constant 0 : index
    %c0_360 = arith.constant 0 : index
    %778 = vector.load %arg15[%c0_359, %c0_360] : memref<32x16xf32, #tpu.memory_space<vmem>>, vector<32x16xf32>
    %cst_361 = arith.constant dense<0.000000e+00> : vector<256x16xf32>
    %779 = tpu.matmul %777, %778, %cst_361 {dimension_numbers = #tpu.dot_dimension_numbers<[1], [0], [0], [1], [0, 0, 1, 1], [], []>} : vector<256x32xf32>, vector<32x16xf32>, vector<256x16xf32> -> vector<256x16xf32>
    %c0_362 = arith.constant 0 : index
    %c0_363 = arith.constant 0 : index
    %780 = vector.load %arg16[%c0_362, %c0_363] : memref<1x16xf32, #tpu.memory_space<vmem>>, vector<1x16xf32>
    %781 = vector.broadcast %780 : vector<1x16xf32> to vector<256x16xf32>
    %782 = arith.addf %779, %781 : vector<256x16xf32>
    %c0_364 = arith.constant 0 : index
    %c0_365 = arith.constant 0 : index
    %783 = vector.load %arg26[%c0_364, %c0_365] : memref<256x16xf32, #tpu.memory_space<vmem>>, vector<256x16xf32>
    %c0_366 = arith.constant 0 : index
    %c0_367 = arith.constant 0 : index
    %784 = vector.load %arg17[%c0_366, %c0_367] : memref<1x16xf32, #tpu.memory_space<vmem>>, vector<1x16xf32>
    %c0_368 = arith.constant 0 : index
    %c0_369 = arith.constant 0 : index
    %785 = vector.load %arg18[%c0_368, %c0_369] : memref<1x16xf32, #tpu.memory_space<vmem>>, vector<1x16xf32>
    %cst_370 = arith.constant dense<0.000000e+00> : vector<256xf32>
    %786 = vector.multi_reduction <add>, %782, %cst_370 [1] : vector<256x16xf32> to vector<256xf32>
    %787 = vector.shape_cast %786 : vector<256xf32> to vector<256x1xf32>
    %cst_371 = arith.constant 1.600000e+01 : f32
    %788 = vector.broadcast %cst_371 : f32 to vector<256x1xf32>
    %789 = arith.divf %787, %788 : vector<256x1xf32>
    %790 = vector.broadcast %789 : vector<256x1xf32> to vector<256x16xf32>
    %791 = arith.subf %782, %790 : vector<256x16xf32>
    %792 = arith.mulf %791, %791 : vector<256x16xf32>
    %cst_372 = arith.constant dense<0.000000e+00> : vector<256xf32>
    %793 = vector.multi_reduction <add>, %792, %cst_372 [1] : vector<256x16xf32> to vector<256xf32>
    %794 = vector.shape_cast %793 : vector<256xf32> to vector<256x1xf32>
    %cst_373 = arith.constant 1.600000e+01 : f32
    %795 = vector.broadcast %cst_373 : f32 to vector<256x1xf32>
    %796 = arith.divf %794, %795 : vector<256x1xf32>
    %797 = vector.broadcast %789 : vector<256x1xf32> to vector<256x16xf32>
    %798 = arith.subf %782, %797 : vector<256x16xf32>
    %cst_374 = arith.constant 9.99999993E-9 : f32
    %799 = vector.broadcast %cst_374 : f32 to vector<256x1xf32>
    %800 = arith.addf %796, %799 : vector<256x1xf32>
    %801 = math.rsqrt %800 : vector<256x1xf32>
    %802 = vector.broadcast %801 : vector<256x1xf32> to vector<256x16xf32>
    %803 = arith.mulf %798, %802 : vector<256x16xf32>
    %804 = vector.broadcast %784 : vector<1x16xf32> to vector<256x16xf32>
    %805 = arith.mulf %803, %804 : vector<256x16xf32>
    %806 = vector.broadcast %785 : vector<1x16xf32> to vector<256x16xf32>
    %807 = arith.addf %805, %806 : vector<256x16xf32>
    %808 = arith.addf %783, %807 : vector<256x16xf32>
    %809 = vector.shape_cast %808 : vector<256x16xf32> to vector<8x32x16xf32>
    %c0_375 = arith.constant 0 : index
    %c0_376 = arith.constant 0 : index
    %c0_377 = arith.constant 0 : index
    %810 = vector.load %arg19[%c0_375, %c0_376, %c0_377] : memref<8x32x16xf32, #tpu.memory_space<vmem>>, vector<8x32x16xf32>
    tpu.vector_store %arg19[%c0_375, %c0_376, %c0_377], %809 {strides = array<i32>} : memref<8x32x16xf32, #tpu.memory_space<vmem>>, vector<8x32x16xf32>,
    %c0_378 = arith.constant 0 : index
    %c0_379 = arith.constant 0 : index
    %811 = vector.load %arg20[%c0_378, %c0_379] : memref<32x32xf32, #tpu.memory_space<vmem>>, vector<32x32xf32>
    tpu.vector_store %arg20[%c0_378, %c0_379], %775 {strides = array<i32>} : memref<32x32xf32, #tpu.memory_space<vmem>>, vector<32x32xf32>,
    return
  }
  func.func @transform_0(%arg0: i32) -> (i32, i32, i32, i32) {
    %c0_i32 = arith.constant 0 : i32
    %c0_i32_0 = arith.constant 0 : i32
    %c0_i32_1 = arith.constant 0 : i32
    %c0_i32_2 = arith.constant 0 : i32
    return %c0_i32, %arg0, %c0_i32_0, %c0_i32_1 : i32, i32, i32, i32
  }
  func.func @transform_1(%arg0: i32) -> (i32, i32) {
    %c0_i32 = arith.constant 0 : i32
    %c0_i32_0 = arith.constant 0 : i32
    %c0_i32_1 = arith.constant 0 : i32
    return %c0_i32, %c0_i32_0 : i32, i32
  }
  func.func @transform_2(%arg0: i32) -> (i32, i32) {
    %c0_i32 = arith.constant 0 : i32
    %c0_i32_0 = arith.constant 0 : i32
    %c0_i32_1 = arith.constant 0 : i32
    return %c0_i32, %c0_i32_0 : i32, i32
  }
  func.func @transform_3(%arg0: i32) -> (i32, i32) {
    %c0_i32 = arith.constant 0 : i32
    %c0_i32_0 = arith.constant 0 : i32
    %c0_i32_1 = arith.constant 0 : i32
    return %c0_i32, %c0_i32_0 : i32, i32
  }
  func.func @transform_4(%arg0: i32) -> (i32, i32) {
    %c0_i32 = arith.constant 0 : i32
    %c0_i32_0 = arith.constant 0 : i32
    %c0_i32_1 = arith.constant 0 : i32
    return %c0_i32, %c0_i32_0 : i32, i32
  }
  func.func @transform_5(%arg0: i32) -> (i32, i32) {
    %c0_i32 = arith.constant 0 : i32
    %c0_i32_0 = arith.constant 0 : i32
    %c0_i32_1 = arith.constant 0 : i32
    return %c0_i32, %c0_i32_0 : i32, i32
  }
  func.func @transform_6(%arg0: i32) -> (i32, i32) {
    %c0_i32 = arith.constant 0 : i32
    %c0_i32_0 = arith.constant 0 : i32
    %c0_i32_1 = arith.constant 0 : i32
    return %c0_i32, %c0_i32_0 : i32, i32
  }
  func.func @transform_7(%arg0: i32) -> (i32, i32) {
    %c0_i32 = arith.constant 0 : i32
    %c0_i32_0 = arith.constant 0 : i32
    %c0_i32_1 = arith.constant 0 : i32
    return %c0_i32, %c0_i32_0 : i32, i32
  }
  func.func @transform_8(%arg0: i32) -> (i32, i32) {
    %c0_i32 = arith.constant 0 : i32
    %c0_i32_0 = arith.constant 0 : i32
    %c0_i32_1 = arith.constant 0 : i32
    return %c0_i32, %c0_i32_0 : i32, i32
  }
  func.func @transform_9(%arg0: i32) -> (i32, i32) {
    %c0_i32 = arith.constant 0 : i32
    %c0_i32_0 = arith.constant 0 : i32
    %c0_i32_1 = arith.constant 0 : i32
    return %c0_i32, %c0_i32_0 : i32, i32
  }
  func.func @transform_10(%arg0: i32) -> (i32, i32) {
    %c0_i32 = arith.constant 0 : i32
    %c0_i32_0 = arith.constant 0 : i32
    %c0_i32_1 = arith.constant 0 : i32
    return %c0_i32, %c0_i32_0 : i32, i32
  }
  func.func @transform_11(%arg0: i32) -> (i32, i32) {
    %c0_i32 = arith.constant 0 : i32
    %c0_i32_0 = arith.constant 0 : i32
    %c0_i32_1 = arith.constant 0 : i32
    return %c0_i32, %c0_i32_0 : i32, i32
  }
  func.func @transform_12(%arg0: i32) -> (i32, i32) {
    %c0_i32 = arith.constant 0 : i32
    %c0_i32_0 = arith.constant 0 : i32
    %c0_i32_1 = arith.constant 0 : i32
    return %c0_i32, %c0_i32_0 : i32, i32
  }
  func.func @transform_13(%arg0: i32) -> (i32, i32) {
    %c0_i32 = arith.constant 0 : i32
    %c0_i32_0 = arith.constant 0 : i32
    %c0_i32_1 = arith.constant 0 : i32
    return %c0_i32, %c0_i32_0 : i32, i32
  }
  func.func @transform_14(%arg0: i32) -> (i32, i32) {
    %c0_i32 = arith.constant 0 : i32
    %c0_i32_0 = arith.constant 0 : i32
    %c0_i32_1 = arith.constant 0 : i32
    return %c0_i32, %c0_i32_0 : i32, i32
  }
  func.func @transform_15(%arg0: i32) -> (i32, i32) {
    %c0_i32 = arith.constant 0 : i32
    %c0_i32_0 = arith.constant 0 : i32
    %c0_i32_1 = arith.constant 0 : i32
    return %c0_i32, %c0_i32_0 : i32, i32
  }
  func.func @transform_16(%arg0: i32) -> (i32, i32) {
    %c0_i32 = arith.constant 0 : i32
    %c0_i32_0 = arith.constant 0 : i32
    %c0_i32_1 = arith.constant 0 : i32
    return %c0_i32, %c0_i32_0 : i32, i32
  }
  func.func @transform_17(%arg0: i32) -> (i32, i32) {
    %c0_i32 = arith.constant 0 : i32
    %c0_i32_0 = arith.constant 0 : i32
    %c0_i32_1 = arith.constant 0 : i32
    return %c0_i32, %c0_i32_0 : i32, i32
  }
  func.func @transform_18(%arg0: i32) -> (i32, i32, i32) {
    %c0_i32 = arith.constant 0 : i32
    %c0_i32_0 = arith.constant 0 : i32
    %c0_i32_1 = arith.constant 0 : i32
    %c0_i32_2 = arith.constant 0 : i32
    return %c0_i32, %c0_i32_0, %c0_i32_1 : i32, i32, i32
  }
  func.func @transform_19(%arg0: i32) -> (i32, i32) {
    %c0_i32 = arith.constant 0 : i32
    %c0_i32_0 = arith.constant 0 : i32
    %c0_i32_1 = arith.constant 0 : i32
    return %c0_i32, %c0_i32_0 : i32, i32
  }
}

</mosaic_0001>

<llo_original>
// kernel: dprnn_block.1
$region0: #{dprnn_block.1}
  #allocation0 [shape = 'u32[]', space=smem, size = 0x4, offset = 0x4, fixed_abs, tag = 'smem constant byte address 0x4 - core index']
  #allocation1 [shape = 'u32[144,128]{1,0:T(1,128)}', space=vmem, size = 0x12000, scoped, tag = 'internal scratch']
  #allocation2 [shape = 'f32[16,2,8,16]{3,2,1,0:T(8,128)}', space=vmem, size = 0x20000, scoped, tag = 'scratch operand']
  #allocation3 [shape = 'f32[256,96]{1,0:T(8,128)}', space=vmem, size = 0x20000, scoped, tag = 'scratch operand']
  #allocation4 [shape = 'f32[256,32]{1,0:T(8,128)}', space=vmem, size = 0x20000, scoped, tag = 'scratch operand']
  #allocation5 [shape = 'f32[256,16]{1,0:T(8,128)}', space=vmem, size = 0x20000, scoped, tag = 'scratch operand']
  #allocation6 [shape = 'f32[256,96]{1,0:T(8,128)}', space=vmem, size = 0x20000, scoped, tag = 'scratch operand']
  #allocation7 [shape = 'f32[256,16]{1,0:T(8,128)}', space=vmem, size = 0x20000, scoped, tag = 'scratch operand']
  #allocation8 [shape = 'f32[256,32]{1,0:T(8,128)}', space=vmem, size = 0x20000, scoped, tag = 'scratch operand']
  %s0 = inlined_call_operand.vmem [shape: f32[16,2,8,16], index: 0, kind: input, shape index: {}]
  %s1 = inlined_call_operand.vmem [shape: f32[16,96], index: 1, kind: input, shape index: {}]
  %s2 = inlined_call_operand.vmem [shape: f32[16,96], index: 2, kind: input, shape index: {}]
  %s3 = inlined_call_operand.vmem [shape: f32[1,96], index: 3, kind: input, shape index: {}]
  %s4 = inlined_call_operand.vmem [shape: bf16[32,96], index: 4, kind: input, shape index: {}]
  %s5 = inlined_call_operand.vmem [shape: f32[1,32], index: 5, kind: input, shape index: {}]
  %s6 = inlined_call_operand.vmem [shape: f32[32,16], index: 6, kind: input, shape index: {}]
  %s7 = inlined_call_operand.vmem [shape: f32[1,16], index: 7, kind: input, shape index: {}]
  %s8 = inlined_call_operand.vmem [shape: f32[1,16], index: 8, kind: input, shape index: {}]
  %s9 = inlined_call_operand.vmem [shape: f32[1,16], index: 9, kind: input, shape index: {}]
  %s10 = inlined_call_operand.vmem [shape: f32[16,96], index: 10, kind: input, shape index: {}]
  %s11 = inlined_call_operand.vmem [shape: f32[1,96], index: 11, kind: input, shape index: {}]
  %s12 = inlined_call_operand.vmem [shape: bf16[32,96], index: 12, kind: input, shape index: {}]
  %s13 = inlined_call_operand.vmem [shape: f32[1,32], index: 13, kind: input, shape index: {}]
  %s14 = inlined_call_operand.vmem [shape: f32[32,16], index: 14, kind: input, shape index: {}]
  %s15 = inlined_call_operand.vmem [shape: f32[1,16], index: 15, kind: input, shape index: {}]
  %s16 = inlined_call_operand.vmem [shape: f32[1,16], index: 16, kind: input, shape index: {}]
  %s17 = inlined_call_operand.vmem [shape: f32[1,16], index: 17, kind: input, shape index: {}]
  %s18 = inlined_call_operand.vmem [shape: f32[8,32,16], index: 18, kind: output, shape index: {0}]
  %s19 = inlined_call_operand.vmem [shape: f32[32,32], index: 19, kind: output, shape index: {1}]
  %20 = xla_tuple %s18, %s19
  %s21 = sld [smem:[#allocation0]]
  $region90: #{dprnn_block.1} parent=0
    _
  %s23 = ssub.s32 1, %s21
  %s24 = scalar_select 0, %s23, %s21
  // Predicated region
  $region2: #{dprnn_block.1} parent=0 // pred_check
    _
  $region3: #{dprnn_block.1} parent=0 // pred_check_branch
    %26 = sbr.rel (0) target = $region5
  $region4: #{dprnn_block.1} parent=0 // pred_region
    _
  $region5: #{dprnn_block.1} parent=0 // pred_fallthru
    _
  // Predicated region
  $region6: #{dprnn_block.1} parent=0 // pred_check
    _
  $region7: #{dprnn_block.1} parent=0 // pred_check_branch
    %28 = sbr.rel (0) target = $region9
  $region8: #{dprnn_block.1} parent=0 // pred_region
    _
  $region9: #{dprnn_block.1} parent=0 // pred_fallthru
    _
  // Predicated region
  $region10: #{dprnn_block.1} parent=0 // pred_check
    _
  $region11: #{dprnn_block.1} parent=0 // pred_check_branch
    %30 = sbr.rel (0) target = $region13
  $region12: #{dprnn_block.1} parent=0 // pred_region
    _
  $region13: #{dprnn_block.1} parent=0 // pred_fallthru
    _
  // Predicated region
  $region14: #{dprnn_block.1} parent=0 // pred_check
    _
  $region15: #{dprnn_block.1} parent=0 // pred_check_branch
    %32 = sbr.rel (0) target = $region17
  $region16: #{dprnn_block.1} parent=0 // pred_region
    _
  $region17: #{dprnn_block.1} parent=0 // pred_fallthru
    _
  // Predicated region
  $region18: #{dprnn_block.1} parent=0 // pred_check
    _
  $region19: #{dprnn_block.1} parent=0 // pred_check_branch
    %34 = sbr.rel (0) target = $region21
  $region20: #{dprnn_block.1} parent=0 // pred_region
    _
  $region21: #{dprnn_block.1} parent=0 // pred_fallthru
    _
  // Predicated region
  $region22: #{dprnn_block.1} parent=0 // pred_check
    _
  $region23: #{dprnn_block.1} parent=0 // pred_check_branch
    %36 = sbr.rel (0) target = $region25
  $region24: #{dprnn_block.1} parent=0 // pred_region
    _
  $region25: #{dprnn_block.1} parent=0 // pred_fallthru
    _
  // Predicated region
  $region26: #{dprnn_block.1} parent=0 // pred_check
    _
  $region27: #{dprnn_block.1} parent=0 // pred_check_branch
    %38 = sbr.rel (0) target = $region29
  $region28: #{dprnn_block.1} parent=0 // pred_region
    _
  $region29: #{dprnn_block.1} parent=0 // pred_fallthru
    _
  // Predicated region
  $region30: #{dprnn_block.1} parent=0 // pred_check
    _
  $region31: #{dprnn_block.1} parent=0 // pred_check_branch
    %40 = sbr.rel (0) target = $region33
  $region32: #{dprnn_block.1} parent=0 // pred_region
    _
  $region33: #{dprnn_block.1} parent=0 // pred_fallthru
    _
  // Predicated region
  $region34: #{dprnn_block.1} parent=0 // pred_check
    _
  $region35: #{dprnn_block.1} parent=0 // pred_check_branch
    %42 = sbr.rel (0) target = $region37
  $region36: #{dprnn_block.1} parent=0 // pred_region
    _
  $region37: #{dprnn_block.1} parent=0 // pred_fallthru
    _
  // Predicated region
  $region38: #{dprnn_block.1} parent=0 // pred_check
    _
  $region39: #{dprnn_block.1} parent=0 // pred_check_branch
    %44 = sbr.rel (0) target = $region41
  $region40: #{dprnn_block.1} parent=0 // pred_region
    _
  $region41: #{dprnn_block.1} parent=0 // pred_fallthru
    _
  // Predicated region
  $region42: #{dprnn_block.1} parent=0 // pred_check
    _
  $region43: #{dprnn_block.1} parent=0 // pred_check_branch
    %46 = sbr.rel (0) target = $region45
  $region44: #{dprnn_block.1} parent=0 // pred_region
    _
  $region45: #{dprnn_block.1} parent=0 // pred_fallthru
    _
  // Predicated region
  $region46: #{dprnn_block.1} parent=0 // pred_check
    _
  $region47: #{dprnn_block.1} parent=0 // pred_check_branch
    %48 = sbr.rel (0) target = $region49
  $region48: #{dprnn_block.1} parent=0 // pred_region
    _
  $region49: #{dprnn_block.1} parent=0 // pred_fallthru
    _
  // Predicated region
  $region50: #{dprnn_block.1} parent=0 // pred_check
    _
  $region51: #{dprnn_block.1} parent=0 // pred_check_branch
    %50 = sbr.rel (0) target = $region53
  $region52: #{dprnn_block.1} parent=0 // pred_region
    _
  $region53: #{dprnn_block.1} parent=0 // pred_fallthru
    _
  // Predicated region
  $region54: #{dprnn_block.1} parent=0 // pred_check
    _
  $region55: #{dprnn_block.1} parent=0 // pred_check_branch
    %52 = sbr.rel (0) target = $region57
  $region56: #{dprnn_block.1} parent=0 // pred_region
    _
  $region57: #{dprnn_block.1} parent=0 // pred_fallthru
    _
  // Predicated region
  $region58: #{dprnn_block.1} parent=0 // pred_check
    _
  $region59: #{dprnn_block.1} parent=0 // pred_check_branch
    %54 = sbr.rel (0) target = $region61
  $region60: #{dprnn_block.1} parent=0 // pred_region
    _
  $region61: #{dprnn_block.1} parent=0 // pred_fallthru
    _
  // Predicated region
  $region62: #{dprnn_block.1} parent=0 // pred_check
    _
  $region63: #{dprnn_block.1} parent=0 // pred_check_branch
    %56 = sbr.rel (0) target = $region65
  $region64: #{dprnn_block.1} parent=0 // pred_region
    _
  $region65: #{dprnn_block.1} parent=0 // pred_fallthru
    _
  // Predicated region
  $region66: #{dprnn_block.1} parent=0 // pred_check
    _
  $region67: #{dprnn_block.1} parent=0 // pred_check_branch
    %58 = sbr.rel (0) target = $region69
  $region68: #{dprnn_block.1} parent=0 // pred_region
    _
  $region69: #{dprnn_block.1} parent=0 // pred_fallthru
    _
  // Predicated region
  $region70: #{dprnn_block.1} parent=0 // pred_check
    _
  $region71: #{dprnn_block.1} parent=0 // pred_check_branch
    %60 = sbr.rel (0) target = $region73
  $region72: #{dprnn_block.1} parent=0 // pred_region
    _
  $region73: #{dprnn_block.1} parent=0 // pred_fallthru
    _
  %s62 = scalar_lea.vmem %s0, 240
  %v63 = vld [vmem:[%s62] sm:$0xff]
  %v64 = vld [vmem:[%s62 + $0x8] sm:$0xff]
  %vm65 = vcmask 130048
  %66 = vst.msk [vmem:[#allocation2] sm:$0xff] %vm65, %v63
  %67 = vst.msk [vmem:[#allocation2 + $0x8] sm:$0xff] %vm65, %v64
  %s68 = scalar_lea.vmem %s0, 224
  %v69 = vld [vmem:[%s68] sm:$0xff]
  %v70 = vld [vmem:[%s68 + $0x8] sm:$0xff]
  %s71 = scalar_lea.vmem [#allocation2], 16
  %72 = vst.msk [vmem:[%s71] sm:$0xff] %vm65, %v69
  %73 = vst.msk [vmem:[%s71 + $0x8] sm:$0xff] %vm65, %v70
  %s74 = scalar_lea.vmem %s0, 208
  %v75 = vld [vmem:[%s74] sm:$0xff]
  %v76 = vld [vmem:[%s74 + $0x8] sm:$0xff]
  %s77 = scalar_lea.vmem [#allocation2], 32
  %78 = vst.msk [vmem:[%s77] sm:$0xff] %vm65, %v75
  %79 = vst.msk [vmem:[%s77 + $0x8] sm:$0xff] %vm65, %v76
  %s80 = scalar_lea.vmem %s0, 192
  %v81 = vld [vmem:[%s80] sm:$0xff]
  %v82 = vld [vmem:[%s80 + $0x8] sm:$0xff]
  %s83 = scalar_lea.vmem [#allocation2], 48
  %84 = vst.msk [vmem:[%s83] sm:$0xff] %vm65, %v81
  %85 = vst.msk [vmem:[%s83 + $0x8] sm:$0xff] %vm65, %v82
  %s86 = scalar_lea.vmem %s0, 176
  %v87 = vld [vmem:[%s86] sm:$0xff]
  %v88 = vld [vmem:[%s86 + $0x8] sm:$0xff]
  %s89 = scalar_lea.vmem [#allocation2], 64
  %90 = vst.msk [vmem:[%s89] sm:$0xff] %vm65, %v87
  %91 = vst.msk [vmem:[%s89 + $0x8] sm:$0xff] %vm65, %v88
  %s92 = scalar_lea.vmem %s0, 160
  %v93 = vld [vmem:[%s92] sm:$0xff]
  %v94 = vld [vmem:[%s92 + $0x8] sm:$0xff]
  %s95 = scalar_lea.vmem [#allocation2], 80
  %96 = vst.msk [vmem:[%s95] sm:$0xff] %vm65, %v93
  %97 = vst.msk [vmem:[%s95 + $0x8] sm:$0xff] %vm65, %v94
  %s98 = scalar_lea.vmem %s0, 144
  %v99 = vld [vmem:[%s98] sm:$0xff]
  %v100 = vld [vmem:[%s98 + $0x8] sm:$0xff]
  %s101 = scalar_lea.vmem [#allocation2], 96
  %102 = vst.msk [vmem:[%s101] sm:$0xff] %vm65, %v99
  %103 = vst.msk [vmem:[%s101 + $0x8] sm:$0xff] %vm65, %v100
  %s104 = scalar_lea.vmem %s0, 128
  %v105 = vld [vmem:[%s104] sm:$0xff]
  %v106 = vld [vmem:[%s104 + $0x8] sm:$0xff]
  %s107 = scalar_lea.vmem [#allocation2], 112
  %108 = vst.msk [vmem:[%s107] sm:$0xff] %vm65, %v105
  %109 = vst.msk [vmem:[%s107 + $0x8] sm:$0xff] %vm65, %v106
  %s110 = scalar_lea.vmem %s0, 112
  %v111 = vld [vmem:[%s110] sm:$0xff]
  %v112 = vld [vmem:[%s110 + $0x8] sm:$0xff]
  %s113 = scalar_lea.vmem [#allocation2], 128
  %114 = vst.msk [vmem:[%s113] sm:$0xff] %vm65, %v111
  %115 = vst.msk [vmem:[%s113 + $0x8] sm:$0xff] %vm65, %v112
  %s116 = scalar_lea.vmem %s0, 96
  %v117 = vld [vmem:[%s116] sm:$0xff]
  %v118 = vld [vmem:[%s116 + $0x8] sm:$0xff]
  %s119 = scalar_lea.vmem [#allocation2], 144
  %120 = vst.msk [vmem:[%s119] sm:$0xff] %vm65, %v117
  %121 = vst.msk [vmem:[%s119 + $0x8] sm:$0xff] %vm65, %v118
  %s122 = scalar_lea.vmem %s0, 80
  %v123 = vld [vmem:[%s122] sm:$0xff]
  %v124 = vld [vmem:[%s122 + $0x8] sm:$0xff]
  %s125 = scalar_lea.vmem [#allocation2], 160
  %126 = vst.msk [vmem:[%s125] sm:$0xff] %vm65, %v123
  %127 = vst.msk [vmem:[%s125 + $0x8] sm:$0xff] %vm65, %v124
  %s128 = scalar_lea.vmem %s0, 64
  %v129 = vld [vmem:[%s128] sm:$0xff]
  %v130 = vld [vmem:[%s128 + $0x8] sm:$0xff]
  %s131 = scalar_lea.vmem [#allocation2], 176
  %132 = vst.msk [vmem:[%s131] sm:$0xff] %vm65, %v129
  %133 = vst.msk [vmem:[%s131 + $0x8] sm:$0xff] %vm65, %v130
  %s134 = scalar_lea.vmem %s0, 48
  %v135 = vld [vmem:[%s134] sm:$0xff]
  %v136 = vld [vmem:[%s134 + $0x8] sm:$0xff]
  %s137 = scalar_lea.vmem [#allocation2], 192
  %138 = vst.msk [vmem:[%s137] sm:$0xff] %vm65, %v135
  %139 = vst.msk [vmem:[%s137 + $0x8] sm:$0xff] %vm65, %v136
  %s140 = scalar_lea.vmem %s0, 32
  %v141 = vld [vmem:[%s140] sm:$0xff]
  %v142 = vld [vmem:[%s140 + $0x8] sm:$0xff]
  %s143 = scalar_lea.vmem [#allocation2], 208
  %144 = vst.msk [vmem:[%s143] sm:$0xff] %vm65, %v141
  %145 = vst.msk [vmem:[%s143 + $0x8] sm:$0xff] %vm65, %v142
  %s146 = scalar_lea.vmem %s0, 16
  %v147 = vld [vmem:[%s146] sm:$0xff]
  %v148 = vld [vmem:[%s146 + $0x8] sm:$0xff]
  %s149 = scalar_lea.vmem [#allocation2], 224
  %150 = vst.msk [vmem:[%s149] sm:$0xff] %vm65, %v147
  %151 = vst.msk [vmem:[%s149 + $0x8] sm:$0xff] %vm65, %v148
  %v152 = vld [vmem:[%s0] sm:$0xff]
  %v153 = vld [vmem:[%s0 + $0x8] sm:$0xff]
  %s154 = scalar_lea.vmem [#allocation2], 240
  %155 = vst.msk [vmem:[%s154] sm:$0xff] %vm65, %v152
  %156 = vst.msk [vmem:[%s154 + $0x8] sm:$0xff] %vm65, %v153
  %v157 = vld [vmem:[%s0] sm:$0xff]
  %v158 = vld [vmem:[%s0 + $0x8] sm:$0xff]
  %v159 = vld [vmem:[%s0 + $0x10] sm:$0xff]
  %v160 = vld [vmem:[%s0 + $0x18] sm:$0xff]
  %v161 = vld [vmem:[%s0 + $0x20] sm:$0xff]
  %v162 = vld [vmem:[%s0 + $0x28] sm:$0xff]
  %v163 = vld [vmem:[%s0 + $0x30] sm:$0xff]
  %v164 = vld [vmem:[%s0 + $0x38] sm:$0xff]
  %v165 = vld [vmem:[%s0 + $0x40] sm:$0xff]
  %v166 = vld [vmem:[%s0 + $0x48] sm:$0xff]
  %v167 = vld [vmem:[%s0 + $0x50] sm:$0xff]
  %v168 = vld [vmem:[%s0 + $0x58] sm:$0xff]
  %v169 = vld [vmem:[%s0 + $0x60] sm:$0xff]
  %v170 = vld [vmem:[%s0 + $0x68] sm:$0xff]
  %v171 = vld [vmem:[%s0 + $0x70] sm:$0xff]
  %v172 = vld [vmem:[%s0 + $0x78] sm:$0xff]
  %v173 = vld [vmem:[%s0 + $0x80] sm:$0xff]
  %v174 = vld [vmem:[%s0 + $0x88] sm:$0xff]
  %v175 = vld [vmem:[%s0 + $0x90] sm:$0xff]
  %v176 = vld [vmem:[%s0 + $0x98] sm:$0xff]
  %v177 = vld [vmem:[%s0 + $0xa0] sm:$0xff]
  %v178 = vld [vmem:[%s0 + $0xa8] sm:$0xff]
  %v179 = vld [vmem:[%s0 + $0xb0] sm:$0xff]
  %v180 = vld [vmem:[%s0 + $0xb8] sm:$0xff]
  %v181 = vld [vmem:[%s0 + $0xc0] sm:$0xff]
  %v182 = vld [vmem:[%s0 + $0xc8] sm:$0xff]
  %v183 = vld [vmem:[%s0 + $0xd0] sm:$0xff]
  %v184 = vld [vmem:[%s0 + $0xd8] sm:$0xff]
  %v185 = vld [vmem:[%s0 + $0xe0] sm:$0xff]
  %v186 = vld [vmem:[%s0 + $0xe8] sm:$0xff]
  %v187 = vld [vmem:[%s0 + $0xf0] sm:$0xff]
  %v188 = vld [vmem:[%s0 + $0xf8] sm:$0xff]
  %v189 = vld [vmem:[#allocation2] sm:$0xff]
  %v190 = vld [vmem:[#allocation2 + $0x8] sm:$0xff]
  %v191 = vld [vmem:[#allocation2 + $0x10] sm:$0xff]
  %v192 = vld [vmem:[#allocation2 + $0x18] sm:$0xff]
  %v193 = vld [vmem:[#allocation2 + $0x20] sm:$0xff]
  %v194 = vld [vmem:[#allocation2 + $0x28] sm:$0xff]
  %v195 = vld [vmem:[#allocation2 + $0x30] sm:$0xff]
  %v196 = vld [vmem:[#allocation2 + $0x38] sm:$0xff]
  %v197 = vld [vmem:[#allocation2 + $0x40] sm:$0xff]
  %v198 = vld [vmem:[#allocation2 + $0x48] sm:$0xff]
  %v199 = vld [vmem:[#allocation2 + $0x50] sm:$0xff]
  %v200 = vld [vmem:[#allocation2 + $0x58] sm:$0xff]
  %v201 = vld [vmem:[#allocation2 + $0x60] sm:$0xff]
  %v202 = vld [vmem:[#allocation2 + $0x68] sm:$0xff]
  %v203 = vld [vmem:[#allocation2 + $0x70] sm:$0xff]
  %v204 = vld [vmem:[#allocation2 + $0x78] sm:$0xff]
  %v205 = vld [vmem:[#allocation2 + $0x80] sm:$0xff]
  %v206 = vld [vmem:[#allocation2 + $0x88] sm:$0xff]
  %v207 = vld [vmem:[#allocation2 + $0x90] sm:$0xff]
  %v208 = vld [vmem:[#allocation2 + $0x98] sm:$0xff]
  %v209 = vld [vmem:[#allocation2 + $0xa0] sm:$0xff]
  %v210 = vld [vmem:[#allocation2 + $0xa8] sm:$0xff]
  %v211 = vld [vmem:[#allocation2 + $0xb0] sm:$0xff]
  %v212 = vld [vmem:[#allocation2 + $0xb8] sm:$0xff]
  %v213 = vld [vmem:[#allocation2 + $0xc0] sm:$0xff]
  %v214 = vld [vmem:[#allocation2 + $0xc8] sm:$0xff]
  %v215 = vld [vmem:[#allocation2 + $0xd0] sm:$0xff]
  %v216 = vld [vmem:[#allocation2 + $0xd8] sm:$0xff]
  %v217 = vld [vmem:[#allocation2 + $0xe0] sm:$0xff]
  %v218 = vld [vmem:[#allocation2 + $0xe8] sm:$0xff]
  %v219 = vld [vmem:[#allocation2 + $0xf0] sm:$0xff]
  %v220 = vld [vmem:[#allocation2 + $0xf8] sm:$0xff]
  %v221 = vld [vmem:[%s1] sm:$0xff]
  %v222 = vld [vmem:[%s1 + $0x8] sm:$0xff]
  %v223 = vld [vmem:[%s2] sm:$0xff]
  %v224 = vld [vmem:[%s2 + $0x8] sm:$0xff]
  %v226 = vsel %vm65, %v189, 0
  %v229 = vsel %vm65, %v190, 0
  %v232 = vsel %vm65, %v191, 0
  %v235 = vsel %vm65, %v192, 0
  %v238 = vsel %vm65, %v193, 0
  %v241 = vsel %vm65, %v194, 0
  %v244 = vsel %vm65, %v195, 0
  %v247 = vsel %vm65, %v196, 0
  %v250 = vsel %vm65, %v197, 0
  %v253 = vsel %vm65, %v198, 0
  %v256 = vsel %vm65, %v199, 0
  %v259 = vsel %vm65, %v200, 0
  %v262 = vsel %vm65, %v201, 0
  %v265 = vsel %vm65, %v202, 0
  %v268 = vsel %vm65, %v203, 0
  %v271 = vsel %vm65, %v204, 0
  %v274 = vsel %vm65, %v205, 0
  %v277 = vsel %vm65, %v206, 0
  %v280 = vsel %vm65, %v207, 0
  %v283 = vsel %vm65, %v208, 0
  %v286 = vsel %vm65, %v209, 0
  %v289 = vsel %vm65, %v210, 0
  %v292 = vsel %vm65, %v211, 0
  %v295 = vsel %vm65, %v212, 0
  %v298 = vsel %vm65, %v213, 0
  %v301 = vsel %vm65, %v214, 0
  %v304 = vsel %vm65, %v215, 0
  %v307 = vsel %vm65, %v216, 0
  %v310 = vsel %vm65, %v217, 0
  %v313 = vsel %vm65, %v218, 0
  %v316 = vsel %vm65, %v219, 0
  %v319 = vsel %vm65, %v220, 0
  %321 = vmatprep.subr.mxu0 0.0
  %322 = vmatpush1.msra.mxu0 %v223
  %323 = vmatprep.subr.mxu0 0.0
  %324 = vmatpush1.msra.mxu0 %v224
  %325 = vmatprep.subr.mxu0 0.0
  %326 = vmatpush1.msra.mxu0 0.0
  %327 = vmatprep.subr.mxu0 0.0
  %328 = vmatpush1.msra.mxu0 0.0
  %329 = vmatprep.subr.mxu0 0.0
  %330 = vmatpush1.msra.mxu0 0.0
  %331 = vmatprep.subr.mxu0 0.0
  %332 = vmatpush1.msra.mxu0 0.0
  %333 = vmatprep.subr.mxu0 0.0
  %334 = vmatpush1.msra.mxu0 0.0
  %335 = vmatprep.subr.mxu0 0.0
  %336 = vmatpush1.msra.mxu0 0.0
  %337 = vmatprep.subr.mxu0 0.0
  %338 = vmatpush1.msra.mxu0 0.0
  %339 = vmatprep.subr.mxu0 0.0
  %340 = vmatpush1.msra.mxu0 0.0
  %341 = vmatprep.subr.mxu0 0.0
  %342 = vmatpush1.msra.mxu0 0.0
  %343 = vmatprep.subr.mxu0 0.0
  %344 = vmatpush1.msra.mxu0 0.0
  %345 = vmatprep.subr.mxu0 0.0
  %346 = vmatpush1.msra.mxu0 0.0
  %347 = vmatprep.subr.mxu0 0.0
  %348 = vmatpush1.msra.mxu0 0.0
  %349 = vmatprep.subr.mxu0 0.0
  %350 = vmatpush1.msra.mxu0 0.0
  %351 = vmatprep.subr.mxu0 0.0
  %352 = vmatpush1.msra.mxu0 0.0
  %353 = vmatprep.subr.mxu0 0.0
  %354 = vmatpush1.msra.mxu0 0.0
  %355 = vmatprep.subr.mxu0 0.0
  %356 = vmatpush1.msra.mxu0 0.0
  %357 = vmatprep.subr.mxu0 0.0
  %358 = vmatpush1.msra.mxu0 0.0
  %359 = vmatprep.subr.mxu0 0.0
  %360 = vmatpush1.msra.mxu0 0.0
  %361 = vmatprep.subr.mxu0 0.0
  %362 = vmatpush1.msra.mxu0 0.0
  %363 = vmatprep.subr.mxu0 0.0
  %364 = vmatpush1.msra.mxu0 0.0
  %365 = vmatprep.subr.mxu0 0.0
  %366 = vmatpush1.msra.mxu0 0.0
  %367 = vmatprep.subr.mxu0 0.0
  %368 = vmatpush1.msra.mxu0 0.0
  %369 = vmatprep.subr.mxu0 0.0
  %370 = vmatpush1.msra.mxu0 0.0
  %371 = vmatprep.subr.mxu0 0.0
  %372 = vmatpush1.msra.mxu0 0.0
  %373 = vmatprep.subr.mxu0 0.0
  %374 = vmatpush1.msra.mxu0 0.0
  %375 = vmatprep.subr.mxu0 0.0
  %376 = vmatpush1.msra.mxu0 0.0
  %377 = vmatprep.subr.mxu0 0.0
  %378 = vmatpush1.msra.mxu0 0.0
  %379 = vmatprep.subr.mxu0 0.0
  %380 = vmatpush1.msra.mxu0 0.0
  %381 = vmatprep.subr.mxu0 0.0
  %382 = vmatpush1.msra.mxu0 0.0
  %383 = vmatprep.subr.mxu0 0.0
  %384 = vmatpush1.msra.mxu0 0.0
  %385 = vmatprep.mubr.f32.mxu0 0.0
  %386 = vmatmul.mubr.f32.gmra.mrb[0].mxu0 %v226
  %v387 = vpop.f32.mrb[0].mxu0
  %v388 = vadd.f32 0.0, %v387
  %v389 = vpop.f32.mrb[0].mxu0
  %390 = vmatprep.mubr.f32.mxu0 0.0
  %391 = vmatmul.mubr.f32.gmra.mrb[0].mxu0 %v229
  %v392 = vpop.f32.mrb[0].mxu0
  %v393 = vadd.f32 0.0, %v392
  %v394 = vpop.f32.mrb[0].mxu0
  %395 = vmatprep.mubr.f32.mxu0 0.0
  %396 = vmatmul.mubr.f32.gmra.mrb[0].mxu0 %v232
  %v397 = vpop.f32.mrb[0].mxu0
  %v398 = vadd.f32 0.0, %v397
  %v399 = vpop.f32.mrb[0].mxu0
  %400 = vmatprep.mubr.f32.mxu0 0.0
  %401 = vmatmul.mubr.f32.gmra.mrb[0].mxu0 %v235
  %v402 = vpop.f32.mrb[0].mxu0
  %v403 = vadd.f32 0.0, %v402
  %v404 = vpop.f32.mrb[0].mxu0
  %405 = vmatprep.mubr.f32.mxu0 0.0
  %406 = vmatmul.mubr.f32.gmra.mrb[0].mxu0 %v238
  %v407 = vpop.f32.mrb[0].mxu0
  %v408 = vadd.f32 0.0, %v407
  %v409 = vpop.f32.mrb[0].mxu0
  %410 = vmatprep.mubr.f32.mxu0 0.0
  %411 = vmatmul.mubr.f32.gmra.mrb[0].mxu0 %v241
  %v412 = vpop.f32.mrb[0].mxu0
  %v413 = vadd.f32 0.0, %v412
  %v414 = vpop.f32.mrb[0].mxu0
  %415 = vmatprep.mubr.f32.mxu0 0.0
  %416 = vmatmul.mubr.f32.gmra.mrb[0].mxu0 %v244
  %v417 = vpop.f32.mrb[0].mxu0
  %v418 = vadd.f32 0.0, %v417
  %v419 = vpop.f32.mrb[0].mxu0
  %420 = vmatprep.mubr.f32.mxu0 0.0
  %421 = vmatmul.mubr.f32.gmra.mrb[0].mxu0 %v247
  %v422 = vpop.f32.mrb[0].mxu0
  %v423 = vadd.f32 0.0, %v422
  %v424 = vpop.f32.mrb[0].mxu0
  %425 = vmatprep.mubr.f32.mxu0 0.0
  %426 = vmatmul.mubr.f32.gmra.mrb[0].mxu0 %v250
  %v427 = vpop.f32.mrb[0].mxu0
  %v428 = vadd.f32 0.0, %v427
  %v429 = vpop.f32.mrb[0].mxu0
  %430 = vmatprep.mubr.f32.mxu0 0.0
  %431 = vmatmul.mubr.f32.gmra.mrb[0].mxu0 %v253
  %v432 = vpop.f32.mrb[0].mxu0
  %v433 = vadd.f32 0.0, %v432
  %v434 = vpop.f32.mrb[0].mxu0
  %435 = vmatprep.mubr.f32.mxu0 0.0
  %436 = vmatmul.mubr.f32.gmra.mrb[0].mxu0 %v256
  %v437 = vpop.f32.mrb[0].mxu0
  %v438 = vadd.f32 0.0, %v437
  %v439 = vpop.f32.mrb[0].mxu0
  %440 = vmatprep.mubr.f32.mxu0 0.0
  %441 = vmatmul.mubr.f32.gmra.mrb[0].mxu0 %v259
  %v442 = vpop.f32.mrb[0].mxu0
  %v443 = vadd.f32 0.0, %v442
  %v444 = vpop.f32.mrb[0].mxu0
  %445 = vmatprep.mubr.f32.mxu0 0.0
  %446 = vmatmul.mubr.f32.gmra.mrb[0].mxu0 %v262
  %v447 = vpop.f32.mrb[0].mxu0
  %v448 = vadd.f32 0.0, %v447
  %v449 = vpop.f32.mrb[0].mxu0
  %450 = vmatprep.mubr.f32.mxu0 0.0
  %451 = vmatmul.mubr.f32.gmra.mrb[0].mxu0 %v265
  %v452 = vpop.f32.mrb[0].mxu0
  %v453 = vadd.f32 0.0, %v452
  %v454 = vpop.f32.mrb[0].mxu0
  %455 = vmatprep.mubr.f32.mxu0 0.0
  %456 = vmatmul.mubr.f32.gmra.mrb[0].mxu0 %v268
  %v457 = vpop.f32.mrb[0].mxu0
  %v458 = vadd.f32 0.0, %v457
  %v459 = vpop.f32.mrb[0].mxu0
  %460 = vmatprep.mubr.f32.mxu0 0.0
  %461 = vmatmul.mubr.f32.gmra.mrb[0].mxu0 %v271
  %v462 = vpop.f32.mrb[0].mxu0
  %v463 = vadd.f32 0.0, %v462
  %v464 = vpop.f32.mrb[0].mxu0
  %465 = vmatprep.mubr.f32.mxu0 0.0
  %466 = vmatmul.mubr.f32.gmra.mrb[0].mxu0 %v274
  %v467 = vpop.f32.mrb[0].mxu0
  %v468 = vadd.f32 0.0, %v467
  %v469 = vpop.f32.mrb[0].mxu0
  %470 = vmatprep.mubr.f32.mxu0 0.0
  %471 = vmatmul.mubr.f32.gmra.mrb[0].mxu0 %v277
  %v472 = vpop.f32.mrb[0].mxu0
  %v473 = vadd.f32 0.0, %v472
  %v474 = vpop.f32.mrb[0].mxu0
  %475 = vmatprep.mubr.f32.mxu0 0.0
  %476 = vmatmul.mubr.f32.gmra.mrb[0].mxu0 %v280
  %v477 = vpop.f32.mrb[0].mxu0
  %v478 = vadd.f32 0.0, %v477
  %v479 = vpop.f32.mrb[0].mxu0
  %480 = vmatprep.mubr.f32.mxu0 0.0
  %481 = vmatmul.mubr.f32.gmra.mrb[0].mxu0 %v283
  %v482 = vpop.f32.mrb[0].mxu0
  %v483 = vadd.f32 0.0, %v482
  %v484 = vpop.f32.mrb[0].mxu0
  %485 = vmatprep.mubr.f32.mxu0 0.0
  %486 = vmatmul.mubr.f32.gmra.mrb[0].mxu0 %v286
  %v487 = vpop.f32.mrb[0].mxu0
  %v488 = vadd.f32 0.0, %v487
  %v489 = vpop.f32.mrb[0].mxu0
  %490 = vmatprep.mubr.f32.mxu0 0.0
  %491 = vmatmul.mubr.f32.gmra.mrb[0].mxu0 %v289
  %v492 = vpop.f32.mrb[0].mxu0
  %v493 = vadd.f32 0.0, %v492
  %v494 = vpop.f32.mrb[0].mxu0
  %495 = vmatprep.mubr.f32.mxu0 0.0
  %496 = vmatmul.mubr.f32.gmra.mrb[0].mxu0 %v292
  %v497 = vpop.f32.mrb[0].mxu0
  %v498 = vadd.f32 0.0, %v497
  %v499 = vpop.f32.mrb[0].mxu0
  %500 = vmatprep.mubr.f32.mxu0 0.0
  %501 = vmatmul.mubr.f32.gmra.mrb[0].mxu0 %v295
  %v502 = vpop.f32.mrb[0].mxu0
  %v503 = vadd.f32 0.0, %v502
  %v504 = vpop.f32.mrb[0].mxu0
  %505 = vmatprep.mubr.f32.mxu0 0.0
  %506 = vmatmul.mubr.f32.gmra.mrb[0].mxu0 %v298
  %v507 = vpop.f32.mrb[0].mxu0
  %v508 = vadd.f32 0.0, %v507
  %v509 = vpop.f32.mrb[0].mxu0
  %510 = vmatprep.mubr.f32.mxu0 0.0
  %511 = vmatmul.mubr.f32.gmra.mrb[0].mxu0 %v301
  %v512 = vpop.f32.mrb[0].mxu0
  %v513 = vadd.f32 0.0, %v512
  %v514 = vpop.f32.mrb[0].mxu0
  %515 = vmatprep.mubr.f32.mxu0 0.0
  %516 = vmatmul.mubr.f32.gmra.mrb[0].mxu0 %v304
  %v517 = vpop.f32.mrb[0].mxu0
  %v518 = vadd.f32 0.0, %v517
  %v519 = vpop.f32.mrb[0].mxu0
  %520 = vmatprep.mubr.f32.mxu0 0.0
  %521 = vmatmul.mubr.f32.gmra.mrb[0].mxu0 %v307
  %v522 = vpop.f32.mrb[0].mxu0
  %v523 = vadd.f32 0.0, %v522
  %v524 = vpop.f32.mrb[0].mxu0
  %525 = vmatprep.mubr.f32.mxu0 0.0
  %526 = vmatmul.mubr.f32.gmra.mrb[0].mxu0 %v310
  %v527 = vpop.f32.mrb[0].mxu0
  %v528 = vadd.f32 0.0, %v527
  %v529 = vpop.f32.mrb[0].mxu0
  %530 = vmatprep.mubr.f32.mxu0 0.0
  %531 = vmatmul.mubr.f32.gmra.mrb[0].mxu0 %v313
  %v532 = vpop.f32.mrb[0].mxu0
  %v533 = vadd.f32 0.0, %v532
  %v534 = vpop.f32.mrb[0].mxu0
  %535 = vmatprep.mubr.f32.mxu0 0.0
  %536 = vmatmul.mubr.f32.gmra.mrb[0].mxu0 %v316
  %v537 = vpop.f32.mrb[0].mxu0
  %v538 = vadd.f32 0.0, %v537
  %v539 = vpop.f32.mrb[0].mxu0
  %540 = vmatprep.mubr.f32.mxu0 0.0
  %541 = vmatmul.mubr.f32.gmra.mrb[0].mxu0 %v319
  %v542 = vpop.f32.mrb[0].mxu0
  %v543 = vadd.f32 0.0, %v542
  %v544 = vpop.f32.mrb[0].mxu0
  %545 = vdwg.mxu0
  %v547 = vsel %vm65, %v157, 0
  %v550 = vsel %vm65, %v158, 0
  %v553 = vsel %vm65, %v159, 0
  %v556 = vsel %vm65, %v160, 0
  %v559 = vsel %vm65, %v161, 0
  %v562 = vsel %vm65, %v162, 0
  %v565 = vsel %vm65, %v163, 0
  %v568 = vsel %vm65, %v164, 0
  %v571 = vsel %vm65, %v165, 0
  %v574 = vsel %vm65, %v166, 0
  %v577 = vsel %vm65, %v167, 0
  %v580 = vsel %vm65, %v168, 0
  %v583 = vsel %vm65, %v169, 0
  %v586 = vsel %vm65, %v170, 0
  %v589 = vsel %vm65, %v171, 0
  %v592 = vsel %vm65, %v172, 0
  %v595 = vsel %vm65, %v173, 0
  %v598 = vsel %vm65, %v174, 0
  %v601 = vsel %vm65, %v175, 0
  %v604 = vsel %vm65, %v176, 0
  %v607 = vsel %vm65, %v177, 0
  %v610 = vsel %vm65, %v178, 0
  %v613 = vsel %vm65, %v179, 0
  %v616 = vsel %vm65, %v180, 0
  %v619 = vsel %vm65, %v181, 0
  %v622 = vsel %vm65, %v182, 0
  %v625 = vsel %vm65, %v183, 0
  %v628 = vsel %vm65, %v184, 0
  %v631 = vsel %vm65, %v185, 0
  %v634 = vsel %vm65, %v186, 0
  %v637 = vsel %vm65, %v187, 0
  %v640 = vsel %vm65, %v188, 0
  %642 = vmatprep.subr.mxu0 0.0
  %643 = vmatpush1.msra.mxu0 %v221
  %644 = vmatprep.subr.mxu0 0.0
  %645 = vmatpush1.msra.mxu0 %v222
  %646 = vmatprep.subr.mxu0 0.0
  %647 = vmatpush1.msra.mxu0 0.0
  %648 = vmatprep.subr.mxu0 0.0
  %649 = vmatpush1.msra.mxu0 0.0
  %650 = vmatprep.subr.mxu0 0.0
  %651 = vmatpush1.msra.mxu0 0.0
  %652 = vmatprep.subr.mxu0 0.0
  %653 = vmatpush1.msra.mxu0 0.0
  %654 = vmatprep.subr.mxu0 0.0
  %655 = vmatpush1.msra.mxu0 0.0
  %656 = vmatprep.subr.mxu0 0.0
  %657 = vmatpush1.msra.mxu0 0.0
  %658 = vmatprep.subr.mxu0 0.0
  %659 = vmatpush1.msra.mxu0 0.0
  %660 = vmatprep.subr.mxu0 0.0
  %661 = vmatpush1.msra.mxu0 0.0
  %662 = vmatprep.subr.mxu0 0.0
  %663 = vmatpush1.msra.mxu0 0.0
  %664 = vmatprep.subr.mxu0 0.0
  %665 = vmatpush1.msra.mxu0 0.0
  %666 = vmatprep.subr.mxu0 0.0
  %667 = vmatpush1.msra.mxu0 0.0
  %668 = vmatprep.subr.mxu0 0.0
  %669 = vmatpush1.msra.mxu0 0.0
  %670 = vmatprep.subr.mxu0 0.0
  %671 = vmatpush1.msra.mxu0 0.0
  %672 = vmatprep.subr.mxu0 0.0
  %673 = vmatpush1.msra.mxu0 0.0
  %674 = vmatprep.subr.mxu0 0.0
  %675 = vmatpush1.msra.mxu0 0.0
  %676 = vmatprep.subr.mxu0 0.0
  %677 = vmatpush1.msra.mxu0 0.0
  %678 = vmatprep.subr.mxu0 0.0
  %679 = vmatpush1.msra.mxu0 0.0
  %680 = vmatprep.subr.mxu0 0.0
  %681 = vmatpush1.msra.mxu0 0.0
  %682 = vmatprep.subr.mxu0 0.0
  %683 = vmatpush1.msra.mxu0 0.0
  %684 = vmatprep.subr.mxu0 0.0
  %685 = vmatpush1.msra.mxu0 0.0
  %686 = vmatprep.subr.mxu0 0.0
  %687 = vmatpush1.msra.mxu0 0.0
  %688 = vmatprep.subr.mxu0 0.0
  %689 = vmatpush1.msra.mxu0 0.0
  %690 = vmatprep.subr.mxu0 0.0
  %691 = vmatpush1.msra.mxu0 0.0
  %692 = vmatprep.subr.mxu0 0.0
  %693 = vmatpush1.msra.mxu0 0.0
  %694 = vmatprep.subr.mxu0 0.0
  %695 = vmatpush1.msra.mxu0 0.0
  %696 = vmatprep.subr.mxu0 0.0
  %697 = vmatpush1.msra.mxu0 0.0
  %698 = vmatprep.subr.mxu0 0.0
  %699 = vmatpush1.msra.mxu0 0.0
  %700 = vmatprep.subr.mxu0 0.0
  %701 = vmatpush1.msra.mxu0 0.0
  %702 = vmatprep.subr.mxu0 0.0
  %703 = vmatpush1.msra.mxu0 0.0
  %704 = vmatprep.subr.mxu0 0.0
  %705 = vmatpush1.msra.mxu0 0.0
  %706 = vmatprep.mubr.f32.mxu0 0.0
  %707 = vmatmul.mubr.f32.gmra.mrb[0].mxu0 %v547
  %v708 = vpop.f32.mrb[0].mxu0
  %v709 = vadd.f32 %v388, %v708
  %v710 = vpop.f32.mrb[0].mxu0
  %711 = vmatprep.mubr.f32.mxu0 0.0
  %712 = vmatmul.mubr.f32.gmra.mrb[0].mxu0 %v550
  %v713 = vpop.f32.mrb[0].mxu0
  %v714 = vadd.f32 %v393, %v713
  %v715 = vpop.f32.mrb[0].mxu0
  %716 = vmatprep.mubr.f32.mxu0 0.0
  %717 = vmatmul.mubr.f32.gmra.mrb[0].mxu0 %v553
  %v718 = vpop.f32.mrb[0].mxu0
  %v719 = vadd.f32 %v398, %v718
  %v720 = vpop.f32.mrb[0].mxu0
  %721 = vmatprep.mubr.f32.mxu0 0.0
  %722 = vmatmul.mubr.f32.gmra.mrb[0].mxu0 %v556
  %v723 = vpop.f32.mrb[0].mxu0
  %v724 = vadd.f32 %v403, %v723
  %v725 = vpop.f32.mrb[0].mxu0
  %726 = vmatprep.mubr.f32.mxu0 0.0
  %727 = vmatmul.mubr.f32.gmra.mrb[0].mxu0 %v559
  %v728 = vpop.f32.mrb[0].mxu0
  %v729 = vadd.f32 %v408, %v728
  %v730 = vpop.f32.mrb[0].mxu0
  %731 = vmatprep.mubr.f32.mxu0 0.0
  %732 = vmatmul.mubr.f32.gmra.mrb[0].mxu0 %v562
  %v733 = vpop.f32.mrb[0].mxu0
  %v734 = vadd.f32 %v413, %v733
  %v735 = vpop.f32.mrb[0].mxu0
  %736 = vmatprep.mubr.f32.mxu0 0.0
  %737 = vmatmul.mubr.f32.gmra.mrb[0].mxu0 %v565
  %v738 = vpop.f32.mrb[0].mxu0
  %v739 = vadd.f32 %v418, %v738
  %v740 = vpop.f32.mrb[0].mxu0
  %741 = vmatprep.mubr.f32.mxu0 0.0
  %742 = vmatmul.mubr.f32.gmra.mrb[0].mxu0 %v568
  %v743 = vpop.f32.mrb[0].mxu0
  %v744 = vadd.f32 %v423, %v743
  %v745 = vpop.f32.mrb[0].mxu0
  %746 = vmatprep.mubr.f32.mxu0 0.0
  %747 = vmatmul.mubr.f32.gmra.mrb[0].mxu0 %v571
  %v748 = vpop.f32.mrb[0].mxu0
  %v749 = vadd.f32 %v428, %v748
  %v750 = vpop.f32.mrb[0].mxu0
  %751 = vmatprep.mubr.f32.mxu0 0.0
  %752 = vmatmul.mubr.f32.gmra.mrb[0].mxu0 %v574
  %v753 = vpop.f32.mrb[0].mxu0
  %v754 = vadd.f32 %v433, %v753
  %v755 = vpop.f32.mrb[0].mxu0
  %756 = vmatprep.mubr.f32.mxu0 0.0
  %757 = vmatmul.mubr.f32.gmra.mrb[0].mxu0 %v577
  %v758 = vpop.f32.mrb[0].mxu0
  %v759 = vadd.f32 %v438, %v758
  %v760 = vpop.f32.mrb[0].mxu0
  %761 = vmatprep.mubr.f32.mxu0 0.0
  %762 = vmatmul.mubr.f32.gmra.mrb[0].mxu0 %v580
  %v763 = vpop.f32.mrb[0].mxu0
  %v764 = vadd.f32 %v443, %v763
  %v765 = vpop.f32.mrb[0].mxu0
  %766 = vmatprep.mubr.f32.mxu0 0.0
  %767 = vmatmul.mubr.f32.gmra.mrb[0].mxu0 %v583
  %v768 = vpop.f32.mrb[0].mxu0
  %v769 = vadd.f32 %v448, %v768
  %v770 = vpop.f32.mrb[0].mxu0
  %771 = vmatprep.mubr.f32.mxu0 0.0
  %772 = vmatmul.mubr.f32.gmra.mrb[0].mxu0 %v586
  %v773 = vpop.f32.mrb[0].mxu0
  %v774 = vadd.f32 %v453, %v773
  %v775 = vpop.f32.mrb[0].mxu0
  %776 = vmatprep.mubr.f32.mxu0 0.0
  %777 = vmatmul.mubr.f32.gmra.mrb[0].mxu0 %v589
  %v778 = vpop.f32.mrb[0].mxu0
  %v779 = vadd.f32 %v458, %v778
  %v780 = vpop.f32.mrb[0].mxu0
  %781 = vmatprep.mubr.f32.mxu0 0.0
  %782 = vmatmul.mubr.f32.gmra.mrb[0].mxu0 %v592
  %v783 = vpop.f32.mrb[0].mxu0
  %v784 = vadd.f32 %v463, %v783
  %v785 = vpop.f32.mrb[0].mxu0
  %786 = vmatprep.mubr.f32.mxu0 0.0
  %787 = vmatmul.mubr.f32.gmra.mrb[0].mxu0 %v595
  %v788 = vpop.f32.mrb[0].mxu0
  %v789 = vadd.f32 %v468, %v788
  %v790 = vpop.f32.mrb[0].mxu0
  %791 = vmatprep.mubr.f32.mxu0 0.0
  %792 = vmatmul.mubr.f32.gmra.mrb[0].mxu0 %v598
  %v793 = vpop.f32.mrb[0].mxu0
  %v794 = vadd.f32 %v473, %v793
  %v795 = vpop.f32.mrb[0].mxu0
  %796 = vmatprep.mubr.f32.mxu0 0.0
  %797 = vmatmul.mubr.f32.gmra.mrb[0].mxu0 %v601
  %v798 = vpop.f32.mrb[0].mxu0
  %v799 = vadd.f32 %v478, %v798
  %v800 = vpop.f32.mrb[0].mxu0
  %801 = vmatprep.mubr.f32.mxu0 0.0
  %802 = vmatmul.mubr.f32.gmra.mrb[0].mxu0 %v604
  %v803 = vpop.f32.mrb[0].mxu0
  %v804 = vadd.f32 %v483, %v803
  %v805 = vpop.f32.mrb[0].mxu0
  %806 = vmatprep.mubr.f32.mxu0 0.0
  %807 = vmatmul.mubr.f32.gmra.mrb[0].mxu0 %v607
  %v808 = vpop.f32.mrb[0].mxu0
  %v809 = vadd.f32 %v488, %v808
  %v810 = vpop.f32.mrb[0].mxu0
  %811 = vmatprep.mubr.f32.mxu0 0.0
  %812 = vmatmul.mubr.f32.gmra.mrb[0].mxu0 %v610
  %v813 = vpop.f32.mrb[0].mxu0
  %v814 = vadd.f32 %v493, %v813
  %v815 = vpop.f32.mrb[0].mxu0
  %816 = vmatprep.mubr.f32.mxu0 0.0
  %817 = vmatmul.mubr.f32.gmra.mrb[0].mxu0 %v613
  %v818 = vpop.f32.mrb[0].mxu0
  %v819 = vadd.f32 %v498, %v818
  %v820 = vpop.f32.mrb[0].mxu0
  %821 = vmatprep.mubr.f32.mxu0 0.0
  %822 = vmatmul.mubr.f32.gmra.mrb[0].mxu0 %v616
  %v823 = vpop.f32.mrb[0].mxu0
  %v824 = vadd.f32 %v503, %v823
  %v825 = vpop.f32.mrb[0].mxu0
  %826 = vmatprep.mubr.f32.mxu0 0.0
  %827 = vmatmul.mubr.f32.gmra.mrb[0].mxu0 %v619
  %v828 = vpop.f32.mrb[0].mxu0
  %v829 = vadd.f32 %v508, %v828
  %v830 = vpop.f32.mrb[0].mxu0
  %831 = vmatprep.mubr.f32.mxu0 0.0
  %832 = vmatmul.mubr.f32.gmra.mrb[0].mxu0 %v622
  %v833 = vpop.f32.mrb[0].mxu0
  %v834 = vadd.f32 %v513, %v833
  %v835 = vpop.f32.mrb[0].mxu0
  %836 = vmatprep.mubr.f32.mxu0 0.0
  %837 = vmatmul.mubr.f32.gmra.mrb[0].mxu0 %v625
  %v838 = vpop.f32.mrb[0].mxu0
  %v839 = vadd.f32 %v518, %v838
  %v840 = vpop.f32.mrb[0].mxu0
  %841 = vmatprep.mubr.f32.mxu0 0.0
  %842 = vmatmul.mubr.f32.gmra.mrb[0].mxu0 %v628
  %v843 = vpop.f32.mrb[0].mxu0
  %v844 = vadd.f32 %v523, %v843
  %v845 = vpop.f32.mrb[0].mxu0
  %846 = vmatprep.mubr.f32.mxu0 0.0
  %847 = vmatmul.mubr.f32.gmra.mrb[0].mxu0 %v631
  %v848 = vpop.f32.mrb[0].mxu0
  %v849 = vadd.f32 %v528, %v848
  %v850 = vpop.f32.mrb[0].mxu0
  %851 = vmatprep.mubr.f32.mxu0 0.0
  %852 = vmatmul.mubr.f32.gmra.mrb[0].mxu0 %v634
  %v853 = vpop.f32.mrb[0].mxu0
  %v854 = vadd.f32 %v533, %v853
  %v855 = vpop.f32.mrb[0].mxu0
  %856 = vmatprep.mubr.f32.mxu0 0.0
  %857 = vmatmul.mubr.f32.gmra.mrb[0].mxu0 %v637
  %v858 = vpop.f32.mrb[0].mxu0
  %v859 = vadd.f32 %v538, %v858
  %v860 = vpop.f32.mrb[0].mxu0
  %861 = vmatprep.mubr.f32.mxu0 0.0
  %862 = vmatmul.mubr.f32.gmra.mrb[0].mxu0 %v640
  %v863 = vpop.f32.mrb[0].mxu0
  %v864 = vadd.f32 %v543, %v863
  %v865 = vpop.f32.mrb[0].mxu0
  %866 = vdwg.mxu0
  %v867 = vld [vmem:[%s3] sm:$0x1]
  %v869 = vlaneseq
  %v870 = vshrl.u32 %v869, 7
  %v871 = vsub.s32 0, %v870
  %v872 = vrot.slane %v867, %v871
  %v874 = vadd.f32 %v709, %v872
  %v875 = vadd.f32 %v714, %v872
  %v876 = vadd.f32 %v719, %v872
  %v877 = vadd.f32 %v724, %v872
  %v878 = vadd.f32 %v729, %v872
  %v879 = vadd.f32 %v734, %v872
  %v880 = vadd.f32 %v739, %v872
  %v881 = vadd.f32 %v744, %v872
  %v882 = vadd.f32 %v749, %v872
  %v883 = vadd.f32 %v754, %v872
  %v884 = vadd.f32 %v759, %v872
  %v885 = vadd.f32 %v764, %v872
  %v886 = vadd.f32 %v769, %v872
  %v887 = vadd.f32 %v774, %v872
  %v888 = vadd.f32 %v779, %v872
  %v889 = vadd.f32 %v784, %v872
  %v890 = vadd.f32 %v789, %v872
  %v891 = vadd.f32 %v794, %v872
  %v892 = vadd.f32 %v799, %v872
  %v893 = vadd.f32 %v804, %v872
  %v894 = vadd.f32 %v809, %v872
  %v895 = vadd.f32 %v814, %v872
  %v896 = vadd.f32 %v819, %v872
  %v897 = vadd.f32 %v824, %v872
  %v898 = vadd.f32 %v829, %v872
  %v899 = vadd.f32 %v834, %v872
  %v900 = vadd.f32 %v839, %v872
  %v901 = vadd.f32 %v844, %v872
  %v902 = vadd.f32 %v849, %v872
  %v903 = vadd.f32 %v854, %v872
  %v904 = vadd.f32 %v859, %v872
  %v905 = vadd.f32 %v864, %v872
  %vm906 = vcmask 785408
  %907 = vst.msk [vmem:[#allocation3] sm:$0xff] %vm906, %v874
  %908 = vst.msk [vmem:[#allocation3 + $0x8] sm:$0xff] %vm906, %v875
  %909 = vst.msk [vmem:[#allocation3 + $0x10] sm:$0xff] %vm906, %v876
  %910 = vst.msk [vmem:[#allocation3 + $0x18] sm:$0xff] %vm906, %v877
  %911 = vst.msk [vmem:[#allocation3 + $0x20] sm:$0xff] %vm906, %v878
  %912 = vst.msk [vmem:[#allocation3 + $0x28] sm:$0xff] %vm906, %v879
  %913 = vst.msk [vmem:[#allocation3 + $0x30] sm:$0xff] %vm906, %v880
  %914 = vst.msk [vmem:[#allocation3 + $0x38] sm:$0xff] %vm906, %v881
  %915 = vst.msk [vmem:[#allocation3 + $0x40] sm:$0xff] %vm906, %v882
  %916 = vst.msk [vmem:[#allocation3 + $0x48] sm:$0xff] %vm906, %v883
  %917 = vst.msk [vmem:[#allocation3 + $0x50] sm:$0xff] %vm906, %v884
  %918 = vst.msk [vmem:[#allocation3 + $0x58] sm:$0xff] %vm906, %v885
  %919 = vst.msk [vmem:[#allocation3 + $0x60] sm:$0xff] %vm906, %v886
  %920 = vst.msk [vmem:[#allocation3 + $0x68] sm:$0xff] %vm906, %v887
  %921 = vst.msk [vmem:[#allocation3 + $0x70] sm:$0xff] %vm906, %v888
  %922 = vst.msk [vmem:[#allocation3 + $0x78] sm:$0xff] %vm906, %v889
  %923 = vst.msk [vmem:[#allocation3 + $0x80] sm:$0xff] %vm906, %v890
  %924 = vst.msk [vmem:[#allocation3 + $0x88] sm:$0xff] %vm906, %v891
  %925 = vst.msk [vmem:[#allocation3 + $0x90] sm:$0xff] %vm906, %v892
  %926 = vst.msk [vmem:[#allocation3 + $0x98] sm:$0xff] %vm906, %v893
  %927 = vst.msk [vmem:[#allocation3 + $0xa0] sm:$0xff] %vm906, %v894
  %928 = vst.msk [vmem:[#allocation3 + $0xa8] sm:$0xff] %vm906, %v895
  %929 = vst.msk [vmem:[#allocation3 + $0xb0] sm:$0xff] %vm906, %v896
  %930 = vst.msk [vmem:[#allocation3 + $0xb8] sm:$0xff] %vm906, %v897
  %931 = vst.msk [vmem:[#allocation3 + $0xc0] sm:$0xff] %vm906, %v898
  %932 = vst.msk [vmem:[#allocation3 + $0xc8] sm:$0xff] %vm906, %v899
  %933 = vst.msk [vmem:[#allocation3 + $0xd0] sm:$0xff] %vm906, %v900
  %934 = vst.msk [vmem:[#allocation3 + $0xd8] sm:$0xff] %vm906, %v901
  %935 = vst.msk [vmem:[#allocation3 + $0xe0] sm:$0xff] %vm906, %v902
  %936 = vst.msk [vmem:[#allocation3 + $0xe8] sm:$0xff] %vm906, %v903
  %937 = vst.msk [vmem:[#allocation3 + $0xf0] sm:$0xff] %vm906, %v904
  %938 = vst.msk [vmem:[#allocation3 + $0xf8] sm:$0xff] %vm906, %v905
  %v939 = vld [vmem:[%s4] sm:$0xf]
  %v940 = vld [vmem:[%s4 + $0x4] sm:$0xf]
  %v941 = vld [vmem:[%s4 + $0x8] sm:$0xf]
  %v942 = vld [vmem:[%s4 + $0xc] sm:$0xf]
  %v943 = vld [vmem:[%s5] sm:$0x1]
  %v944 = vld [vmem:[#allocation3] sm:$0xff]
  %v945 = vld [vmem:[#allocation3 + $0x8] sm:$0xff]
  %v950 = vunpack.c.l.b16 %v939
  %v951 = vunpack.c.l.b16 %v940
  %v952 = vunpack.c.l.b16 %v941
  %v953 = vunpack.c.l.b16 %v942
  %v954 = vpack.c.b16 %v951, %v950
  %v955 = vpack.c.b16 %v953, %v952
  %vm958 = vcmask 261120
  %v960 = vsel %vm958, 0, 0
  %962 = vmatprep.subr.bf16.mxu0 0
  %963 = vmatpush1.bf16.msra.mxu0 %v954
  %964 = vmatprep.subr.bf16.mxu0 0
  %965 = vmatpush1.bf16.msra.mxu0 %v955
  %966 = vmatprep.subr.bf16.mxu0 0
  %967 = vmatpush1.bf16.msra.mxu0 0
  %968 = vmatprep.subr.bf16.mxu0 0
  %969 = vmatpush1.bf16.msra.mxu0 0
  %970 = vmatprep.subr.bf16.mxu0 0
  %971 = vmatpush1.bf16.msra.mxu0 0
  %972 = vmatprep.subr.bf16.mxu0 0
  %973 = vmatpush1.bf16.msra.mxu0 0
  %974 = vmatprep.subr.bf16.mxu0 0
  %975 = vmatpush1.bf16.msra.mxu0 0
  %976 = vmatprep.subr.bf16.mxu0 0
  %977 = vmatpush1.bf16.msra.mxu0 0
  %978 = vmatprep.subr.bf16.mxu0 0
  %979 = vmatpush1.bf16.msra.mxu0 0
  %980 = vmatprep.subr.bf16.mxu0 0
  %981 = vmatpush1.bf16.msra.mxu0 0
  %982 = vmatprep.subr.bf16.mxu0 0
  %983 = vmatpush1.bf16.msra.mxu0 0
  %984 = vmatprep.subr.bf16.mxu0 0
  %985 = vmatpush1.bf16.msra.mxu0 0
  %986 = vmatprep.subr.bf16.mxu0 0
  %987 = vmatpush1.bf16.msra.mxu0 0
  %988 = vmatprep.subr.bf16.mxu0 0
  %989 = vmatpush1.bf16.msra.mxu0 0
  %990 = vmatprep.subr.bf16.mxu0 0
  %991 = vmatpush1.bf16.msra.mxu0 0
  %992 = vmatprep.subr.bf16.mxu0 0
  %993 = vmatpush1.bf16.msra.mxu0 0
  %994 = vmatprep.mubr.bf16.mxu0 0
  %995 = vmatmul.mubr.bf16.gmra.mrb[0].mxu0 %v960
  %v996 = vpop.f32.mrb[0].mxu0
  %v997 = vadd.f32 0.0, %v996
  %v998 = vpop.f32.mrb[0].mxu0
  %v999 = vpop.f32.mrb[0].mxu0
  %v1000 = vadd.f32 0.0, %v999
  %v1001 = vpop.f32.mrb[0].mxu0
  %1002 = vdwg.mxu0
  %v1003 = vadd.f32 %v944, %v997
  %v1004 = vadd.f32 %v945, %v1000
  %v1005 = vxor.u32 %v1003, 2147483648
  %v1006 = vxor.u32 %v1004, 2147483648
  %v1007 = vmul.f32 %v1005, 1.442695
  %v1008 = vpow.pop %v1007
  %v1009 = vmul.f32 %v1006, 1.442695
  %v1010 = vpow.pop %v1009
  %v1011 = vadd.f32 %v1008, 1.0
  %v1012 = vadd.f32 %v1010, 1.0
  %v1013 = vrcp.pop %v1011
  %v1014 = vmul.f32 1.0, %v1013
  %v1015 = vrcp.pop %v1012
  %v1016 = vmul.f32 1.0, %v1015
  %v1018 = vlaneseq
  %v1019 = vshrl.u32 %v1018, 7
  %v1020 = vsub.s32 0, %v1019
  %v1021 = vrot.slane %v943, %v1020
  %1022 = vrot.lane.b32.xlu0 %v1021, 64
  %v1023 = vpop.permute.xlu0 %1022
  %v1025 = vadd.f32 %v997, %v1023
  %v1026 = vadd.f32 %v1000, %v1023
  %1029 = vrot.lane.b32.xlu0 %v1025, 64
  %v1030 = vpop.permute.xlu0 %1029
  %1031 = vrot.lane.b32.xlu0 %v1026, 64
  %v1032 = vpop.permute.xlu0 %1031
  %v1035 = vmul.f32 %v1014, %v1030
  %v1036 = vmul.f32 %v1016, %v1032
  %1039 = vrot.lane.b32.xlu0 %v1035, 64
  %v1040 = vpop.permute.xlu0 %1039
  %1041 = vrot.lane.b32.xlu0 %v1036, 64
  %v1042 = vpop.permute.xlu0 %1041
  %v1045 = vadd.f32 %v944, %v1040
  %v1046 = vadd.f32 %v945, %v1042
  %v1047 = vtanh.pop %v1045
  %v1048 = vtanh.pop %v1046
  %v1049 = vsub.f32 0.0, %v1047
  %v1050 = vsub.f32 0.0, %v1048
  %1053 = vrot.lane.b32.xlu0 %v1049, 96
  %v1054 = vpop.permute.xlu0 %1053
  %1055 = vrot.lane.b32.xlu0 %v1050, 96
  %v1056 = vpop.permute.xlu0 %1055
  %v1059 = vmul.f32 %v1014, %v1054
  %v1060 = vmul.f32 %v1016, %v1056
  %1063 = vrot.lane.b32.xlu0 %v1059, 32
  %v1064 = vpop.permute.xlu0 %1063
  %1065 = vrot.lane.b32.xlu0 %v1060, 32
  %v1066 = vpop.permute.xlu0 %1065
  %v1069 = vadd.f32 %v1047, %v1064
  %v1070 = vadd.f32 %v1048, %v1066
  %1073 = vrot.lane.b32.xlu0 %v1069, 64
  %v1074 = vpop.permute.xlu0 %1073
  %1075 = vrot.lane.b32.xlu0 %v1070, 64
  %v1076 = vpop.permute.xlu0 %1075
  %1079 = vst.msk [vmem:[#allocation4] sm:$0xff] %vm65, %v1074
  %1080 = vst.msk [vmem:[#allocation4 + $0x8] sm:$0xff] %vm65, %v1076
  %vm1081 = vcmask 261248
  %1082 = vst.msk [vmem:[#allocation4 + $0xf0] sm:$0xff] %vm1081, %v1074
  %1083 = vst.msk [vmem:[#allocation4 + $0xf8] sm:$0xff] %vm1081, %v1076
  %v1084 = vld [vmem:[#allocation3 + $0x10] sm:$0xff]
  %v1085 = vld [vmem:[#allocation3 + $0x18] sm:$0xff]
  %v1086 = vpack.c.bf16 %v1070, %v1069
  %1088 = vrot.lane.b32.xlu0 %v1086, 64
  %v1089 = vpop.permute.xlu0 %1088
  %v1091 = vsel %vm958, %v1089, 0
  %1093 = vmatprep.subr.bf16.mxu0 0
  %1094 = vmatpush1.bf16.msra.mxu0 %v954
  %1095 = vmatprep.subr.bf16.mxu0 0
  %1096 = vmatpush1.bf16.msra.mxu0 %v955
  %1097 = vmatprep.subr.bf16.mxu0 0
  %1098 = vmatpush1.bf16.msra.mxu0 0
  %1099 = vmatprep.subr.bf16.mxu0 0
  %1100 = vmatpush1.bf16.msra.mxu0 0
  %1101 = vmatprep.subr.bf16.mxu0 0
  %1102 = vmatpush1.bf16.msra.mxu0 0
  %1103 = vmatprep.subr.bf16.mxu0 0
  %1104 = vmatpush1.bf16.msra.mxu0 0
  %1105 = vmatprep.subr.bf16.mxu0 0
  %1106 = vmatpush1.bf16.msra.mxu0 0
  %1107 = vmatprep.subr.bf16.mxu0 0
  %1108 = vmatpush1.bf16.msra.mxu0 0
  %1109 = vmatprep.subr.bf16.mxu0 0
  %1110 = vmatpush1.bf16.msra.mxu0 0
  %1111 = vmatprep.subr.bf16.mxu0 0
  %1112 = vmatpush1.bf16.msra.mxu0 0
  %1113 = vmatprep.subr.bf16.mxu0 0
  %1114 = vmatpush1.bf16.msra.mxu0 0
  %1115 = vmatprep.subr.bf16.mxu0 0
  %1116 = vmatpush1.bf16.msra.mxu0 0
  %1117 = vmatprep.subr.bf16.mxu0 0
  %1118 = vmatpush1.bf16.msra.mxu0 0
  %1119 = vmatprep.subr.bf16.mxu0 0
  %1120 = vmatpush1.bf16.msra.mxu0 0
  %1121 = vmatprep.subr.bf16.mxu0 0
  %1122 = vmatpush1.bf16.msra.mxu0 0
  %1123 = vmatprep.subr.bf16.mxu0 0
  %1124 = vmatpush1.bf16.msra.mxu0 0
  %1125 = vmatprep.mubr.bf16.mxu0 0
  %1126 = vmatmul.mubr.bf16.gmra.mrb[0].mxu0 %v1091
  %v1127 = vpop.f32.mrb[0].mxu0
  %v1128 = vadd.f32 0.0, %v1127
  %v1129 = vpop.f32.mrb[0].mxu0
  %v1130 = vpop.f32.mrb[0].mxu0
  %v1131 = vadd.f32 0.0, %v1130
  %v1132 = vpop.f32.mrb[0].mxu0
  %1133 = vdwg.mxu0
  %v1134 = vadd.f32 %v1084, %v1128
  %v1135 = vadd.f32 %v1085, %v1131
  %v1136 = vxor.u32 %v1134, 2147483648
  %v1137 = vxor.u32 %v1135, 2147483648
  %v1138 = vmul.f32 %v1136, 1.442695
  %v1139 = vpow.pop %v1138
  %v1140 = vmul.f32 %v1137, 1.442695
  %v1141 = vpow.pop %v1140
  %v1142 = vadd.f32 %v1139, 1.0
  %v1143 = vadd.f32 %v1141, 1.0
  %v1144 = vrcp.pop %v1142
  %v1145 = vmul.f32 1.0, %v1144
  %v1146 = vrcp.pop %v1143
  %v1147 = vmul.f32 1.0, %v1146
  %v1148 = vadd.f32 %v1128, %v1023
  %v1149 = vadd.f32 %v1131, %v1023
  %1152 = vrot.lane.b32.xlu0 %v1148, 64
  %v1153 = vpop.permute.xlu0 %1152
  %1154 = vrot.lane.b32.xlu0 %v1149, 64
  %v1155 = vpop.permute.xlu0 %1154
  %v1158 = vmul.f32 %v1145, %v1153
  %v1159 = vmul.f32 %v1147, %v1155
  %1162 = vrot.lane.b32.xlu0 %v1158, 64
  %v1163 = vpop.permute.xlu0 %1162
  %1164 = vrot.lane.b32.xlu0 %v1159, 64
  %v1165 = vpop.permute.xlu0 %1164
  %v1168 = vadd.f32 %v1084, %v1163
  %v1169 = vadd.f32 %v1085, %v1165
  %v1170 = vtanh.pop %v1168
  %v1171 = vtanh.pop %v1169
  %v1172 = vsub.f32 %v1069, %v1170
  %v1173 = vsub.f32 %v1070, %v1171
  %1176 = vrot.lane.b32.xlu0 %v1172, 96
  %v1177 = vpop.permute.xlu0 %1176
  %1178 = vrot.lane.b32.xlu0 %v1173, 96
  %v1179 = vpop.permute.xlu0 %1178
  %v1182 = vmul.f32 %v1145, %v1177
  %v1183 = vmul.f32 %v1147, %v1179
  %1186 = vrot.lane.b32.xlu0 %v1182, 32
  %v1187 = vpop.permute.xlu0 %1186
  %1188 = vrot.lane.b32.xlu0 %v1183, 32
  %v1189 = vpop.permute.xlu0 %1188
  %v1192 = vadd.f32 %v1170, %v1187
  %v1193 = vadd.f32 %v1171, %v1189
  %1196 = vrot.lane.b32.xlu0 %v1192, 64
  %v1197 = vpop.permute.xlu0 %1196
  %1198 = vrot.lane.b32.xlu0 %v1193, 64
  %v1199 = vpop.permute.xlu0 %1198
  %1202 = vst.msk [vmem:[#allocation4 + $0x10] sm:$0xff] %vm65, %v1197
  %1203 = vst.msk [vmem:[#allocation4 + $0x18] sm:$0xff] %vm65, %v1199
  %1204 = vst.msk [vmem:[#allocation4 + $0xe0] sm:$0xff] %vm1081, %v1197
  %1205 = vst.msk [vmem:[#allocation4 + $0xe8] sm:$0xff] %vm1081, %v1199
  %v1206 = vld [vmem:[#allocation3 + $0x20] sm:$0xff]
  %v1207 = vld [vmem:[#allocation3 + $0x28] sm:$0xff]
  %v1208 = vpack.c.bf16 %v1193, %v1192
  %1210 = vrot.lane.b32.xlu0 %v1208, 64
  %v1211 = vpop.permute.xlu0 %1210
  %v1213 = vsel %vm958, %v1211, 0
  %1215 = vmatprep.subr.bf16.mxu0 0
  %1216 = vmatpush1.bf16.msra.mxu0 %v954
  %1217 = vmatprep.subr.bf16.mxu0 0
  %1218 = vmatpush1.bf16.msra.mxu0 %v955
  %1219 = vmatprep.subr.bf16.mxu0 0
  %1220 = vmatpush1.bf16.msra.mxu0 0
  %1221 = vmatprep.subr.bf16.mxu0 0
  %1222 = vmatpush1.bf16.msra.mxu0 0
  %1223 = vmatprep.subr.bf16.mxu0 0
  %1224 = vmatpush1.bf16.msra.mxu0 0
  %1225 = vmatprep.subr.bf16.mxu0 0
  %1226 = vmatpush1.bf16.msra.mxu0 0
  %1227 = vmatprep.subr.bf16.mxu0 0
  %1228 = vmatpush1.bf16.msra.mxu0 0
  %1229 = vmatprep.subr.bf16.mxu0 0
  %1230 = vmatpush1.bf16.msra.mxu0 0
  %1231 = vmatprep.subr.bf16.mxu0 0
  %1232 = vmatpush1.bf16.msra.mxu0 0
  %1233 = vmatprep.subr.bf16.mxu0 0
  %1234 = vmatpush1.bf16.msra.mxu0 0
  %1235 = vmatprep.subr.bf16.mxu0 0
  %1236 = vmatpush1.bf16.msra.mxu0 0
  %1237 = vmatprep.subr.bf16.mxu0 0
  %1238 = vmatpush1.bf16.msra.mxu0 0
  %1239 = vmatprep.subr.bf16.mxu0 0
  %1240 = vmatpush1.bf16.msra.mxu0 0
  %1241 = vmatprep.subr.bf16.mxu0 0
  %1242 = vmatpush1.bf16.msra.mxu0 0
  %1243 = vmatprep.subr.bf16.mxu0 0
  %1244 = vmatpush1.bf16.msra.mxu0 0
  %1245 = vmatprep.subr.bf16.mxu0 0
  %1246 = vmatpush1.bf16.msra.mxu0 0
  %1247 = vmatprep.mubr.bf16.mxu0 0
  %1248 = vmatmul.mubr.bf16.gmra.mrb[0].mxu0 %v1213
  %v1249 = vpop.f32.mrb[0].mxu0
  %v1250 = vadd.f32 0.0, %v1249
  %v1251 = vpop.f32.mrb[0].mxu0
  %v1252 = vpop.f32.mrb[0].mxu0
  %v1253 = vadd.f32 0.0, %v1252
  %v1254 = vpop.f32.mrb[0].mxu0
  %1255 = vdwg.mxu0
  %v1256 = vadd.f32 %v1206, %v1250
  %v1257 = vadd.f32 %v1207, %v1253
  %v1258 = vxor.u32 %v1256, 2147483648
  %v1259 = vxor.u32 %v1257, 2147483648
  %v1260 = vmul.f32 %v1258, 1.442695
  %v1261 = vpow.pop %v1260
  %v1262 = vmul.f32 %v1259, 1.442695
  %v1263 = vpow.pop %v1262
  %v1264 = vadd.f32 %v1261, 1.0
  %v1265 = vadd.f32 %v1263, 1.0
  %v1266 = vrcp.pop %v1264
  %v1267 = vmul.f32 1.0, %v1266
  %v1268 = vrcp.pop %v1265
  %v1269 = vmul.f32 1.0, %v1268
  %v1270 = vadd.f32 %v1250, %v1023
  %v1271 = vadd.f32 %v1253, %v1023
  %1274 = vrot.lane.b32.xlu0 %v1270, 64
  %v1275 = vpop.permute.xlu0 %1274
  %1276 = vrot.lane.b32.xlu0 %v1271, 64
  %v1277 = vpop.permute.xlu0 %1276
  %v1280 = vmul.f32 %v1267, %v1275
  %v1281 = vmul.f32 %v1269, %v1277
  %1284 = vrot.lane.b32.xlu0 %v1280, 64
  %v1285 = vpop.permute.xlu0 %1284
  %1286 = vrot.lane.b32.xlu0 %v1281, 64
  %v1287 = vpop.permute.xlu0 %1286
  %v1290 = vadd.f32 %v1206, %v1285
  %v1291 = vadd.f32 %v1207, %v1287
  %v1292 = vtanh.pop %v1290
  %v1293 = vtanh.pop %v1291
  %v1294 = vsub.f32 %v1192, %v1292
  %v1295 = vsub.f32 %v1193, %v1293
  %1298 = vrot.lane.b32.xlu0 %v1294, 96
  %v1299 = vpop.permute.xlu0 %1298
  %1300 = vrot.lane.b32.xlu0 %v1295, 96
  %v1301 = vpop.permute.xlu0 %1300
  %v1304 = vmul.f32 %v1267, %v1299
  %v1305 = vmul.f32 %v1269, %v1301
  %1308 = vrot.lane.b32.xlu0 %v1304, 32
  %v1309 = vpop.permute.xlu0 %1308
  %1310 = vrot.lane.b32.xlu0 %v1305, 32
  %v1311 = vpop.permute.xlu0 %1310
  %v1314 = vadd.f32 %v1292, %v1309
  %v1315 = vadd.f32 %v1293, %v1311
  %1318 = vrot.lane.b32.xlu0 %v1314, 64
  %v1319 = vpop.permute.xlu0 %1318
  %1320 = vrot.lane.b32.xlu0 %v1315, 64
  %v1321 = vpop.permute.xlu0 %1320
  %1324 = vst.msk [vmem:[#allocation4 + $0x20] sm:$0xff] %vm65, %v1319
  %1325 = vst.msk [vmem:[#allocation4 + $0x28] sm:$0xff] %vm65, %v1321
  %1326 = vst.msk [vmem:[#allocation4 + $0xd0] sm:$0xff] %vm1081, %v1319
  %1327 = vst.msk [vmem:[#allocation4 + $0xd8] sm:$0xff] %vm1081, %v1321
  %v1328 = vld [vmem:[#allocation3 + $0x30] sm:$0xff]
  %v1329 = vld [vmem:[#allocation3 + $0x38] sm:$0xff]
  %v1330 = vpack.c.bf16 %v1315, %v1314
  %1332 = vrot.lane.b32.xlu0 %v1330, 64
  %v1333 = vpop.permute.xlu0 %1332
  %v1335 = vsel %vm958, %v1333, 0
  %1337 = vmatprep.subr.bf16.mxu0 0
  %1338 = vmatpush1.bf16.msra.mxu0 %v954
  %1339 = vmatprep.subr.bf16.mxu0 0
  %1340 = vmatpush1.bf16.msra.mxu0 %v955
  %1341 = vmatprep.subr.bf16.mxu0 0
  %1342 = vmatpush1.bf16.msra.mxu0 0
  %1343 = vmatprep.subr.bf16.mxu0 0
  %1344 = vmatpush1.bf16.msra.mxu0 0
  %1345 = vmatprep.subr.bf16.mxu0 0
  %1346 = vmatpush1.bf16.msra.mxu0 0
  %1347 = vmatprep.subr.bf16.mxu0 0
  %1348 = vmatpush1.bf16.msra.mxu0 0
  %1349 = vmatprep.subr.bf16.mxu0 0
  %1350 = vmatpush1.bf16.msra.mxu0 0
  %1351 = vmatprep.subr.bf16.mxu0 0
  %1352 = vmatpush1.bf16.msra.mxu0 0
  %1353 = vmatprep.subr.bf16.mxu0 0
  %1354 = vmatpush1.bf16.msra.mxu0 0
  %1355 = vmatprep.subr.bf16.mxu0 0
  %1356 = vmatpush1.bf16.msra.mxu0 0
  %1357 = vmatprep.subr.bf16.mxu0 0
  %1358 = vmatpush1.bf16.msra.mxu0 0
  %1359 = vmatprep.subr.bf16.mxu0 0
  %1360 = vmatpush1.bf16.msra.mxu0 0
  %1361 = vmatprep.subr.bf16.mxu0 0
  %1362 = vmatpush1.bf16.msra.mxu0 0
  %1363 = vmatprep.subr.bf16.mxu0 0
  %1364 = vmatpush1.bf16.msra.mxu0 0
  %1365 = vmatprep.subr.bf16.mxu0 0
  %1366 = vmatpush1.bf16.msra.mxu0 0
  %1367 = vmatprep.subr.bf16.mxu0 0
  %1368 = vmatpush1.bf16.msra.mxu0 0
  %1369 = vmatprep.mubr.bf16.mxu0 0
  %1370 = vmatmul.mubr.bf16.gmra.mrb[0].mxu0 %v1335
  %v1371 = vpop.f32.mrb[0].mxu0
  %v1372 = vadd.f32 0.0, %v1371
  %v1373 = vpop.f32.mrb[0].mxu0
  %v1374 = vpop.f32.mrb[0].mxu0
  %v1375 = vadd.f32 0.0, %v1374
  %v1376 = vpop.f32.mrb[0].mxu0
  %1377 = vdwg.mxu0
  %v1378 = vadd.f32 %v1328, %v1372
  %v1379 = vadd.f32 %v1329, %v1375
  %v1380 = vxor.u32 %v1378, 2147483648
  %v1381 = vxor.u32 %v1379, 2147483648
  %v1382 = vmul.f32 %v1380, 1.442695
  %v1383 = vpow.pop %v1382
  %v1384 = vmul.f32 %v1381, 1.442695
  %v1385 = vpow.pop %v1384
  %v1386 = vadd.f32 %v1383, 1.0
  %v1387 = vadd.f32 %v1385, 1.0
  %v1388 = vrcp.pop %v1386
  %v1389 = vmul.f32 1.0, %v1388
  %v1390 = vrcp.pop %v1387
  %v1391 = vmul.f32 1.0, %v1390
  %v1392 = vadd.f32 %v1372, %v1023
  %v1393 = vadd.f32 %v1375, %v1023
  %1396 = vrot.lane.b32.xlu0 %v1392, 64
  %v1397 = vpop.permute.xlu0 %1396
  %1398 = vrot.lane.b32.xlu0 %v1393, 64
  %v1399 = vpop.permute.xlu0 %1398
  %v1402 = vmul.f32 %v1389, %v1397
  %v1403 = vmul.f32 %v1391, %v1399
  %1406 = vrot.lane.b32.xlu0 %v1402, 64
  %v1407 = vpop.permute.xlu0 %1406
  %1408 = vrot.lane.b32.xlu0 %v1403, 64
  %v1409 = vpop.permute.xlu0 %1408
  %v1412 = vadd.f32 %v1328, %v1407
  %v1413 = vadd.f32 %v1329, %v1409
  %v1414 = vtanh.pop %v1412
  %v1415 = vtanh.pop %v1413
  %v1416 = vsub.f32 %v1314, %v1414
  %v1417 = vsub.f32 %v1315, %v1415
  %1420 = vrot.lane.b32.xlu0 %v1416, 96
  %v1421 = vpop.permute.xlu0 %1420
  %1422 = vrot.lane.b32.xlu0 %v1417, 96
  %v1423 = vpop.permute.xlu0 %1422
  %v1426 = vmul.f32 %v1389, %v1421
  %v1427 = vmul.f32 %v1391, %v1423
  %1430 = vrot.lane.b32.xlu0 %v1426, 32
  %v1431 = vpop.permute.xlu0 %1430
  %1432 = vrot.lane.b32.xlu0 %v1427, 32
  %v1433 = vpop.permute.xlu0 %1432
  %v1436 = vadd.f32 %v1414, %v1431
  %v1437 = vadd.f32 %v1415, %v1433
  %1440 = vrot.lane.b32.xlu0 %v1436, 64
  %v1441 = vpop.permute.xlu0 %1440
  %1442 = vrot.lane.b32.xlu0 %v1437, 64
  %v1443 = vpop.permute.xlu0 %1442
  %1446 = vst.msk [vmem:[#allocation4 + $0x30] sm:$0xff] %vm65, %v1441
  %1447 = vst.msk [vmem:[#allocation4 + $0x38] sm:$0xff] %vm65, %v1443
  %1448 = vst.msk [vmem:[#allocation4 + $0xc0] sm:$0xff] %vm1081, %v1441
  %1449 = vst.msk [vmem:[#allocation4 + $0xc8] sm:$0xff] %vm1081, %v1443
  %v1450 = vld [vmem:[#allocation3 + $0x40] sm:$0xff]
  %v1451 = vld [vmem:[#allocation3 + $0x48] sm:$0xff]
  %v1452 = vpack.c.bf16 %v1437, %v1436
  %1454 = vrot.lane.b32.xlu0 %v1452, 64
  %v1455 = vpop.permute.xlu0 %1454
  %v1457 = vsel %vm958, %v1455, 0
  %1459 = vmatprep.subr.bf16.mxu0 0
  %1460 = vmatpush1.bf16.msra.mxu0 %v954
  %1461 = vmatprep.subr.bf16.mxu0 0
  %1462 = vmatpush1.bf16.msra.mxu0 %v955
  %1463 = vmatprep.subr.bf16.mxu0 0
  %1464 = vmatpush1.bf16.msra.mxu0 0
  %1465 = vmatprep.subr.bf16.mxu0 0
  %1466 = vmatpush1.bf16.msra.mxu0 0
  %1467 = vmatprep.subr.bf16.mxu0 0
  %1468 = vmatpush1.bf16.msra.mxu0 0
  %1469 = vmatprep.subr.bf16.mxu0 0
  %1470 = vmatpush1.bf16.msra.mxu0 0
  %1471 = vmatprep.subr.bf16.mxu0 0
  %1472 = vmatpush1.bf16.msra.mxu0 0
  %1473 = vmatprep.subr.bf16.mxu0 0
  %1474 = vmatpush1.bf16.msra.mxu0 0
  %1475 = vmatprep.subr.bf16.mxu0 0
  %1476 = vmatpush1.bf16.msra.mxu0 0
  %1477 = vmatprep.subr.bf16.mxu0 0
  %1478 = vmatpush1.bf16.msra.mxu0 0
  %1479 = vmatprep.subr.bf16.mxu0 0
  %1480 = vmatpush1.bf16.msra.mxu0 0
  %1481 = vmatprep.subr.bf16.mxu0 0
  %1482 = vmatpush1.bf16.msra.mxu0 0
  %1483 = vmatprep.subr.bf16.mxu0 0
  %1484 = vmatpush1.bf16.msra.mxu0 0
  %1485 = vmatprep.subr.bf16.mxu0 0
  %1486 = vmatpush1.bf16.msra.mxu0 0
  %1487 = vmatprep.subr.bf16.mxu0 0
  %1488 = vmatpush1.bf16.msra.mxu0 0
  %1489 = vmatprep.subr.bf16.mxu0 0
  %1490 = vmatpush1.bf16.msra.mxu0 0
  %1491 = vmatprep.mubr.bf16.mxu0 0
  %1492 = vmatmul.mubr.bf16.gmra.mrb[0].mxu0 %v1457
  %v1493 = vpop.f32.mrb[0].mxu0
  %v1494 = vadd.f32 0.0, %v1493
  %v1495 = vpop.f32.mrb[0].mxu0
  %v1496 = vpop.f32.mrb[0].mxu0
  %v1497 = vadd.f32 0.0, %v1496
  %v1498 = vpop.f32.mrb[0].mxu0
  %1499 = vdwg.mxu0
  %v1500 = vadd.f32 %v1450, %v1494
  %v1501 = vadd.f32 %v1451, %v1497
  %v1502 = vxor.u32 %v1500, 2147483648
  %v1503 = vxor.u32 %v1501, 2147483648
  %v1504 = vmul.f32 %v1502, 1.442695
  %v1505 = vpow.pop %v1504
  %v1506 = vmul.f32 %v1503, 1.442695
  %v1507 = vpow.pop %v1506
  %v1508 = vadd.f32 %v1505, 1.0
  %v1509 = vadd.f32 %v1507, 1.0
  %v1510 = vrcp.pop %v1508
  %v1511 = vmul.f32 1.0, %v1510
  %v1512 = vrcp.pop %v1509
  %v1513 = vmul.f32 1.0, %v1512
  %v1514 = vadd.f32 %v1494, %v1023
  %v1515 = vadd.f32 %v1497, %v1023
  %1518 = vrot.lane.b32.xlu0 %v1514, 64
  %v1519 = vpop.permute.xlu0 %1518
  %1520 = vrot.lane.b32.xlu0 %v1515, 64
  %v1521 = vpop.permute.xlu0 %1520
  %v1524 = vmul.f32 %v1511, %v1519
  %v1525 = vmul.f32 %v1513, %v1521
  %1528 = vrot.lane.b32.xlu0 %v1524, 64
  %v1529 = vpop.permute.xlu0 %1528
  %1530 = vrot.lane.b32.xlu0 %v1525, 64
  %v1531 = vpop.permute.xlu0 %1530
  %v1534 = vadd.f32 %v1450, %v1529
  %v1535 = vadd.f32 %v1451, %v1531
  %v1536 = vtanh.pop %v1534
  %v1537 = vtanh.pop %v1535
  %v1538 = vsub.f32 %v1436, %v1536
  %v1539 = vsub.f32 %v1437, %v1537
  %1542 = vrot.lane.b32.xlu0 %v1538, 96
  %v1543 = vpop.permute.xlu0 %1542
  %1544 = vrot.lane.b32.xlu0 %v1539, 96
  %v1545 = vpop.permute.xlu0 %1544
  %v1548 = vmul.f32 %v1511, %v1543
  %v1549 = vmul.f32 %v1513, %v1545
  %1552 = vrot.lane.b32.xlu0 %v1548, 32
  %v1553 = vpop.permute.xlu0 %1552
  %1554 = vrot.lane.b32.xlu0 %v1549, 32
  %v1555 = vpop.permute.xlu0 %1554
  %v1558 = vadd.f32 %v1536, %v1553
  %v1559 = vadd.f32 %v1537, %v1555
  %1562 = vrot.lane.b32.xlu0 %v1558, 64
  %v1563 = vpop.permute.xlu0 %1562
  %1564 = vrot.lane.b32.xlu0 %v1559, 64
  %v1565 = vpop.permute.xlu0 %1564
  %1568 = vst.msk [vmem:[#allocation4 + $0x40] sm:$0xff] %vm65, %v1563
  %1569 = vst.msk [vmem:[#allocation4 + $0x48] sm:$0xff] %vm65, %v1565
  %1570 = vst.msk [vmem:[#allocation4 + $0xb0] sm:$0xff] %vm1081, %v1563
  %1571 = vst.msk [vmem:[#allocation4 + $0xb8] sm:$0xff] %vm1081, %v1565
  %v1572 = vld [vmem:[#allocation3 + $0x50] sm:$0xff]
  %v1573 = vld [vmem:[#allocation3 + $0x58] sm:$0xff]
  %v1574 = vpack.c.bf16 %v1559, %v1558
  %1576 = vrot.lane.b32.xlu0 %v1574, 64
  %v1577 = vpop.permute.xlu0 %1576
  %v1579 = vsel %vm958, %v1577, 0
  %1581 = vmatprep.subr.bf16.mxu0 0
  %1582 = vmatpush1.bf16.msra.mxu0 %v954
  %1583 = vmatprep.subr.bf16.mxu0 0
  %1584 = vmatpush1.bf16.msra.mxu0 %v955
  %1585 = vmatprep.subr.bf16.mxu0 0
  %1586 = vmatpush1.bf16.msra.mxu0 0
  %1587 = vmatprep.subr.bf16.mxu0 0
  %1588 = vmatpush1.bf16.msra.mxu0 0
  %1589 = vmatprep.subr.bf16.mxu0 0
  %1590 = vmatpush1.bf16.msra.mxu0 0
  %1591 = vmatprep.subr.bf16.mxu0 0
  %1592 = vmatpush1.bf16.msra.mxu0 0
  %1593 = vmatprep.subr.bf16.mxu0 0
  %1594 = vmatpush1.bf16.msra.mxu0 0
  %1595 = vmatprep.subr.bf16.mxu0 0
  %1596 = vmatpush1.bf16.msra.mxu0 0
  %1597 = vmatprep.subr.bf16.mxu0 0
  %1598 = vmatpush1.bf16.msra.mxu0 0
  %1599 = vmatprep.subr.bf16.mxu0 0
  %1600 = vmatpush1.bf16.msra.mxu0 0
  %1601 = vmatprep.subr.bf16.mxu0 0
  %1602 = vmatpush1.bf16.msra.mxu0 0
  %1603 = vmatprep.subr.bf16.mxu0 0
  %1604 = vmatpush1.bf16.msra.mxu0 0
  %1605 = vmatprep.subr.bf16.mxu0 0
  %1606 = vmatpush1.bf16.msra.mxu0 0
  %1607 = vmatprep.subr.bf16.mxu0 0
  %1608 = vmatpush1.bf16.msra.mxu0 0
  %1609 = vmatprep.subr.bf16.mxu0 0
  %1610 = vmatpush1.bf16.msra.mxu0 0
  %1611 = vmatprep.subr.bf16.mxu0 0
  %1612 = vmatpush1.bf16.msra.mxu0 0
  %1613 = vmatprep.mubr.bf16.mxu0 0
  %1614 = vmatmul.mubr.bf16.gmra.mrb[0].mxu0 %v1579
  %v1615 = vpop.f32.mrb[0].mxu0
  %v1616 = vadd.f32 0.0, %v1615
  %v1617 = vpop.f32.mrb[0].mxu0
  %v1618 = vpop.f32.mrb[0].mxu0
  %v1619 = vadd.f32 0.0, %v1618
  %v1620 = vpop.f32.mrb[0].mxu0
  %1621 = vdwg.mxu0
  %v1622 = vadd.f32 %v1572, %v1616
  %v1623 = vadd.f32 %v1573, %v1619
  %v1624 = vxor.u32 %v1622, 2147483648
  %v1625 = vxor.u32 %v1623, 2147483648
  %v1626 = vmul.f32 %v1624, 1.442695
  %v1627 = vpow.pop %v1626
  %v1628 = vmul.f32 %v1625, 1.442695
  %v1629 = vpow.pop %v1628
  %v1630 = vadd.f32 %v1627, 1.0
  %v1631 = vadd.f32 %v1629, 1.0
  %v1632 = vrcp.pop %v1630
  %v1633 = vmul.f32 1.0, %v1632
  %v1634 = vrcp.pop %v1631
  %v1635 = vmul.f32 1.0, %v1634
  %v1636 = vadd.f32 %v1616, %v1023
  %v1637 = vadd.f32 %v1619, %v1023
  %1640 = vrot.lane.b32.xlu0 %v1636, 64
  %v1641 = vpop.permute.xlu0 %1640
  %1642 = vrot.lane.b32.xlu0 %v1637, 64
  %v1643 = vpop.permute.xlu0 %1642
  %v1646 = vmul.f32 %v1633, %v1641
  %v1647 = vmul.f32 %v1635, %v1643
  %1650 = vrot.lane.b32.xlu0 %v1646, 64
  %v1651 = vpop.permute.xlu0 %1650
  %1652 = vrot.lane.b32.xlu0 %v1647, 64
  %v1653 = vpop.permute.xlu0 %1652
  %v1656 = vadd.f32 %v1572, %v1651
  %v1657 = vadd.f32 %v1573, %v1653
  %v1658 = vtanh.pop %v1656
  %v1659 = vtanh.pop %v1657
  %v1660 = vsub.f32 %v1558, %v1658
  %v1661 = vsub.f32 %v1559, %v1659
  %1664 = vrot.lane.b32.xlu0 %v1660, 96
  %v1665 = vpop.permute.xlu0 %1664
  %1666 = vrot.lane.b32.xlu0 %v1661, 96
  %v1667 = vpop.permute.xlu0 %1666
  %v1670 = vmul.f32 %v1633, %v1665
  %v1671 = vmul.f32 %v1635, %v1667
  %1674 = vrot.lane.b32.xlu0 %v1670, 32
  %v1675 = vpop.permute.xlu0 %1674
  %1676 = vrot.lane.b32.xlu0 %v1671, 32
  %v1677 = vpop.permute.xlu0 %1676
  %v1680 = vadd.f32 %v1658, %v1675
  %v1681 = vadd.f32 %v1659, %v1677
  %1684 = vrot.lane.b32.xlu0 %v1680, 64
  %v1685 = vpop.permute.xlu0 %1684
  %1686 = vrot.lane.b32.xlu0 %v1681, 64
  %v1687 = vpop.permute.xlu0 %1686
  %1690 = vst.msk [vmem:[#allocation4 + $0x50] sm:$0xff] %vm65, %v1685
  %1691 = vst.msk [vmem:[#allocation4 + $0x58] sm:$0xff] %vm65, %v1687
  %1692 = vst.msk [vmem:[#allocation4 + $0xa0] sm:$0xff] %vm1081, %v1685
  %1693 = vst.msk [vmem:[#allocation4 + $0xa8] sm:$0xff] %vm1081, %v1687
  %v1694 = vld [vmem:[#allocation3 + $0x60] sm:$0xff]
  %v1695 = vld [vmem:[#allocation3 + $0x68] sm:$0xff]
  %v1696 = vpack.c.bf16 %v1681, %v1680
  %1698 = vrot.lane.b32.xlu0 %v1696, 64
  %v1699 = vpop.permute.xlu0 %1698
  %v1701 = vsel %vm958, %v1699, 0
  %1703 = vmatprep.subr.bf16.mxu0 0
  %1704 = vmatpush1.bf16.msra.mxu0 %v954
  %1705 = vmatprep.subr.bf16.mxu0 0
  %1706 = vmatpush1.bf16.msra.mxu0 %v955
  %1707 = vmatprep.subr.bf16.mxu0 0
  %1708 = vmatpush1.bf16.msra.mxu0 0
  %1709 = vmatprep.subr.bf16.mxu0 0
  %1710 = vmatpush1.bf16.msra.mxu0 0
  %1711 = vmatprep.subr.bf16.mxu0 0
  %1712 = vmatpush1.bf16.msra.mxu0 0
  %1713 = vmatprep.subr.bf16.mxu0 0
  %1714 = vmatpush1.bf16.msra.mxu0 0
  %1715 = vmatprep.subr.bf16.mxu0 0
  %1716 = vmatpush1.bf16.msra.mxu0 0
  %1717 = vmatprep.subr.bf16.mxu0 0
  %1718 = vmatpush1.bf16.msra.mxu0 0
  %1719 = vmatprep.subr.bf16.mxu0 0
  %1720 = vmatpush1.bf16.msra.mxu0 0
  %1721 = vmatprep.subr.bf16.mxu0 0
  %1722 = vmatpush1.bf16.msra.mxu0 0
  %1723 = vmatprep.subr.bf16.mxu0 0
  %1724 = vmatpush1.bf16.msra.mxu0 0
  %1725 = vmatprep.subr.bf16.mxu0 0
  %1726 = vmatpush1.bf16.msra.mxu0 0
  %1727 = vmatprep.subr.bf16.mxu0 0
  %1728 = vmatpush1.bf16.msra.mxu0 0
  %1729 = vmatprep.subr.bf16.mxu0 0
  %1730 = vmatpush1.bf16.msra.mxu0 0
  %1731 = vmatprep.subr.bf16.mxu0 0
  %1732 = vmatpush1.bf16.msra.mxu0 0
  %1733 = vmatprep.subr.bf16.mxu0 0
  %1734 = vmatpush1.bf16.msra.mxu0 0
  %1735 = vmatprep.mubr.bf16.mxu0 0
  %1736 = vmatmul.mubr.bf16.gmra.mrb[0].mxu0 %v1701
  %v1737 = vpop.f32.mrb[0].mxu0
  %v1738 = vadd.f32 0.0, %v1737
  %v1739 = vpop.f32.mrb[0].mxu0
  %v1740 = vpop.f32.mrb[0].mxu0
  %v1741 = vadd.f32 0.0, %v1740
  %v1742 = vpop.f32.mrb[0].mxu0
  %1743 = vdwg.mxu0
  %v1744 = vadd.f32 %v1694, %v1738
  %v1745 = vadd.f32 %v1695, %v1741
  %v1746 = vxor.u32 %v1744, 2147483648
  %v1747 = vxor.u32 %v1745, 2147483648
  %v1748 = vmul.f32 %v1746, 1.442695
  %v1749 = vpow.pop %v1748
  %v1750 = vmul.f32 %v1747, 1.442695
  %v1751 = vpow.pop %v1750
  %v1752 = vadd.f32 %v1749, 1.0
  %v1753 = vadd.f32 %v1751, 1.0
  %v1754 = vrcp.pop %v1752
  %v1755 = vmul.f32 1.0, %v1754
  %v1756 = vrcp.pop %v1753
  %v1757 = vmul.f32 1.0, %v1756
  %v1758 = vadd.f32 %v1738, %v1023
  %v1759 = vadd.f32 %v1741, %v1023
  %1762 = vrot.lane.b32.xlu0 %v1758, 64
  %v1763 = vpop.permute.xlu0 %1762
  %1764 = vrot.lane.b32.xlu0 %v1759, 64
  %v1765 = vpop.permute.xlu0 %1764
  %v1768 = vmul.f32 %v1755, %v1763
  %v1769 = vmul.f32 %v1757, %v1765
  %1772 = vrot.lane.b32.xlu0 %v1768, 64
  %v1773 = vpop.permute.xlu0 %1772
  %1774 = vrot.lane.b32.xlu0 %v1769, 64
  %v1775 = vpop.permute.xlu0 %1774
  %v1778 = vadd.f32 %v1694, %v1773
  %v1779 = vadd.f32 %v1695, %v1775
  %v1780 = vtanh.pop %v1778
  %v1781 = vtanh.pop %v1779
  %v1782 = vsub.f32 %v1680, %v1780
  %v1783 = vsub.f32 %v1681, %v1781
  %1786 = vrot.lane.b32.xlu0 %v1782, 96
  %v1787 = vpop.permute.xlu0 %1786
  %1788 = vrot.lane.b32.xlu0 %v1783, 96
  %v1789 = vpop.permute.xlu0 %1788
  %v1792 = vmul.f32 %v1755, %v1787
  %v1793 = vmul.f32 %v1757, %v1789
  %1796 = vrot.lane.b32.xlu0 %v1792, 32
  %v1797 = vpop.permute.xlu0 %1796
  %1798 = vrot.lane.b32.xlu0 %v1793, 32
  %v1799 = vpop.permute.xlu0 %1798
  %v1802 = vadd.f32 %v1780, %v1797
  %v1803 = vadd.f32 %v1781, %v1799
  %1806 = vrot.lane.b32.xlu0 %v1802, 64
  %v1807 = vpop.permute.xlu0 %1806
  %1808 = vrot.lane.b32.xlu0 %v1803, 64
  %v1809 = vpop.permute.xlu0 %1808
  %1812 = vst.msk [vmem:[#allocation4 + $0x60] sm:$0xff] %vm65, %v1807
  %1813 = vst.msk [vmem:[#allocation4 + $0x68] sm:$0xff] %vm65, %v1809
  %1814 = vst.msk [vmem:[#allocation4 + $0x90] sm:$0xff] %vm1081, %v1807
  %1815 = vst.msk [vmem:[#allocation4 + $0x98] sm:$0xff] %vm1081, %v1809
  %v1816 = vld [vmem:[#allocation3 + $0x70] sm:$0xff]
  %v1817 = vld [vmem:[#allocation3 + $0x78] sm:$0xff]
  %v1818 = vpack.c.bf16 %v1803, %v1802
  %1820 = vrot.lane.b32.xlu0 %v1818, 64
  %v1821 = vpop.permute.xlu0 %1820
  %v1823 = vsel %vm958, %v1821, 0
  %1825 = vmatprep.subr.bf16.mxu0 0
  %1826 = vmatpush1.bf16.msra.mxu0 %v954
  %1827 = vmatprep.subr.bf16.mxu0 0
  %1828 = vmatpush1.bf16.msra.mxu0 %v955
  %1829 = vmatprep.subr.bf16.mxu0 0
  %1830 = vmatpush1.bf16.msra.mxu0 0
  %1831 = vmatprep.subr.bf16.mxu0 0
  %1832 = vmatpush1.bf16.msra.mxu0 0
  %1833 = vmatprep.subr.bf16.mxu0 0
  %1834 = vmatpush1.bf16.msra.mxu0 0
  %1835 = vmatprep.subr.bf16.mxu0 0
  %1836 = vmatpush1.bf16.msra.mxu0 0
  %1837 = vmatprep.subr.bf16.mxu0 0
  %1838 = vmatpush1.bf16.msra.mxu0 0
  %1839 = vmatprep.subr.bf16.mxu0 0
  %1840 = vmatpush1.bf16.msra.mxu0 0
  %1841 = vmatprep.subr.bf16.mxu0 0
  %1842 = vmatpush1.bf16.msra.mxu0 0
  %1843 = vmatprep.subr.bf16.mxu0 0
  %1844 = vmatpush1.bf16.msra.mxu0 0
  %1845 = vmatprep.subr.bf16.mxu0 0
  %1846 = vmatpush1.bf16.msra.mxu0 0
  %1847 = vmatprep.subr.bf16.mxu0 0
  %1848 = vmatpush1.bf16.msra.mxu0 0
  %1849 = vmatprep.subr.bf16.mxu0 0
  %1850 = vmatpush1.bf16.msra.mxu0 0
  %1851 = vmatprep.subr.bf16.mxu0 0
  %1852 = vmatpush1.bf16.msra.mxu0 0
  %1853 = vmatprep.subr.bf16.mxu0 0
  %1854 = vmatpush1.bf16.msra.mxu0 0
  %1855 = vmatprep.subr.bf16.mxu0 0
  %1856 = vmatpush1.bf16.msra.mxu0 0
  %1857 = vmatprep.mubr.bf16.mxu0 0
  %1858 = vmatmul.mubr.bf16.gmra.mrb[0].mxu0 %v1823
  %v1859 = vpop.f32.mrb[0].mxu0
  %v1860 = vadd.f32 0.0, %v1859
  %v1861 = vpop.f32.mrb[0].mxu0
  %v1862 = vpop.f32.mrb[0].mxu0
  %v1863 = vadd.f32 0.0, %v1862
  %v1864 = vpop.f32.mrb[0].mxu0
  %1865 = vdwg.mxu0
  %v1866 = vadd.f32 %v1816, %v1860
  %v1867 = vadd.f32 %v1817, %v1863
  %v1868 = vxor.u32 %v1866, 2147483648
  %v1869 = vxor.u32 %v1867, 2147483648
  %v1870 = vmul.f32 %v1868, 1.442695
  %v1871 = vpow.pop %v1870
  %v1872 = vmul.f32 %v1869, 1.442695
  %v1873 = vpow.pop %v1872
  %v1874 = vadd.f32 %v1871, 1.0
  %v1875 = vadd.f32 %v1873, 1.0
  %v1876 = vrcp.pop %v1874
  %v1877 = vmul.f32 1.0, %v1876
  %v1878 = vrcp.pop %v1875
  %v1879 = vmul.f32 1.0, %v1878
  %v1880 = vadd.f32 %v1860, %v1023
  %v1881 = vadd.f32 %v1863, %v1023
  %1884 = vrot.lane.b32.xlu0 %v1880, 64
  %v1885 = vpop.permute.xlu0 %1884
  %1886 = vrot.lane.b32.xlu0 %v1881, 64
  %v1887 = vpop.permute.xlu0 %1886
  %v1890 = vmul.f32 %v1877, %v1885
  %v1891 = vmul.f32 %v1879, %v1887
  %1894 = vrot.lane.b32.xlu0 %v1890, 64
  %v1895 = vpop.permute.xlu0 %1894
  %1896 = vrot.lane.b32.xlu0 %v1891, 64
  %v1897 = vpop.permute.xlu0 %1896
  %v1900 = vadd.f32 %v1816, %v1895
  %v1901 = vadd.f32 %v1817, %v1897
  %v1902 = vtanh.pop %v1900
  %v1903 = vtanh.pop %v1901
  %v1904 = vsub.f32 %v1802, %v1902
  %v1905 = vsub.f32 %v1803, %v1903
  %1908 = vrot.lane.b32.xlu0 %v1904, 96
  %v1909 = vpop.permute.xlu0 %1908
  %1910 = vrot.lane.b32.xlu0 %v1905, 96
  %v1911 = vpop.permute.xlu0 %1910
  %v1914 = vmul.f32 %v1877, %v1909
  %v1915 = vmul.f32 %v1879, %v1911
  %1918 = vrot.lane.b32.xlu0 %v1914, 32
  %v1919 = vpop.permute.xlu0 %1918
  %1920 = vrot.lane.b32.xlu0 %v1915, 32
  %v1921 = vpop.permute.xlu0 %1920
  %v1924 = vadd.f32 %v1902, %v1919
  %v1925 = vadd.f32 %v1903, %v1921
  %1928 = vrot.lane.b32.xlu0 %v1924, 64
  %v1929 = vpop.permute.xlu0 %1928
  %1930 = vrot.lane.b32.xlu0 %v1925, 64
  %v1931 = vpop.permute.xlu0 %1930
  %1934 = vst.msk [vmem:[#allocation4 + $0x70] sm:$0xff] %vm65, %v1929
  %1935 = vst.msk [vmem:[#allocation4 + $0x78] sm:$0xff] %vm65, %v1931
  %1936 = vst.msk [vmem:[#allocation4 + $0x80] sm:$0xff] %vm1081, %v1929
  %1937 = vst.msk [vmem:[#allocation4 + $0x88] sm:$0xff] %vm1081, %v1931
  %v1938 = vld [vmem:[#allocation3 + $0x80] sm:$0xff]
  %v1939 = vld [vmem:[#allocation3 + $0x88] sm:$0xff]
  %v1940 = vpack.c.bf16 %v1925, %v1924
  %1942 = vrot.lane.b32.xlu0 %v1940, 64
  %v1943 = vpop.permute.xlu0 %1942
  %v1945 = vsel %vm958, %v1943, 0
  %1947 = vmatprep.subr.bf16.mxu0 0
  %1948 = vmatpush1.bf16.msra.mxu0 %v954
  %1949 = vmatprep.subr.bf16.mxu0 0
  %1950 = vmatpush1.bf16.msra.mxu0 %v955
  %1951 = vmatprep.subr.bf16.mxu0 0
  %1952 = vmatpush1.bf16.msra.mxu0 0
  %1953 = vmatprep.subr.bf16.mxu0 0
  %1954 = vmatpush1.bf16.msra.mxu0 0
  %1955 = vmatprep.subr.bf16.mxu0 0
  %1956 = vmatpush1.bf16.msra.mxu0 0
  %1957 = vmatprep.subr.bf16.mxu0 0
  %1958 = vmatpush1.bf16.msra.mxu0 0
  %1959 = vmatprep.subr.bf16.mxu0 0
  %1960 = vmatpush1.bf16.msra.mxu0 0
  %1961 = vmatprep.subr.bf16.mxu0 0
  %1962 = vmatpush1.bf16.msra.mxu0 0
  %1963 = vmatprep.subr.bf16.mxu0 0
  %1964 = vmatpush1.bf16.msra.mxu0 0
  %1965 = vmatprep.subr.bf16.mxu0 0
  %1966 = vmatpush1.bf16.msra.mxu0 0
  %1967 = vmatprep.subr.bf16.mxu0 0
  %1968 = vmatpush1.bf16.msra.mxu0 0
  %1969 = vmatprep.subr.bf16.mxu0 0
  %1970 = vmatpush1.bf16.msra.mxu0 0
  %1971 = vmatprep.subr.bf16.mxu0 0
  %1972 = vmatpush1.bf16.msra.mxu0 0
  %1973 = vmatprep.subr.bf16.mxu0 0
  %1974 = vmatpush1.bf16.msra.mxu0 0
  %1975 = vmatprep.subr.bf16.mxu0 0
  %1976 = vmatpush1.bf16.msra.mxu0 0
  %1977 = vmatprep.subr.bf16.mxu0 0
  %1978 = vmatpush1.bf16.msra.mxu0 0
  %1979 = vmatprep.mubr.bf16.mxu0 0
  %1980 = vmatmul.mubr.bf16.gmra.mrb[0].mxu0 %v1945
  %v1981 = vpop.f32.mrb[0].mxu0
  %v1982 = vadd.f32 0.0, %v1981
  %v1983 = vpop.f32.mrb[0].mxu0
  %v1984 = vpop.f32.mrb[0].mxu0
  %v1985 = vadd.f32 0.0, %v1984
  %v1986 = vpop.f32.mrb[0].mxu0
  %1987 = vdwg.mxu0
  %v1988 = vadd.f32 %v1938, %v1982
  %v1989 = vadd.f32 %v1939, %v1985
  %v1990 = vxor.u32 %v1988, 2147483648
  %v1991 = vxor.u32 %v1989, 2147483648
  %v1992 = vmul.f32 %v1990, 1.442695
  %v1993 = vpow.pop %v1992
  %v1994 = vmul.f32 %v1991, 1.442695
  %v1995 = vpow.pop %v1994
  %v1996 = vadd.f32 %v1993, 1.0
  %v1997 = vadd.f32 %v1995, 1.0
  %v1998 = vrcp.pop %v1996
  %v1999 = vmul.f32 1.0, %v1998
  %v2000 = vrcp.pop %v1997
  %v2001 = vmul.f32 1.0, %v2000
  %v2002 = vadd.f32 %v1982, %v1023
  %v2003 = vadd.f32 %v1985, %v1023
  %2006 = vrot.lane.b32.xlu0 %v2002, 64
  %v2007 = vpop.permute.xlu0 %2006
  %2008 = vrot.lane.b32.xlu0 %v2003, 64
  %v2009 = vpop.permute.xlu0 %2008
  %v2012 = vmul.f32 %v1999, %v2007
  %v2013 = vmul.f32 %v2001, %v2009
  %2016 = vrot.lane.b32.xlu0 %v2012, 64
  %v2017 = vpop.permute.xlu0 %2016
  %2018 = vrot.lane.b32.xlu0 %v2013, 64
  %v2019 = vpop.permute.xlu0 %2018
  %v2022 = vadd.f32 %v1938, %v2017
  %v2023 = vadd.f32 %v1939, %v2019
  %v2024 = vtanh.pop %v2022
  %v2025 = vtanh.pop %v2023
  %v2026 = vsub.f32 %v1924, %v2024
  %v2027 = vsub.f32 %v1925, %v2025
  %2030 = vrot.lane.b32.xlu0 %v2026, 96
  %v2031 = vpop.permute.xlu0 %2030
  %2032 = vrot.lane.b32.xlu0 %v2027, 96
  %v2033 = vpop.permute.xlu0 %2032
  %v2036 = vmul.f32 %v1999, %v2031
  %v2037 = vmul.f32 %v2001, %v2033
  %2040 = vrot.lane.b32.xlu0 %v2036, 32
  %v2041 = vpop.permute.xlu0 %2040
  %2042 = vrot.lane.b32.xlu0 %v2037, 32
  %v2043 = vpop.permute.xlu0 %2042
  %v2046 = vadd.f32 %v2024, %v2041
  %v2047 = vadd.f32 %v2025, %v2043
  %2050 = vrot.lane.b32.xlu0 %v2046, 64
  %v2051 = vpop.permute.xlu0 %2050
  %2052 = vrot.lane.b32.xlu0 %v2047, 64
  %v2053 = vpop.permute.xlu0 %2052
  %2056 = vst.msk [vmem:[#allocation4 + $0x80] sm:$0xff] %vm65, %v2051
  %2057 = vst.msk [vmem:[#allocation4 + $0x88] sm:$0xff] %vm65, %v2053
  %2058 = vst.msk [vmem:[#allocation4 + $0x70] sm:$0xff] %vm1081, %v2051
  %2059 = vst.msk [vmem:[#allocation4 + $0x78] sm:$0xff] %vm1081, %v2053
  %v2060 = vld [vmem:[#allocation3 + $0x90] sm:$0xff]
  %v2061 = vld [vmem:[#allocation3 + $0x98] sm:$0xff]
  %v2062 = vpack.c.bf16 %v2047, %v2046
  %2064 = vrot.lane.b32.xlu0 %v2062, 64
  %v2065 = vpop.permute.xlu0 %2064
  %v2067 = vsel %vm958, %v2065, 0
  %2069 = vmatprep.subr.bf16.mxu0 0
  %2070 = vmatpush1.bf16.msra.mxu0 %v954
  %2071 = vmatprep.subr.bf16.mxu0 0
  %2072 = vmatpush1.bf16.msra.mxu0 %v955
  %2073 = vmatprep.subr.bf16.mxu0 0
  %2074 = vmatpush1.bf16.msra.mxu0 0
  %2075 = vmatprep.subr.bf16.mxu0 0
  %2076 = vmatpush1.bf16.msra.mxu0 0
  %2077 = vmatprep.subr.bf16.mxu0 0
  %2078 = vmatpush1.bf16.msra.mxu0 0
  %2079 = vmatprep.subr.bf16.mxu0 0
  %2080 = vmatpush1.bf16.msra.mxu0 0
  %2081 = vmatprep.subr.bf16.mxu0 0
  %2082 = vmatpush1.bf16.msra.mxu0 0
  %2083 = vmatprep.subr.bf16.mxu0 0
  %2084 = vmatpush1.bf16.msra.mxu0 0
  %2085 = vmatprep.subr.bf16.mxu0 0
  %2086 = vmatpush1.bf16.msra.mxu0 0
  %2087 = vmatprep.subr.bf16.mxu0 0
  %2088 = vmatpush1.bf16.msra.mxu0 0
  %2089 = vmatprep.subr.bf16.mxu0 0
  %2090 = vmatpush1.bf16.msra.mxu0 0
  %2091 = vmatprep.subr.bf16.mxu0 0
  %2092 = vmatpush1.bf16.msra.mxu0 0
  %2093 = vmatprep.subr.bf16.mxu0 0
  %2094 = vmatpush1.bf16.msra.mxu0 0
  %2095 = vmatprep.subr.bf16.mxu0 0
  %2096 = vmatpush1.bf16.msra.mxu0 0
  %2097 = vmatprep.subr.bf16.mxu0 0
  %2098 = vmatpush1.bf16.msra.mxu0 0
  %2099 = vmatprep.subr.bf16.mxu0 0
  %2100 = vmatpush1.bf16.msra.mxu0 0
  %2101 = vmatprep.mubr.bf16.mxu0 0
  %2102 = vmatmul.mubr.bf16.gmra.mrb[0].mxu0 %v2067
  %v2103 = vpop.f32.mrb[0].mxu0
  %v2104 = vadd.f32 0.0, %v2103
  %v2105 = vpop.f32.mrb[0].mxu0
  %v2106 = vpop.f32.mrb[0].mxu0
  %v2107 = vadd.f32 0.0, %v2106
  %v2108 = vpop.f32.mrb[0].mxu0
  %2109 = vdwg.mxu0
  %v2110 = vadd.f32 %v2060, %v2104
  %v2111 = vadd.f32 %v2061, %v2107
  %v2112 = vxor.u32 %v2110, 2147483648
  %v2113 = vxor.u32 %v2111, 2147483648
  %v2114 = vmul.f32 %v2112, 1.442695
  %v2115 = vpow.pop %v2114
  %v2116 = vmul.f32 %v2113, 1.442695
  %v2117 = vpow.pop %v2116
  %v2118 = vadd.f32 %v2115, 1.0
  %v2119 = vadd.f32 %v2117, 1.0
  %v2120 = vrcp.pop %v2118
  %v2121 = vmul.f32 1.0, %v2120
  %v2122 = vrcp.pop %v2119
  %v2123 = vmul.f32 1.0, %v2122
  %v2124 = vadd.f32 %v2104, %v1023
  %v2125 = vadd.f32 %v2107, %v1023
  %2128 = vrot.lane.b32.xlu0 %v2124, 64
  %v2129 = vpop.permute.xlu0 %2128
  %2130 = vrot.lane.b32.xlu0 %v2125, 64
  %v2131 = vpop.permute.xlu0 %2130
  %v2134 = vmul.f32 %v2121, %v2129
  %v2135 = vmul.f32 %v2123, %v2131
  %2138 = vrot.lane.b32.xlu0 %v2134, 64
  %v2139 = vpop.permute.xlu0 %2138
  %2140 = vrot.lane.b32.xlu0 %v2135, 64
  %v2141 = vpop.permute.xlu0 %2140
  %v2144 = vadd.f32 %v2060, %v2139
  %v2145 = vadd.f32 %v2061, %v2141
  %v2146 = vtanh.pop %v2144
  %v2147 = vtanh.pop %v2145
  %v2148 = vsub.f32 %v2046, %v2146
  %v2149 = vsub.f32 %v2047, %v2147
  %2152 = vrot.lane.b32.xlu0 %v2148, 96
  %v2153 = vpop.permute.xlu0 %2152
  %2154 = vrot.lane.b32.xlu0 %v2149, 96
  %v2155 = vpop.permute.xlu0 %2154
  %v2158 = vmul.f32 %v2121, %v2153
  %v2159 = vmul.f32 %v2123, %v2155
  %2162 = vrot.lane.b32.xlu0 %v2158, 32
  %v2163 = vpop.permute.xlu0 %2162
  %2164 = vrot.lane.b32.xlu0 %v2159, 32
  %v2165 = vpop.permute.xlu0 %2164
  %v2168 = vadd.f32 %v2146, %v2163
  %v2169 = vadd.f32 %v2147, %v2165
  %2172 = vrot.lane.b32.xlu0 %v2168, 64
  %v2173 = vpop.permute.xlu0 %2172
  %2174 = vrot.lane.b32.xlu0 %v2169, 64
  %v2175 = vpop.permute.xlu0 %2174
  %2178 = vst.msk [vmem:[#allocation4 + $0x90] sm:$0xff] %vm65, %v2173
  %2179 = vst.msk [vmem:[#allocation4 + $0x98] sm:$0xff] %vm65, %v2175
  %2180 = vst.msk [vmem:[#allocation4 + $0x60] sm:$0xff] %vm1081, %v2173
  %2181 = vst.msk [vmem:[#allocation4 + $0x68] sm:$0xff] %vm1081, %v2175
  %v2182 = vld [vmem:[#allocation3 + $0xa0] sm:$0xff]
  %v2183 = vld [vmem:[#allocation3 + $0xa8] sm:$0xff]
  %v2184 = vpack.c.bf16 %v2169, %v2168
  %2186 = vrot.lane.b32.xlu0 %v2184, 64
  %v2187 = vpop.permute.xlu0 %2186
  %v2189 = vsel %vm958, %v2187, 0
  %2191 = vmatprep.subr.bf16.mxu0 0
  %2192 = vmatpush1.bf16.msra.mxu0 %v954
  %2193 = vmatprep.subr.bf16.mxu0 0
  %2194 = vmatpush1.bf16.msra.mxu0 %v955
  %2195 = vmatprep.subr.bf16.mxu0 0
  %2196 = vmatpush1.bf16.msra.mxu0 0
  %2197 = vmatprep.subr.bf16.mxu0 0
  %2198 = vmatpush1.bf16.msra.mxu0 0
  %2199 = vmatprep.subr.bf16.mxu0 0
  %2200 = vmatpush1.bf16.msra.mxu0 0
  %2201 = vmatprep.subr.bf16.mxu0 0
  %2202 = vmatpush1.bf16.msra.mxu0 0
  %2203 = vmatprep.subr.bf16.mxu0 0
  %2204 = vmatpush1.bf16.msra.mxu0 0
  %2205 = vmatprep.subr.bf16.mxu0 0
  %2206 = vmatpush1.bf16.msra.mxu0 0
  %2207 = vmatprep.subr.bf16.mxu0 0
  %2208 = vmatpush1.bf16.msra.mxu0 0
  %2209 = vmatprep.subr.bf16.mxu0 0
  %2210 = vmatpush1.bf16.msra.mxu0 0
  %2211 = vmatprep.subr.bf16.mxu0 0
  %2212 = vmatpush1.bf16.msra.mxu0 0
  %2213 = vmatprep.subr.bf16.mxu0 0
  %2214 = vmatpush1.bf16.msra.mxu0 0
  %2215 = vmatprep.subr.bf16.mxu0 0
  %2216 = vmatpush1.bf16.msra.mxu0 0
  %2217 = vmatprep.subr.bf16.mxu0 0
  %2218 = vmatpush1.bf16.msra.mxu0 0
  %2219 = vmatprep.subr.bf16.mxu0 0
  %2220 = vmatpush1.bf16.msra.mxu0 0
  %2221 = vmatprep.subr.bf16.mxu0 0
  %2222 = vmatpush1.bf16.msra.mxu0 0
  %2223 = vmatprep.mubr.bf16.mxu0 0
  %2224 = vmatmul.mubr.bf16.gmra.mrb[0].mxu0 %v2189
  %v2225 = vpop.f32.mrb[0].mxu0
  %v2226 = vadd.f32 0.0, %v2225
  %v2227 = vpop.f32.mrb[0].mxu0
  %v2228 = vpop.f32.mrb[0].mxu0
  %v2229 = vadd.f32 0.0, %v2228
  %v2230 = vpop.f32.mrb[0].mxu0
  %2231 = vdwg.mxu0
  %v2232 = vadd.f32 %v2182, %v2226
  %v2233 = vadd.f32 %v2183, %v2229
  %v2234 = vxor.u32 %v2232, 2147483648
  %v2235 = vxor.u32 %v2233, 2147483648
  %v2236 = vmul.f32 %v2234, 1.442695
  %v2237 = vpow.pop %v2236
  %v2238 = vmul.f32 %v2235, 1.442695
  %v2239 = vpow.pop %v2238
  %v2240 = vadd.f32 %v2237, 1.0
  %v2241 = vadd.f32 %v2239, 1.0
  %v2242 = vrcp.pop %v2240
  %v2243 = vmul.f32 1.0, %v2242
  %v2244 = vrcp.pop %v2241
  %v2245 = vmul.f32 1.0, %v2244
  %v2246 = vadd.f32 %v2226, %v1023
  %v2247 = vadd.f32 %v2229, %v1023
  %2250 = vrot.lane.b32.xlu0 %v2246, 64
  %v2251 = vpop.permute.xlu0 %2250
  %2252 = vrot.lane.b32.xlu0 %v2247, 64
  %v2253 = vpop.permute.xlu0 %2252
  %v2256 = vmul.f32 %v2243, %v2251
  %v2257 = vmul.f32 %v2245, %v2253
  %2260 = vrot.lane.b32.xlu0 %v2256, 64
  %v2261 = vpop.permute.xlu0 %2260
  %2262 = vrot.lane.b32.xlu0 %v2257, 64
  %v2263 = vpop.permute.xlu0 %2262
  %v2266 = vadd.f32 %v2182, %v2261
  %v2267 = vadd.f32 %v2183, %v2263
  %v2268 = vtanh.pop %v2266
  %v2269 = vtanh.pop %v2267
  %v2270 = vsub.f32 %v2168, %v2268
  %v2271 = vsub.f32 %v2169, %v2269
  %2274 = vrot.lane.b32.xlu0 %v2270, 96
  %v2275 = vpop.permute.xlu0 %2274
  %2276 = vrot.lane.b32.xlu0 %v2271, 96
  %v2277 = vpop.permute.xlu0 %2276
  %v2280 = vmul.f32 %v2243, %v2275
  %v2281 = vmul.f32 %v2245, %v2277
  %2284 = vrot.lane.b32.xlu0 %v2280, 32
  %v2285 = vpop.permute.xlu0 %2284
  %2286 = vrot.lane.b32.xlu0 %v2281, 32
  %v2287 = vpop.permute.xlu0 %2286
  %v2290 = vadd.f32 %v2268, %v2285
  %v2291 = vadd.f32 %v2269, %v2287
  %2294 = vrot.lane.b32.xlu0 %v2290, 64
  %v2295 = vpop.permute.xlu0 %2294
  %2296 = vrot.lane.b32.xlu0 %v2291, 64
  %v2297 = vpop.permute.xlu0 %2296
  %2300 = vst.msk [vmem:[#allocation4 + $0xa0] sm:$0xff] %vm65, %v2295
  %2301 = vst.msk [vmem:[#allocation4 + $0xa8] sm:$0xff] %vm65, %v2297
  %2302 = vst.msk [vmem:[#allocation4 + $0x50] sm:$0xff] %vm1081, %v2295
  %2303 = vst.msk [vmem:[#allocation4 + $0x58] sm:$0xff] %vm1081, %v2297
  %v2304 = vld [vmem:[#allocation3 + $0xb0] sm:$0xff]
  %v2305 = vld [vmem:[#allocation3 + $0xb8] sm:$0xff]
  %v2306 = vpack.c.bf16 %v2291, %v2290
  %2308 = vrot.lane.b32.xlu0 %v2306, 64
  %v2309 = vpop.permute.xlu0 %2308
  %v2311 = vsel %vm958, %v2309, 0
  %2313 = vmatprep.subr.bf16.mxu0 0
  %2314 = vmatpush1.bf16.msra.mxu0 %v954
  %2315 = vmatprep.subr.bf16.mxu0 0
  %2316 = vmatpush1.bf16.msra.mxu0 %v955
  %2317 = vmatprep.subr.bf16.mxu0 0
  %2318 = vmatpush1.bf16.msra.mxu0 0
  %2319 = vmatprep.subr.bf16.mxu0 0
  %2320 = vmatpush1.bf16.msra.mxu0 0
  %2321 = vmatprep.subr.bf16.mxu0 0
  %2322 = vmatpush1.bf16.msra.mxu0 0
  %2323 = vmatprep.subr.bf16.mxu0 0
  %2324 = vmatpush1.bf16.msra.mxu0 0
  %2325 = vmatprep.subr.bf16.mxu0 0
  %2326 = vmatpush1.bf16.msra.mxu0 0
  %2327 = vmatprep.subr.bf16.mxu0 0
  %2328 = vmatpush1.bf16.msra.mxu0 0
  %2329 = vmatprep.subr.bf16.mxu0 0
  %2330 = vmatpush1.bf16.msra.mxu0 0
  %2331 = vmatprep.subr.bf16.mxu0 0
  %2332 = vmatpush1.bf16.msra.mxu0 0
  %2333 = vmatprep.subr.bf16.mxu0 0
  %2334 = vmatpush1.bf16.msra.mxu0 0
  %2335 = vmatprep.subr.bf16.mxu0 0
  %2336 = vmatpush1.bf16.msra.mxu0 0
  %2337 = vmatprep.subr.bf16.mxu0 0
  %2338 = vmatpush1.bf16.msra.mxu0 0
  %2339 = vmatprep.subr.bf16.mxu0 0
  %2340 = vmatpush1.bf16.msra.mxu0 0
  %2341 = vmatprep.subr.bf16.mxu0 0
  %2342 = vmatpush1.bf16.msra.mxu0 0
  %2343 = vmatprep.subr.bf16.mxu0 0
  %2344 = vmatpush1.bf16.msra.mxu0 0
  %2345 = vmatprep.mubr.bf16.mxu0 0
  %2346 = vmatmul.mubr.bf16.gmra.mrb[0].mxu0 %v2311
  %v2347 = vpop.f32.mrb[0].mxu0
  %v2348 = vadd.f32 0.0, %v2347
  %v2349 = vpop.f32.mrb[0].mxu0
  %v2350 = vpop.f32.mrb[0].mxu0
  %v2351 = vadd.f32 0.0, %v2350
  %v2352 = vpop.f32.mrb[0].mxu0
  %2353 = vdwg.mxu0
  %v2354 = vadd.f32 %v2304, %v2348
  %v2355 = vadd.f32 %v2305, %v2351
  %v2356 = vxor.u32 %v2354, 2147483648
  %v2357 = vxor.u32 %v2355, 2147483648
  %v2358 = vmul.f32 %v2356, 1.442695
  %v2359 = vpow.pop %v2358
  %v2360 = vmul.f32 %v2357, 1.442695
  %v2361 = vpow.pop %v2360
  %v2362 = vadd.f32 %v2359, 1.0
  %v2363 = vadd.f32 %v2361, 1.0
  %v2364 = vrcp.pop %v2362
  %v2365 = vmul.f32 1.0, %v2364
  %v2366 = vrcp.pop %v2363
  %v2367 = vmul.f32 1.0, %v2366
  %v2368 = vadd.f32 %v2348, %v1023
  %v2369 = vadd.f32 %v2351, %v1023
  %2372 = vrot.lane.b32.xlu0 %v2368, 64
  %v2373 = vpop.permute.xlu0 %2372
  %2374 = vrot.lane.b32.xlu0 %v2369, 64
  %v2375 = vpop.permute.xlu0 %2374
  %v2378 = vmul.f32 %v2365, %v2373
  %v2379 = vmul.f32 %v2367, %v2375
  %2382 = vrot.lane.b32.xlu0 %v2378, 64
  %v2383 = vpop.permute.xlu0 %2382
  %2384 = vrot.lane.b32.xlu0 %v2379, 64
  %v2385 = vpop.permute.xlu0 %2384
  %v2388 = vadd.f32 %v2304, %v2383
  %v2389 = vadd.f32 %v2305, %v2385
  %v2390 = vtanh.pop %v2388
  %v2391 = vtanh.pop %v2389
  %v2392 = vsub.f32 %v2290, %v2390
  %v2393 = vsub.f32 %v2291, %v2391
  %2396 = vrot.lane.b32.xlu0 %v2392, 96
  %v2397 = vpop.permute.xlu0 %2396
  %2398 = vrot.lane.b32.xlu0 %v2393, 96
  %v2399 = vpop.permute.xlu0 %2398
  %v2402 = vmul.f32 %v2365, %v2397
  %v2403 = vmul.f32 %v2367, %v2399
  %2406 = vrot.lane.b32.xlu0 %v2402, 32
  %v2407 = vpop.permute.xlu0 %2406
  %2408 = vrot.lane.b32.xlu0 %v2403, 32
  %v2409 = vpop.permute.xlu0 %2408
  %v2412 = vadd.f32 %v2390, %v2407
  %v2413 = vadd.f32 %v2391, %v2409
  %2416 = vrot.lane.b32.xlu0 %v2412, 64
  %v2417 = vpop.permute.xlu0 %2416
  %2418 = vrot.lane.b32.xlu0 %v2413, 64
  %v2419 = vpop.permute.xlu0 %2418
  %2422 = vst.msk [vmem:[#allocation4 + $0xb0] sm:$0xff] %vm65, %v2417
  %2423 = vst.msk [vmem:[#allocation4 + $0xb8] sm:$0xff] %vm65, %v2419
  %2424 = vst.msk [vmem:[#allocation4 + $0x40] sm:$0xff] %vm1081, %v2417
  %2425 = vst.msk [vmem:[#allocation4 + $0x48] sm:$0xff] %vm1081, %v2419
  %v2426 = vld [vmem:[#allocation3 + $0xc0] sm:$0xff]
  %v2427 = vld [vmem:[#allocation3 + $0xc8] sm:$0xff]
  %v2428 = vpack.c.bf16 %v2413, %v2412
  %2430 = vrot.lane.b32.xlu0 %v2428, 64
  %v2431 = vpop.permute.xlu0 %2430
  %v2433 = vsel %vm958, %v2431, 0
  %2435 = vmatprep.subr.bf16.mxu0 0
  %2436 = vmatpush1.bf16.msra.mxu0 %v954
  %2437 = vmatprep.subr.bf16.mxu0 0
  %2438 = vmatpush1.bf16.msra.mxu0 %v955
  %2439 = vmatprep.subr.bf16.mxu0 0
  %2440 = vmatpush1.bf16.msra.mxu0 0
  %2441 = vmatprep.subr.bf16.mxu0 0
  %2442 = vmatpush1.bf16.msra.mxu0 0
  %2443 = vmatprep.subr.bf16.mxu0 0
  %2444 = vmatpush1.bf16.msra.mxu0 0
  %2445 = vmatprep.subr.bf16.mxu0 0
  %2446 = vmatpush1.bf16.msra.mxu0 0
  %2447 = vmatprep.subr.bf16.mxu0 0
  %2448 = vmatpush1.bf16.msra.mxu0 0
  %2449 = vmatprep.subr.bf16.mxu0 0
  %2450 = vmatpush1.bf16.msra.mxu0 0
  %2451 = vmatprep.subr.bf16.mxu0 0
  %2452 = vmatpush1.bf16.msra.mxu0 0
  %2453 = vmatprep.subr.bf16.mxu0 0
  %2454 = vmatpush1.bf16.msra.mxu0 0
  %2455 = vmatprep.subr.bf16.mxu0 0
  %2456 = vmatpush1.bf16.msra.mxu0 0
  %2457 = vmatprep.subr.bf16.mxu0 0
  %2458 = vmatpush1.bf16.msra.mxu0 0
  %2459 = vmatprep.subr.bf16.mxu0 0
  %2460 = vmatpush1.bf16.msra.mxu0 0
  %2461 = vmatprep.subr.bf16.mxu0 0
  %2462 = vmatpush1.bf16.msra.mxu0 0
  %2463 = vmatprep.subr.bf16.mxu0 0
  %2464 = vmatpush1.bf16.msra.mxu0 0
  %2465 = vmatprep.subr.bf16.mxu0 0
  %2466 = vmatpush1.bf16.msra.mxu0 0
  %2467 = vmatprep.mubr.bf16.mxu0 0
  %2468 = vmatmul.mubr.bf16.gmra.mrb[0].mxu0 %v2433
  %v2469 = vpop.f32.mrb[0].mxu0
  %v2470 = vadd.f32 0.0, %v2469
  %v2471 = vpop.f32.mrb[0].mxu0
  %v2472 = vpop.f32.mrb[0].mxu0
  %v2473 = vadd.f32 0.0, %v2472
  %v2474 = vpop.f32.mrb[0].mxu0
  %2475 = vdwg.mxu0
  %v2476 = vadd.f32 %v2426, %v2470
  %v2477 = vadd.f32 %v2427, %v2473
  %v2478 = vxor.u32 %v2476, 2147483648
  %v2479 = vxor.u32 %v2477, 2147483648
  %v2480 = vmul.f32 %v2478, 1.442695
  %v2481 = vpow.pop %v2480
  %v2482 = vmul.f32 %v2479, 1.442695
  %v2483 = vpow.pop %v2482
  %v2484 = vadd.f32 %v2481, 1.0
  %v2485 = vadd.f32 %v2483, 1.0
  %v2486 = vrcp.pop %v2484
  %v2487 = vmul.f32 1.0, %v2486
  %v2488 = vrcp.pop %v2485
  %v2489 = vmul.f32 1.0, %v2488
  %v2490 = vadd.f32 %v2470, %v1023
  %v2491 = vadd.f32 %v2473, %v1023
  %2494 = vrot.lane.b32.xlu0 %v2490, 64
  %v2495 = vpop.permute.xlu0 %2494
  %2496 = vrot.lane.b32.xlu0 %v2491, 64
  %v2497 = vpop.permute.xlu0 %2496
  %v2500 = vmul.f32 %v2487, %v2495
  %v2501 = vmul.f32 %v2489, %v2497
  %2504 = vrot.lane.b32.xlu0 %v2500, 64
  %v2505 = vpop.permute.xlu0 %2504
  %2506 = vrot.lane.b32.xlu0 %v2501, 64
  %v2507 = vpop.permute.xlu0 %2506
  %v2510 = vadd.f32 %v2426, %v2505
  %v2511 = vadd.f32 %v2427, %v2507
  %v2512 = vtanh.pop %v2510
  %v2513 = vtanh.pop %v2511
  %v2514 = vsub.f32 %v2412, %v2512
  %v2515 = vsub.f32 %v2413, %v2513
  %2518 = vrot.lane.b32.xlu0 %v2514, 96
  %v2519 = vpop.permute.xlu0 %2518
  %2520 = vrot.lane.b32.xlu0 %v2515, 96
  %v2521 = vpop.permute.xlu0 %2520
  %v2524 = vmul.f32 %v2487, %v2519
  %v2525 = vmul.f32 %v2489, %v2521
  %2528 = vrot.lane.b32.xlu0 %v2524, 32
  %v2529 = vpop.permute.xlu0 %2528
  %2530 = vrot.lane.b32.xlu0 %v2525, 32
  %v2531 = vpop.permute.xlu0 %2530
  %v2534 = vadd.f32 %v2512, %v2529
  %v2535 = vadd.f32 %v2513, %v2531
  %2538 = vrot.lane.b32.xlu0 %v2534, 64
  %v2539 = vpop.permute.xlu0 %2538
  %2540 = vrot.lane.b32.xlu0 %v2535, 64
  %v2541 = vpop.permute.xlu0 %2540
  %2544 = vst.msk [vmem:[#allocation4 + $0xc0] sm:$0xff] %vm65, %v2539
  %2545 = vst.msk [vmem:[#allocation4 + $0xc8] sm:$0xff] %vm65, %v2541
  %2546 = vst.msk [vmem:[#allocation4 + $0x30] sm:$0xff] %vm1081, %v2539
  %2547 = vst.msk [vmem:[#allocation4 + $0x38] sm:$0xff] %vm1081, %v2541
  %v2548 = vld [vmem:[#allocation3 + $0xd0] sm:$0xff]
  %v2549 = vld [vmem:[#allocation3 + $0xd8] sm:$0xff]
  %v2550 = vpack.c.bf16 %v2535, %v2534
  %2552 = vrot.lane.b32.xlu0 %v2550, 64
  %v2553 = vpop.permute.xlu0 %2552
  %v2555 = vsel %vm958, %v2553, 0
  %2557 = vmatprep.subr.bf16.mxu0 0
  %2558 = vmatpush1.bf16.msra.mxu0 %v954
  %2559 = vmatprep.subr.bf16.mxu0 0
  %2560 = vmatpush1.bf16.msra.mxu0 %v955
  %2561 = vmatprep.subr.bf16.mxu0 0
  %2562 = vmatpush1.bf16.msra.mxu0 0
  %2563 = vmatprep.subr.bf16.mxu0 0
  %2564 = vmatpush1.bf16.msra.mxu0 0
  %2565 = vmatprep.subr.bf16.mxu0 0
  %2566 = vmatpush1.bf16.msra.mxu0 0
  %2567 = vmatprep.subr.bf16.mxu0 0
  %2568 = vmatpush1.bf16.msra.mxu0 0
  %2569 = vmatprep.subr.bf16.mxu0 0
  %2570 = vmatpush1.bf16.msra.mxu0 0
  %2571 = vmatprep.subr.bf16.mxu0 0
  %2572 = vmatpush1.bf16.msra.mxu0 0
  %2573 = vmatprep.subr.bf16.mxu0 0
  %2574 = vmatpush1.bf16.msra.mxu0 0
  %2575 = vmatprep.subr.bf16.mxu0 0
  %2576 = vmatpush1.bf16.msra.mxu0 0
  %2577 = vmatprep.subr.bf16.mxu0 0
  %2578 = vmatpush1.bf16.msra.mxu0 0
  %2579 = vmatprep.subr.bf16.mxu0 0
  %2580 = vmatpush1.bf16.msra.mxu0 0
  %2581 = vmatprep.subr.bf16.mxu0 0
  %2582 = vmatpush1.bf16.msra.mxu0 0
  %2583 = vmatprep.subr.bf16.mxu0 0
  %2584 = vmatpush1.bf16.msra.mxu0 0
  %2585 = vmatprep.subr.bf16.mxu0 0
  %2586 = vmatpush1.bf16.msra.mxu0 0
  %2587 = vmatprep.subr.bf16.mxu0 0
  %2588 = vmatpush1.bf16.msra.mxu0 0
  %2589 = vmatprep.mubr.bf16.mxu0 0
  %2590 = vmatmul.mubr.bf16.gmra.mrb[0].mxu0 %v2555
  %v2591 = vpop.f32.mrb[0].mxu0
  %v2592 = vadd.f32 0.0, %v2591
  %v2593 = vpop.f32.mrb[0].mxu0
  %v2594 = vpop.f32.mrb[0].mxu0
  %v2595 = vadd.f32 0.0, %v2594
  %v2596 = vpop.f32.mrb[0].mxu0
  %2597 = vdwg.mxu0
  %v2598 = vadd.f32 %v2548, %v2592
  %v2599 = vadd.f32 %v2549, %v2595
  %v2600 = vxor.u32 %v2598, 2147483648
  %v2601 = vxor.u32 %v2599, 2147483648
  %v2602 = vmul.f32 %v2600, 1.442695
  %v2603 = vpow.pop %v2602
  %v2604 = vmul.f32 %v2601, 1.442695
  %v2605 = vpow.pop %v2604
  %v2606 = vadd.f32 %v2603, 1.0
  %v2607 = vadd.f32 %v2605, 1.0
  %v2608 = vrcp.pop %v2606
  %v2609 = vmul.f32 1.0, %v2608
  %v2610 = vrcp.pop %v2607
  %v2611 = vmul.f32 1.0, %v2610
  %v2612 = vadd.f32 %v2592, %v1023
  %v2613 = vadd.f32 %v2595, %v1023
  %2616 = vrot.lane.b32.xlu0 %v2612, 64
  %v2617 = vpop.permute.xlu0 %2616
  %2618 = vrot.lane.b32.xlu0 %v2613, 64
  %v2619 = vpop.permute.xlu0 %2618
  %v2622 = vmul.f32 %v2609, %v2617
  %v2623 = vmul.f32 %v2611, %v2619
  %2626 = vrot.lane.b32.xlu0 %v2622, 64
  %v2627 = vpop.permute.xlu0 %2626
  %2628 = vrot.lane.b32.xlu0 %v2623, 64
  %v2629 = vpop.permute.xlu0 %2628
  %v2632 = vadd.f32 %v2548, %v2627
  %v2633 = vadd.f32 %v2549, %v2629
  %v2634 = vtanh.pop %v2632
  %v2635 = vtanh.pop %v2633
  %v2636 = vsub.f32 %v2534, %v2634
  %v2637 = vsub.f32 %v2535, %v2635
  %2640 = vrot.lane.b32.xlu0 %v2636, 96
  %v2641 = vpop.permute.xlu0 %2640
  %2642 = vrot.lane.b32.xlu0 %v2637, 96
  %v2643 = vpop.permute.xlu0 %2642
  %v2646 = vmul.f32 %v2609, %v2641
  %v2647 = vmul.f32 %v2611, %v2643
  %2650 = vrot.lane.b32.xlu0 %v2646, 32
  %v2651 = vpop.permute.xlu0 %2650
  %2652 = vrot.lane.b32.xlu0 %v2647, 32
  %v2653 = vpop.permute.xlu0 %2652
  %v2656 = vadd.f32 %v2634, %v2651
  %v2657 = vadd.f32 %v2635, %v2653
  %2660 = vrot.lane.b32.xlu0 %v2656, 64
  %v2661 = vpop.permute.xlu0 %2660
  %2662 = vrot.lane.b32.xlu0 %v2657, 64
  %v2663 = vpop.permute.xlu0 %2662
  %2666 = vst.msk [vmem:[#allocation4 + $0xd0] sm:$0xff] %vm65, %v2661
  %2667 = vst.msk [vmem:[#allocation4 + $0xd8] sm:$0xff] %vm65, %v2663
  %2668 = vst.msk [vmem:[#allocation4 + $0x20] sm:$0xff] %vm1081, %v2661
  %2669 = vst.msk [vmem:[#allocation4 + $0x28] sm:$0xff] %vm1081, %v2663
  %v2670 = vld [vmem:[#allocation3 + $0xe0] sm:$0xff]
  %v2671 = vld [vmem:[#allocation3 + $0xe8] sm:$0xff]
  %v2672 = vpack.c.bf16 %v2657, %v2656
  %2674 = vrot.lane.b32.xlu0 %v2672, 64
  %v2675 = vpop.permute.xlu0 %2674
  %v2677 = vsel %vm958, %v2675, 0
  %2679 = vmatprep.subr.bf16.mxu0 0
  %2680 = vmatpush1.bf16.msra.mxu0 %v954
  %2681 = vmatprep.subr.bf16.mxu0 0
  %2682 = vmatpush1.bf16.msra.mxu0 %v955
  %2683 = vmatprep.subr.bf16.mxu0 0
  %2684 = vmatpush1.bf16.msra.mxu0 0
  %2685 = vmatprep.subr.bf16.mxu0 0
  %2686 = vmatpush1.bf16.msra.mxu0 0
  %2687 = vmatprep.subr.bf16.mxu0 0
  %2688 = vmatpush1.bf16.msra.mxu0 0
  %2689 = vmatprep.subr.bf16.mxu0 0
  %2690 = vmatpush1.bf16.msra.mxu0 0
  %2691 = vmatprep.subr.bf16.mxu0 0
  %2692 = vmatpush1.bf16.msra.mxu0 0
  %2693 = vmatprep.subr.bf16.mxu0 0
  %2694 = vmatpush1.bf16.msra.mxu0 0
  %2695 = vmatprep.subr.bf16.mxu0 0
  %2696 = vmatpush1.bf16.msra.mxu0 0
  %2697 = vmatprep.subr.bf16.mxu0 0
  %2698 = vmatpush1.bf16.msra.mxu0 0
  %2699 = vmatprep.subr.bf16.mxu0 0
  %2700 = vmatpush1.bf16.msra.mxu0 0
  %2701 = vmatprep.subr.bf16.mxu0 0
  %2702 = vmatpush1.bf16.msra.mxu0 0
  %2703 = vmatprep.subr.bf16.mxu0 0
  %2704 = vmatpush1.bf16.msra.mxu0 0
  %2705 = vmatprep.subr.bf16.mxu0 0
  %2706 = vmatpush1.bf16.msra.mxu0 0
  %2707 = vmatprep.subr.bf16.mxu0 0
  %2708 = vmatpush1.bf16.msra.mxu0 0
  %2709 = vmatprep.subr.bf16.mxu0 0
  %2710 = vmatpush1.bf16.msra.mxu0 0
  %2711 = vmatprep.mubr.bf16.mxu0 0
  %2712 = vmatmul.mubr.bf16.gmra.mrb[0].mxu0 %v2677
  %v2713 = vpop.f32.mrb[0].mxu0
  %v2714 = vadd.f32 0.0, %v2713
  %v2715 = vpop.f32.mrb[0].mxu0
  %v2716 = vpop.f32.mrb[0].mxu0
  %v2717 = vadd.f32 0.0, %v2716
  %v2718 = vpop.f32.mrb[0].mxu0
  %2719 = vdwg.mxu0
  %v2720 = vadd.f32 %v2670, %v2714
  %v2721 = vadd.f32 %v2671, %v2717
  %v2722 = vxor.u32 %v2720, 2147483648
  %v2723 = vxor.u32 %v2721, 2147483648
  %v2724 = vmul.f32 %v2722, 1.442695
  %v2725 = vpow.pop %v2724
  %v2726 = vmul.f32 %v2723, 1.442695
  %v2727 = vpow.pop %v2726
  %v2728 = vadd.f32 %v2725, 1.0
  %v2729 = vadd.f32 %v2727, 1.0
  %v2730 = vrcp.pop %v2728
  %v2731 = vmul.f32 1.0, %v2730
  %v2732 = vrcp.pop %v2729
  %v2733 = vmul.f32 1.0, %v2732
  %v2734 = vadd.f32 %v2714, %v1023
  %v2735 = vadd.f32 %v2717, %v1023
  %2738 = vrot.lane.b32.xlu0 %v2734, 64
  %v2739 = vpop.permute.xlu0 %2738
  %2740 = vrot.lane.b32.xlu0 %v2735, 64
  %v2741 = vpop.permute.xlu0 %2740
  %v2744 = vmul.f32 %v2731, %v2739
  %v2745 = vmul.f32 %v2733, %v2741
  %2748 = vrot.lane.b32.xlu0 %v2744, 64
  %v2749 = vpop.permute.xlu0 %2748
  %2750 = vrot.lane.b32.xlu0 %v2745, 64
  %v2751 = vpop.permute.xlu0 %2750
  %v2754 = vadd.f32 %v2670, %v2749
  %v2755 = vadd.f32 %v2671, %v2751
  %v2756 = vtanh.pop %v2754
  %v2757 = vtanh.pop %v2755
  %v2758 = vsub.f32 %v2656, %v2756
  %v2759 = vsub.f32 %v2657, %v2757
  %2762 = vrot.lane.b32.xlu0 %v2758, 96
  %v2763 = vpop.permute.xlu0 %2762
  %2764 = vrot.lane.b32.xlu0 %v2759, 96
  %v2765 = vpop.permute.xlu0 %2764
  %v2768 = vmul.f32 %v2731, %v2763
  %v2769 = vmul.f32 %v2733, %v2765
  %2772 = vrot.lane.b32.xlu0 %v2768, 32
  %v2773 = vpop.permute.xlu0 %2772
  %2774 = vrot.lane.b32.xlu0 %v2769, 32
  %v2775 = vpop.permute.xlu0 %2774
  %v2778 = vadd.f32 %v2756, %v2773
  %v2779 = vadd.f32 %v2757, %v2775
  %2782 = vrot.lane.b32.xlu0 %v2778, 64
  %v2783 = vpop.permute.xlu0 %2782
  %2784 = vrot.lane.b32.xlu0 %v2779, 64
  %v2785 = vpop.permute.xlu0 %2784
  %2788 = vst.msk [vmem:[#allocation4 + $0xe0] sm:$0xff] %vm65, %v2783
  %2789 = vst.msk [vmem:[#allocation4 + $0xe8] sm:$0xff] %vm65, %v2785
  %2790 = vst.msk [vmem:[#allocation4 + $0x10] sm:$0xff] %vm1081, %v2783
  %2791 = vst.msk [vmem:[#allocation4 + $0x18] sm:$0xff] %vm1081, %v2785
  %v2792 = vld [vmem:[#allocation3 + $0xf0] sm:$0xff]
  %v2793 = vld [vmem:[#allocation3 + $0xf8] sm:$0xff]
  %v2794 = vpack.c.bf16 %v2779, %v2778
  %2796 = vrot.lane.b32.xlu0 %v2794, 64
  %v2797 = vpop.permute.xlu0 %2796
  %v2799 = vsel %vm958, %v2797, 0
  %2801 = vmatprep.subr.bf16.mxu0 0
  %2802 = vmatpush1.bf16.msra.mxu0 %v954
  %2803 = vmatprep.subr.bf16.mxu0 0
  %2804 = vmatpush1.bf16.msra.mxu0 %v955
  %2805 = vmatprep.subr.bf16.mxu0 0
  %2806 = vmatpush1.bf16.msra.mxu0 0
  %2807 = vmatprep.subr.bf16.mxu0 0
  %2808 = vmatpush1.bf16.msra.mxu0 0
  %2809 = vmatprep.subr.bf16.mxu0 0
  %2810 = vmatpush1.bf16.msra.mxu0 0
  %2811 = vmatprep.subr.bf16.mxu0 0
  %2812 = vmatpush1.bf16.msra.mxu0 0
  %2813 = vmatprep.subr.bf16.mxu0 0
  %2814 = vmatpush1.bf16.msra.mxu0 0
  %2815 = vmatprep.subr.bf16.mxu0 0
  %2816 = vmatpush1.bf16.msra.mxu0 0
  %2817 = vmatprep.subr.bf16.mxu0 0
  %2818 = vmatpush1.bf16.msra.mxu0 0
  %2819 = vmatprep.subr.bf16.mxu0 0
  %2820 = vmatpush1.bf16.msra.mxu0 0
  %2821 = vmatprep.subr.bf16.mxu0 0
  %2822 = vmatpush1.bf16.msra.mxu0 0
  %2823 = vmatprep.subr.bf16.mxu0 0
  %2824 = vmatpush1.bf16.msra.mxu0 0
  %2825 = vmatprep.subr.bf16.mxu0 0
  %2826 = vmatpush1.bf16.msra.mxu0 0
  %2827 = vmatprep.subr.bf16.mxu0 0
  %2828 = vmatpush1.bf16.msra.mxu0 0
  %2829 = vmatprep.subr.bf16.mxu0 0
  %2830 = vmatpush1.bf16.msra.mxu0 0
  %2831 = vmatprep.subr.bf16.mxu0 0
  %2832 = vmatpush1.bf16.msra.mxu0 0
  %2833 = vmatprep.mubr.bf16.mxu0 0
  %2834 = vmatmul.mubr.bf16.gmra.mrb[0].mxu0 %v2799
  %v2835 = vpop.f32.mrb[0].mxu0
  %v2836 = vadd.f32 0.0, %v2835
  %v2837 = vpop.f32.mrb[0].mxu0
  %v2838 = vpop.f32.mrb[0].mxu0
  %v2839 = vadd.f32 0.0, %v2838
  %v2840 = vpop.f32.mrb[0].mxu0
  %2841 = vdwg.mxu0
  %v2842 = vadd.f32 %v2792, %v2836
  %v2843 = vadd.f32 %v2793, %v2839
  %v2844 = vxor.u32 %v2842, 2147483648
  %v2845 = vxor.u32 %v2843, 2147483648
  %v2846 = vmul.f32 %v2844, 1.442695
  %v2847 = vpow.pop %v2846
  %v2848 = vmul.f32 %v2845, 1.442695
  %v2849 = vpow.pop %v2848
  %v2850 = vadd.f32 %v2847, 1.0
  %v2851 = vadd.f32 %v2849, 1.0
  %v2852 = vrcp.pop %v2850
  %v2853 = vmul.f32 1.0, %v2852
  %v2854 = vrcp.pop %v2851
  %v2855 = vmul.f32 1.0, %v2854
  %v2856 = vadd.f32 %v2836, %v1023
  %v2857 = vadd.f32 %v2839, %v1023
  %2860 = vrot.lane.b32.xlu0 %v2856, 64
  %v2861 = vpop.permute.xlu0 %2860
  %2862 = vrot.lane.b32.xlu0 %v2857, 64
  %v2863 = vpop.permute.xlu0 %2862
  %v2866 = vmul.f32 %v2853, %v2861
  %v2867 = vmul.f32 %v2855, %v2863
  %2870 = vrot.lane.b32.xlu0 %v2866, 64
  %v2871 = vpop.permute.xlu0 %2870
  %2872 = vrot.lane.b32.xlu0 %v2867, 64
  %v2873 = vpop.permute.xlu0 %2872
  %v2876 = vadd.f32 %v2792, %v2871
  %v2877 = vadd.f32 %v2793, %v2873
  %v2878 = vtanh.pop %v2876
  %v2879 = vtanh.pop %v2877
  %v2880 = vsub.f32 %v2778, %v2878
  %v2881 = vsub.f32 %v2779, %v2879
  %2884 = vrot.lane.b32.xlu0 %v2880, 96
  %v2885 = vpop.permute.xlu0 %2884
  %2886 = vrot.lane.b32.xlu0 %v2881, 96
  %v2887 = vpop.permute.xlu0 %2886
  %v2890 = vmul.f32 %v2853, %v2885
  %v2891 = vmul.f32 %v2855, %v2887
  %2894 = vrot.lane.b32.xlu0 %v2890, 32
  %v2895 = vpop.permute.xlu0 %2894
  %2896 = vrot.lane.b32.xlu0 %v2891, 32
  %v2897 = vpop.permute.xlu0 %2896
  %v2900 = vadd.f32 %v2878, %v2895
  %v2901 = vadd.f32 %v2879, %v2897
  %2904 = vrot.lane.b32.xlu0 %v2900, 64
  %v2905 = vpop.permute.xlu0 %2904
  %2906 = vrot.lane.b32.xlu0 %v2901, 64
  %v2907 = vpop.permute.xlu0 %2906
  %2910 = vst.msk [vmem:[#allocation4 + $0xf0] sm:$0xff] %vm65, %v2905
  %2911 = vst.msk [vmem:[#allocation4 + $0xf8] sm:$0xff] %vm65, %v2907
  %2912 = vst.msk [vmem:[#allocation4] sm:$0xff] %vm1081, %v2905
  %2913 = vst.msk [vmem:[#allocation4 + $0x8] sm:$0xff] %vm1081, %v2907
  %v2914 = vld [vmem:[#allocation4] sm:$0xff]
  %v2915 = vld [vmem:[#allocation4 + $0x8] sm:$0xff]
  %v2916 = vld [vmem:[#allocation4 + $0x10] sm:$0xff]
  %v2917 = vld [vmem:[#allocation4 + $0x18] sm:$0xff]
  %v2918 = vld [vmem:[#allocation4 + $0x20] sm:$0xff]
  %v2919 = vld [vmem:[#allocation4 + $0x28] sm:$0xff]
  %v2920 = vld [vmem:[#allocation4 + $0x30] sm:$0xff]
  %v2921 = vld [vmem:[#allocation4 + $0x38] sm:$0xff]
  %v2922 = vld [vmem:[#allocation4 + $0x40] sm:$0xff]
  %v2923 = vld [vmem:[#allocation4 + $0x48] sm:$0xff]
  %v2924 = vld [vmem:[#allocation4 + $0x50] sm:$0xff]
  %v2925 = vld [vmem:[#allocation4 + $0x58] sm:$0xff]
  %v2926 = vld [vmem:[#allocation4 + $0x60] sm:$0xff]
  %v2927 = vld [vmem:[#allocation4 + $0x68] sm:$0xff]
  %v2928 = vld [vmem:[#allocation4 + $0x70] sm:$0xff]
  %v2929 = vld [vmem:[#allocation4 + $0x78] sm:$0xff]
  %v2930 = vld [vmem:[#allocation4 + $0x80] sm:$0xff]
  %v2931 = vld [vmem:[#allocation4 + $0x88] sm:$0xff]
  %v2932 = vld [vmem:[#allocation4 + $0x90] sm:$0xff]
  %v2933 = vld [vmem:[#allocation4 + $0x98] sm:$0xff]
  %v2934 = vld [vmem:[#allocation4 + $0xa0] sm:$0xff]
  %v2935 = vld [vmem:[#allocation4 + $0xa8] sm:$0xff]
  %v2936 = vld [vmem:[#allocation4 + $0xb0] sm:$0xff]
  %v2937 = vld [vmem:[#allocation4 + $0xb8] sm:$0xff]
  %v2938 = vld [vmem:[#allocation4 + $0xc0] sm:$0xff]
  %v2939 = vld [vmem:[#allocation4 + $0xc8] sm:$0xff]
  %v2940 = vld [vmem:[#allocation4 + $0xd0] sm:$0xff]
  %v2941 = vld [vmem:[#allocation4 + $0xd8] sm:$0xff]
  %v2942 = vld [vmem:[#allocation4 + $0xe0] sm:$0xff]
  %v2943 = vld [vmem:[#allocation4 + $0xe8] sm:$0xff]
  %v2944 = vld [vmem:[#allocation4 + $0xf0] sm:$0xff]
  %v2945 = vld [vmem:[#allocation4 + $0xf8] sm:$0xff]
  %v2946 = vld [vmem:[%s6] sm:$0xff]
  %v2947 = vld [vmem:[%s6 + $0x8] sm:$0xff]
  %v2948 = vld [vmem:[%s6 + $0x10] sm:$0xff]
  %v2949 = vld [vmem:[%s6 + $0x18] sm:$0xff]
  %v2950 = vld [vmem:[%s7] sm:$0x1]
  %v2952 = vlaneseq
  %v2953 = vshrl.u32 %v2952, 7
  %v2954 = vsub.s32 0, %v2953
  %v2955 = vrot.slane %v2950, %v2954
  %v2958 = vsel %vm958, %v2914, 0
  %v2961 = vsel %vm958, %v2915, 0
  %v2964 = vsel %vm958, %v2916, 0
  %v2967 = vsel %vm958, %v2917, 0
  %v2970 = vsel %vm958, %v2918, 0
  %v2973 = vsel %vm958, %v2919, 0
  %v2976 = vsel %vm958, %v2920, 0
  %v2979 = vsel %vm958, %v2921, 0
  %v2982 = vsel %vm958, %v2922, 0
  %v2985 = vsel %vm958, %v2923, 0
  %v2988 = vsel %vm958, %v2924, 0
  %v2991 = vsel %vm958, %v2925, 0
  %v2994 = vsel %vm958, %v2926, 0
  %v2997 = vsel %vm958, %v2927, 0
  %v3000 = vsel %vm958, %v2928, 0
  %v3003 = vsel %vm958, %v2929, 0
  %v3006 = vsel %vm958, %v2930, 0
  %v3009 = vsel %vm958, %v2931, 0
  %v3012 = vsel %vm958, %v2932, 0
  %v3015 = vsel %vm958, %v2933, 0
  %v3018 = vsel %vm958, %v2934, 0
  %v3021 = vsel %vm958, %v2935, 0
  %v3024 = vsel %vm958, %v2936, 0
  %v3027 = vsel %vm958, %v2937, 0
  %v3030 = vsel %vm958, %v2938, 0
  %v3033 = vsel %vm958, %v2939, 0
  %v3036 = vsel %vm958, %v2940, 0
  %v3039 = vsel %vm958, %v2941, 0
  %v3042 = vsel %vm958, %v2942, 0
  %v3045 = vsel %vm958, %v2943, 0
  %v3048 = vsel %vm958, %v2944, 0
  %v3051 = vsel %vm958, %v2945, 0
  %3053 = vmatprep.subr.mxu0 0.0
  %3054 = vmatpush1.msra.mxu0 %v2946
  %3055 = vmatprep.subr.mxu0 0.0
  %3056 = vmatpush1.msra.mxu0 %v2947
  %3057 = vmatprep.subr.mxu0 0.0
  %3058 = vmatpush1.msra.mxu0 %v2948
  %3059 = vmatprep.subr.mxu0 0.0
  %3060 = vmatpush1.msra.mxu0 %v2949
  %3061 = vmatprep.subr.mxu0 0.0
  %3062 = vmatpush1.msra.mxu0 0.0
  %3063 = vmatprep.subr.mxu0 0.0
  %3064 = vmatpush1.msra.mxu0 0.0
  %3065 = vmatprep.subr.mxu0 0.0
  %3066 = vmatpush1.msra.mxu0 0.0
  %3067 = vmatprep.subr.mxu0 0.0
  %3068 = vmatpush1.msra.mxu0 0.0
  %3069 = vmatprep.subr.mxu0 0.0
  %3070 = vmatpush1.msra.mxu0 0.0
  %3071 = vmatprep.subr.mxu0 0.0
  %3072 = vmatpush1.msra.mxu0 0.0
  %3073 = vmatprep.subr.mxu0 0.0
  %3074 = vmatpush1.msra.mxu0 0.0
  %3075 = vmatprep.subr.mxu0 0.0
  %3076 = vmatpush1.msra.mxu0 0.0
  %3077 = vmatprep.subr.mxu0 0.0
  %3078 = vmatpush1.msra.mxu0 0.0
  %3079 = vmatprep.subr.mxu0 0.0
  %3080 = vmatpush1.msra.mxu0 0.0
  %3081 = vmatprep.subr.mxu0 0.0
  %3082 = vmatpush1.msra.mxu0 0.0
  %3083 = vmatprep.subr.mxu0 0.0
  %3084 = vmatpush1.msra.mxu0 0.0
  %3085 = vmatprep.subr.mxu0 0.0
  %3086 = vmatpush1.msra.mxu0 0.0
  %3087 = vmatprep.subr.mxu0 0.0
  %3088 = vmatpush1.msra.mxu0 0.0
  %3089 = vmatprep.subr.mxu0 0.0
  %3090 = vmatpush1.msra.mxu0 0.0
  %3091 = vmatprep.subr.mxu0 0.0
  %3092 = vmatpush1.msra.mxu0 0.0
  %3093 = vmatprep.subr.mxu0 0.0
  %3094 = vmatpush1.msra.mxu0 0.0
  %3095 = vmatprep.subr.mxu0 0.0
  %3096 = vmatpush1.msra.mxu0 0.0
  %3097 = vmatprep.subr.mxu0 0.0
  %3098 = vmatpush1.msra.mxu0 0.0
  %3099 = vmatprep.subr.mxu0 0.0
  %3100 = vmatpush1.msra.mxu0 0.0
  %3101 = vmatprep.subr.mxu0 0.0
  %3102 = vmatpush1.msra.mxu0 0.0
  %3103 = vmatprep.subr.mxu0 0.0
  %3104 = vmatpush1.msra.mxu0 0.0
  %3105 = vmatprep.subr.mxu0 0.0
  %3106 = vmatpush1.msra.mxu0 0.0
  %3107 = vmatprep.subr.mxu0 0.0
  %3108 = vmatpush1.msra.mxu0 0.0
  %3109 = vmatprep.subr.mxu0 0.0
  %3110 = vmatpush1.msra.mxu0 0.0
  %3111 = vmatprep.subr.mxu0 0.0
  %3112 = vmatpush1.msra.mxu0 0.0
  %3113 = vmatprep.subr.mxu0 0.0
  %3114 = vmatpush1.msra.mxu0 0.0
  %3115 = vmatprep.subr.mxu0 0.0
  %3116 = vmatpush1.msra.mxu0 0.0
  %3117 = vmatprep.mubr.f32.mxu0 0.0
  %3118 = vmatmul.mubr.f32.gmra.mrb[0].mxu0 %v2958
  %v3119 = vpop.f32.mrb[0].mxu0
  %v3120 = vadd.f32 %v2955, %v3119
  %v3121 = vpop.f32.mrb[0].mxu0
  %3122 = vmatprep.mubr.f32.mxu0 0.0
  %3123 = vmatmul.mubr.f32.gmra.mrb[0].mxu0 %v2961
  %v3124 = vpop.f32.mrb[0].mxu0
  %v3125 = vadd.f32 %v2955, %v3124
  %v3126 = vpop.f32.mrb[0].mxu0
  %3127 = vmatprep.mubr.f32.mxu0 0.0
  %3128 = vmatmul.mubr.f32.gmra.mrb[0].mxu0 %v2964
  %v3129 = vpop.f32.mrb[0].mxu0
  %v3130 = vadd.f32 %v2955, %v3129
  %v3131 = vpop.f32.mrb[0].mxu0
  %3132 = vmatprep.mubr.f32.mxu0 0.0
  %3133 = vmatmul.mubr.f32.gmra.mrb[0].mxu0 %v2967
  %v3134 = vpop.f32.mrb[0].mxu0
  %v3135 = vadd.f32 %v2955, %v3134
  %v3136 = vpop.f32.mrb[0].mxu0
  %3137 = vmatprep.mubr.f32.mxu0 0.0
  %3138 = vmatmul.mubr.f32.gmra.mrb[0].mxu0 %v2970
  %v3139 = vpop.f32.mrb[0].mxu0
  %v3140 = vadd.f32 %v2955, %v3139
  %v3141 = vpop.f32.mrb[0].mxu0
  %3142 = vmatprep.mubr.f32.mxu0 0.0
  %3143 = vmatmul.mubr.f32.gmra.mrb[0].mxu0 %v2973
  %v3144 = vpop.f32.mrb[0].mxu0
  %v3145 = vadd.f32 %v2955, %v3144
  %v3146 = vpop.f32.mrb[0].mxu0
  %3147 = vmatprep.mubr.f32.mxu0 0.0
  %3148 = vmatmul.mubr.f32.gmra.mrb[0].mxu0 %v2976
  %v3149 = vpop.f32.mrb[0].mxu0
  %v3150 = vadd.f32 %v2955, %v3149
  %v3151 = vpop.f32.mrb[0].mxu0
  %3152 = vmatprep.mubr.f32.mxu0 0.0
  %3153 = vmatmul.mubr.f32.gmra.mrb[0].mxu0 %v2979
  %v3154 = vpop.f32.mrb[0].mxu0
  %v3155 = vadd.f32 %v2955, %v3154
  %v3156 = vpop.f32.mrb[0].mxu0
  %3157 = vmatprep.mubr.f32.mxu0 0.0
  %3158 = vmatmul.mubr.f32.gmra.mrb[0].mxu0 %v2982
  %v3159 = vpop.f32.mrb[0].mxu0
  %v3160 = vadd.f32 %v2955, %v3159
  %v3161 = vpop.f32.mrb[0].mxu0
  %3162 = vmatprep.mubr.f32.mxu0 0.0
  %3163 = vmatmul.mubr.f32.gmra.mrb[0].mxu0 %v2985
  %v3164 = vpop.f32.mrb[0].mxu0
  %v3165 = vadd.f32 %v2955, %v3164
  %v3166 = vpop.f32.mrb[0].mxu0
  %3167 = vmatprep.mubr.f32.mxu0 0.0
  %3168 = vmatmul.mubr.f32.gmra.mrb[0].mxu0 %v2988
  %v3169 = vpop.f32.mrb[0].mxu0
  %v3170 = vadd.f32 %v2955, %v3169
  %v3171 = vpop.f32.mrb[0].mxu0
  %3172 = vmatprep.mubr.f32.mxu0 0.0
  %3173 = vmatmul.mubr.f32.gmra.mrb[0].mxu0 %v2991
  %v3174 = vpop.f32.mrb[0].mxu0
  %v3175 = vadd.f32 %v2955, %v3174
  %v3176 = vpop.f32.mrb[0].mxu0
  %3177 = vmatprep.mubr.f32.mxu0 0.0
  %3178 = vmatmul.mubr.f32.gmra.mrb[0].mxu0 %v2994
  %v3179 = vpop.f32.mrb[0].mxu0
  %v3180 = vadd.f32 %v2955, %v3179
  %v3181 = vpop.f32.mrb[0].mxu0
  %3182 = vmatprep.mubr.f32.mxu0 0.0
  %3183 = vmatmul.mubr.f32.gmra.mrb[0].mxu0 %v2997
  %v3184 = vpop.f32.mrb[0].mxu0
  %v3185 = vadd.f32 %v2955, %v3184
  %v3186 = vpop.f32.mrb[0].mxu0
  %3187 = vmatprep.mubr.f32.mxu0 0.0
  %3188 = vmatmul.mubr.f32.gmra.mrb[0].mxu0 %v3000
  %v3189 = vpop.f32.mrb[0].mxu0
  %v3190 = vadd.f32 %v2955, %v3189
  %v3191 = vpop.f32.mrb[0].mxu0
  %3192 = vmatprep.mubr.f32.mxu0 0.0
  %3193 = vmatmul.mubr.f32.gmra.mrb[0].mxu0 %v3003
  %v3194 = vpop.f32.mrb[0].mxu0
  %v3195 = vadd.f32 %v2955, %v3194
  %v3196 = vpop.f32.mrb[0].mxu0
  %3197 = vmatprep.mubr.f32.mxu0 0.0
  %3198 = vmatmul.mubr.f32.gmra.mrb[0].mxu0 %v3006
  %v3199 = vpop.f32.mrb[0].mxu0
  %v3200 = vadd.f32 %v2955, %v3199
  %v3201 = vpop.f32.mrb[0].mxu0
  %3202 = vmatprep.mubr.f32.mxu0 0.0
  %3203 = vmatmul.mubr.f32.gmra.mrb[0].mxu0 %v3009
  %v3204 = vpop.f32.mrb[0].mxu0
  %v3205 = vadd.f32 %v2955, %v3204
  %v3206 = vpop.f32.mrb[0].mxu0
  %3207 = vmatprep.mubr.f32.mxu0 0.0
  %3208 = vmatmul.mubr.f32.gmra.mrb[0].mxu0 %v3012
  %v3209 = vpop.f32.mrb[0].mxu0
  %v3210 = vadd.f32 %v2955, %v3209
  %v3211 = vpop.f32.mrb[0].mxu0
  %3212 = vmatprep.mubr.f32.mxu0 0.0
  %3213 = vmatmul.mubr.f32.gmra.mrb[0].mxu0 %v3015
  %v3214 = vpop.f32.mrb[0].mxu0
  %v3215 = vadd.f32 %v2955, %v3214
  %v3216 = vpop.f32.mrb[0].mxu0
  %3217 = vmatprep.mubr.f32.mxu0 0.0
  %3218 = vmatmul.mubr.f32.gmra.mrb[0].mxu0 %v3018
  %v3219 = vpop.f32.mrb[0].mxu0
  %v3220 = vadd.f32 %v2955, %v3219
  %v3221 = vpop.f32.mrb[0].mxu0
  %3222 = vmatprep.mubr.f32.mxu0 0.0
  %3223 = vmatmul.mubr.f32.gmra.mrb[0].mxu0 %v3021
  %v3224 = vpop.f32.mrb[0].mxu0
  %v3225 = vadd.f32 %v2955, %v3224
  %v3226 = vpop.f32.mrb[0].mxu0
  %3227 = vmatprep.mubr.f32.mxu0 0.0
  %3228 = vmatmul.mubr.f32.gmra.mrb[0].mxu0 %v3024
  %v3229 = vpop.f32.mrb[0].mxu0
  %v3230 = vadd.f32 %v2955, %v3229
  %v3231 = vpop.f32.mrb[0].mxu0
  %3232 = vmatprep.mubr.f32.mxu0 0.0
  %3233 = vmatmul.mubr.f32.gmra.mrb[0].mxu0 %v3027
  %v3234 = vpop.f32.mrb[0].mxu0
  %v3235 = vadd.f32 %v2955, %v3234
  %v3236 = vpop.f32.mrb[0].mxu0
  %3237 = vmatprep.mubr.f32.mxu0 0.0
  %3238 = vmatmul.mubr.f32.gmra.mrb[0].mxu0 %v3030
  %v3239 = vpop.f32.mrb[0].mxu0
  %v3240 = vadd.f32 %v2955, %v3239
  %v3241 = vpop.f32.mrb[0].mxu0
  %3242 = vmatprep.mubr.f32.mxu0 0.0
  %3243 = vmatmul.mubr.f32.gmra.mrb[0].mxu0 %v3033
  %v3244 = vpop.f32.mrb[0].mxu0
  %v3245 = vadd.f32 %v2955, %v3244
  %v3246 = vpop.f32.mrb[0].mxu0
  %3247 = vmatprep.mubr.f32.mxu0 0.0
  %3248 = vmatmul.mubr.f32.gmra.mrb[0].mxu0 %v3036
  %v3249 = vpop.f32.mrb[0].mxu0
  %v3250 = vadd.f32 %v2955, %v3249
  %v3251 = vpop.f32.mrb[0].mxu0
  %3252 = vmatprep.mubr.f32.mxu0 0.0
  %3253 = vmatmul.mubr.f32.gmra.mrb[0].mxu0 %v3039
  %v3254 = vpop.f32.mrb[0].mxu0
  %v3255 = vadd.f32 %v2955, %v3254
  %v3256 = vpop.f32.mrb[0].mxu0
  %3257 = vmatprep.mubr.f32.mxu0 0.0
  %3258 = vmatmul.mubr.f32.gmra.mrb[0].mxu0 %v3042
  %v3259 = vpop.f32.mrb[0].mxu0
  %v3260 = vadd.f32 %v2955, %v3259
  %v3261 = vpop.f32.mrb[0].mxu0
  %3262 = vmatprep.mubr.f32.mxu0 0.0
  %3263 = vmatmul.mubr.f32.gmra.mrb[0].mxu0 %v3045
  %v3264 = vpop.f32.mrb[0].mxu0
  %v3265 = vadd.f32 %v2955, %v3264
  %v3266 = vpop.f32.mrb[0].mxu0
  %3267 = vmatprep.mubr.f32.mxu0 0.0
  %3268 = vmatmul.mubr.f32.gmra.mrb[0].mxu0 %v3048
  %v3269 = vpop.f32.mrb[0].mxu0
  %v3270 = vadd.f32 %v2955, %v3269
  %v3271 = vpop.f32.mrb[0].mxu0
  %3272 = vmatprep.mubr.f32.mxu0 0.0
  %3273 = vmatmul.mubr.f32.gmra.mrb[0].mxu0 %v3051
  %v3274 = vpop.f32.mrb[0].mxu0
  %v3275 = vadd.f32 %v2955, %v3274
  %v3276 = vpop.f32.mrb[0].mxu0
  %3277 = vdwg.mxu0
  %v3278 = vld [vmem:[%s8] sm:$0x1]
  %v3279 = vld [vmem:[%s9] sm:$0x1]
  %v3280 = vsel %vm65, %v3120, 0.0
  %3281 = vadd.xlane.f32.xlu0 %v3280
  %v3282 = vpop.xlane.xlu0 %3281
  %v3283 = vsel %vm65, %v3125, 0.0
  %3284 = vadd.xlane.f32.xlu0 %v3283
  %v3285 = vpop.xlane.xlu0 %3284
  %v3286 = vsel %vm65, %v3130, 0.0
  %3287 = vadd.xlane.f32.xlu0 %v3286
  %v3288 = vpop.xlane.xlu0 %3287
  %v3289 = vsel %vm65, %v3135, 0.0
  %3290 = vadd.xlane.f32.xlu0 %v3289
  %v3291 = vpop.xlane.xlu0 %3290
  %v3292 = vsel %vm65, %v3140, 0.0
  %3293 = vadd.xlane.f32.xlu0 %v3292
  %v3294 = vpop.xlane.xlu0 %3293
  %v3295 = vsel %vm65, %v3145, 0.0
  %3296 = vadd.xlane.f32.xlu0 %v3295
  %v3297 = vpop.xlane.xlu0 %3296
  %v3298 = vsel %vm65, %v3150, 0.0
  %3299 = vadd.xlane.f32.xlu0 %v3298
  %v3300 = vpop.xlane.xlu0 %3299
  %v3301 = vsel %vm65, %v3155, 0.0
  %3302 = vadd.xlane.f32.xlu0 %v3301
  %v3303 = vpop.xlane.xlu0 %3302
  %v3304 = vsel %vm65, %v3160, 0.0
  %3305 = vadd.xlane.f32.xlu0 %v3304
  %v3306 = vpop.xlane.xlu0 %3305
  %v3307 = vsel %vm65, %v3165, 0.0
  %3308 = vadd.xlane.f32.xlu0 %v3307
  %v3309 = vpop.xlane.xlu0 %3308
  %v3310 = vsel %vm65, %v3170, 0.0
  %3311 = vadd.xlane.f32.xlu0 %v3310
  %v3312 = vpop.xlane.xlu0 %3311
  %v3313 = vsel %vm65, %v3175, 0.0
  %3314 = vadd.xlane.f32.xlu0 %v3313
  %v3315 = vpop.xlane.xlu0 %3314
  %v3316 = vsel %vm65, %v3180, 0.0
  %3317 = vadd.xlane.f32.xlu0 %v3316
  %v3318 = vpop.xlane.xlu0 %3317
  %v3319 = vsel %vm65, %v3185, 0.0
  %3320 = vadd.xlane.f32.xlu0 %v3319
  %v3321 = vpop.xlane.xlu0 %3320
  %v3322 = vsel %vm65, %v3190, 0.0
  %3323 = vadd.xlane.f32.xlu0 %v3322
  %v3324 = vpop.xlane.xlu0 %3323
  %v3325 = vsel %vm65, %v3195, 0.0
  %3326 = vadd.xlane.f32.xlu0 %v3325
  %v3327 = vpop.xlane.xlu0 %3326
  %v3328 = vsel %vm65, %v3200, 0.0
  %3329 = vadd.xlane.f32.xlu0 %v3328
  %v3330 = vpop.xlane.xlu0 %3329
  %v3331 = vsel %vm65, %v3205, 0.0
  %3332 = vadd.xlane.f32.xlu0 %v3331
  %v3333 = vpop.xlane.xlu0 %3332
  %v3334 = vsel %vm65, %v3210, 0.0
  %3335 = vadd.xlane.f32.xlu0 %v3334
  %v3336 = vpop.xlane.xlu0 %3335
  %v3337 = vsel %vm65, %v3215, 0.0
  %3338 = vadd.xlane.f32.xlu0 %v3337
  %v3339 = vpop.xlane.xlu0 %3338
  %v3340 = vsel %vm65, %v3220, 0.0
  %3341 = vadd.xlane.f32.xlu0 %v3340
  %v3342 = vpop.xlane.xlu0 %3341
  %v3343 = vsel %vm65, %v3225, 0.0
  %3344 = vadd.xlane.f32.xlu0 %v3343
  %v3345 = vpop.xlane.xlu0 %3344
  %v3346 = vsel %vm65, %v3230, 0.0
  %3347 = vadd.xlane.f32.xlu0 %v3346
  %v3348 = vpop.xlane.xlu0 %3347
  %v3349 = vsel %vm65, %v3235, 0.0
  %3350 = vadd.xlane.f32.xlu0 %v3349
  %v3351 = vpop.xlane.xlu0 %3350
  %v3352 = vsel %vm65, %v3240, 0.0
  %3353 = vadd.xlane.f32.xlu0 %v3352
  %v3354 = vpop.xlane.xlu0 %3353
  %v3355 = vsel %vm65, %v3245, 0.0
  %3356 = vadd.xlane.f32.xlu0 %v3355
  %v3357 = vpop.xlane.xlu0 %3356
  %v3358 = vsel %vm65, %v3250, 0.0
  %3359 = vadd.xlane.f32.xlu0 %v3358
  %v3360 = vpop.xlane.xlu0 %3359
  %v3361 = vsel %vm65, %v3255, 0.0
  %3362 = vadd.xlane.f32.xlu0 %v3361
  %v3363 = vpop.xlane.xlu0 %3362
  %v3364 = vsel %vm65, %v3260, 0.0
  %3365 = vadd.xlane.f32.xlu0 %v3364
  %v3366 = vpop.xlane.xlu0 %3365
  %v3367 = vsel %vm65, %v3265, 0.0
  %3368 = vadd.xlane.f32.xlu0 %v3367
  %v3369 = vpop.xlane.xlu0 %3368
  %v3370 = vsel %vm65, %v3270, 0.0
  %3371 = vadd.xlane.f32.xlu0 %v3370
  %v3372 = vpop.xlane.xlu0 %3371
  %v3373 = vsel %vm65, %v3275, 0.0
  %3374 = vadd.xlane.f32.xlu0 %v3373
  %v3375 = vpop.xlane.xlu0 %3374
  %v3376 = vrcp.pop 16.0
  %v3377 = vmul.f32 %v3282, %v3376
  %v3378 = vmul.f32 %v3285, %v3376
  %v3379 = vmul.f32 %v3288, %v3376
  %v3380 = vmul.f32 %v3291, %v3376
  %v3381 = vmul.f32 %v3294, %v3376
  %v3382 = vmul.f32 %v3297, %v3376
  %v3383 = vmul.f32 %v3300, %v3376
  %v3384 = vmul.f32 %v3303, %v3376
  %v3385 = vmul.f32 %v3306, %v3376
  %v3386 = vmul.f32 %v3309, %v3376
  %v3387 = vmul.f32 %v3312, %v3376
  %v3388 = vmul.f32 %v3315, %v3376
  %v3389 = vmul.f32 %v3318, %v3376
  %v3390 = vmul.f32 %v3321, %v3376
  %v3391 = vmul.f32 %v3324, %v3376
  %v3392 = vmul.f32 %v3327, %v3376
  %v3393 = vmul.f32 %v3330, %v3376
  %v3394 = vmul.f32 %v3333, %v3376
  %v3395 = vmul.f32 %v3336, %v3376
  %v3396 = vmul.f32 %v3339, %v3376
  %v3397 = vmul.f32 %v3342, %v3376
  %v3398 = vmul.f32 %v3345, %v3376
  %v3399 = vmul.f32 %v3348, %v3376
  %v3400 = vmul.f32 %v3351, %v3376
  %v3401 = vmul.f32 %v3354, %v3376
  %v3402 = vmul.f32 %v3357, %v3376
  %v3403 = vmul.f32 %v3360, %v3376
  %v3404 = vmul.f32 %v3363, %v3376
  %v3405 = vmul.f32 %v3366, %v3376
  %v3406 = vmul.f32 %v3369, %v3376
  %v3407 = vmul.f32 %v3372, %v3376
  %v3408 = vmul.f32 %v3375, %v3376
  %v3409 = vsub.f32 %v3120, %v3377
  %v3410 = vsub.f32 %v3125, %v3378
  %v3411 = vsub.f32 %v3130, %v3379
  %v3412 = vsub.f32 %v3135, %v3380
  %v3413 = vsub.f32 %v3140, %v3381
  %v3414 = vsub.f32 %v3145, %v3382
  %v3415 = vsub.f32 %v3150, %v3383
  %v3416 = vsub.f32 %v3155, %v3384
  %v3417 = vsub.f32 %v3160, %v3385
  %v3418 = vsub.f32 %v3165, %v3386
  %v3419 = vsub.f32 %v3170, %v3387
  %v3420 = vsub.f32 %v3175, %v3388
  %v3421 = vsub.f32 %v3180, %v3389
  %v3422 = vsub.f32 %v3185, %v3390
  %v3423 = vsub.f32 %v3190, %v3391
  %v3424 = vsub.f32 %v3195, %v3392
  %v3425 = vsub.f32 %v3200, %v3393
  %v3426 = vsub.f32 %v3205, %v3394
  %v3427 = vsub.f32 %v3210, %v3395
  %v3428 = vsub.f32 %v3215, %v3396
  %v3429 = vsub.f32 %v3220, %v3397
  %v3430 = vsub.f32 %v3225, %v3398
  %v3431 = vsub.f32 %v3230, %v3399
  %v3432 = vsub.f32 %v3235, %v3400
  %v3433 = vsub.f32 %v3240, %v3401
  %v3434 = vsub.f32 %v3245, %v3402
  %v3435 = vsub.f32 %v3250, %v3403
  %v3436 = vsub.f32 %v3255, %v3404
  %v3437 = vsub.f32 %v3260, %v3405
  %v3438 = vsub.f32 %v3265, %v3406
  %v3439 = vsub.f32 %v3270, %v3407
  %v3440 = vsub.f32 %v3275, %v3408
  %v3441 = vmul.f32 %v3409, %v3409
  %v3442 = vmul.f32 %v3410, %v3410
  %v3443 = vmul.f32 %v3411, %v3411
  %v3444 = vmul.f32 %v3412, %v3412
  %v3445 = vmul.f32 %v3413, %v3413
  %v3446 = vmul.f32 %v3414, %v3414
  %v3447 = vmul.f32 %v3415, %v3415
  %v3448 = vmul.f32 %v3416, %v3416
  %v3449 = vmul.f32 %v3417, %v3417
  %v3450 = vmul.f32 %v3418, %v3418
  %v3451 = vmul.f32 %v3419, %v3419
  %v3452 = vmul.f32 %v3420, %v3420
  %v3453 = vmul.f32 %v3421, %v3421
  %v3454 = vmul.f32 %v3422, %v3422
  %v3455 = vmul.f32 %v3423, %v3423
  %v3456 = vmul.f32 %v3424, %v3424
  %v3457 = vmul.f32 %v3425, %v3425
  %v3458 = vmul.f32 %v3426, %v3426
  %v3459 = vmul.f32 %v3427, %v3427
  %v3460 = vmul.f32 %v3428, %v3428
  %v3461 = vmul.f32 %v3429, %v3429
  %v3462 = vmul.f32 %v3430, %v3430
  %v3463 = vmul.f32 %v3431, %v3431
  %v3464 = vmul.f32 %v3432, %v3432
  %v3465 = vmul.f32 %v3433, %v3433
  %v3466 = vmul.f32 %v3434, %v3434
  %v3467 = vmul.f32 %v3435, %v3435
  %v3468 = vmul.f32 %v3436, %v3436
  %v3469 = vmul.f32 %v3437, %v3437
  %v3470 = vmul.f32 %v3438, %v3438
  %v3471 = vmul.f32 %v3439, %v3439
  %v3472 = vmul.f32 %v3440, %v3440
  %v3473 = vsel %vm65, %v3441, 0.0
  %3474 = vadd.xlane.f32.xlu0 %v3473
  %v3475 = vpop.xlane.xlu0 %3474
  %v3476 = vsel %vm65, %v3442, 0.0
  %3477 = vadd.xlane.f32.xlu0 %v3476
  %v3478 = vpop.xlane.xlu0 %3477
  %v3479 = vsel %vm65, %v3443, 0.0
  %3480 = vadd.xlane.f32.xlu0 %v3479
  %v3481 = vpop.xlane.xlu0 %3480
  %v3482 = vsel %vm65, %v3444, 0.0
  %3483 = vadd.xlane.f32.xlu0 %v3482
  %v3484 = vpop.xlane.xlu0 %3483
  %v3485 = vsel %vm65, %v3445, 0.0
  %3486 = vadd.xlane.f32.xlu0 %v3485
  %v3487 = vpop.xlane.xlu0 %3486
  %v3488 = vsel %vm65, %v3446, 0.0
  %3489 = vadd.xlane.f32.xlu0 %v3488
  %v3490 = vpop.xlane.xlu0 %3489
  %v3491 = vsel %vm65, %v3447, 0.0
  %3492 = vadd.xlane.f32.xlu0 %v3491
  %v3493 = vpop.xlane.xlu0 %3492
  %v3494 = vsel %vm65, %v3448, 0.0
  %3495 = vadd.xlane.f32.xlu0 %v3494
  %v3496 = vpop.xlane.xlu0 %3495
  %v3497 = vsel %vm65, %v3449, 0.0
  %3498 = vadd.xlane.f32.xlu0 %v3497
  %v3499 = vpop.xlane.xlu0 %3498
  %v3500 = vsel %vm65, %v3450, 0.0
  %3501 = vadd.xlane.f32.xlu0 %v3500
  %v3502 = vpop.xlane.xlu0 %3501
  %v3503 = vsel %vm65, %v3451, 0.0
  %3504 = vadd.xlane.f32.xlu0 %v3503
  %v3505 = vpop.xlane.xlu0 %3504
  %v3506 = vsel %vm65, %v3452, 0.0
  %3507 = vadd.xlane.f32.xlu0 %v3506
  %v3508 = vpop.xlane.xlu0 %3507
  %v3509 = vsel %vm65, %v3453, 0.0
  %3510 = vadd.xlane.f32.xlu0 %v3509
  %v3511 = vpop.xlane.xlu0 %3510
  %v3512 = vsel %vm65, %v3454, 0.0
  %3513 = vadd.xlane.f32.xlu0 %v3512
  %v3514 = vpop.xlane.xlu0 %3513
  %v3515 = vsel %vm65, %v3455, 0.0
  %3516 = vadd.xlane.f32.xlu0 %v3515
  %v3517 = vpop.xlane.xlu0 %3516
  %v3518 = vsel %vm65, %v3456, 0.0
  %3519 = vadd.xlane.f32.xlu0 %v3518
  %v3520 = vpop.xlane.xlu0 %3519
  %v3521 = vsel %vm65, %v3457, 0.0
  %3522 = vadd.xlane.f32.xlu0 %v3521
  %v3523 = vpop.xlane.xlu0 %3522
  %v3524 = vsel %vm65, %v3458, 0.0
  %3525 = vadd.xlane.f32.xlu0 %v3524
  %v3526 = vpop.xlane.xlu0 %3525
  %v3527 = vsel %vm65, %v3459, 0.0
  %3528 = vadd.xlane.f32.xlu0 %v3527
  %v3529 = vpop.xlane.xlu0 %3528
  %v3530 = vsel %vm65, %v3460, 0.0
  %3531 = vadd.xlane.f32.xlu0 %v3530
  %v3532 = vpop.xlane.xlu0 %3531
  %v3533 = vsel %vm65, %v3461, 0.0
  %3534 = vadd.xlane.f32.xlu0 %v3533
  %v3535 = vpop.xlane.xlu0 %3534
  %v3536 = vsel %vm65, %v3462, 0.0
  %3537 = vadd.xlane.f32.xlu0 %v3536
  %v3538 = vpop.xlane.xlu0 %3537
  %v3539 = vsel %vm65, %v3463, 0.0
  %3540 = vadd.xlane.f32.xlu0 %v3539
  %v3541 = vpop.xlane.xlu0 %3540
  %v3542 = vsel %vm65, %v3464, 0.0
  %3543 = vadd.xlane.f32.xlu0 %v3542
  %v3544 = vpop.xlane.xlu0 %3543
  %v3545 = vsel %vm65, %v3465, 0.0
  %3546 = vadd.xlane.f32.xlu0 %v3545
  %v3547 = vpop.xlane.xlu0 %3546
  %v3548 = vsel %vm65, %v3466, 0.0
  %3549 = vadd.xlane.f32.xlu0 %v3548
  %v3550 = vpop.xlane.xlu0 %3549
  %v3551 = vsel %vm65, %v3467, 0.0
  %3552 = vadd.xlane.f32.xlu0 %v3551
  %v3553 = vpop.xlane.xlu0 %3552
  %v3554 = vsel %vm65, %v3468, 0.0
  %3555 = vadd.xlane.f32.xlu0 %v3554
  %v3556 = vpop.xlane.xlu0 %3555
  %v3557 = vsel %vm65, %v3469, 0.0
  %3558 = vadd.xlane.f32.xlu0 %v3557
  %v3559 = vpop.xlane.xlu0 %3558
  %v3560 = vsel %vm65, %v3470, 0.0
  %3561 = vadd.xlane.f32.xlu0 %v3560
  %v3562 = vpop.xlane.xlu0 %3561
  %v3563 = vsel %vm65, %v3471, 0.0
  %3564 = vadd.xlane.f32.xlu0 %v3563
  %v3565 = vpop.xlane.xlu0 %3564
  %v3566 = vsel %vm65, %v3472, 0.0
  %3567 = vadd.xlane.f32.xlu0 %v3566
  %v3568 = vpop.xlane.xlu0 %3567
  %v3569 = vmul.f32 %v3475, %v3376
  %v3570 = vmul.f32 %v3478, %v3376
  %v3571 = vmul.f32 %v3481, %v3376
  %v3572 = vmul.f32 %v3484, %v3376
  %v3573 = vmul.f32 %v3487, %v3376
  %v3574 = vmul.f32 %v3490, %v3376
  %v3575 = vmul.f32 %v3493, %v3376
  %v3576 = vmul.f32 %v3496, %v3376
  %v3577 = vmul.f32 %v3499, %v3376
  %v3578 = vmul.f32 %v3502, %v3376
  %v3579 = vmul.f32 %v3505, %v3376
  %v3580 = vmul.f32 %v3508, %v3376
  %v3581 = vmul.f32 %v3511, %v3376
  %v3582 = vmul.f32 %v3514, %v3376
  %v3583 = vmul.f32 %v3517, %v3376
  %v3584 = vmul.f32 %v3520, %v3376
  %v3585 = vmul.f32 %v3523, %v3376
  %v3586 = vmul.f32 %v3526, %v3376
  %v3587 = vmul.f32 %v3529, %v3376
  %v3588 = vmul.f32 %v3532, %v3376
  %v3589 = vmul.f32 %v3535, %v3376
  %v3590 = vmul.f32 %v3538, %v3376
  %v3591 = vmul.f32 %v3541, %v3376
  %v3592 = vmul.f32 %v3544, %v3376
  %v3593 = vmul.f32 %v3547, %v3376
  %v3594 = vmul.f32 %v3550, %v3376
  %v3595 = vmul.f32 %v3553, %v3376
  %v3596 = vmul.f32 %v3556, %v3376
  %v3597 = vmul.f32 %v3559, %v3376
  %v3598 = vmul.f32 %v3562, %v3376
  %v3599 = vmul.f32 %v3565, %v3376
  %v3600 = vmul.f32 %v3568, %v3376
  %v3601 = vadd.f32 %v3569, 1e-08
  %v3602 = vadd.f32 %v3570, 1e-08
  %v3603 = vadd.f32 %v3571, 1e-08
  %v3604 = vadd.f32 %v3572, 1e-08
  %v3605 = vadd.f32 %v3573, 1e-08
  %v3606 = vadd.f32 %v3574, 1e-08
  %v3607 = vadd.f32 %v3575, 1e-08
  %v3608 = vadd.f32 %v3576, 1e-08
  %v3609 = vadd.f32 %v3577, 1e-08
  %v3610 = vadd.f32 %v3578, 1e-08
  %v3611 = vadd.f32 %v3579, 1e-08
  %v3612 = vadd.f32 %v3580, 1e-08
  %v3613 = vadd.f32 %v3581, 1e-08
  %v3614 = vadd.f32 %v3582, 1e-08
  %v3615 = vadd.f32 %v3583, 1e-08
  %v3616 = vadd.f32 %v3584, 1e-08
  %v3617 = vadd.f32 %v3585, 1e-08
  %v3618 = vadd.f32 %v3586, 1e-08
  %v3619 = vadd.f32 %v3587, 1e-08
  %v3620 = vadd.f32 %v3588, 1e-08
  %v3621 = vadd.f32 %v3589, 1e-08
  %v3622 = vadd.f32 %v3590, 1e-08
  %v3623 = vadd.f32 %v3591, 1e-08
  %v3624 = vadd.f32 %v3592, 1e-08
  %v3625 = vadd.f32 %v3593, 1e-08
  %v3626 = vadd.f32 %v3594, 1e-08
  %v3627 = vadd.f32 %v3595, 1e-08
  %v3628 = vadd.f32 %v3596, 1e-08
  %v3629 = vadd.f32 %v3597, 1e-08
  %v3630 = vadd.f32 %v3598, 1e-08
  %v3631 = vadd.f32 %v3599, 1e-08
  %v3632 = vadd.f32 %v3600, 1e-08
  %v3633 = vrsqrt.pop %v3601
  %v3634 = vrsqrt.pop %v3602
  %v3635 = vrsqrt.pop %v3603
  %v3636 = vrsqrt.pop %v3604
  %v3637 = vrsqrt.pop %v3605
  %v3638 = vrsqrt.pop %v3606
  %v3639 = vrsqrt.pop %v3607
  %v3640 = vrsqrt.pop %v3608
  %v3641 = vrsqrt.pop %v3609
  %v3642 = vrsqrt.pop %v3610
  %v3643 = vrsqrt.pop %v3611
  %v3644 = vrsqrt.pop %v3612
  %v3645 = vrsqrt.pop %v3613
  %v3646 = vrsqrt.pop %v3614
  %v3647 = vrsqrt.pop %v3615
  %v3648 = vrsqrt.pop %v3616
  %v3649 = vrsqrt.pop %v3617
  %v3650 = vrsqrt.pop %v3618
  %v3651 = vrsqrt.pop %v3619
  %v3652 = vrsqrt.pop %v3620
  %v3653 = vrsqrt.pop %v3621
  %v3654 = vrsqrt.pop %v3622
  %v3655 = vrsqrt.pop %v3623
  %v3656 = vrsqrt.pop %v3624
  %v3657 = vrsqrt.pop %v3625
  %v3658 = vrsqrt.pop %v3626
  %v3659 = vrsqrt.pop %v3627
  %v3660 = vrsqrt.pop %v3628
  %v3661 = vrsqrt.pop %v3629
  %v3662 = vrsqrt.pop %v3630
  %v3663 = vrsqrt.pop %v3631
  %v3664 = vrsqrt.pop %v3632
  %v3665 = vmul.f32 %v3409, %v3633
  %v3666 = vmul.f32 %v3410, %v3634
  %v3667 = vmul.f32 %v3411, %v3635
  %v3668 = vmul.f32 %v3412, %v3636
  %v3669 = vmul.f32 %v3413, %v3637
  %v3670 = vmul.f32 %v3414, %v3638
  %v3671 = vmul.f32 %v3415, %v3639
  %v3672 = vmul.f32 %v3416, %v3640
  %v3673 = vmul.f32 %v3417, %v3641
  %v3674 = vmul.f32 %v3418, %v3642
  %v3675 = vmul.f32 %v3419, %v3643
  %v3676 = vmul.f32 %v3420, %v3644
  %v3677 = vmul.f32 %v3421, %v3645
  %v3678 = vmul.f32 %v3422, %v3646
  %v3679 = vmul.f32 %v3423, %v3647
  %v3680 = vmul.f32 %v3424, %v3648
  %v3681 = vmul.f32 %v3425, %v3649
  %v3682 = vmul.f32 %v3426, %v3650
  %v3683 = vmul.f32 %v3427, %v3651
  %v3684 = vmul.f32 %v3428, %v3652
  %v3685 = vmul.f32 %v3429, %v3653
  %v3686 = vmul.f32 %v3430, %v3654
  %v3687 = vmul.f32 %v3431, %v3655
  %v3688 = vmul.f32 %v3432, %v3656
  %v3689 = vmul.f32 %v3433, %v3657
  %v3690 = vmul.f32 %v3434, %v3658
  %v3691 = vmul.f32 %v3435, %v3659
  %v3692 = vmul.f32 %v3436, %v3660
  %v3693 = vmul.f32 %v3437, %v3661
  %v3694 = vmul.f32 %v3438, %v3662
  %v3695 = vmul.f32 %v3439, %v3663
  %v3696 = vmul.f32 %v3440, %v3664
  %v3698 = vlaneseq
  %v3699 = vshrl.u32 %v3698, 7
  %v3700 = vsub.s32 0, %v3699
  %v3701 = vrot.slane %v3278, %v3700
  %v3703 = vmul.f32 %v3665, %v3701
  %v3704 = vmul.f32 %v3666, %v3701
  %v3705 = vmul.f32 %v3667, %v3701
  %v3706 = vmul.f32 %v3668, %v3701
  %v3707 = vmul.f32 %v3669, %v3701
  %v3708 = vmul.f32 %v3670, %v3701
  %v3709 = vmul.f32 %v3671, %v3701
  %v3710 = vmul.f32 %v3672, %v3701
  %v3711 = vmul.f32 %v3673, %v3701
  %v3712 = vmul.f32 %v3674, %v3701
  %v3713 = vmul.f32 %v3675, %v3701
  %v3714 = vmul.f32 %v3676, %v3701
  %v3715 = vmul.f32 %v3677, %v3701
  %v3716 = vmul.f32 %v3678, %v3701
  %v3717 = vmul.f32 %v3679, %v3701
  %v3718 = vmul.f32 %v3680, %v3701
  %v3719 = vmul.f32 %v3681, %v3701
  %v3720 = vmul.f32 %v3682, %v3701
  %v3721 = vmul.f32 %v3683, %v3701
  %v3722 = vmul.f32 %v3684, %v3701
  %v3723 = vmul.f32 %v3685, %v3701
  %v3724 = vmul.f32 %v3686, %v3701
  %v3725 = vmul.f32 %v3687, %v3701
  %v3726 = vmul.f32 %v3688, %v3701
  %v3727 = vmul.f32 %v3689, %v3701
  %v3728 = vmul.f32 %v3690, %v3701
  %v3729 = vmul.f32 %v3691, %v3701
  %v3730 = vmul.f32 %v3692, %v3701
  %v3731 = vmul.f32 %v3693, %v3701
  %v3732 = vmul.f32 %v3694, %v3701
  %v3733 = vmul.f32 %v3695, %v3701
  %v3734 = vmul.f32 %v3696, %v3701
  %v3736 = vlaneseq
  %v3737 = vshrl.u32 %v3736, 7
  %v3738 = vsub.s32 0, %v3737
  %v3739 = vrot.slane %v3279, %v3738
  %v3741 = vadd.f32 %v3703, %v3739
  %v3742 = vadd.f32 %v3704, %v3739
  %v3743 = vadd.f32 %v3705, %v3739
  %v3744 = vadd.f32 %v3706, %v3739
  %v3745 = vadd.f32 %v3707, %v3739
  %v3746 = vadd.f32 %v3708, %v3739
  %v3747 = vadd.f32 %v3709, %v3739
  %v3748 = vadd.f32 %v3710, %v3739
  %v3749 = vadd.f32 %v3711, %v3739
  %v3750 = vadd.f32 %v3712, %v3739
  %v3751 = vadd.f32 %v3713, %v3739
  %v3752 = vadd.f32 %v3714, %v3739
  %v3753 = vadd.f32 %v3715, %v3739
  %v3754 = vadd.f32 %v3716, %v3739
  %v3755 = vadd.f32 %v3717, %v3739
  %v3756 = vadd.f32 %v3718, %v3739
  %v3757 = vadd.f32 %v3719, %v3739
  %v3758 = vadd.f32 %v3720, %v3739
  %v3759 = vadd.f32 %v3721, %v3739
  %v3760 = vadd.f32 %v3722, %v3739
  %v3761 = vadd.f32 %v3723, %v3739
  %v3762 = vadd.f32 %v3724, %v3739
  %v3763 = vadd.f32 %v3725, %v3739
  %v3764 = vadd.f32 %v3726, %v3739
  %v3765 = vadd.f32 %v3727, %v3739
  %v3766 = vadd.f32 %v3728, %v3739
  %v3767 = vadd.f32 %v3729, %v3739
  %v3768 = vadd.f32 %v3730, %v3739
  %v3769 = vadd.f32 %v3731, %v3739
  %v3770 = vadd.f32 %v3732, %v3739
  %v3771 = vadd.f32 %v3733, %v3739
  %v3772 = vadd.f32 %v3734, %v3739
  %v3773 = vadd.f32 %v157, %v3741
  %v3774 = vadd.f32 %v158, %v3742
  %v3775 = vadd.f32 %v159, %v3743
  %v3776 = vadd.f32 %v160, %v3744
  %v3777 = vadd.f32 %v161, %v3745
  %v3778 = vadd.f32 %v162, %v3746
  %v3779 = vadd.f32 %v163, %v3747
  %v3780 = vadd.f32 %v164, %v3748
  %v3781 = vadd.f32 %v165, %v3749
  %v3782 = vadd.f32 %v166, %v3750
  %v3783 = vadd.f32 %v167, %v3751
  %v3784 = vadd.f32 %v168, %v3752
  %v3785 = vadd.f32 %v169, %v3753
  %v3786 = vadd.f32 %v170, %v3754
  %v3787 = vadd.f32 %v171, %v3755
  %v3788 = vadd.f32 %v172, %v3756
  %v3789 = vadd.f32 %v173, %v3757
  %v3790 = vadd.f32 %v174, %v3758
  %v3791 = vadd.f32 %v175, %v3759
  %v3792 = vadd.f32 %v176, %v3760
  %v3793 = vadd.f32 %v177, %v3761
  %v3794 = vadd.f32 %v178, %v3762
  %v3795 = vadd.f32 %v179, %v3763
  %v3796 = vadd.f32 %v180, %v3764
  %v3797 = vadd.f32 %v181, %v3765
  %v3798 = vadd.f32 %v182, %v3766
  %v3799 = vadd.f32 %v183, %v3767
  %v3800 = vadd.f32 %v184, %v3768
  %v3801 = vadd.f32 %v185, %v3769
  %v3802 = vadd.f32 %v186, %v3770
  %v3803 = vadd.f32 %v187, %v3771
  %v3804 = vadd.f32 %v188, %v3772
  %3805 = vst.msk [vmem:[#allocation5] sm:$0xff] %vm65, %v3773
  %3806 = vst.msk [vmem:[#allocation5 + $0x8] sm:$0xff] %vm65, %v3774
  %3807 = vst.msk [vmem:[#allocation5 + $0x10] sm:$0xff] %vm65, %v3775
  %3808 = vst.msk [vmem:[#allocation5 + $0x18] sm:$0xff] %vm65, %v3776
  %3809 = vst.msk [vmem:[#allocation5 + $0x20] sm:$0xff] %vm65, %v3777
  %3810 = vst.msk [vmem:[#allocation5 + $0x28] sm:$0xff] %vm65, %v3778
  %3811 = vst.msk [vmem:[#allocation5 + $0x30] sm:$0xff] %vm65, %v3779
  %3812 = vst.msk [vmem:[#allocation5 + $0x38] sm:$0xff] %vm65, %v3780
  %3813 = vst.msk [vmem:[#allocation5 + $0x40] sm:$0xff] %vm65, %v3781
  %3814 = vst.msk [vmem:[#allocation5 + $0x48] sm:$0xff] %vm65, %v3782
  %3815 = vst.msk [vmem:[#allocation5 + $0x50] sm:$0xff] %vm65, %v3783
  %3816 = vst.msk [vmem:[#allocation5 + $0x58] sm:$0xff] %vm65, %v3784
  %3817 = vst.msk [vmem:[#allocation5 + $0x60] sm:$0xff] %vm65, %v3785
  %3818 = vst.msk [vmem:[#allocation5 + $0x68] sm:$0xff] %vm65, %v3786
  %3819 = vst.msk [vmem:[#allocation5 + $0x70] sm:$0xff] %vm65, %v3787
  %3820 = vst.msk [vmem:[#allocation5 + $0x78] sm:$0xff] %vm65, %v3788
  %3821 = vst.msk [vmem:[#allocation5 + $0x80] sm:$0xff] %vm65, %v3789
  %3822 = vst.msk [vmem:[#allocation5 + $0x88] sm:$0xff] %vm65, %v3790
  %3823 = vst.msk [vmem:[#allocation5 + $0x90] sm:$0xff] %vm65, %v3791
  %3824 = vst.msk [vmem:[#allocation5 + $0x98] sm:$0xff] %vm65, %v3792
  %3825 = vst.msk [vmem:[#allocation5 + $0xa0] sm:$0xff] %vm65, %v3793
  %3826 = vst.msk [vmem:[#allocation5 + $0xa8] sm:$0xff] %vm65, %v3794
  %3827 = vst.msk [vmem:[#allocation5 + $0xb0] sm:$0xff] %vm65, %v3795
  %3828 = vst.msk [vmem:[#allocation5 + $0xb8] sm:$0xff] %vm65, %v3796
  %3829 = vst.msk [vmem:[#allocation5 + $0xc0] sm:$0xff] %vm65, %v3797
  %3830 = vst.msk [vmem:[#allocation5 + $0xc8] sm:$0xff] %vm65, %v3798
  %3831 = vst.msk [vmem:[#allocation5 + $0xd0] sm:$0xff] %vm65, %v3799
  %3832 = vst.msk [vmem:[#allocation5 + $0xd8] sm:$0xff] %vm65, %v3800
  %3833 = vst.msk [vmem:[#allocation5 + $0xe0] sm:$0xff] %vm65, %v3801
  %3834 = vst.msk [vmem:[#allocation5 + $0xe8] sm:$0xff] %vm65, %v3802
  %3835 = vst.msk [vmem:[#allocation5 + $0xf0] sm:$0xff] %vm65, %v3803
  %3836 = vst.msk [vmem:[#allocation5 + $0xf8] sm:$0xff] %vm65, %v3804
  %v3837 = vld [vmem:[%s10] sm:$0xff]
  %v3838 = vld [vmem:[%s10 + $0x8] sm:$0xff]
  %v3839 = vld [vmem:[%s11] sm:$0x1]
  %v3841 = vlaneseq
  %v3842 = vshrl.u32 %v3841, 7
  %v3843 = vsub.s32 0, %v3842
  %v3844 = vrot.slane %v3839, %v3843
  %v3847 = vsel %vm65, %v3773, 0
  %v3850 = vsel %vm65, %v3774, 0
  %v3853 = vsel %vm65, %v3775, 0
  %v3856 = vsel %vm65, %v3776, 0
  %v3859 = vsel %vm65, %v3777, 0
  %v3862 = vsel %vm65, %v3778, 0
  %v3865 = vsel %vm65, %v3779, 0
  %v3868 = vsel %vm65, %v3780, 0
  %v3871 = vsel %vm65, %v3781, 0
  %v3874 = vsel %vm65, %v3782, 0
  %v3877 = vsel %vm65, %v3783, 0
  %v3880 = vsel %vm65, %v3784, 0
  %v3883 = vsel %vm65, %v3785, 0
  %v3886 = vsel %vm65, %v3786, 0
  %v3889 = vsel %vm65, %v3787, 0
  %v3892 = vsel %vm65, %v3788, 0
  %v3895 = vsel %vm65, %v3789, 0
  %v3898 = vsel %vm65, %v3790, 0
  %v3901 = vsel %vm65, %v3791, 0
  %v3904 = vsel %vm65, %v3792, 0
  %v3907 = vsel %vm65, %v3793, 0
  %v3910 = vsel %vm65, %v3794, 0
  %v3913 = vsel %vm65, %v3795, 0
  %v3916 = vsel %vm65, %v3796, 0
  %v3919 = vsel %vm65, %v3797, 0
  %v3922 = vsel %vm65, %v3798, 0
  %v3925 = vsel %vm65, %v3799, 0
  %v3928 = vsel %vm65, %v3800, 0
  %v3931 = vsel %vm65, %v3801, 0
  %v3934 = vsel %vm65, %v3802, 0
  %v3937 = vsel %vm65, %v3803, 0
  %v3940 = vsel %vm65, %v3804, 0
  %3942 = vmatprep.subr.mxu0 0.0
  %3943 = vmatpush1.msra.mxu0 %v3837
  %3944 = vmatprep.subr.mxu0 0.0
  %3945 = vmatpush1.msra.mxu0 %v3838
  %3946 = vmatprep.subr.mxu0 0.0
  %3947 = vmatpush1.msra.mxu0 0.0
  %3948 = vmatprep.subr.mxu0 0.0
  %3949 = vmatpush1.msra.mxu0 0.0
  %3950 = vmatprep.subr.mxu0 0.0
  %3951 = vmatpush1.msra.mxu0 0.0
  %3952 = vmatprep.subr.mxu0 0.0
  %3953 = vmatpush1.msra.mxu0 0.0
  %3954 = vmatprep.subr.mxu0 0.0
  %3955 = vmatpush1.msra.mxu0 0.0
  %3956 = vmatprep.subr.mxu0 0.0
  %3957 = vmatpush1.msra.mxu0 0.0
  %3958 = vmatprep.subr.mxu0 0.0
  %3959 = vmatpush1.msra.mxu0 0.0
  %3960 = vmatprep.subr.mxu0 0.0
  %3961 = vmatpush1.msra.mxu0 0.0
  %3962 = vmatprep.subr.mxu0 0.0
  %3963 = vmatpush1.msra.mxu0 0.0
  %3964 = vmatprep.subr.mxu0 0.0
  %3965 = vmatpush1.msra.mxu0 0.0
  %3966 = vmatprep.subr.mxu0 0.0
  %3967 = vmatpush1.msra.mxu0 0.0
  %3968 = vmatprep.subr.mxu0 0.0
  %3969 = vmatpush1.msra.mxu0 0.0
  %3970 = vmatprep.subr.mxu0 0.0
  %3971 = vmatpush1.msra.mxu0 0.0
  %3972 = vmatprep.subr.mxu0 0.0
  %3973 = vmatpush1.msra.mxu0 0.0
  %3974 = vmatprep.subr.mxu0 0.0
  %3975 = vmatpush1.msra.mxu0 0.0
  %3976 = vmatprep.subr.mxu0 0.0
  %3977 = vmatpush1.msra.mxu0 0.0
  %3978 = vmatprep.subr.mxu0 0.0
  %3979 = vmatpush1.msra.mxu0 0.0
  %3980 = vmatprep.subr.mxu0 0.0
  %3981 = vmatpush1.msra.mxu0 0.0
  %3982 = vmatprep.subr.mxu0 0.0
  %3983 = vmatpush1.msra.mxu0 0.0
  %3984 = vmatprep.subr.mxu0 0.0
  %3985 = vmatpush1.msra.mxu0 0.0
  %3986 = vmatprep.subr.mxu0 0.0
  %3987 = vmatpush1.msra.mxu0 0.0
  %3988 = vmatprep.subr.mxu0 0.0
  %3989 = vmatpush1.msra.mxu0 0.0
  %3990 = vmatprep.subr.mxu0 0.0
  %3991 = vmatpush1.msra.mxu0 0.0
  %3992 = vmatprep.subr.mxu0 0.0
  %3993 = vmatpush1.msra.mxu0 0.0
  %3994 = vmatprep.subr.mxu0 0.0
  %3995 = vmatpush1.msra.mxu0 0.0
  %3996 = vmatprep.subr.mxu0 0.0
  %3997 = vmatpush1.msra.mxu0 0.0
  %3998 = vmatprep.subr.mxu0 0.0
  %3999 = vmatpush1.msra.mxu0 0.0
  %4000 = vmatprep.subr.mxu0 0.0
  %4001 = vmatpush1.msra.mxu0 0.0
  %4002 = vmatprep.subr.mxu0 0.0
  %4003 = vmatpush1.msra.mxu0 0.0
  %4004 = vmatprep.subr.mxu0 0.0
  %4005 = vmatpush1.msra.mxu0 0.0
  %4006 = vmatprep.mubr.f32.mxu0 0.0
  %4007 = vmatmul.mubr.f32.gmra.mrb[0].mxu0 %v3847
  %v4008 = vpop.f32.mrb[0].mxu0
  %v4009 = vadd.f32 %v3844, %v4008
  %v4010 = vpop.f32.mrb[0].mxu0
  %4011 = vmatprep.mubr.f32.mxu0 0.0
  %4012 = vmatmul.mubr.f32.gmra.mrb[0].mxu0 %v3850
  %v4013 = vpop.f32.mrb[0].mxu0
  %v4014 = vadd.f32 %v3844, %v4013
  %v4015 = vpop.f32.mrb[0].mxu0
  %4016 = vmatprep.mubr.f32.mxu0 0.0
  %4017 = vmatmul.mubr.f32.gmra.mrb[0].mxu0 %v3853
  %v4018 = vpop.f32.mrb[0].mxu0
  %v4019 = vadd.f32 %v3844, %v4018
  %v4020 = vpop.f32.mrb[0].mxu0
  %4021 = vmatprep.mubr.f32.mxu0 0.0
  %4022 = vmatmul.mubr.f32.gmra.mrb[0].mxu0 %v3856
  %v4023 = vpop.f32.mrb[0].mxu0
  %v4024 = vadd.f32 %v3844, %v4023
  %v4025 = vpop.f32.mrb[0].mxu0
  %4026 = vmatprep.mubr.f32.mxu0 0.0
  %4027 = vmatmul.mubr.f32.gmra.mrb[0].mxu0 %v3859
  %v4028 = vpop.f32.mrb[0].mxu0
  %v4029 = vadd.f32 %v3844, %v4028
  %v4030 = vpop.f32.mrb[0].mxu0
  %4031 = vmatprep.mubr.f32.mxu0 0.0
  %4032 = vmatmul.mubr.f32.gmra.mrb[0].mxu0 %v3862
  %v4033 = vpop.f32.mrb[0].mxu0
  %v4034 = vadd.f32 %v3844, %v4033
  %v4035 = vpop.f32.mrb[0].mxu0
  %4036 = vmatprep.mubr.f32.mxu0 0.0
  %4037 = vmatmul.mubr.f32.gmra.mrb[0].mxu0 %v3865
  %v4038 = vpop.f32.mrb[0].mxu0
  %v4039 = vadd.f32 %v3844, %v4038
  %v4040 = vpop.f32.mrb[0].mxu0
  %4041 = vmatprep.mubr.f32.mxu0 0.0
  %4042 = vmatmul.mubr.f32.gmra.mrb[0].mxu0 %v3868
  %v4043 = vpop.f32.mrb[0].mxu0
  %v4044 = vadd.f32 %v3844, %v4043
  %v4045 = vpop.f32.mrb[0].mxu0
  %4046 = vmatprep.mubr.f32.mxu0 0.0
  %4047 = vmatmul.mubr.f32.gmra.mrb[0].mxu0 %v3871
  %v4048 = vpop.f32.mrb[0].mxu0
  %v4049 = vadd.f32 %v3844, %v4048
  %v4050 = vpop.f32.mrb[0].mxu0
  %4051 = vmatprep.mubr.f32.mxu0 0.0
  %4052 = vmatmul.mubr.f32.gmra.mrb[0].mxu0 %v3874
  %v4053 = vpop.f32.mrb[0].mxu0
  %v4054 = vadd.f32 %v3844, %v4053
  %v4055 = vpop.f32.mrb[0].mxu0
  %4056 = vmatprep.mubr.f32.mxu0 0.0
  %4057 = vmatmul.mubr.f32.gmra.mrb[0].mxu0 %v3877
  %v4058 = vpop.f32.mrb[0].mxu0
  %v4059 = vadd.f32 %v3844, %v4058
  %v4060 = vpop.f32.mrb[0].mxu0
  %4061 = vmatprep.mubr.f32.mxu0 0.0
  %4062 = vmatmul.mubr.f32.gmra.mrb[0].mxu0 %v3880
  %v4063 = vpop.f32.mrb[0].mxu0
  %v4064 = vadd.f32 %v3844, %v4063
  %v4065 = vpop.f32.mrb[0].mxu0
  %4066 = vmatprep.mubr.f32.mxu0 0.0
  %4067 = vmatmul.mubr.f32.gmra.mrb[0].mxu0 %v3883
  %v4068 = vpop.f32.mrb[0].mxu0
  %v4069 = vadd.f32 %v3844, %v4068
  %v4070 = vpop.f32.mrb[0].mxu0
  %4071 = vmatprep.mubr.f32.mxu0 0.0
  %4072 = vmatmul.mubr.f32.gmra.mrb[0].mxu0 %v3886
  %v4073 = vpop.f32.mrb[0].mxu0
  %v4074 = vadd.f32 %v3844, %v4073
  %v4075 = vpop.f32.mrb[0].mxu0
  %4076 = vmatprep.mubr.f32.mxu0 0.0
  %4077 = vmatmul.mubr.f32.gmra.mrb[0].mxu0 %v3889
  %v4078 = vpop.f32.mrb[0].mxu0
  %v4079 = vadd.f32 %v3844, %v4078
  %v4080 = vpop.f32.mrb[0].mxu0
  %4081 = vmatprep.mubr.f32.mxu0 0.0
  %4082 = vmatmul.mubr.f32.gmra.mrb[0].mxu0 %v3892
  %v4083 = vpop.f32.mrb[0].mxu0
  %v4084 = vadd.f32 %v3844, %v4083
  %v4085 = vpop.f32.mrb[0].mxu0
  %4086 = vmatprep.mubr.f32.mxu0 0.0
  %4087 = vmatmul.mubr.f32.gmra.mrb[0].mxu0 %v3895
  %v4088 = vpop.f32.mrb[0].mxu0
  %v4089 = vadd.f32 %v3844, %v4088
  %v4090 = vpop.f32.mrb[0].mxu0
  %4091 = vmatprep.mubr.f32.mxu0 0.0
  %4092 = vmatmul.mubr.f32.gmra.mrb[0].mxu0 %v3898
  %v4093 = vpop.f32.mrb[0].mxu0
  %v4094 = vadd.f32 %v3844, %v4093
  %v4095 = vpop.f32.mrb[0].mxu0
  %4096 = vmatprep.mubr.f32.mxu0 0.0
  %4097 = vmatmul.mubr.f32.gmra.mrb[0].mxu0 %v3901
  %v4098 = vpop.f32.mrb[0].mxu0
  %v4099 = vadd.f32 %v3844, %v4098
  %v4100 = vpop.f32.mrb[0].mxu0
  %4101 = vmatprep.mubr.f32.mxu0 0.0
  %4102 = vmatmul.mubr.f32.gmra.mrb[0].mxu0 %v3904
  %v4103 = vpop.f32.mrb[0].mxu0
  %v4104 = vadd.f32 %v3844, %v4103
  %v4105 = vpop.f32.mrb[0].mxu0
  %4106 = vmatprep.mubr.f32.mxu0 0.0
  %4107 = vmatmul.mubr.f32.gmra.mrb[0].mxu0 %v3907
  %v4108 = vpop.f32.mrb[0].mxu0
  %v4109 = vadd.f32 %v3844, %v4108
  %v4110 = vpop.f32.mrb[0].mxu0
  %4111 = vmatprep.mubr.f32.mxu0 0.0
  %4112 = vmatmul.mubr.f32.gmra.mrb[0].mxu0 %v3910
  %v4113 = vpop.f32.mrb[0].mxu0
  %v4114 = vadd.f32 %v3844, %v4113
  %v4115 = vpop.f32.mrb[0].mxu0
  %4116 = vmatprep.mubr.f32.mxu0 0.0
  %4117 = vmatmul.mubr.f32.gmra.mrb[0].mxu0 %v3913
  %v4118 = vpop.f32.mrb[0].mxu0
  %v4119 = vadd.f32 %v3844, %v4118
  %v4120 = vpop.f32.mrb[0].mxu0
  %4121 = vmatprep.mubr.f32.mxu0 0.0
  %4122 = vmatmul.mubr.f32.gmra.mrb[0].mxu0 %v3916
  %v4123 = vpop.f32.mrb[0].mxu0
  %v4124 = vadd.f32 %v3844, %v4123
  %v4125 = vpop.f32.mrb[0].mxu0
  %4126 = vmatprep.mubr.f32.mxu0 0.0
  %4127 = vmatmul.mubr.f32.gmra.mrb[0].mxu0 %v3919
  %v4128 = vpop.f32.mrb[0].mxu0
  %v4129 = vadd.f32 %v3844, %v4128
  %v4130 = vpop.f32.mrb[0].mxu0
  %4131 = vmatprep.mubr.f32.mxu0 0.0
  %4132 = vmatmul.mubr.f32.gmra.mrb[0].mxu0 %v3922
  %v4133 = vpop.f32.mrb[0].mxu0
  %v4134 = vadd.f32 %v3844, %v4133
  %v4135 = vpop.f32.mrb[0].mxu0
  %4136 = vmatprep.mubr.f32.mxu0 0.0
  %4137 = vmatmul.mubr.f32.gmra.mrb[0].mxu0 %v3925
  %v4138 = vpop.f32.mrb[0].mxu0
  %v4139 = vadd.f32 %v3844, %v4138
  %v4140 = vpop.f32.mrb[0].mxu0
  %4141 = vmatprep.mubr.f32.mxu0 0.0
  %4142 = vmatmul.mubr.f32.gmra.mrb[0].mxu0 %v3928
  %v4143 = vpop.f32.mrb[0].mxu0
  %v4144 = vadd.f32 %v3844, %v4143
  %v4145 = vpop.f32.mrb[0].mxu0
  %4146 = vmatprep.mubr.f32.mxu0 0.0
  %4147 = vmatmul.mubr.f32.gmra.mrb[0].mxu0 %v3931
  %v4148 = vpop.f32.mrb[0].mxu0
  %v4149 = vadd.f32 %v3844, %v4148
  %v4150 = vpop.f32.mrb[0].mxu0
  %4151 = vmatprep.mubr.f32.mxu0 0.0
  %4152 = vmatmul.mubr.f32.gmra.mrb[0].mxu0 %v3934
  %v4153 = vpop.f32.mrb[0].mxu0
  %v4154 = vadd.f32 %v3844, %v4153
  %v4155 = vpop.f32.mrb[0].mxu0
  %4156 = vmatprep.mubr.f32.mxu0 0.0
  %4157 = vmatmul.mubr.f32.gmra.mrb[0].mxu0 %v3937
  %v4158 = vpop.f32.mrb[0].mxu0
  %v4159 = vadd.f32 %v3844, %v4158
  %v4160 = vpop.f32.mrb[0].mxu0
  %4161 = vmatprep.mubr.f32.mxu0 0.0
  %4162 = vmatmul.mubr.f32.gmra.mrb[0].mxu0 %v3940
  %v4163 = vpop.f32.mrb[0].mxu0
  %v4164 = vadd.f32 %v3844, %v4163
  %v4165 = vpop.f32.mrb[0].mxu0
  %4166 = vdwg.mxu0
  %4167 = vst.msk [vmem:[#allocation6] sm:$0xff] %vm906, %v4009
  %4168 = vst.msk [vmem:[#allocation6 + $0x8] sm:$0xff] %vm906, %v4014
  %4169 = vst.msk [vmem:[#allocation6 + $0x10] sm:$0xff] %vm906, %v4019
  %4170 = vst.msk [vmem:[#allocation6 + $0x18] sm:$0xff] %vm906, %v4024
  %4171 = vst.msk [vmem:[#allocation6 + $0x20] sm:$0xff] %vm906, %v4029
  %4172 = vst.msk [vmem:[#allocation6 + $0x28] sm:$0xff] %vm906, %v4034
  %4173 = vst.msk [vmem:[#allocation6 + $0x30] sm:$0xff] %vm906, %v4039
  %4174 = vst.msk [vmem:[#allocation6 + $0x38] sm:$0xff] %vm906, %v4044
  %4175 = vst.msk [vmem:[#allocation6 + $0x40] sm:$0xff] %vm906, %v4049
  %4176 = vst.msk [vmem:[#allocation6 + $0x48] sm:$0xff] %vm906, %v4054
  %4177 = vst.msk [vmem:[#allocation6 + $0x50] sm:$0xff] %vm906, %v4059
  %4178 = vst.msk [vmem:[#allocation6 + $0x58] sm:$0xff] %vm906, %v4064
  %4179 = vst.msk [vmem:[#allocation6 + $0x60] sm:$0xff] %vm906, %v4069
  %4180 = vst.msk [vmem:[#allocation6 + $0x68] sm:$0xff] %vm906, %v4074
  %4181 = vst.msk [vmem:[#allocation6 + $0x70] sm:$0xff] %vm906, %v4079
  %4182 = vst.msk [vmem:[#allocation6 + $0x78] sm:$0xff] %vm906, %v4084
  %4183 = vst.msk [vmem:[#allocation6 + $0x80] sm:$0xff] %vm906, %v4089
  %4184 = vst.msk [vmem:[#allocation6 + $0x88] sm:$0xff] %vm906, %v4094
  %4185 = vst.msk [vmem:[#allocation6 + $0x90] sm:$0xff] %vm906, %v4099
  %4186 = vst.msk [vmem:[#allocation6 + $0x98] sm:$0xff] %vm906, %v4104
  %4187 = vst.msk [vmem:[#allocation6 + $0xa0] sm:$0xff] %vm906, %v4109
  %4188 = vst.msk [vmem:[#allocation6 + $0xa8] sm:$0xff] %vm906, %v4114
  %4189 = vst.msk [vmem:[#allocation6 + $0xb0] sm:$0xff] %vm906, %v4119
  %4190 = vst.msk [vmem:[#allocation6 + $0xb8] sm:$0xff] %vm906, %v4124
  %4191 = vst.msk [vmem:[#allocation6 + $0xc0] sm:$0xff] %vm906, %v4129
  %4192 = vst.msk [vmem:[#allocation6 + $0xc8] sm:$0xff] %vm906, %v4134
  %4193 = vst.msk [vmem:[#allocation6 + $0xd0] sm:$0xff] %vm906, %v4139
  %4194 = vst.msk [vmem:[#allocation6 + $0xd8] sm:$0xff] %vm906, %v4144
  %4195 = vst.msk [vmem:[#allocation6 + $0xe0] sm:$0xff] %vm906, %v4149
  %4196 = vst.msk [vmem:[#allocation6 + $0xe8] sm:$0xff] %vm906, %v4154
  %4197 = vst.msk [vmem:[#allocation6 + $0xf0] sm:$0xff] %vm906, %v4159
  %4198 = vst.msk [vmem:[#allocation6 + $0xf8] sm:$0xff] %vm906, %v4164
  %v4199 = vld [vmem:[%s12] sm:$0xf]
  %v4200 = vld [vmem:[%s12 + $0x4] sm:$0xf]
  %v4201 = vld [vmem:[%s12 + $0x8] sm:$0xf]
  %v4202 = vld [vmem:[%s12 + $0xc] sm:$0xf]
  %v4203 = vld [vmem:[%s13] sm:$0x1]
  %v4204 = vld [vmem:[#allocation6] ss:$8 sm:$0xf]
  %v4205 = vld [vmem:[#allocation6] ss:$8 sm:$0xf0]
  %v4206 = vor.u32 %v4204, %v4205
  %s4207 = scalar_lea.vmem [#allocation6], 64
  %v4208 = vld [vmem:[%s4207] ss:$8 sm:$0xf]
  %v4209 = vld [vmem:[%s4207] ss:$8 sm:$0xf0]
  %v4210 = vor.u32 %v4208, %v4209
  %s4211 = scalar_lea.vmem [#allocation6], 128
  %v4212 = vld [vmem:[%s4211] ss:$8 sm:$0xf]
  %v4213 = vld [vmem:[%s4211] ss:$8 sm:$0xf0]
  %v4214 = vor.u32 %v4212, %v4213
  %s4215 = scalar_lea.vmem [#allocation6], 192
  %v4216 = vld [vmem:[%s4215] ss:$8 sm:$0xf]
  %v4217 = vld [vmem:[%s4215] ss:$8 sm:$0xf0]
  %v4218 = vor.u32 %v4216, %v4217
  %v4219 = vld [vmem:[#allocation5] ss:$8 sm:$0xf]
  %v4220 = vld [vmem:[#allocation5] ss:$8 sm:$0xf0]
  %v4221 = vor.u32 %v4219, %v4220
  %s4222 = scalar_lea.vmem [#allocation5], 64
  %v4223 = vld [vmem:[%s4222] ss:$8 sm:$0xf]
  %v4224 = vld [vmem:[%s4222] ss:$8 sm:$0xf0]
  %v4225 = vor.u32 %v4223, %v4224
  %s4226 = scalar_lea.vmem [#allocation5], 128
  %v4227 = vld [vmem:[%s4226] ss:$8 sm:$0xf]
  %v4228 = vld [vmem:[%s4226] ss:$8 sm:$0xf0]
  %v4229 = vor.u32 %v4227, %v4228
  %s4230 = scalar_lea.vmem [#allocation5], 192
  %v4231 = vld [vmem:[%s4230] ss:$8 sm:$0xf]
  %v4232 = vld [vmem:[%s4230] ss:$8 sm:$0xf0]
  %v4233 = vor.u32 %v4231, %v4232
  %4234 = vst.msk [vmem:[#allocation7] sm:$0xff] %vm65, %v4221
  %4235 = vst.msk [vmem:[#allocation7 + $0x8] sm:$0xff] %vm65, %v4225
  %4236 = vst.msk [vmem:[#allocation7 + $0x10] sm:$0xff] %vm65, %v4229
  %4237 = vst.msk [vmem:[#allocation7 + $0x18] sm:$0xff] %vm65, %v4233
  %v4242 = vunpack.c.l.b16 %v4199
  %v4243 = vunpack.c.l.b16 %v4200
  %v4244 = vunpack.c.l.b16 %v4201
  %v4245 = vunpack.c.l.b16 %v4202
  %v4246 = vpack.c.b16 %v4243, %v4242
  %v4247 = vpack.c.b16 %v4245, %v4244
  %4250 = vmatprep.subr.bf16.mxu0 0
  %4251 = vmatpush1.bf16.msra.mxu0 %v4246
  %4252 = vmatprep.subr.bf16.mxu0 0
  %4253 = vmatpush1.bf16.msra.mxu0 %v4247
  %4254 = vmatprep.subr.bf16.mxu0 0
  %4255 = vmatpush1.bf16.msra.mxu0 0
  %4256 = vmatprep.subr.bf16.mxu0 0
  %4257 = vmatpush1.bf16.msra.mxu0 0
  %4258 = vmatprep.subr.bf16.mxu0 0
  %4259 = vmatpush1.bf16.msra.mxu0 0
  %4260 = vmatprep.subr.bf16.mxu0 0
  %4261 = vmatpush1.bf16.msra.mxu0 0
  %4262 = vmatprep.subr.bf16.mxu0 0
  %4263 = vmatpush1.bf16.msra.mxu0 0
  %4264 = vmatprep.subr.bf16.mxu0 0
  %4265 = vmatpush1.bf16.msra.mxu0 0
  %4266 = vmatprep.subr.bf16.mxu0 0
  %4267 = vmatpush1.bf16.msra.mxu0 0
  %4268 = vmatprep.subr.bf16.mxu0 0
  %4269 = vmatpush1.bf16.msra.mxu0 0
  %4270 = vmatprep.subr.bf16.mxu0 0
  %4271 = vmatpush1.bf16.msra.mxu0 0
  %4272 = vmatprep.subr.bf16.mxu0 0
  %4273 = vmatpush1.bf16.msra.mxu0 0
  %4274 = vmatprep.subr.bf16.mxu0 0
  %4275 = vmatpush1.bf16.msra.mxu0 0
  %4276 = vmatprep.subr.bf16.mxu0 0
  %4277 = vmatpush1.bf16.msra.mxu0 0
  %4278 = vmatprep.subr.bf16.mxu0 0
  %4279 = vmatpush1.bf16.msra.mxu0 0
  %4280 = vmatprep.subr.bf16.mxu0 0
  %4281 = vmatpush1.bf16.msra.mxu0 0
  %4282 = vmatprep.mubr.bf16.mxu0 0
  %4283 = vmatmul.mubr.bf16.gmra.mrb[0].mxu0 %v960
  %v4284 = vpop.f32.mrb[0].mxu0
  %v4285 = vadd.f32 0.0, %v4284
  %v4286 = vpop.f32.mrb[0].mxu0
  %v4287 = vpop.f32.mrb[0].mxu0
  %v4288 = vadd.f32 0.0, %v4287
  %v4289 = vpop.f32.mrb[0].mxu0
  %4290 = vmatprep.mubr.bf16.mxu0 0
  %4291 = vmatmul.mubr.bf16.gmra.mrb[0].mxu0 %v960
  %v4292 = vpop.f32.mrb[0].mxu0
  %v4293 = vadd.f32 0.0, %v4292
  %v4294 = vpop.f32.mrb[0].mxu0
  %v4295 = vpop.f32.mrb[0].mxu0
  %v4296 = vadd.f32 0.0, %v4295
  %v4297 = vpop.f32.mrb[0].mxu0
  %4298 = vdwg.mxu0
  %v4299 = vadd.f32 %v4206, %v4285
  %v4300 = vadd.f32 %v4210, %v4288
  %v4301 = vadd.f32 %v4214, %v4293
  %v4302 = vadd.f32 %v4218, %v4296
  %v4303 = vxor.u32 %v4299, 2147483648
  %v4304 = vxor.u32 %v4300, 2147483648
  %v4305 = vxor.u32 %v4301, 2147483648
  %v4306 = vxor.u32 %v4302, 2147483648
  %v4307 = vmul.f32 %v4303, 1.442695
  %v4308 = vpow.pop %v4307
  %v4309 = vmul.f32 %v4304, 1.442695
  %v4310 = vpow.pop %v4309
  %v4311 = vmul.f32 %v4305, 1.442695
  %v4312 = vpow.pop %v4311
  %v4313 = vmul.f32 %v4306, 1.442695
  %v4314 = vpow.pop %v4313
  %v4315 = vadd.f32 %v4308, 1.0
  %v4316 = vadd.f32 %v4310, 1.0
  %v4317 = vadd.f32 %v4312, 1.0
  %v4318 = vadd.f32 %v4314, 1.0
  %v4319 = vrcp.pop %v4315
  %v4320 = vmul.f32 1.0, %v4319
  %v4321 = vrcp.pop %v4316
  %v4322 = vmul.f32 1.0, %v4321
  %v4323 = vrcp.pop %v4317
  %v4324 = vmul.f32 1.0, %v4323
  %v4325 = vrcp.pop %v4318
  %v4326 = vmul.f32 1.0, %v4325
  %v4328 = vlaneseq
  %v4329 = vshrl.u32 %v4328, 7
  %v4330 = vsub.s32 0, %v4329
  %v4331 = vrot.slane %v4203, %v4330
  %4332 = vrot.lane.b32.xlu0 %v4331, 64
  %v4333 = vpop.permute.xlu0 %4332
  %v4335 = vadd.f32 %v4285, %v4333
  %v4336 = vadd.f32 %v4288, %v4333
  %v4337 = vadd.f32 %v4293, %v4333
  %v4338 = vadd.f32 %v4296, %v4333
  %4343 = vrot.lane.b32.xlu0 %v4335, 64
  %v4344 = vpop.permute.xlu0 %4343
  %4345 = vrot.lane.b32.xlu0 %v4336, 64
  %v4346 = vpop.permute.xlu0 %4345
  %4347 = vrot.lane.b32.xlu0 %v4337, 64
  %v4348 = vpop.permute.xlu0 %4347
  %4349 = vrot.lane.b32.xlu0 %v4338, 64
  %v4350 = vpop.permute.xlu0 %4349
  %v4355 = vmul.f32 %v4320, %v4344
  %v4356 = vmul.f32 %v4322, %v4346
  %v4357 = vmul.f32 %v4324, %v4348
  %v4358 = vmul.f32 %v4326, %v4350
  %4363 = vrot.lane.b32.xlu0 %v4355, 64
  %v4364 = vpop.permute.xlu0 %4363
  %4365 = vrot.lane.b32.xlu0 %v4356, 64
  %v4366 = vpop.permute.xlu0 %4365
  %4367 = vrot.lane.b32.xlu0 %v4357, 64
  %v4368 = vpop.permute.xlu0 %4367
  %4369 = vrot.lane.b32.xlu0 %v4358, 64
  %v4370 = vpop.permute.xlu0 %4369
  %v4375 = vadd.f32 %v4206, %v4364
  %v4376 = vadd.f32 %v4210, %v4366
  %v4377 = vadd.f32 %v4214, %v4368
  %v4378 = vadd.f32 %v4218, %v4370
  %v4379 = vtanh.pop %v4375
  %v4380 = vtanh.pop %v4376
  %v4381 = vtanh.pop %v4377
  %v4382 = vtanh.pop %v4378
  %v4383 = vsub.f32 0.0, %v4379
  %v4384 = vsub.f32 0.0, %v4380
  %v4385 = vsub.f32 0.0, %v4381
  %v4386 = vsub.f32 0.0, %v4382
  %4391 = vrot.lane.b32.xlu0 %v4383, 96
  %v4392 = vpop.permute.xlu0 %4391
  %4393 = vrot.lane.b32.xlu0 %v4384, 96
  %v4394 = vpop.permute.xlu0 %4393
  %4395 = vrot.lane.b32.xlu0 %v4385, 96
  %v4396 = vpop.permute.xlu0 %4395
  %4397 = vrot.lane.b32.xlu0 %v4386, 96
  %v4398 = vpop.permute.xlu0 %4397
  %v4403 = vmul.f32 %v4320, %v4392
  %v4404 = vmul.f32 %v4322, %v4394
  %v4405 = vmul.f32 %v4324, %v4396
  %v4406 = vmul.f32 %v4326, %v4398
  %4411 = vrot.lane.b32.xlu0 %v4403, 32
  %v4412 = vpop.permute.xlu0 %4411
  %4413 = vrot.lane.b32.xlu0 %v4404, 32
  %v4414 = vpop.permute.xlu0 %4413
  %4415 = vrot.lane.b32.xlu0 %v4405, 32
  %v4416 = vpop.permute.xlu0 %4415
  %4417 = vrot.lane.b32.xlu0 %v4406, 32
  %v4418 = vpop.permute.xlu0 %4417
  %v4423 = vadd.f32 %v4379, %v4412
  %v4424 = vadd.f32 %v4380, %v4414
  %v4425 = vadd.f32 %v4381, %v4416
  %v4426 = vadd.f32 %v4382, %v4418
  %4431 = vrot.lane.b32.xlu0 %v4423, 64
  %v4432 = vpop.permute.xlu0 %4431
  %4433 = vrot.lane.b32.xlu0 %v4424, 64
  %v4434 = vpop.permute.xlu0 %4433
  %4435 = vrot.lane.b32.xlu0 %v4425, 64
  %v4436 = vpop.permute.xlu0 %4435
  %4437 = vrot.lane.b32.xlu0 %v4426, 64
  %v4438 = vpop.permute.xlu0 %4437
  %4443 = vst.msk [vmem:[#allocation8] sm:$0xff] %vm958, %v4432
  %4444 = vst.msk [vmem:[#allocation8 + $0x8] sm:$0xff] %vm958, %v4434
  %4445 = vst.msk [vmem:[#allocation8 + $0x10] sm:$0xff] %vm958, %v4436
  %4446 = vst.msk [vmem:[#allocation8 + $0x18] sm:$0xff] %vm958, %v4438
  %s4447 = scalar_lea.vmem [#allocation6], 1
  %v4448 = vld [vmem:[%s4447] ss:$8 sm:$0xf]
  %v4449 = vld [vmem:[%s4447] ss:$8 sm:$0xf0]
  %v4450 = vor.u32 %v4448, %v4449
  %s4451 = scalar_lea.vmem [#allocation6], 65
  %v4452 = vld [vmem:[%s4451] ss:$8 sm:$0xf]
  %v4453 = vld [vmem:[%s4451] ss:$8 sm:$0xf0]
  %v4454 = vor.u32 %v4452, %v4453
  %s4455 = scalar_lea.vmem [#allocation6], 129
  %v4456 = vld [vmem:[%s4455] ss:$8 sm:$0xf]
  %v4457 = vld [vmem:[%s4455] ss:$8 sm:$0xf0]
  %v4458 = vor.u32 %v4456, %v4457
  %s4459 = scalar_lea.vmem [#allocation6], 193
  %v4460 = vld [vmem:[%s4459] ss:$8 sm:$0xf]
  %v4461 = vld [vmem:[%s4459] ss:$8 sm:$0xf0]
  %v4462 = vor.u32 %v4460, %v4461
  %s4463 = scalar_lea.vmem [#allocation5], 1
  %v4464 = vld [vmem:[%s4463] ss:$8 sm:$0xf]
  %v4465 = vld [vmem:[%s4463] ss:$8 sm:$0xf0]
  %v4466 = vor.u32 %v4464, %v4465
  %s4467 = scalar_lea.vmem [#allocation5], 65
  %v4468 = vld [vmem:[%s4467] ss:$8 sm:$0xf]
  %v4469 = vld [vmem:[%s4467] ss:$8 sm:$0xf0]
  %v4470 = vor.u32 %v4468, %v4469
  %s4471 = scalar_lea.vmem [#allocation5], 129
  %v4472 = vld [vmem:[%s4471] ss:$8 sm:$0xf]
  %v4473 = vld [vmem:[%s4471] ss:$8 sm:$0xf0]
  %v4474 = vor.u32 %v4472, %v4473
  %s4475 = scalar_lea.vmem [#allocation5], 193
  %v4476 = vld [vmem:[%s4475] ss:$8 sm:$0xf]
  %v4477 = vld [vmem:[%s4475] ss:$8 sm:$0xf0]
  %v4478 = vor.u32 %v4476, %v4477
  %4479 = vst.msk [vmem:[#allocation7 + $0x20] sm:$0xff] %vm65, %v4466
  %4480 = vst.msk [vmem:[#allocation7 + $0x28] sm:$0xff] %vm65, %v4470
  %4481 = vst.msk [vmem:[#allocation7 + $0x30] sm:$0xff] %vm65, %v4474
  %4482 = vst.msk [vmem:[#allocation7 + $0x38] sm:$0xff] %vm65, %v4478
  %v4483 = vpack.c.bf16 %v4424, %v4423
  %v4484 = vpack.c.bf16 %v4426, %v4425
  %4487 = vrot.lane.b32.xlu0 %v4483, 64
  %v4488 = vpop.permute.xlu0 %4487
  %4489 = vrot.lane.b32.xlu0 %v4484, 64
  %v4490 = vpop.permute.xlu0 %4489
  %v4492 = vsel %vm958, %v4488, 0
  %v4495 = vsel %vm958, %v4490, 0
  %4497 = vmatprep.subr.bf16.mxu0 0
  %4498 = vmatpush1.bf16.msra.mxu0 %v4246
  %4499 = vmatprep.subr.bf16.mxu0 0
  %4500 = vmatpush1.bf16.msra.mxu0 %v4247
  %4501 = vmatprep.subr.bf16.mxu0 0
  %4502 = vmatpush1.bf16.msra.mxu0 0
  %4503 = vmatprep.subr.bf16.mxu0 0
  %4504 = vmatpush1.bf16.msra.mxu0 0
  %4505 = vmatprep.subr.bf16.mxu0 0
  %4506 = vmatpush1.bf16.msra.mxu0 0
  %4507 = vmatprep.subr.bf16.mxu0 0
  %4508 = vmatpush1.bf16.msra.mxu0 0
  %4509 = vmatprep.subr.bf16.mxu0 0
  %4510 = vmatpush1.bf16.msra.mxu0 0
  %4511 = vmatprep.subr.bf16.mxu0 0
  %4512 = vmatpush1.bf16.msra.mxu0 0
  %4513 = vmatprep.subr.bf16.mxu0 0
  %4514 = vmatpush1.bf16.msra.mxu0 0
  %4515 = vmatprep.subr.bf16.mxu0 0
  %4516 = vmatpush1.bf16.msra.mxu0 0
  %4517 = vmatprep.subr.bf16.mxu0 0
  %4518 = vmatpush1.bf16.msra.mxu0 0
  %4519 = vmatprep.subr.bf16.mxu0 0
  %4520 = vmatpush1.bf16.msra.mxu0 0
  %4521 = vmatprep.subr.bf16.mxu0 0
  %4522 = vmatpush1.bf16.msra.mxu0 0
  %4523 = vmatprep.subr.bf16.mxu0 0
  %4524 = vmatpush1.bf16.msra.mxu0 0
  %4525 = vmatprep.subr.bf16.mxu0 0
  %4526 = vmatpush1.bf16.msra.mxu0 0
  %4527 = vmatprep.subr.bf16.mxu0 0
  %4528 = vmatpush1.bf16.msra.mxu0 0
  %4529 = vmatprep.mubr.bf16.mxu0 0
  %4530 = vmatmul.mubr.bf16.gmra.mrb[0].mxu0 %v4492
  %v4531 = vpop.f32.mrb[0].mxu0
  %v4532 = vadd.f32 0.0, %v4531
  %v4533 = vpop.f32.mrb[0].mxu0
  %v4534 = vpop.f32.mrb[0].mxu0
  %v4535 = vadd.f32 0.0, %v4534
  %v4536 = vpop.f32.mrb[0].mxu0
  %4537 = vmatprep.mubr.bf16.mxu0 0
  %4538 = vmatmul.mubr.bf16.gmra.mrb[0].mxu0 %v4495
  %v4539 = vpop.f32.mrb[0].mxu0
  %v4540 = vadd.f32 0.0, %v4539
  %v4541 = vpop.f32.mrb[0].mxu0
  %v4542 = vpop.f32.mrb[0].mxu0
  %v4543 = vadd.f32 0.0, %v4542
  %v4544 = vpop.f32.mrb[0].mxu0
  %4545 = vdwg.mxu0
  %v4546 = vadd.f32 %v4450, %v4532
  %v4547 = vadd.f32 %v4454, %v4535
  %v4548 = vadd.f32 %v4458, %v4540
  %v4549 = vadd.f32 %v4462, %v4543
  %v4550 = vxor.u32 %v4546, 2147483648
  %v4551 = vxor.u32 %v4547, 2147483648
  %v4552 = vxor.u32 %v4548, 2147483648
  %v4553 = vxor.u32 %v4549, 2147483648
  %v4554 = vmul.f32 %v4550, 1.442695
  %v4555 = vpow.pop %v4554
  %v4556 = vmul.f32 %v4551, 1.442695
  %v4557 = vpow.pop %v4556
  %v4558 = vmul.f32 %v4552, 1.442695
  %v4559 = vpow.pop %v4558
  %v4560 = vmul.f32 %v4553, 1.442695
  %v4561 = vpow.pop %v4560
  %v4562 = vadd.f32 %v4555, 1.0
  %v4563 = vadd.f32 %v4557, 1.0
  %v4564 = vadd.f32 %v4559, 1.0
  %v4565 = vadd.f32 %v4561, 1.0
  %v4566 = vrcp.pop %v4562
  %v4567 = vmul.f32 1.0, %v4566
  %v4568 = vrcp.pop %v4563
  %v4569 = vmul.f32 1.0, %v4568
  %v4570 = vrcp.pop %v4564
  %v4571 = vmul.f32 1.0, %v4570
  %v4572 = vrcp.pop %v4565
  %v4573 = vmul.f32 1.0, %v4572
  %v4574 = vadd.f32 %v4532, %v4333
  %v4575 = vadd.f32 %v4535, %v4333
  %v4576 = vadd.f32 %v4540, %v4333
  %v4577 = vadd.f32 %v4543, %v4333
  %4582 = vrot.lane.b32.xlu0 %v4574, 64
  %v4583 = vpop.permute.xlu0 %4582
  %4584 = vrot.lane.b32.xlu0 %v4575, 64
  %v4585 = vpop.permute.xlu0 %4584
  %4586 = vrot.lane.b32.xlu0 %v4576, 64
  %v4587 = vpop.permute.xlu0 %4586
  %4588 = vrot.lane.b32.xlu0 %v4577, 64
  %v4589 = vpop.permute.xlu0 %4588
  %v4594 = vmul.f32 %v4567, %v4583
  %v4595 = vmul.f32 %v4569, %v4585
  %v4596 = vmul.f32 %v4571, %v4587
  %v4597 = vmul.f32 %v4573, %v4589
  %4602 = vrot.lane.b32.xlu0 %v4594, 64
  %v4603 = vpop.permute.xlu0 %4602
  %4604 = vrot.lane.b32.xlu0 %v4595, 64
  %v4605 = vpop.permute.xlu0 %4604
  %4606 = vrot.lane.b32.xlu0 %v4596, 64
  %v4607 = vpop.permute.xlu0 %4606
  %4608 = vrot.lane.b32.xlu0 %v4597, 64
  %v4609 = vpop.permute.xlu0 %4608
  %v4614 = vadd.f32 %v4450, %v4603
  %v4615 = vadd.f32 %v4454, %v4605
  %v4616 = vadd.f32 %v4458, %v4607
  %v4617 = vadd.f32 %v4462, %v4609
  %v4618 = vtanh.pop %v4614
  %v4619 = vtanh.pop %v4615
  %v4620 = vtanh.pop %v4616
  %v4621 = vtanh.pop %v4617
  %v4622 = vsub.f32 %v4423, %v4618
  %v4623 = vsub.f32 %v4424, %v4619
  %v4624 = vsub.f32 %v4425, %v4620
  %v4625 = vsub.f32 %v4426, %v4621
  %4630 = vrot.lane.b32.xlu0 %v4622, 96
  %v4631 = vpop.permute.xlu0 %4630
  %4632 = vrot.lane.b32.xlu0 %v4623, 96
  %v4633 = vpop.permute.xlu0 %4632
  %4634 = vrot.lane.b32.xlu0 %v4624, 96
  %v4635 = vpop.permute.xlu0 %4634
  %4636 = vrot.lane.b32.xlu0 %v4625, 96
  %v4637 = vpop.permute.xlu0 %4636
  %v4642 = vmul.f32 %v4567, %v4631
  %v4643 = vmul.f32 %v4569, %v4633
  %v4644 = vmul.f32 %v4571, %v4635
  %v4645 = vmul.f32 %v4573, %v4637
  %4650 = vrot.lane.b32.xlu0 %v4642, 32
  %v4651 = vpop.permute.xlu0 %4650
  %4652 = vrot.lane.b32.xlu0 %v4643, 32
  %v4653 = vpop.permute.xlu0 %4652
  %4654 = vrot.lane.b32.xlu0 %v4644, 32
  %v4655 = vpop.permute.xlu0 %4654
  %4656 = vrot.lane.b32.xlu0 %v4645, 32
  %v4657 = vpop.permute.xlu0 %4656
  %v4662 = vadd.f32 %v4618, %v4651
  %v4663 = vadd.f32 %v4619, %v4653
  %v4664 = vadd.f32 %v4620, %v4655
  %v4665 = vadd.f32 %v4621, %v4657
  %4670 = vrot.lane.b32.xlu0 %v4662, 64
  %v4671 = vpop.permute.xlu0 %4670
  %4672 = vrot.lane.b32.xlu0 %v4663, 64
  %v4673 = vpop.permute.xlu0 %4672
  %4674 = vrot.lane.b32.xlu0 %v4664, 64
  %v4675 = vpop.permute.xlu0 %4674
  %4676 = vrot.lane.b32.xlu0 %v4665, 64
  %v4677 = vpop.permute.xlu0 %4676
  %4682 = vst.msk [vmem:[#allocation8 + $0x20] sm:$0xff] %vm958, %v4671
  %4683 = vst.msk [vmem:[#allocation8 + $0x28] sm:$0xff] %vm958, %v4673
  %4684 = vst.msk [vmem:[#allocation8 + $0x30] sm:$0xff] %vm958, %v4675
  %4685 = vst.msk [vmem:[#allocation8 + $0x38] sm:$0xff] %vm958, %v4677
  %s4686 = scalar_lea.vmem [#allocation6], 2
  %v4687 = vld [vmem:[%s4686] ss:$8 sm:$0xf]
  %v4688 = vld [vmem:[%s4686] ss:$8 sm:$0xf0]
  %v4689 = vor.u32 %v4687, %v4688
  %s4690 = scalar_lea.vmem [#allocation6], 66
  %v4691 = vld [vmem:[%s4690] ss:$8 sm:$0xf]
  %v4692 = vld [vmem:[%s4690] ss:$8 sm:$0xf0]
  %v4693 = vor.u32 %v4691, %v4692
  %s4694 = scalar_lea.vmem [#allocation6], 130
  %v4695 = vld [vmem:[%s4694] ss:$8 sm:$0xf]
  %v4696 = vld [vmem:[%s4694] ss:$8 sm:$0xf0]
  %v4697 = vor.u32 %v4695, %v4696
  %s4698 = scalar_lea.vmem [#allocation6], 194
  %v4699 = vld [vmem:[%s4698] ss:$8 sm:$0xf]
  %v4700 = vld [vmem:[%s4698] ss:$8 sm:$0xf0]
  %v4701 = vor.u32 %v4699, %v4700
  %s4702 = scalar_lea.vmem [#allocation5], 2
  %v4703 = vld [vmem:[%s4702] ss:$8 sm:$0xf]
  %v4704 = vld [vmem:[%s4702] ss:$8 sm:$0xf0]
  %v4705 = vor.u32 %v4703, %v4704
  %s4706 = scalar_lea.vmem [#allocation5], 66
  %v4707 = vld [vmem:[%s4706] ss:$8 sm:$0xf]
  %v4708 = vld [vmem:[%s4706] ss:$8 sm:$0xf0]
  %v4709 = vor.u32 %v4707, %v4708
  %s4710 = scalar_lea.vmem [#allocation5], 130
  %v4711 = vld [vmem:[%s4710] ss:$8 sm:$0xf]
  %v4712 = vld [vmem:[%s4710] ss:$8 sm:$0xf0]
  %v4713 = vor.u32 %v4711, %v4712
  %s4714 = scalar_lea.vmem [#allocation5], 194
  %v4715 = vld [vmem:[%s4714] ss:$8 sm:$0xf]
  %v4716 = vld [vmem:[%s4714] ss:$8 sm:$0xf0]
  %v4717 = vor.u32 %v4715, %v4716
  %4718 = vst.msk [vmem:[#allocation7 + $0x40] sm:$0xff] %vm65, %v4705
  %4719 = vst.msk [vmem:[#allocation7 + $0x48] sm:$0xff] %vm65, %v4709
  %4720 = vst.msk [vmem:[#allocation7 + $0x50] sm:$0xff] %vm65, %v4713
  %4721 = vst.msk [vmem:[#allocation7 + $0x58] sm:$0xff] %vm65, %v4717
  %v4722 = vpack.c.bf16 %v4663, %v4662
  %v4723 = vpack.c.bf16 %v4665, %v4664
  %4726 = vrot.lane.b32.xlu0 %v4722, 64
  %v4727 = vpop.permute.xlu0 %4726
  %4728 = vrot.lane.b32.xlu0 %v4723, 64
  %v4729 = vpop.permute.xlu0 %4728
  %v4731 = vsel %vm958, %v4727, 0
  %v4734 = vsel %vm958, %v4729, 0
  %4736 = vmatprep.subr.bf16.mxu0 0
  %4737 = vmatpush1.bf16.msra.mxu0 %v4246
  %4738 = vmatprep.subr.bf16.mxu0 0
  %4739 = vmatpush1.bf16.msra.mxu0 %v4247
  %4740 = vmatprep.subr.bf16.mxu0 0
  %4741 = vmatpush1.bf16.msra.mxu0 0
  %4742 = vmatprep.subr.bf16.mxu0 0
  %4743 = vmatpush1.bf16.msra.mxu0 0
  %4744 = vmatprep.subr.bf16.mxu0 0
  %4745 = vmatpush1.bf16.msra.mxu0 0
  %4746 = vmatprep.subr.bf16.mxu0 0
  %4747 = vmatpush1.bf16.msra.mxu0 0
  %4748 = vmatprep.subr.bf16.mxu0 0
  %4749 = vmatpush1.bf16.msra.mxu0 0
  %4750 = vmatprep.subr.bf16.mxu0 0
  %4751 = vmatpush1.bf16.msra.mxu0 0
  %4752 = vmatprep.subr.bf16.mxu0 0
  %4753 = vmatpush1.bf16.msra.mxu0 0
  %4754 = vmatprep.subr.bf16.mxu0 0
  %4755 = vmatpush1.bf16.msra.mxu0 0
  %4756 = vmatprep.subr.bf16.mxu0 0
  %4757 = vmatpush1.bf16.msra.mxu0 0
  %4758 = vmatprep.subr.bf16.mxu0 0
  %4759 = vmatpush1.bf16.msra.mxu0 0
  %4760 = vmatprep.subr.bf16.mxu0 0
  %4761 = vmatpush1.bf16.msra.mxu0 0
  %4762 = vmatprep.subr.bf16.mxu0 0
  %4763 = vmatpush1.bf16.msra.mxu0 0
  %4764 = vmatprep.subr.bf16.mxu0 0
  %4765 = vmatpush1.bf16.msra.mxu0 0
  %4766 = vmatprep.subr.bf16.mxu0 0
  %4767 = vmatpush1.bf16.msra.mxu0 0
  %4768 = vmatprep.mubr.bf16.mxu0 0
  %4769 = vmatmul.mubr.bf16.gmra.mrb[0].mxu0 %v4731
  %v4770 = vpop.f32.mrb[0].mxu0
  %v4771 = vadd.f32 0.0, %v4770
  %v4772 = vpop.f32.mrb[0].mxu0
  %v4773 = vpop.f32.mrb[0].mxu0
  %v4774 = vadd.f32 0.0, %v4773
  %v4775 = vpop.f32.mrb[0].mxu0
  %4776 = vmatprep.mubr.bf16.mxu0 0
  %4777 = vmatmul.mubr.bf16.gmra.mrb[0].mxu0 %v4734
  %v4778 = vpop.f32.mrb[0].mxu0
  %v4779 = vadd.f32 0.0, %v4778
  %v4780 = vpop.f32.mrb[0].mxu0
  %v4781 = vpop.f32.mrb[0].mxu0
  %v4782 = vadd.f32 0.0, %v4781
  %v4783 = vpop.f32.mrb[0].mxu0
  %4784 = vdwg.mxu0
  %v4785 = vadd.f32 %v4689, %v4771
  %v4786 = vadd.f32 %v4693, %v4774
  %v4787 = vadd.f32 %v4697, %v4779
  %v4788 = vadd.f32 %v4701, %v4782
  %v4789 = vxor.u32 %v4785, 2147483648
  %v4790 = vxor.u32 %v4786, 2147483648
  %v4791 = vxor.u32 %v4787, 2147483648
  %v4792 = vxor.u32 %v4788, 2147483648
  %v4793 = vmul.f32 %v4789, 1.442695
  %v4794 = vpow.pop %v4793
  %v4795 = vmul.f32 %v4790, 1.442695
  %v4796 = vpow.pop %v4795
  %v4797 = vmul.f32 %v4791, 1.442695
  %v4798 = vpow.pop %v4797
  %v4799 = vmul.f32 %v4792, 1.442695
  %v4800 = vpow.pop %v4799
  %v4801 = vadd.f32 %v4794, 1.0
  %v4802 = vadd.f32 %v4796, 1.0
  %v4803 = vadd.f32 %v4798, 1.0
  %v4804 = vadd.f32 %v4800, 1.0
  %v4805 = vrcp.pop %v4801
  %v4806 = vmul.f32 1.0, %v4805
  %v4807 = vrcp.pop %v4802
  %v4808 = vmul.f32 1.0, %v4807
  %v4809 = vrcp.pop %v4803
  %v4810 = vmul.f32 1.0, %v4809
  %v4811 = vrcp.pop %v4804
  %v4812 = vmul.f32 1.0, %v4811
  %v4813 = vadd.f32 %v4771, %v4333
  %v4814 = vadd.f32 %v4774, %v4333
  %v4815 = vadd.f32 %v4779, %v4333
  %v4816 = vadd.f32 %v4782, %v4333
  %4821 = vrot.lane.b32.xlu0 %v4813, 64
  %v4822 = vpop.permute.xlu0 %4821
  %4823 = vrot.lane.b32.xlu0 %v4814, 64
  %v4824 = vpop.permute.xlu0 %4823
  %4825 = vrot.lane.b32.xlu0 %v4815, 64
  %v4826 = vpop.permute.xlu0 %4825
  %4827 = vrot.lane.b32.xlu0 %v4816, 64
  %v4828 = vpop.permute.xlu0 %4827
  %v4833 = vmul.f32 %v4806, %v4822
  %v4834 = vmul.f32 %v4808, %v4824
  %v4835 = vmul.f32 %v4810, %v4826
  %v4836 = vmul.f32 %v4812, %v4828
  %4841 = vrot.lane.b32.xlu0 %v4833, 64
  %v4842 = vpop.permute.xlu0 %4841
  %4843 = vrot.lane.b32.xlu0 %v4834, 64
  %v4844 = vpop.permute.xlu0 %4843
  %4845 = vrot.lane.b32.xlu0 %v4835, 64
  %v4846 = vpop.permute.xlu0 %4845
  %4847 = vrot.lane.b32.xlu0 %v4836, 64
  %v4848 = vpop.permute.xlu0 %4847
  %v4853 = vadd.f32 %v4689, %v4842
  %v4854 = vadd.f32 %v4693, %v4844
  %v4855 = vadd.f32 %v4697, %v4846
  %v4856 = vadd.f32 %v4701, %v4848
  %v4857 = vtanh.pop %v4853
  %v4858 = vtanh.pop %v4854
  %v4859 = vtanh.pop %v4855
  %v4860 = vtanh.pop %v4856
  %v4861 = vsub.f32 %v4662, %v4857
  %v4862 = vsub.f32 %v4663, %v4858
  %v4863 = vsub.f32 %v4664, %v4859
  %v4864 = vsub.f32 %v4665, %v4860
  %4869 = vrot.lane.b32.xlu0 %v4861, 96
  %v4870 = vpop.permute.xlu0 %4869
  %4871 = vrot.lane.b32.xlu0 %v4862, 96
  %v4872 = vpop.permute.xlu0 %4871
  %4873 = vrot.lane.b32.xlu0 %v4863, 96
  %v4874 = vpop.permute.xlu0 %4873
  %4875 = vrot.lane.b32.xlu0 %v4864, 96
  %v4876 = vpop.permute.xlu0 %4875
  %v4881 = vmul.f32 %v4806, %v4870
  %v4882 = vmul.f32 %v4808, %v4872
  %v4883 = vmul.f32 %v4810, %v4874
  %v4884 = vmul.f32 %v4812, %v4876
  %4889 = vrot.lane.b32.xlu0 %v4881, 32
  %v4890 = vpop.permute.xlu0 %4889
  %4891 = vrot.lane.b32.xlu0 %v4882, 32
  %v4892 = vpop.permute.xlu0 %4891
  %4893 = vrot.lane.b32.xlu0 %v4883, 32
  %v4894 = vpop.permute.xlu0 %4893
  %4895 = vrot.lane.b32.xlu0 %v4884, 32
  %v4896 = vpop.permute.xlu0 %4895
  %v4901 = vadd.f32 %v4857, %v4890
  %v4902 = vadd.f32 %v4858, %v4892
  %v4903 = vadd.f32 %v4859, %v4894
  %v4904 = vadd.f32 %v4860, %v4896
  %4909 = vrot.lane.b32.xlu0 %v4901, 64
  %v4910 = vpop.permute.xlu0 %4909
  %4911 = vrot.lane.b32.xlu0 %v4902, 64
  %v4912 = vpop.permute.xlu0 %4911
  %4913 = vrot.lane.b32.xlu0 %v4903, 64
  %v4914 = vpop.permute.xlu0 %4913
  %4915 = vrot.lane.b32.xlu0 %v4904, 64
  %v4916 = vpop.permute.xlu0 %4915
  %4921 = vst.msk [vmem:[#allocation8 + $0x40] sm:$0xff] %vm958, %v4910
  %4922 = vst.msk [vmem:[#allocation8 + $0x48] sm:$0xff] %vm958, %v4912
  %4923 = vst.msk [vmem:[#allocation8 + $0x50] sm:$0xff] %vm958, %v4914
  %4924 = vst.msk [vmem:[#allocation8 + $0x58] sm:$0xff] %vm958, %v4916
  %s4925 = scalar_lea.vmem [#allocation6], 3
  %v4926 = vld [vmem:[%s4925] ss:$8 sm:$0xf]
  %v4927 = vld [vmem:[%s4925] ss:$8 sm:$0xf0]
  %v4928 = vor.u32 %v4926, %v4927
  %s4929 = scalar_lea.vmem [#allocation6], 67
  %v4930 = vld [vmem:[%s4929] ss:$8 sm:$0xf]
  %v4931 = vld [vmem:[%s4929] ss:$8 sm:$0xf0]
  %v4932 = vor.u32 %v4930, %v4931
  %s4933 = scalar_lea.vmem [#allocation6], 131
  %v4934 = vld [vmem:[%s4933] ss:$8 sm:$0xf]
  %v4935 = vld [vmem:[%s4933] ss:$8 sm:$0xf0]
  %v4936 = vor.u32 %v4934, %v4935
  %s4937 = scalar_lea.vmem [#allocation6], 195
  %v4938 = vld [vmem:[%s4937] ss:$8 sm:$0xf]
  %v4939 = vld [vmem:[%s4937] ss:$8 sm:$0xf0]
  %v4940 = vor.u32 %v4938, %v4939
  %s4941 = scalar_lea.vmem [#allocation5], 3
  %v4942 = vld [vmem:[%s4941] ss:$8 sm:$0xf]
  %v4943 = vld [vmem:[%s4941] ss:$8 sm:$0xf0]
  %v4944 = vor.u32 %v4942, %v4943
  %s4945 = scalar_lea.vmem [#allocation5], 67
  %v4946 = vld [vmem:[%s4945] ss:$8 sm:$0xf]
  %v4947 = vld [vmem:[%s4945] ss:$8 sm:$0xf0]
  %v4948 = vor.u32 %v4946, %v4947
  %s4949 = scalar_lea.vmem [#allocation5], 131
  %v4950 = vld [vmem:[%s4949] ss:$8 sm:$0xf]
  %v4951 = vld [vmem:[%s4949] ss:$8 sm:$0xf0]
  %v4952 = vor.u32 %v4950, %v4951
  %s4953 = scalar_lea.vmem [#allocation5], 195
  %v4954 = vld [vmem:[%s4953] ss:$8 sm:$0xf]
  %v4955 = vld [vmem:[%s4953] ss:$8 sm:$0xf0]
  %v4956 = vor.u32 %v4954, %v4955
  %4957 = vst.msk [vmem:[#allocation7 + $0x60] sm:$0xff] %vm65, %v4944
  %4958 = vst.msk [vmem:[#allocation7 + $0x68] sm:$0xff] %vm65, %v4948
  %4959 = vst.msk [vmem:[#allocation7 + $0x70] sm:$0xff] %vm65, %v4952
  %4960 = vst.msk [vmem:[#allocation7 + $0x78] sm:$0xff] %vm65, %v4956
  %v4961 = vpack.c.bf16 %v4902, %v4901
  %v4962 = vpack.c.bf16 %v4904, %v4903
  %4965 = vrot.lane.b32.xlu0 %v4961, 64
  %v4966 = vpop.permute.xlu0 %4965
  %4967 = vrot.lane.b32.xlu0 %v4962, 64
  %v4968 = vpop.permute.xlu0 %4967
  %v4970 = vsel %vm958, %v4966, 0
  %v4973 = vsel %vm958, %v4968, 0
  %4975 = vmatprep.subr.bf16.mxu0 0
  %4976 = vmatpush1.bf16.msra.mxu0 %v4246
  %4977 = vmatprep.subr.bf16.mxu0 0
  %4978 = vmatpush1.bf16.msra.mxu0 %v4247
  %4979 = vmatprep.subr.bf16.mxu0 0
  %4980 = vmatpush1.bf16.msra.mxu0 0
  %4981 = vmatprep.subr.bf16.mxu0 0
  %4982 = vmatpush1.bf16.msra.mxu0 0
  %4983 = vmatprep.subr.bf16.mxu0 0
  %4984 = vmatpush1.bf16.msra.mxu0 0
  %4985 = vmatprep.subr.bf16.mxu0 0
  %4986 = vmatpush1.bf16.msra.mxu0 0
  %4987 = vmatprep.subr.bf16.mxu0 0
  %4988 = vmatpush1.bf16.msra.mxu0 0
  %4989 = vmatprep.subr.bf16.mxu0 0
  %4990 = vmatpush1.bf16.msra.mxu0 0
  %4991 = vmatprep.subr.bf16.mxu0 0
  %4992 = vmatpush1.bf16.msra.mxu0 0
  %4993 = vmatprep.subr.bf16.mxu0 0
  %4994 = vmatpush1.bf16.msra.mxu0 0
  %4995 = vmatprep.subr.bf16.mxu0 0
  %4996 = vmatpush1.bf16.msra.mxu0 0
  %4997 = vmatprep.subr.bf16.mxu0 0
  %4998 = vmatpush1.bf16.msra.mxu0 0
  %4999 = vmatprep.subr.bf16.mxu0 0
  %5000 = vmatpush1.bf16.msra.mxu0 0
  %5001 = vmatprep.subr.bf16.mxu0 0
  %5002 = vmatpush1.bf16.msra.mxu0 0
  %5003 = vmatprep.subr.bf16.mxu0 0
  %5004 = vmatpush1.bf16.msra.mxu0 0
  %5005 = vmatprep.subr.bf16.mxu0 0
  %5006 = vmatpush1.bf16.msra.mxu0 0
  %5007 = vmatprep.mubr.bf16.mxu0 0
  %5008 = vmatmul.mubr.bf16.gmra.mrb[0].mxu0 %v4970
  %v5009 = vpop.f32.mrb[0].mxu0
  %v5010 = vadd.f32 0.0, %v5009
  %v5011 = vpop.f32.mrb[0].mxu0
  %v5012 = vpop.f32.mrb[0].mxu0
  %v5013 = vadd.f32 0.0, %v5012
  %v5014 = vpop.f32.mrb[0].mxu0
  %5015 = vmatprep.mubr.bf16.mxu0 0
  %5016 = vmatmul.mubr.bf16.gmra.mrb[0].mxu0 %v4973
  %v5017 = vpop.f32.mrb[0].mxu0
  %v5018 = vadd.f32 0.0, %v5017
  %v5019 = vpop.f32.mrb[0].mxu0
  %v5020 = vpop.f32.mrb[0].mxu0
  %v5021 = vadd.f32 0.0, %v5020
  %v5022 = vpop.f32.mrb[0].mxu0
  %5023 = vdwg.mxu0
  %v5024 = vadd.f32 %v4928, %v5010
  %v5025 = vadd.f32 %v4932, %v5013
  %v5026 = vadd.f32 %v4936, %v5018
  %v5027 = vadd.f32 %v4940, %v5021
  %v5028 = vxor.u32 %v5024, 2147483648
  %v5029 = vxor.u32 %v5025, 2147483648
  %v5030 = vxor.u32 %v5026, 2147483648
  %v5031 = vxor.u32 %v5027, 2147483648
  %v5032 = vmul.f32 %v5028, 1.442695
  %v5033 = vpow.pop %v5032
  %v5034 = vmul.f32 %v5029, 1.442695
  %v5035 = vpow.pop %v5034
  %v5036 = vmul.f32 %v5030, 1.442695
  %v5037 = vpow.pop %v5036
  %v5038 = vmul.f32 %v5031, 1.442695
  %v5039 = vpow.pop %v5038
  %v5040 = vadd.f32 %v5033, 1.0
  %v5041 = vadd.f32 %v5035, 1.0
  %v5042 = vadd.f32 %v5037, 1.0
  %v5043 = vadd.f32 %v5039, 1.0
  %v5044 = vrcp.pop %v5040
  %v5045 = vmul.f32 1.0, %v5044
  %v5046 = vrcp.pop %v5041
  %v5047 = vmul.f32 1.0, %v5046
  %v5048 = vrcp.pop %v5042
  %v5049 = vmul.f32 1.0, %v5048
  %v5050 = vrcp.pop %v5043
  %v5051 = vmul.f32 1.0, %v5050
  %v5052 = vadd.f32 %v5010, %v4333
  %v5053 = vadd.f32 %v5013, %v4333
  %v5054 = vadd.f32 %v5018, %v4333
  %v5055 = vadd.f32 %v5021, %v4333
  %5060 = vrot.lane.b32.xlu0 %v5052, 64
  %v5061 = vpop.permute.xlu0 %5060
  %5062 = vrot.lane.b32.xlu0 %v5053, 64
  %v5063 = vpop.permute.xlu0 %5062
  %5064 = vrot.lane.b32.xlu0 %v5054, 64
  %v5065 = vpop.permute.xlu0 %5064
  %5066 = vrot.lane.b32.xlu0 %v5055, 64
  %v5067 = vpop.permute.xlu0 %5066
  %v5072 = vmul.f32 %v5045, %v5061
  %v5073 = vmul.f32 %v5047, %v5063
  %v5074 = vmul.f32 %v5049, %v5065
  %v5075 = vmul.f32 %v5051, %v5067
  %5080 = vrot.lane.b32.xlu0 %v5072, 64
  %v5081 = vpop.permute.xlu0 %5080
  %5082 = vrot.lane.b32.xlu0 %v5073, 64
  %v5083 = vpop.permute.xlu0 %5082
  %5084 = vrot.lane.b32.xlu0 %v5074, 64
  %v5085 = vpop.permute.xlu0 %5084
  %5086 = vrot.lane.b32.xlu0 %v5075, 64
  %v5087 = vpop.permute.xlu0 %5086
  %v5092 = vadd.f32 %v4928, %v5081
  %v5093 = vadd.f32 %v4932, %v5083
  %v5094 = vadd.f32 %v4936, %v5085
  %v5095 = vadd.f32 %v4940, %v5087
  %v5096 = vtanh.pop %v5092
  %v5097 = vtanh.pop %v5093
  %v5098 = vtanh.pop %v5094
  %v5099 = vtanh.pop %v5095
  %v5100 = vsub.f32 %v4901, %v5096
  %v5101 = vsub.f32 %v4902, %v5097
  %v5102 = vsub.f32 %v4903, %v5098
  %v5103 = vsub.f32 %v4904, %v5099
  %5108 = vrot.lane.b32.xlu0 %v5100, 96
  %v5109 = vpop.permute.xlu0 %5108
  %5110 = vrot.lane.b32.xlu0 %v5101, 96
  %v5111 = vpop.permute.xlu0 %5110
  %5112 = vrot.lane.b32.xlu0 %v5102, 96
  %v5113 = vpop.permute.xlu0 %5112
  %5114 = vrot.lane.b32.xlu0 %v5103, 96
  %v5115 = vpop.permute.xlu0 %5114
  %v5120 = vmul.f32 %v5045, %v5109
  %v5121 = vmul.f32 %v5047, %v5111
  %v5122 = vmul.f32 %v5049, %v5113
  %v5123 = vmul.f32 %v5051, %v5115
  %5128 = vrot.lane.b32.xlu0 %v5120, 32
  %v5129 = vpop.permute.xlu0 %5128
  %5130 = vrot.lane.b32.xlu0 %v5121, 32
  %v5131 = vpop.permute.xlu0 %5130
  %5132 = vrot.lane.b32.xlu0 %v5122, 32
  %v5133 = vpop.permute.xlu0 %5132
  %5134 = vrot.lane.b32.xlu0 %v5123, 32
  %v5135 = vpop.permute.xlu0 %5134
  %v5140 = vadd.f32 %v5096, %v5129
  %v5141 = vadd.f32 %v5097, %v5131
  %v5142 = vadd.f32 %v5098, %v5133
  %v5143 = vadd.f32 %v5099, %v5135
  %5148 = vrot.lane.b32.xlu0 %v5140, 64
  %v5149 = vpop.permute.xlu0 %5148
  %5150 = vrot.lane.b32.xlu0 %v5141, 64
  %v5151 = vpop.permute.xlu0 %5150
  %5152 = vrot.lane.b32.xlu0 %v5142, 64
  %v5153 = vpop.permute.xlu0 %5152
  %5154 = vrot.lane.b32.xlu0 %v5143, 64
  %v5155 = vpop.permute.xlu0 %5154
  %5160 = vst.msk [vmem:[#allocation8 + $0x60] sm:$0xff] %vm958, %v5149
  %5161 = vst.msk [vmem:[#allocation8 + $0x68] sm:$0xff] %vm958, %v5151
  %5162 = vst.msk [vmem:[#allocation8 + $0x70] sm:$0xff] %vm958, %v5153
  %5163 = vst.msk [vmem:[#allocation8 + $0x78] sm:$0xff] %vm958, %v5155
  %s5164 = scalar_lea.vmem [#allocation6], 4
  %v5165 = vld [vmem:[%s5164] ss:$8 sm:$0xf]
  %v5166 = vld [vmem:[%s5164] ss:$8 sm:$0xf0]
  %v5167 = vor.u32 %v5165, %v5166
  %s5168 = scalar_lea.vmem [#allocation6], 68
  %v5169 = vld [vmem:[%s5168] ss:$8 sm:$0xf]
  %v5170 = vld [vmem:[%s5168] ss:$8 sm:$0xf0]
  %v5171 = vor.u32 %v5169, %v5170
  %s5172 = scalar_lea.vmem [#allocation6], 132
  %v5173 = vld [vmem:[%s5172] ss:$8 sm:$0xf]
  %v5174 = vld [vmem:[%s5172] ss:$8 sm:$0xf0]
  %v5175 = vor.u32 %v5173, %v5174
  %s5176 = scalar_lea.vmem [#allocation6], 196
  %v5177 = vld [vmem:[%s5176] ss:$8 sm:$0xf]
  %v5178 = vld [vmem:[%s5176] ss:$8 sm:$0xf0]
  %v5179 = vor.u32 %v5177, %v5178
  %s5180 = scalar_lea.vmem [#allocation5], 4
  %v5181 = vld [vmem:[%s5180] ss:$8 sm:$0xf]
  %v5182 = vld [vmem:[%s5180] ss:$8 sm:$0xf0]
  %v5183 = vor.u32 %v5181, %v5182
  %s5184 = scalar_lea.vmem [#allocation5], 68
  %v5185 = vld [vmem:[%s5184] ss:$8 sm:$0xf]
  %v5186 = vld [vmem:[%s5184] ss:$8 sm:$0xf0]
  %v5187 = vor.u32 %v5185, %v5186
  %s5188 = scalar_lea.vmem [#allocation5], 132
  %v5189 = vld [vmem:[%s5188] ss:$8 sm:$0xf]
  %v5190 = vld [vmem:[%s5188] ss:$8 sm:$0xf0]
  %v5191 = vor.u32 %v5189, %v5190
  %s5192 = scalar_lea.vmem [#allocation5], 196
  %v5193 = vld [vmem:[%s5192] ss:$8 sm:$0xf]
  %v5194 = vld [vmem:[%s5192] ss:$8 sm:$0xf0]
  %v5195 = vor.u32 %v5193, %v5194
  %5196 = vst.msk [vmem:[#allocation7 + $0x80] sm:$0xff] %vm65, %v5183
  %5197 = vst.msk [vmem:[#allocation7 + $0x88] sm:$0xff] %vm65, %v5187
  %5198 = vst.msk [vmem:[#allocation7 + $0x90] sm:$0xff] %vm65, %v5191
  %5199 = vst.msk [vmem:[#allocation7 + $0x98] sm:$0xff] %vm65, %v5195
  %v5200 = vpack.c.bf16 %v5141, %v5140
  %v5201 = vpack.c.bf16 %v5143, %v5142
  %5204 = vrot.lane.b32.xlu0 %v5200, 64
  %v5205 = vpop.permute.xlu0 %5204
  %5206 = vrot.lane.b32.xlu0 %v5201, 64
  %v5207 = vpop.permute.xlu0 %5206
  %v5209 = vsel %vm958, %v5205, 0
  %v5212 = vsel %vm958, %v5207, 0
  %5214 = vmatprep.subr.bf16.mxu0 0
  %5215 = vmatpush1.bf16.msra.mxu0 %v4246
  %5216 = vmatprep.subr.bf16.mxu0 0
  %5217 = vmatpush1.bf16.msra.mxu0 %v4247
  %5218 = vmatprep.subr.bf16.mxu0 0
  %5219 = vmatpush1.bf16.msra.mxu0 0
  %5220 = vmatprep.subr.bf16.mxu0 0
  %5221 = vmatpush1.bf16.msra.mxu0 0
  %5222 = vmatprep.subr.bf16.mxu0 0
  %5223 = vmatpush1.bf16.msra.mxu0 0
  %5224 = vmatprep.subr.bf16.mxu0 0
  %5225 = vmatpush1.bf16.msra.mxu0 0
  %5226 = vmatprep.subr.bf16.mxu0 0
  %5227 = vmatpush1.bf16.msra.mxu0 0
  %5228 = vmatprep.subr.bf16.mxu0 0
  %5229 = vmatpush1.bf16.msra.mxu0 0
  %5230 = vmatprep.subr.bf16.mxu0 0
  %5231 = vmatpush1.bf16.msra.mxu0 0
  %5232 = vmatprep.subr.bf16.mxu0 0
  %5233 = vmatpush1.bf16.msra.mxu0 0
  %5234 = vmatprep.subr.bf16.mxu0 0
  %5235 = vmatpush1.bf16.msra.mxu0 0
  %5236 = vmatprep.subr.bf16.mxu0 0
  %5237 = vmatpush1.bf16.msra.mxu0 0
  %5238 = vmatprep.subr.bf16.mxu0 0
  %5239 = vmatpush1.bf16.msra.mxu0 0
  %5240 = vmatprep.subr.bf16.mxu0 0
  %5241 = vmatpush1.bf16.msra.mxu0 0
  %5242 = vmatprep.subr.bf16.mxu0 0
  %5243 = vmatpush1.bf16.msra.mxu0 0
  %5244 = vmatprep.subr.bf16.mxu0 0
  %5245 = vmatpush1.bf16.msra.mxu0 0
  %5246 = vmatprep.mubr.bf16.mxu0 0
  %5247 = vmatmul.mubr.bf16.gmra.mrb[0].mxu0 %v5209
  %v5248 = vpop.f32.mrb[0].mxu0
  %v5249 = vadd.f32 0.0, %v5248
  %v5250 = vpop.f32.mrb[0].mxu0
  %v5251 = vpop.f32.mrb[0].mxu0
  %v5252 = vadd.f32 0.0, %v5251
  %v5253 = vpop.f32.mrb[0].mxu0
  %5254 = vmatprep.mubr.bf16.mxu0 0
  %5255 = vmatmul.mubr.bf16.gmra.mrb[0].mxu0 %v5212
  %v5256 = vpop.f32.mrb[0].mxu0
  %v5257 = vadd.f32 0.0, %v5256
  %v5258 = vpop.f32.mrb[0].mxu0
  %v5259 = vpop.f32.mrb[0].mxu0
  %v5260 = vadd.f32 0.0, %v5259
  %v5261 = vpop.f32.mrb[0].mxu0
  %5262 = vdwg.mxu0
  %v5263 = vadd.f32 %v5167, %v5249
  %v5264 = vadd.f32 %v5171, %v5252
  %v5265 = vadd.f32 %v5175, %v5257
  %v5266 = vadd.f32 %v5179, %v5260
  %v5267 = vxor.u32 %v5263, 2147483648
  %v5268 = vxor.u32 %v5264, 2147483648
  %v5269 = vxor.u32 %v5265, 2147483648
  %v5270 = vxor.u32 %v5266, 2147483648
  %v5271 = vmul.f32 %v5267, 1.442695
  %v5272 = vpow.pop %v5271
  %v5273 = vmul.f32 %v5268, 1.442695
  %v5274 = vpow.pop %v5273
  %v5275 = vmul.f32 %v5269, 1.442695
  %v5276 = vpow.pop %v5275
  %v5277 = vmul.f32 %v5270, 1.442695
  %v5278 = vpow.pop %v5277
  %v5279 = vadd.f32 %v5272, 1.0
  %v5280 = vadd.f32 %v5274, 1.0
  %v5281 = vadd.f32 %v5276, 1.0
  %v5282 = vadd.f32 %v5278, 1.0
  %v5283 = vrcp.pop %v5279
  %v5284 = vmul.f32 1.0, %v5283
  %v5285 = vrcp.pop %v5280
  %v5286 = vmul.f32 1.0, %v5285
  %v5287 = vrcp.pop %v5281
  %v5288 = vmul.f32 1.0, %v5287
  %v5289 = vrcp.pop %v5282
  %v5290 = vmul.f32 1.0, %v5289
  %v5291 = vadd.f32 %v5249, %v4333
  %v5292 = vadd.f32 %v5252, %v4333
  %v5293 = vadd.f32 %v5257, %v4333
  %v5294 = vadd.f32 %v5260, %v4333
  %5299 = vrot.lane.b32.xlu0 %v5291, 64
  %v5300 = vpop.permute.xlu0 %5299
  %5301 = vrot.lane.b32.xlu0 %v5292, 64
  %v5302 = vpop.permute.xlu0 %5301
  %5303 = vrot.lane.b32.xlu0 %v5293, 64
  %v5304 = vpop.permute.xlu0 %5303
  %5305 = vrot.lane.b32.xlu0 %v5294, 64
  %v5306 = vpop.permute.xlu0 %5305
  %v5311 = vmul.f32 %v5284, %v5300
  %v5312 = vmul.f32 %v5286, %v5302
  %v5313 = vmul.f32 %v5288, %v5304
  %v5314 = vmul.f32 %v5290, %v5306
  %5319 = vrot.lane.b32.xlu0 %v5311, 64
  %v5320 = vpop.permute.xlu0 %5319
  %5321 = vrot.lane.b32.xlu0 %v5312, 64
  %v5322 = vpop.permute.xlu0 %5321
  %5323 = vrot.lane.b32.xlu0 %v5313, 64
  %v5324 = vpop.permute.xlu0 %5323
  %5325 = vrot.lane.b32.xlu0 %v5314, 64
  %v5326 = vpop.permute.xlu0 %5325
  %v5331 = vadd.f32 %v5167, %v5320
  %v5332 = vadd.f32 %v5171, %v5322
  %v5333 = vadd.f32 %v5175, %v5324
  %v5334 = vadd.f32 %v5179, %v5326
  %v5335 = vtanh.pop %v5331
  %v5336 = vtanh.pop %v5332
  %v5337 = vtanh.pop %v5333
  %v5338 = vtanh.pop %v5334
  %v5339 = vsub.f32 %v5140, %v5335
  %v5340 = vsub.f32 %v5141, %v5336
  %v5341 = vsub.f32 %v5142, %v5337
  %v5342 = vsub.f32 %v5143, %v5338
  %5347 = vrot.lane.b32.xlu0 %v5339, 96
  %v5348 = vpop.permute.xlu0 %5347
  %5349 = vrot.lane.b32.xlu0 %v5340, 96
  %v5350 = vpop.permute.xlu0 %5349
  %5351 = vrot.lane.b32.xlu0 %v5341, 96
  %v5352 = vpop.permute.xlu0 %5351
  %5353 = vrot.lane.b32.xlu0 %v5342, 96
  %v5354 = vpop.permute.xlu0 %5353
  %v5359 = vmul.f32 %v5284, %v5348
  %v5360 = vmul.f32 %v5286, %v5350
  %v5361 = vmul.f32 %v5288, %v5352
  %v5362 = vmul.f32 %v5290, %v5354
  %5367 = vrot.lane.b32.xlu0 %v5359, 32
  %v5368 = vpop.permute.xlu0 %5367
  %5369 = vrot.lane.b32.xlu0 %v5360, 32
  %v5370 = vpop.permute.xlu0 %5369
  %5371 = vrot.lane.b32.xlu0 %v5361, 32
  %v5372 = vpop.permute.xlu0 %5371
  %5373 = vrot.lane.b32.xlu0 %v5362, 32
  %v5374 = vpop.permute.xlu0 %5373
  %v5379 = vadd.f32 %v5335, %v5368
  %v5380 = vadd.f32 %v5336, %v5370
  %v5381 = vadd.f32 %v5337, %v5372
  %v5382 = vadd.f32 %v5338, %v5374
  %5387 = vrot.lane.b32.xlu0 %v5379, 64
  %v5388 = vpop.permute.xlu0 %5387
  %5389 = vrot.lane.b32.xlu0 %v5380, 64
  %v5390 = vpop.permute.xlu0 %5389
  %5391 = vrot.lane.b32.xlu0 %v5381, 64
  %v5392 = vpop.permute.xlu0 %5391
  %5393 = vrot.lane.b32.xlu0 %v5382, 64
  %v5394 = vpop.permute.xlu0 %5393
  %5399 = vst.msk [vmem:[#allocation8 + $0x80] sm:$0xff] %vm958, %v5388
  %5400 = vst.msk [vmem:[#allocation8 + $0x88] sm:$0xff] %vm958, %v5390
  %5401 = vst.msk [vmem:[#allocation8 + $0x90] sm:$0xff] %vm958, %v5392
  %5402 = vst.msk [vmem:[#allocation8 + $0x98] sm:$0xff] %vm958, %v5394
  %s5403 = scalar_lea.vmem [#allocation6], 5
  %v5404 = vld [vmem:[%s5403] ss:$8 sm:$0xf]
  %v5405 = vld [vmem:[%s5403] ss:$8 sm:$0xf0]
  %v5406 = vor.u32 %v5404, %v5405
  %s5407 = scalar_lea.vmem [#allocation6], 69
  %v5408 = vld [vmem:[%s5407] ss:$8 sm:$0xf]
  %v5409 = vld [vmem:[%s5407] ss:$8 sm:$0xf0]
  %v5410 = vor.u32 %v5408, %v5409
  %s5411 = scalar_lea.vmem [#allocation6], 133
  %v5412 = vld [vmem:[%s5411] ss:$8 sm:$0xf]
  %v5413 = vld [vmem:[%s5411] ss:$8 sm:$0xf0]
  %v5414 = vor.u32 %v5412, %v5413
  %s5415 = scalar_lea.vmem [#allocation6], 197
  %v5416 = vld [vmem:[%s5415] ss:$8 sm:$0xf]
  %v5417 = vld [vmem:[%s5415] ss:$8 sm:$0xf0]
  %v5418 = vor.u32 %v5416, %v5417
  %s5419 = scalar_lea.vmem [#allocation5], 5
  %v5420 = vld [vmem:[%s5419] ss:$8 sm:$0xf]
  %v5421 = vld [vmem:[%s5419] ss:$8 sm:$0xf0]
  %v5422 = vor.u32 %v5420, %v5421
  %s5423 = scalar_lea.vmem [#allocation5], 69
  %v5424 = vld [vmem:[%s5423] ss:$8 sm:$0xf]
  %v5425 = vld [vmem:[%s5423] ss:$8 sm:$0xf0]
  %v5426 = vor.u32 %v5424, %v5425
  %s5427 = scalar_lea.vmem [#allocation5], 133
  %v5428 = vld [vmem:[%s5427] ss:$8 sm:$0xf]
  %v5429 = vld [vmem:[%s5427] ss:$8 sm:$0xf0]
  %v5430 = vor.u32 %v5428, %v5429
  %s5431 = scalar_lea.vmem [#allocation5], 197
  %v5432 = vld [vmem:[%s5431] ss:$8 sm:$0xf]
  %v5433 = vld [vmem:[%s5431] ss:$8 sm:$0xf0]
  %v5434 = vor.u32 %v5432, %v5433
  %5435 = vst.msk [vmem:[#allocation7 + $0xa0] sm:$0xff] %vm65, %v5422
  %5436 = vst.msk [vmem:[#allocation7 + $0xa8] sm:$0xff] %vm65, %v5426
  %5437 = vst.msk [vmem:[#allocation7 + $0xb0] sm:$0xff] %vm65, %v5430
  %5438 = vst.msk [vmem:[#allocation7 + $0xb8] sm:$0xff] %vm65, %v5434
  %v5439 = vpack.c.bf16 %v5380, %v5379
  %v5440 = vpack.c.bf16 %v5382, %v5381
  %5443 = vrot.lane.b32.xlu0 %v5439, 64
  %v5444 = vpop.permute.xlu0 %5443
  %5445 = vrot.lane.b32.xlu0 %v5440, 64
  %v5446 = vpop.permute.xlu0 %5445
  %v5448 = vsel %vm958, %v5444, 0
  %v5451 = vsel %vm958, %v5446, 0
  %5453 = vmatprep.subr.bf16.mxu0 0
  %5454 = vmatpush1.bf16.msra.mxu0 %v4246
  %5455 = vmatprep.subr.bf16.mxu0 0
  %5456 = vmatpush1.bf16.msra.mxu0 %v4247
  %5457 = vmatprep.subr.bf16.mxu0 0
  %5458 = vmatpush1.bf16.msra.mxu0 0
  %5459 = vmatprep.subr.bf16.mxu0 0
  %5460 = vmatpush1.bf16.msra.mxu0 0
  %5461 = vmatprep.subr.bf16.mxu0 0
  %5462 = vmatpush1.bf16.msra.mxu0 0
  %5463 = vmatprep.subr.bf16.mxu0 0
  %5464 = vmatpush1.bf16.msra.mxu0 0
  %5465 = vmatprep.subr.bf16.mxu0 0
  %5466 = vmatpush1.bf16.msra.mxu0 0
  %5467 = vmatprep.subr.bf16.mxu0 0
  %5468 = vmatpush1.bf16.msra.mxu0 0
  %5469 = vmatprep.subr.bf16.mxu0 0
  %5470 = vmatpush1.bf16.msra.mxu0 0
  %5471 = vmatprep.subr.bf16.mxu0 0
  %5472 = vmatpush1.bf16.msra.mxu0 0
  %5473 = vmatprep.subr.bf16.mxu0 0
  %5474 = vmatpush1.bf16.msra.mxu0 0
  %5475 = vmatprep.subr.bf16.mxu0 0
  %5476 = vmatpush1.bf16.msra.mxu0 0
  %5477 = vmatprep.subr.bf16.mxu0 0
  %5478 = vmatpush1.bf16.msra.mxu0 0
  %5479 = vmatprep.subr.bf16.mxu0 0
  %5480 = vmatpush1.bf16.msra.mxu0 0
  %5481 = vmatprep.subr.bf16.mxu0 0
  %5482 = vmatpush1.bf16.msra.mxu0 0
  %5483 = vmatprep.subr.bf16.mxu0 0
  %5484 = vmatpush1.bf16.msra.mxu0 0
  %5485 = vmatprep.mubr.bf16.mxu0 0
  %5486 = vmatmul.mubr.bf16.gmra.mrb[0].mxu0 %v5448
  %v5487 = vpop.f32.mrb[0].mxu0
  %v5488 = vadd.f32 0.0, %v5487
  %v5489 = vpop.f32.mrb[0].mxu0
  %v5490 = vpop.f32.mrb[0].mxu0
  %v5491 = vadd.f32 0.0, %v5490
  %v5492 = vpop.f32.mrb[0].mxu0
  %5493 = vmatprep.mubr.bf16.mxu0 0
  %5494 = vmatmul.mubr.bf16.gmra.mrb[0].mxu0 %v5451
  %v5495 = vpop.f32.mrb[0].mxu0
  %v5496 = vadd.f32 0.0, %v5495
  %v5497 = vpop.f32.mrb[0].mxu0
  %v5498 = vpop.f32.mrb[0].mxu0
  %v5499 = vadd.f32 0.0, %v5498
  %v5500 = vpop.f32.mrb[0].mxu0
  %5501 = vdwg.mxu0
  %v5502 = vadd.f32 %v5406, %v5488
  %v5503 = vadd.f32 %v5410, %v5491
  %v5504 = vadd.f32 %v5414, %v5496
  %v5505 = vadd.f32 %v5418, %v5499
  %v5506 = vxor.u32 %v5502, 2147483648
  %v5507 = vxor.u32 %v5503, 2147483648
  %v5508 = vxor.u32 %v5504, 2147483648
  %v5509 = vxor.u32 %v5505, 2147483648
  %v5510 = vmul.f32 %v5506, 1.442695
  %v5511 = vpow.pop %v5510
  %v5512 = vmul.f32 %v5507, 1.442695
  %v5513 = vpow.pop %v5512
  %v5514 = vmul.f32 %v5508, 1.442695
  %v5515 = vpow.pop %v5514
  %v5516 = vmul.f32 %v5509, 1.442695
  %v5517 = vpow.pop %v5516
  %v5518 = vadd.f32 %v5511, 1.0
  %v5519 = vadd.f32 %v5513, 1.0
  %v5520 = vadd.f32 %v5515, 1.0
  %v5521 = vadd.f32 %v5517, 1.0
  %v5522 = vrcp.pop %v5518
  %v5523 = vmul.f32 1.0, %v5522
  %v5524 = vrcp.pop %v5519
  %v5525 = vmul.f32 1.0, %v5524
  %v5526 = vrcp.pop %v5520
  %v5527 = vmul.f32 1.0, %v5526
  %v5528 = vrcp.pop %v5521
  %v5529 = vmul.f32 1.0, %v5528
  %v5530 = vadd.f32 %v5488, %v4333
  %v5531 = vadd.f32 %v5491, %v4333
  %v5532 = vadd.f32 %v5496, %v4333
  %v5533 = vadd.f32 %v5499, %v4333
  %5538 = vrot.lane.b32.xlu0 %v5530, 64
  %v5539 = vpop.permute.xlu0 %5538
  %5540 = vrot.lane.b32.xlu0 %v5531, 64
  %v5541 = vpop.permute.xlu0 %5540
  %5542 = vrot.lane.b32.xlu0 %v5532, 64
  %v5543 = vpop.permute.xlu0 %5542
  %5544 = vrot.lane.b32.xlu0 %v5533, 64
  %v5545 = vpop.permute.xlu0 %5544
  %v5550 = vmul.f32 %v5523, %v5539
  %v5551 = vmul.f32 %v5525, %v5541
  %v5552 = vmul.f32 %v5527, %v5543
  %v5553 = vmul.f32 %v5529, %v5545
  %5558 = vrot.lane.b32.xlu0 %v5550, 64
  %v5559 = vpop.permute.xlu0 %5558
  %5560 = vrot.lane.b32.xlu0 %v5551, 64
  %v5561 = vpop.permute.xlu0 %5560
  %5562 = vrot.lane.b32.xlu0 %v5552, 64
  %v5563 = vpop.permute.xlu0 %5562
  %5564 = vrot.lane.b32.xlu0 %v5553, 64
  %v5565 = vpop.permute.xlu0 %5564
  %v5570 = vadd.f32 %v5406, %v5559
  %v5571 = vadd.f32 %v5410, %v5561
  %v5572 = vadd.f32 %v5414, %v5563
  %v5573 = vadd.f32 %v5418, %v5565
  %v5574 = vtanh.pop %v5570
  %v5575 = vtanh.pop %v5571
  %v5576 = vtanh.pop %v5572
  %v5577 = vtanh.pop %v5573
  %v5578 = vsub.f32 %v5379, %v5574
  %v5579 = vsub.f32 %v5380, %v5575
  %v5580 = vsub.f32 %v5381, %v5576
  %v5581 = vsub.f32 %v5382, %v5577
  %5586 = vrot.lane.b32.xlu0 %v5578, 96
  %v5587 = vpop.permute.xlu0 %5586
  %5588 = vrot.lane.b32.xlu0 %v5579, 96
  %v5589 = vpop.permute.xlu0 %5588
  %5590 = vrot.lane.b32.xlu0 %v5580, 96
  %v5591 = vpop.permute.xlu0 %5590
  %5592 = vrot.lane.b32.xlu0 %v5581, 96
  %v5593 = vpop.permute.xlu0 %5592
  %v5598 = vmul.f32 %v5523, %v5587
  %v5599 = vmul.f32 %v5525, %v5589
  %v5600 = vmul.f32 %v5527, %v5591
  %v5601 = vmul.f32 %v5529, %v5593
  %5606 = vrot.lane.b32.xlu0 %v5598, 32
  %v5607 = vpop.permute.xlu0 %5606
  %5608 = vrot.lane.b32.xlu0 %v5599, 32
  %v5609 = vpop.permute.xlu0 %5608
  %5610 = vrot.lane.b32.xlu0 %v5600, 32
  %v5611 = vpop.permute.xlu0 %5610
  %5612 = vrot.lane.b32.xlu0 %v5601, 32
  %v5613 = vpop.permute.xlu0 %5612
  %v5618 = vadd.f32 %v5574, %v5607
  %v5619 = vadd.f32 %v5575, %v5609
  %v5620 = vadd.f32 %v5576, %v5611
  %v5621 = vadd.f32 %v5577, %v5613
  %5626 = vrot.lane.b32.xlu0 %v5618, 64
  %v5627 = vpop.permute.xlu0 %5626
  %5628 = vrot.lane.b32.xlu0 %v5619, 64
  %v5629 = vpop.permute.xlu0 %5628
  %5630 = vrot.lane.b32.xlu0 %v5620, 64
  %v5631 = vpop.permute.xlu0 %5630
  %5632 = vrot.lane.b32.xlu0 %v5621, 64
  %v5633 = vpop.permute.xlu0 %5632
  %5638 = vst.msk [vmem:[#allocation8 + $0xa0] sm:$0xff] %vm958, %v5627
  %5639 = vst.msk [vmem:[#allocation8 + $0xa8] sm:$0xff] %vm958, %v5629
  %5640 = vst.msk [vmem:[#allocation8 + $0xb0] sm:$0xff] %vm958, %v5631
  %5641 = vst.msk [vmem:[#allocation8 + $0xb8] sm:$0xff] %vm958, %v5633
  %s5642 = scalar_lea.vmem [#allocation6], 6
  %v5643 = vld [vmem:[%s5642] ss:$8 sm:$0xf]
  %v5644 = vld [vmem:[%s5642] ss:$8 sm:$0xf0]
  %v5645 = vor.u32 %v5643, %v5644
  %s5646 = scalar_lea.vmem [#allocation6], 70
  %v5647 = vld [vmem:[%s5646] ss:$8 sm:$0xf]
  %v5648 = vld [vmem:[%s5646] ss:$8 sm:$0xf0]
  %v5649 = vor.u32 %v5647, %v5648
  %s5650 = scalar_lea.vmem [#allocation6], 134
  %v5651 = vld [vmem:[%s5650] ss:$8 sm:$0xf]
  %v5652 = vld [vmem:[%s5650] ss:$8 sm:$0xf0]
  %v5653 = vor.u32 %v5651, %v5652
  %s5654 = scalar_lea.vmem [#allocation6], 198
  %v5655 = vld [vmem:[%s5654] ss:$8 sm:$0xf]
  %v5656 = vld [vmem:[%s5654] ss:$8 sm:$0xf0]
  %v5657 = vor.u32 %v5655, %v5656
  %s5658 = scalar_lea.vmem [#allocation5], 6
  %v5659 = vld [vmem:[%s5658] ss:$8 sm:$0xf]
  %v5660 = vld [vmem:[%s5658] ss:$8 sm:$0xf0]
  %v5661 = vor.u32 %v5659, %v5660
  %s5662 = scalar_lea.vmem [#allocation5], 70
  %v5663 = vld [vmem:[%s5662] ss:$8 sm:$0xf]
  %v5664 = vld [vmem:[%s5662] ss:$8 sm:$0xf0]
  %v5665 = vor.u32 %v5663, %v5664
  %s5666 = scalar_lea.vmem [#allocation5], 134
  %v5667 = vld [vmem:[%s5666] ss:$8 sm:$0xf]
  %v5668 = vld [vmem:[%s5666] ss:$8 sm:$0xf0]
  %v5669 = vor.u32 %v5667, %v5668
  %s5670 = scalar_lea.vmem [#allocation5], 198
  %v5671 = vld [vmem:[%s5670] ss:$8 sm:$0xf]
  %v5672 = vld [vmem:[%s5670] ss:$8 sm:$0xf0]
  %v5673 = vor.u32 %v5671, %v5672
  %5674 = vst.msk [vmem:[#allocation7 + $0xc0] sm:$0xff] %vm65, %v5661
  %5675 = vst.msk [vmem:[#allocation7 + $0xc8] sm:$0xff] %vm65, %v5665
  %5676 = vst.msk [vmem:[#allocation7 + $0xd0] sm:$0xff] %vm65, %v5669
  %5677 = vst.msk [vmem:[#allocation7 + $0xd8] sm:$0xff] %vm65, %v5673
  %v5678 = vpack.c.bf16 %v5619, %v5618
  %v5679 = vpack.c.bf16 %v5621, %v5620
  %5682 = vrot.lane.b32.xlu0 %v5678, 64
  %v5683 = vpop.permute.xlu0 %5682
  %5684 = vrot.lane.b32.xlu0 %v5679, 64
  %v5685 = vpop.permute.xlu0 %5684
  %v5687 = vsel %vm958, %v5683, 0
  %v5690 = vsel %vm958, %v5685, 0
  %5692 = vmatprep.subr.bf16.mxu0 0
  %5693 = vmatpush1.bf16.msra.mxu0 %v4246
  %5694 = vmatprep.subr.bf16.mxu0 0
  %5695 = vmatpush1.bf16.msra.mxu0 %v4247
  %5696 = vmatprep.subr.bf16.mxu0 0
  %5697 = vmatpush1.bf16.msra.mxu0 0
  %5698 = vmatprep.subr.bf16.mxu0 0
  %5699 = vmatpush1.bf16.msra.mxu0 0
  %5700 = vmatprep.subr.bf16.mxu0 0
  %5701 = vmatpush1.bf16.msra.mxu0 0
  %5702 = vmatprep.subr.bf16.mxu0 0
  %5703 = vmatpush1.bf16.msra.mxu0 0
  %5704 = vmatprep.subr.bf16.mxu0 0
  %5705 = vmatpush1.bf16.msra.mxu0 0
  %5706 = vmatprep.subr.bf16.mxu0 0
  %5707 = vmatpush1.bf16.msra.mxu0 0
  %5708 = vmatprep.subr.bf16.mxu0 0
  %5709 = vmatpush1.bf16.msra.mxu0 0
  %5710 = vmatprep.subr.bf16.mxu0 0
  %5711 = vmatpush1.bf16.msra.mxu0 0
  %5712 = vmatprep.subr.bf16.mxu0 0
  %5713 = vmatpush1.bf16.msra.mxu0 0
  %5714 = vmatprep.subr.bf16.mxu0 0
  %5715 = vmatpush1.bf16.msra.mxu0 0
  %5716 = vmatprep.subr.bf16.mxu0 0
  %5717 = vmatpush1.bf16.msra.mxu0 0
  %5718 = vmatprep.subr.bf16.mxu0 0
  %5719 = vmatpush1.bf16.msra.mxu0 0
  %5720 = vmatprep.subr.bf16.mxu0 0
  %5721 = vmatpush1.bf16.msra.mxu0 0
  %5722 = vmatprep.subr.bf16.mxu0 0
  %5723 = vmatpush1.bf16.msra.mxu0 0
  %5724 = vmatprep.mubr.bf16.mxu0 0
  %5725 = vmatmul.mubr.bf16.gmra.mrb[0].mxu0 %v5687
  %v5726 = vpop.f32.mrb[0].mxu0
  %v5727 = vadd.f32 0.0, %v5726
  %v5728 = vpop.f32.mrb[0].mxu0
  %v5729 = vpop.f32.mrb[0].mxu0
  %v5730 = vadd.f32 0.0, %v5729
  %v5731 = vpop.f32.mrb[0].mxu0
  %5732 = vmatprep.mubr.bf16.mxu0 0
  %5733 = vmatmul.mubr.bf16.gmra.mrb[0].mxu0 %v5690
  %v5734 = vpop.f32.mrb[0].mxu0
  %v5735 = vadd.f32 0.0, %v5734
  %v5736 = vpop.f32.mrb[0].mxu0
  %v5737 = vpop.f32.mrb[0].mxu0
  %v5738 = vadd.f32 0.0, %v5737
  %v5739 = vpop.f32.mrb[0].mxu0
  %5740 = vdwg.mxu0
  %v5741 = vadd.f32 %v5645, %v5727
  %v5742 = vadd.f32 %v5649, %v5730
  %v5743 = vadd.f32 %v5653, %v5735
  %v5744 = vadd.f32 %v5657, %v5738
  %v5745 = vxor.u32 %v5741, 2147483648
  %v5746 = vxor.u32 %v5742, 2147483648
  %v5747 = vxor.u32 %v5743, 2147483648
  %v5748 = vxor.u32 %v5744, 2147483648
  %v5749 = vmul.f32 %v5745, 1.442695
  %v5750 = vpow.pop %v5749
  %v5751 = vmul.f32 %v5746, 1.442695
  %v5752 = vpow.pop %v5751
  %v5753 = vmul.f32 %v5747, 1.442695
  %v5754 = vpow.pop %v5753
  %v5755 = vmul.f32 %v5748, 1.442695
  %v5756 = vpow.pop %v5755
  %v5757 = vadd.f32 %v5750, 1.0
  %v5758 = vadd.f32 %v5752, 1.0
  %v5759 = vadd.f32 %v5754, 1.0
  %v5760 = vadd.f32 %v5756, 1.0
  %v5761 = vrcp.pop %v5757
  %v5762 = vmul.f32 1.0, %v5761
  %v5763 = vrcp.pop %v5758
  %v5764 = vmul.f32 1.0, %v5763
  %v5765 = vrcp.pop %v5759
  %v5766 = vmul.f32 1.0, %v5765
  %v5767 = vrcp.pop %v5760
  %v5768 = vmul.f32 1.0, %v5767
  %v5769 = vadd.f32 %v5727, %v4333
  %v5770 = vadd.f32 %v5730, %v4333
  %v5771 = vadd.f32 %v5735, %v4333
  %v5772 = vadd.f32 %v5738, %v4333
  %5777 = vrot.lane.b32.xlu0 %v5769, 64
  %v5778 = vpop.permute.xlu0 %5777
  %5779 = vrot.lane.b32.xlu0 %v5770, 64
  %v5780 = vpop.permute.xlu0 %5779
  %5781 = vrot.lane.b32.xlu0 %v5771, 64
  %v5782 = vpop.permute.xlu0 %5781
  %5783 = vrot.lane.b32.xlu0 %v5772, 64
  %v5784 = vpop.permute.xlu0 %5783
  %v5789 = vmul.f32 %v5762, %v5778
  %v5790 = vmul.f32 %v5764, %v5780
  %v5791 = vmul.f32 %v5766, %v5782
  %v5792 = vmul.f32 %v5768, %v5784
  %5797 = vrot.lane.b32.xlu0 %v5789, 64
  %v5798 = vpop.permute.xlu0 %5797
  %5799 = vrot.lane.b32.xlu0 %v5790, 64
  %v5800 = vpop.permute.xlu0 %5799
  %5801 = vrot.lane.b32.xlu0 %v5791, 64
  %v5802 = vpop.permute.xlu0 %5801
  %5803 = vrot.lane.b32.xlu0 %v5792, 64
  %v5804 = vpop.permute.xlu0 %5803
  %v5809 = vadd.f32 %v5645, %v5798
  %v5810 = vadd.f32 %v5649, %v5800
  %v5811 = vadd.f32 %v5653, %v5802
  %v5812 = vadd.f32 %v5657, %v5804
  %v5813 = vtanh.pop %v5809
  %v5814 = vtanh.pop %v5810
  %v5815 = vtanh.pop %v5811
  %v5816 = vtanh.pop %v5812
  %v5817 = vsub.f32 %v5618, %v5813
  %v5818 = vsub.f32 %v5619, %v5814
  %v5819 = vsub.f32 %v5620, %v5815
  %v5820 = vsub.f32 %v5621, %v5816
  %5825 = vrot.lane.b32.xlu0 %v5817, 96
  %v5826 = vpop.permute.xlu0 %5825
  %5827 = vrot.lane.b32.xlu0 %v5818, 96
  %v5828 = vpop.permute.xlu0 %5827
  %5829 = vrot.lane.b32.xlu0 %v5819, 96
  %v5830 = vpop.permute.xlu0 %5829
  %5831 = vrot.lane.b32.xlu0 %v5820, 96
  %v5832 = vpop.permute.xlu0 %5831
  %v5837 = vmul.f32 %v5762, %v5826
  %v5838 = vmul.f32 %v5764, %v5828
  %v5839 = vmul.f32 %v5766, %v5830
  %v5840 = vmul.f32 %v5768, %v5832
  %5845 = vrot.lane.b32.xlu0 %v5837, 32
  %v5846 = vpop.permute.xlu0 %5845
  %5847 = vrot.lane.b32.xlu0 %v5838, 32
  %v5848 = vpop.permute.xlu0 %5847
  %5849 = vrot.lane.b32.xlu0 %v5839, 32
  %v5850 = vpop.permute.xlu0 %5849
  %5851 = vrot.lane.b32.xlu0 %v5840, 32
  %v5852 = vpop.permute.xlu0 %5851
  %v5857 = vadd.f32 %v5813, %v5846
  %v5858 = vadd.f32 %v5814, %v5848
  %v5859 = vadd.f32 %v5815, %v5850
  %v5860 = vadd.f32 %v5816, %v5852
  %5865 = vrot.lane.b32.xlu0 %v5857, 64
  %v5866 = vpop.permute.xlu0 %5865
  %5867 = vrot.lane.b32.xlu0 %v5858, 64
  %v5868 = vpop.permute.xlu0 %5867
  %5869 = vrot.lane.b32.xlu0 %v5859, 64
  %v5870 = vpop.permute.xlu0 %5869
  %5871 = vrot.lane.b32.xlu0 %v5860, 64
  %v5872 = vpop.permute.xlu0 %5871
  %5877 = vst.msk [vmem:[#allocation8 + $0xc0] sm:$0xff] %vm958, %v5866
  %5878 = vst.msk [vmem:[#allocation8 + $0xc8] sm:$0xff] %vm958, %v5868
  %5879 = vst.msk [vmem:[#allocation8 + $0xd0] sm:$0xff] %vm958, %v5870
  %5880 = vst.msk [vmem:[#allocation8 + $0xd8] sm:$0xff] %vm958, %v5872
  %s5881 = scalar_lea.vmem [#allocation6], 7
  %v5882 = vld [vmem:[%s5881] ss:$8 sm:$0xf]
  %v5883 = vld [vmem:[%s5881] ss:$8 sm:$0xf0]
  %v5884 = vor.u32 %v5882, %v5883
  %s5885 = scalar_lea.vmem [#allocation6], 71
  %v5886 = vld [vmem:[%s5885] ss:$8 sm:$0xf]
  %v5887 = vld [vmem:[%s5885] ss:$8 sm:$0xf0]
  %v5888 = vor.u32 %v5886, %v5887
  %s5889 = scalar_lea.vmem [#allocation6], 135
  %v5890 = vld [vmem:[%s5889] ss:$8 sm:$0xf]
  %v5891 = vld [vmem:[%s5889] ss:$8 sm:$0xf0]
  %v5892 = vor.u32 %v5890, %v5891
  %s5893 = scalar_lea.vmem [#allocation6], 199
  %v5894 = vld [vmem:[%s5893] ss:$8 sm:$0xf]
  %v5895 = vld [vmem:[%s5893] ss:$8 sm:$0xf0]
  %v5896 = vor.u32 %v5894, %v5895
  %s5897 = scalar_lea.vmem [#allocation5], 7
  %v5898 = vld [vmem:[%s5897] ss:$8 sm:$0xf]
  %v5899 = vld [vmem:[%s5897] ss:$8 sm:$0xf0]
  %v5900 = vor.u32 %v5898, %v5899
  %s5901 = scalar_lea.vmem [#allocation5], 71
  %v5902 = vld [vmem:[%s5901] ss:$8 sm:$0xf]
  %v5903 = vld [vmem:[%s5901] ss:$8 sm:$0xf0]
  %v5904 = vor.u32 %v5902, %v5903
  %s5905 = scalar_lea.vmem [#allocation5], 135
  %v5906 = vld [vmem:[%s5905] ss:$8 sm:$0xf]
  %v5907 = vld [vmem:[%s5905] ss:$8 sm:$0xf0]
  %v5908 = vor.u32 %v5906, %v5907
  %s5909 = scalar_lea.vmem [#allocation5], 199
  %v5910 = vld [vmem:[%s5909] ss:$8 sm:$0xf]
  %v5911 = vld [vmem:[%s5909] ss:$8 sm:$0xf0]
  %v5912 = vor.u32 %v5910, %v5911
  %5913 = vst.msk [vmem:[#allocation7 + $0xe0] sm:$0xff] %vm65, %v5900
  %5914 = vst.msk [vmem:[#allocation7 + $0xe8] sm:$0xff] %vm65, %v5904
  %5915 = vst.msk [vmem:[#allocation7 + $0xf0] sm:$0xff] %vm65, %v5908
  %5916 = vst.msk [vmem:[#allocation7 + $0xf8] sm:$0xff] %vm65, %v5912
  %v5917 = vpack.c.bf16 %v5858, %v5857
  %v5918 = vpack.c.bf16 %v5860, %v5859
  %5921 = vrot.lane.b32.xlu0 %v5917, 64
  %v5922 = vpop.permute.xlu0 %5921
  %5923 = vrot.lane.b32.xlu0 %v5918, 64
  %v5924 = vpop.permute.xlu0 %5923
  %v5926 = vsel %vm958, %v5922, 0
  %v5929 = vsel %vm958, %v5924, 0
  %5931 = vmatprep.subr.bf16.mxu0 0
  %5932 = vmatpush1.bf16.msra.mxu0 %v4246
  %5933 = vmatprep.subr.bf16.mxu0 0
  %5934 = vmatpush1.bf16.msra.mxu0 %v4247
  %5935 = vmatprep.subr.bf16.mxu0 0
  %5936 = vmatpush1.bf16.msra.mxu0 0
  %5937 = vmatprep.subr.bf16.mxu0 0
  %5938 = vmatpush1.bf16.msra.mxu0 0
  %5939 = vmatprep.subr.bf16.mxu0 0
  %5940 = vmatpush1.bf16.msra.mxu0 0
  %5941 = vmatprep.subr.bf16.mxu0 0
  %5942 = vmatpush1.bf16.msra.mxu0 0
  %5943 = vmatprep.subr.bf16.mxu0 0
  %5944 = vmatpush1.bf16.msra.mxu0 0
  %5945 = vmatprep.subr.bf16.mxu0 0
  %5946 = vmatpush1.bf16.msra.mxu0 0
  %5947 = vmatprep.subr.bf16.mxu0 0
  %5948 = vmatpush1.bf16.msra.mxu0 0
  %5949 = vmatprep.subr.bf16.mxu0 0
  %5950 = vmatpush1.bf16.msra.mxu0 0
  %5951 = vmatprep.subr.bf16.mxu0 0
  %5952 = vmatpush1.bf16.msra.mxu0 0
  %5953 = vmatprep.subr.bf16.mxu0 0
  %5954 = vmatpush1.bf16.msra.mxu0 0
  %5955 = vmatprep.subr.bf16.mxu0 0
  %5956 = vmatpush1.bf16.msra.mxu0 0
  %5957 = vmatprep.subr.bf16.mxu0 0
  %5958 = vmatpush1.bf16.msra.mxu0 0
  %5959 = vmatprep.subr.bf16.mxu0 0
  %5960 = vmatpush1.bf16.msra.mxu0 0
  %5961 = vmatprep.subr.bf16.mxu0 0
  %5962 = vmatpush1.bf16.msra.mxu0 0
  %5963 = vmatprep.mubr.bf16.mxu0 0
  %5964 = vmatmul.mubr.bf16.gmra.mrb[0].mxu0 %v5926
  %v5965 = vpop.f32.mrb[0].mxu0
  %v5966 = vadd.f32 0.0, %v5965
  %v5967 = vpop.f32.mrb[0].mxu0
  %v5968 = vpop.f32.mrb[0].mxu0
  %v5969 = vadd.f32 0.0, %v5968
  %v5970 = vpop.f32.mrb[0].mxu0
  %5971 = vmatprep.mubr.bf16.mxu0 0
  %5972 = vmatmul.mubr.bf16.gmra.mrb[0].mxu0 %v5929
  %v5973 = vpop.f32.mrb[0].mxu0
  %v5974 = vadd.f32 0.0, %v5973
  %v5975 = vpop.f32.mrb[0].mxu0
  %v5976 = vpop.f32.mrb[0].mxu0
  %v5977 = vadd.f32 0.0, %v5976
  %v5978 = vpop.f32.mrb[0].mxu0
  %5979 = vdwg.mxu0
  %v5980 = vadd.f32 %v5884, %v5966
  %v5981 = vadd.f32 %v5888, %v5969
  %v5982 = vadd.f32 %v5892, %v5974
  %v5983 = vadd.f32 %v5896, %v5977
  %v5984 = vxor.u32 %v5980, 2147483648
  %v5985 = vxor.u32 %v5981, 2147483648
  %v5986 = vxor.u32 %v5982, 2147483648
  %v5987 = vxor.u32 %v5983, 2147483648
  %v5988 = vmul.f32 %v5984, 1.442695
  %v5989 = vpow.pop %v5988
  %v5990 = vmul.f32 %v5985, 1.442695
  %v5991 = vpow.pop %v5990
  %v5992 = vmul.f32 %v5986, 1.442695
  %v5993 = vpow.pop %v5992
  %v5994 = vmul.f32 %v5987, 1.442695
  %v5995 = vpow.pop %v5994
  %v5996 = vadd.f32 %v5989, 1.0
  %v5997 = vadd.f32 %v5991, 1.0
  %v5998 = vadd.f32 %v5993, 1.0
  %v5999 = vadd.f32 %v5995, 1.0
  %v6000 = vrcp.pop %v5996
  %v6001 = vmul.f32 1.0, %v6000
  %v6002 = vrcp.pop %v5997
  %v6003 = vmul.f32 1.0, %v6002
  %v6004 = vrcp.pop %v5998
  %v6005 = vmul.f32 1.0, %v6004
  %v6006 = vrcp.pop %v5999
  %v6007 = vmul.f32 1.0, %v6006
  %v6008 = vadd.f32 %v5966, %v4333
  %v6009 = vadd.f32 %v5969, %v4333
  %v6010 = vadd.f32 %v5974, %v4333
  %v6011 = vadd.f32 %v5977, %v4333
  %6016 = vrot.lane.b32.xlu0 %v6008, 64
  %v6017 = vpop.permute.xlu0 %6016
  %6018 = vrot.lane.b32.xlu0 %v6009, 64
  %v6019 = vpop.permute.xlu0 %6018
  %6020 = vrot.lane.b32.xlu0 %v6010, 64
  %v6021 = vpop.permute.xlu0 %6020
  %6022 = vrot.lane.b32.xlu0 %v6011, 64
  %v6023 = vpop.permute.xlu0 %6022
  %v6028 = vmul.f32 %v6001, %v6017
  %v6029 = vmul.f32 %v6003, %v6019
  %v6030 = vmul.f32 %v6005, %v6021
  %v6031 = vmul.f32 %v6007, %v6023
  %6036 = vrot.lane.b32.xlu0 %v6028, 64
  %v6037 = vpop.permute.xlu0 %6036
  %6038 = vrot.lane.b32.xlu0 %v6029, 64
  %v6039 = vpop.permute.xlu0 %6038
  %6040 = vrot.lane.b32.xlu0 %v6030, 64
  %v6041 = vpop.permute.xlu0 %6040
  %6042 = vrot.lane.b32.xlu0 %v6031, 64
  %v6043 = vpop.permute.xlu0 %6042
  %v6048 = vadd.f32 %v5884, %v6037
  %v6049 = vadd.f32 %v5888, %v6039
  %v6050 = vadd.f32 %v5892, %v6041
  %v6051 = vadd.f32 %v5896, %v6043
  %v6052 = vtanh.pop %v6048
  %v6053 = vtanh.pop %v6049
  %v6054 = vtanh.pop %v6050
  %v6055 = vtanh.pop %v6051
  %v6056 = vsub.f32 %v5857, %v6052
  %v6057 = vsub.f32 %v5858, %v6053
  %v6058 = vsub.f32 %v5859, %v6054
  %v6059 = vsub.f32 %v5860, %v6055
  %6064 = vrot.lane.b32.xlu0 %v6056, 96
  %v6065 = vpop.permute.xlu0 %6064
  %6066 = vrot.lane.b32.xlu0 %v6057, 96
  %v6067 = vpop.permute.xlu0 %6066
  %6068 = vrot.lane.b32.xlu0 %v6058, 96
  %v6069 = vpop.permute.xlu0 %6068
  %6070 = vrot.lane.b32.xlu0 %v6059, 96
  %v6071 = vpop.permute.xlu0 %6070
  %v6076 = vmul.f32 %v6001, %v6065
  %v6077 = vmul.f32 %v6003, %v6067
  %v6078 = vmul.f32 %v6005, %v6069
  %v6079 = vmul.f32 %v6007, %v6071
  %6084 = vrot.lane.b32.xlu0 %v6076, 32
  %v6085 = vpop.permute.xlu0 %6084
  %6086 = vrot.lane.b32.xlu0 %v6077, 32
  %v6087 = vpop.permute.xlu0 %6086
  %6088 = vrot.lane.b32.xlu0 %v6078, 32
  %v6089 = vpop.permute.xlu0 %6088
  %6090 = vrot.lane.b32.xlu0 %v6079, 32
  %v6091 = vpop.permute.xlu0 %6090
  %v6096 = vadd.f32 %v6052, %v6085
  %v6097 = vadd.f32 %v6053, %v6087
  %v6098 = vadd.f32 %v6054, %v6089
  %v6099 = vadd.f32 %v6055, %v6091
  %6104 = vrot.lane.b32.xlu0 %v6096, 64
  %v6105 = vpop.permute.xlu0 %6104
  %6106 = vrot.lane.b32.xlu0 %v6097, 64
  %v6107 = vpop.permute.xlu0 %6106
  %6108 = vrot.lane.b32.xlu0 %v6098, 64
  %v6109 = vpop.permute.xlu0 %6108
  %6110 = vrot.lane.b32.xlu0 %v6099, 64
  %v6111 = vpop.permute.xlu0 %6110
  %6116 = vst.msk [vmem:[#allocation8 + $0xe0] sm:$0xff] %vm958, %v6105
  %6117 = vst.msk [vmem:[#allocation8 + $0xe8] sm:$0xff] %vm958, %v6107
  %6118 = vst.msk [vmem:[#allocation8 + $0xf0] sm:$0xff] %vm958, %v6109
  %6119 = vst.msk [vmem:[#allocation8 + $0xf8] sm:$0xff] %vm958, %v6111
  %v6120 = vld [vmem:[#allocation8] sm:$0xff]
  %v6121 = vld [vmem:[#allocation8 + $0x8] sm:$0xff]
  %v6122 = vld [vmem:[#allocation8 + $0x10] sm:$0xff]
  %v6123 = vld [vmem:[#allocation8 + $0x18] sm:$0xff]
  %v6124 = vld [vmem:[#allocation8 + $0x20] sm:$0xff]
  %v6125 = vld [vmem:[#allocation8 + $0x28] sm:$0xff]
  %v6126 = vld [vmem:[#allocation8 + $0x30] sm:$0xff]
  %v6127 = vld [vmem:[#allocation8 + $0x38] sm:$0xff]
  %v6128 = vld [vmem:[#allocation8 + $0x40] sm:$0xff]
  %v6129 = vld [vmem:[#allocation8 + $0x48] sm:$0xff]
  %v6130 = vld [vmem:[#allocation8 + $0x50] sm:$0xff]
  %v6131 = vld [vmem:[#allocation8 + $0x58] sm:$0xff]
  %v6132 = vld [vmem:[#allocation8 + $0x60] sm:$0xff]
  %v6133 = vld [vmem:[#allocation8 + $0x68] sm:$0xff]
  %v6134 = vld [vmem:[#allocation8 + $0x70] sm:$0xff]
  %v6135 = vld [vmem:[#allocation8 + $0x78] sm:$0xff]
  %v6136 = vld [vmem:[#allocation8 + $0x80] sm:$0xff]
  %v6137 = vld [vmem:[#allocation8 + $0x88] sm:$0xff]
  %v6138 = vld [vmem:[#allocation8 + $0x90] sm:$0xff]
  %v6139 = vld [vmem:[#allocation8 + $0x98] sm:$0xff]
  %v6140 = vld [vmem:[#allocation8 + $0xa0] sm:$0xff]
  %v6141 = vld [vmem:[#allocation8 + $0xa8] sm:$0xff]
  %v6142 = vld [vmem:[#allocation8 + $0xb0] sm:$0xff]
  %v6143 = vld [vmem:[#allocation8 + $0xb8] sm:$0xff]
  %v6144 = vld [vmem:[#allocation8 + $0xc0] sm:$0xff]
  %v6145 = vld [vmem:[#allocation8 + $0xc8] sm:$0xff]
  %v6146 = vld [vmem:[#allocation8 + $0xd0] sm:$0xff]
  %v6147 = vld [vmem:[#allocation8 + $0xd8] sm:$0xff]
  %v6148 = vld [vmem:[#allocation8 + $0xe0] sm:$0xff]
  %v6149 = vld [vmem:[#allocation8 + $0xe8] sm:$0xff]
  %v6150 = vld [vmem:[#allocation8 + $0xf0] sm:$0xff]
  %v6151 = vld [vmem:[#allocation8 + $0xf8] sm:$0xff]
  %v6152 = vld [vmem:[%s14] sm:$0xff]
  %v6153 = vld [vmem:[%s14 + $0x8] sm:$0xff]
  %v6154 = vld [vmem:[%s14 + $0x10] sm:$0xff]
  %v6155 = vld [vmem:[%s14 + $0x18] sm:$0xff]
  %v6156 = vld [vmem:[%s15] sm:$0x1]
  %v6158 = vlaneseq
  %v6159 = vshrl.u32 %v6158, 7
  %v6160 = vsub.s32 0, %v6159
  %v6161 = vrot.slane %v6156, %v6160
  %v6164 = vsel %vm958, %v6120, 0
  %v6167 = vsel %vm958, %v6121, 0
  %v6170 = vsel %vm958, %v6122, 0
  %v6173 = vsel %vm958, %v6123, 0
  %v6176 = vsel %vm958, %v6124, 0
  %v6179 = vsel %vm958, %v6125, 0
  %v6182 = vsel %vm958, %v6126, 0
  %v6185 = vsel %vm958, %v6127, 0
  %v6188 = vsel %vm958, %v6128, 0
  %v6191 = vsel %vm958, %v6129, 0
  %v6194 = vsel %vm958, %v6130, 0
  %v6197 = vsel %vm958, %v6131, 0
  %v6200 = vsel %vm958, %v6132, 0
  %v6203 = vsel %vm958, %v6133, 0
  %v6206 = vsel %vm958, %v6134, 0
  %v6209 = vsel %vm958, %v6135, 0
  %v6212 = vsel %vm958, %v6136, 0
  %v6215 = vsel %vm958, %v6137, 0
  %v6218 = vsel %vm958, %v6138, 0
  %v6221 = vsel %vm958, %v6139, 0
  %v6224 = vsel %vm958, %v6140, 0
  %v6227 = vsel %vm958, %v6141, 0
  %v6230 = vsel %vm958, %v6142, 0
  %v6233 = vsel %vm958, %v6143, 0
  %v6236 = vsel %vm958, %v6144, 0
  %v6239 = vsel %vm958, %v6145, 0
  %v6242 = vsel %vm958, %v6146, 0
  %v6245 = vsel %vm958, %v6147, 0
  %v6248 = vsel %vm958, %v6148, 0
  %v6251 = vsel %vm958, %v6149, 0
  %v6254 = vsel %vm958, %v6150, 0
  %v6257 = vsel %vm958, %v6151, 0
  %6259 = vmatprep.subr.mxu0 0.0
  %6260 = vmatpush1.msra.mxu0 %v6152
  %6261 = vmatprep.subr.mxu0 0.0
  %6262 = vmatpush1.msra.mxu0 %v6153
  %6263 = vmatprep.subr.mxu0 0.0
  %6264 = vmatpush1.msra.mxu0 %v6154
  %6265 = vmatprep.subr.mxu0 0.0
  %6266 = vmatpush1.msra.mxu0 %v6155
  %6267 = vmatprep.subr.mxu0 0.0
  %6268 = vmatpush1.msra.mxu0 0.0
  %6269 = vmatprep.subr.mxu0 0.0
  %6270 = vmatpush1.msra.mxu0 0.0
  %6271 = vmatprep.subr.mxu0 0.0
  %6272 = vmatpush1.msra.mxu0 0.0
  %6273 = vmatprep.subr.mxu0 0.0
  %6274 = vmatpush1.msra.mxu0 0.0
  %6275 = vmatprep.subr.mxu0 0.0
  %6276 = vmatpush1.msra.mxu0 0.0
  %6277 = vmatprep.subr.mxu0 0.0
  %6278 = vmatpush1.msra.mxu0 0.0
  %6279 = vmatprep.subr.mxu0 0.0
  %6280 = vmatpush1.msra.mxu0 0.0
  %6281 = vmatprep.subr.mxu0 0.0
  %6282 = vmatpush1.msra.mxu0 0.0
  %6283 = vmatprep.subr.mxu0 0.0
  %6284 = vmatpush1.msra.mxu0 0.0
  %6285 = vmatprep.subr.mxu0 0.0
  %6286 = vmatpush1.msra.mxu0 0.0
  %6287 = vmatprep.subr.mxu0 0.0
  %6288 = vmatpush1.msra.mxu0 0.0
  %6289 = vmatprep.subr.mxu0 0.0
  %6290 = vmatpush1.msra.mxu0 0.0
  %6291 = vmatprep.subr.mxu0 0.0
  %6292 = vmatpush1.msra.mxu0 0.0
  %6293 = vmatprep.subr.mxu0 0.0
  %6294 = vmatpush1.msra.mxu0 0.0
  %6295 = vmatprep.subr.mxu0 0.0
  %6296 = vmatpush1.msra.mxu0 0.0
  %6297 = vmatprep.subr.mxu0 0.0
  %6298 = vmatpush1.msra.mxu0 0.0
  %6299 = vmatprep.subr.mxu0 0.0
  %6300 = vmatpush1.msra.mxu0 0.0
  %6301 = vmatprep.subr.mxu0 0.0
  %6302 = vmatpush1.msra.mxu0 0.0
  %6303 = vmatprep.subr.mxu0 0.0
  %6304 = vmatpush1.msra.mxu0 0.0
  %6305 = vmatprep.subr.mxu0 0.0
  %6306 = vmatpush1.msra.mxu0 0.0
  %6307 = vmatprep.subr.mxu0 0.0
  %6308 = vmatpush1.msra.mxu0 0.0
  %6309 = vmatprep.subr.mxu0 0.0
  %6310 = vmatpush1.msra.mxu0 0.0
  %6311 = vmatprep.subr.mxu0 0.0
  %6312 = vmatpush1.msra.mxu0 0.0
  %6313 = vmatprep.subr.mxu0 0.0
  %6314 = vmatpush1.msra.mxu0 0.0
  %6315 = vmatprep.subr.mxu0 0.0
  %6316 = vmatpush1.msra.mxu0 0.0
  %6317 = vmatprep.subr.mxu0 0.0
  %6318 = vmatpush1.msra.mxu0 0.0
  %6319 = vmatprep.subr.mxu0 0.0
  %6320 = vmatpush1.msra.mxu0 0.0
  %6321 = vmatprep.subr.mxu0 0.0
  %6322 = vmatpush1.msra.mxu0 0.0
  %6323 = vmatprep.mubr.f32.mxu0 0.0
  %6324 = vmatmul.mubr.f32.gmra.mrb[0].mxu0 %v6164
  %v6325 = vpop.f32.mrb[0].mxu0
  %v6326 = vadd.f32 %v6161, %v6325
  %v6327 = vpop.f32.mrb[0].mxu0
  %6328 = vmatprep.mubr.f32.mxu0 0.0
  %6329 = vmatmul.mubr.f32.gmra.mrb[0].mxu0 %v6167
  %v6330 = vpop.f32.mrb[0].mxu0
  %v6331 = vadd.f32 %v6161, %v6330
  %v6332 = vpop.f32.mrb[0].mxu0
  %6333 = vmatprep.mubr.f32.mxu0 0.0
  %6334 = vmatmul.mubr.f32.gmra.mrb[0].mxu0 %v6170
  %v6335 = vpop.f32.mrb[0].mxu0
  %v6336 = vadd.f32 %v6161, %v6335
  %v6337 = vpop.f32.mrb[0].mxu0
  %6338 = vmatprep.mubr.f32.mxu0 0.0
  %6339 = vmatmul.mubr.f32.gmra.mrb[0].mxu0 %v6173
  %v6340 = vpop.f32.mrb[0].mxu0
  %v6341 = vadd.f32 %v6161, %v6340
  %v6342 = vpop.f32.mrb[0].mxu0
  %6343 = vmatprep.mubr.f32.mxu0 0.0
  %6344 = vmatmul.mubr.f32.gmra.mrb[0].mxu0 %v6176
  %v6345 = vpop.f32.mrb[0].mxu0
  %v6346 = vadd.f32 %v6161, %v6345
  %v6347 = vpop.f32.mrb[0].mxu0
  %6348 = vmatprep.mubr.f32.mxu0 0.0
  %6349 = vmatmul.mubr.f32.gmra.mrb[0].mxu0 %v6179
  %v6350 = vpop.f32.mrb[0].mxu0
  %v6351 = vadd.f32 %v6161, %v6350
  %v6352 = vpop.f32.mrb[0].mxu0
  %6353 = vmatprep.mubr.f32.mxu0 0.0
  %6354 = vmatmul.mubr.f32.gmra.mrb[0].mxu0 %v6182
  %v6355 = vpop.f32.mrb[0].mxu0
  %v6356 = vadd.f32 %v6161, %v6355
  %v6357 = vpop.f32.mrb[0].mxu0
  %6358 = vmatprep.mubr.f32.mxu0 0.0
  %6359 = vmatmul.mubr.f32.gmra.mrb[0].mxu0 %v6185
  %v6360 = vpop.f32.mrb[0].mxu0
  %v6361 = vadd.f32 %v6161, %v6360
  %v6362 = vpop.f32.mrb[0].mxu0
  %6363 = vmatprep.mubr.f32.mxu0 0.0
  %6364 = vmatmul.mubr.f32.gmra.mrb[0].mxu0 %v6188
  %v6365 = vpop.f32.mrb[0].mxu0
  %v6366 = vadd.f32 %v6161, %v6365
  %v6367 = vpop.f32.mrb[0].mxu0
  %6368 = vmatprep.mubr.f32.mxu0 0.0
  %6369 = vmatmul.mubr.f32.gmra.mrb[0].mxu0 %v6191
  %v6370 = vpop.f32.mrb[0].mxu0
  %v6371 = vadd.f32 %v6161, %v6370
  %v6372 = vpop.f32.mrb[0].mxu0
  %6373 = vmatprep.mubr.f32.mxu0 0.0
  %6374 = vmatmul.mubr.f32.gmra.mrb[0].mxu0 %v6194
  %v6375 = vpop.f32.mrb[0].mxu0
  %v6376 = vadd.f32 %v6161, %v6375
  %v6377 = vpop.f32.mrb[0].mxu0
  %6378 = vmatprep.mubr.f32.mxu0 0.0
  %6379 = vmatmul.mubr.f32.gmra.mrb[0].mxu0 %v6197
  %v6380 = vpop.f32.mrb[0].mxu0
  %v6381 = vadd.f32 %v6161, %v6380
  %v6382 = vpop.f32.mrb[0].mxu0
  %6383 = vmatprep.mubr.f32.mxu0 0.0
  %6384 = vmatmul.mubr.f32.gmra.mrb[0].mxu0 %v6200
  %v6385 = vpop.f32.mrb[0].mxu0
  %v6386 = vadd.f32 %v6161, %v6385
  %v6387 = vpop.f32.mrb[0].mxu0
  %6388 = vmatprep.mubr.f32.mxu0 0.0
  %6389 = vmatmul.mubr.f32.gmra.mrb[0].mxu0 %v6203
  %v6390 = vpop.f32.mrb[0].mxu0
  %v6391 = vadd.f32 %v6161, %v6390
  %v6392 = vpop.f32.mrb[0].mxu0
  %6393 = vmatprep.mubr.f32.mxu0 0.0
  %6394 = vmatmul.mubr.f32.gmra.mrb[0].mxu0 %v6206
  %v6395 = vpop.f32.mrb[0].mxu0
  %v6396 = vadd.f32 %v6161, %v6395
  %v6397 = vpop.f32.mrb[0].mxu0
  %6398 = vmatprep.mubr.f32.mxu0 0.0
  %6399 = vmatmul.mubr.f32.gmra.mrb[0].mxu0 %v6209
  %v6400 = vpop.f32.mrb[0].mxu0
  %v6401 = vadd.f32 %v6161, %v6400
  %v6402 = vpop.f32.mrb[0].mxu0
  %6403 = vmatprep.mubr.f32.mxu0 0.0
  %6404 = vmatmul.mubr.f32.gmra.mrb[0].mxu0 %v6212
  %v6405 = vpop.f32.mrb[0].mxu0
  %v6406 = vadd.f32 %v6161, %v6405
  %v6407 = vpop.f32.mrb[0].mxu0
  %6408 = vmatprep.mubr.f32.mxu0 0.0
  %6409 = vmatmul.mubr.f32.gmra.mrb[0].mxu0 %v6215
  %v6410 = vpop.f32.mrb[0].mxu0
  %v6411 = vadd.f32 %v6161, %v6410
  %v6412 = vpop.f32.mrb[0].mxu0
  %6413 = vmatprep.mubr.f32.mxu0 0.0
  %6414 = vmatmul.mubr.f32.gmra.mrb[0].mxu0 %v6218
  %v6415 = vpop.f32.mrb[0].mxu0
  %v6416 = vadd.f32 %v6161, %v6415
  %v6417 = vpop.f32.mrb[0].mxu0
  %6418 = vmatprep.mubr.f32.mxu0 0.0
  %6419 = vmatmul.mubr.f32.gmra.mrb[0].mxu0 %v6221
  %v6420 = vpop.f32.mrb[0].mxu0
  %v6421 = vadd.f32 %v6161, %v6420
  %v6422 = vpop.f32.mrb[0].mxu0
  %6423 = vmatprep.mubr.f32.mxu0 0.0
  %6424 = vmatmul.mubr.f32.gmra.mrb[0].mxu0 %v6224
  %v6425 = vpop.f32.mrb[0].mxu0
  %v6426 = vadd.f32 %v6161, %v6425
  %v6427 = vpop.f32.mrb[0].mxu0
  %6428 = vmatprep.mubr.f32.mxu0 0.0
  %6429 = vmatmul.mubr.f32.gmra.mrb[0].mxu0 %v6227
  %v6430 = vpop.f32.mrb[0].mxu0
  %v6431 = vadd.f32 %v6161, %v6430
  %v6432 = vpop.f32.mrb[0].mxu0
  %6433 = vmatprep.mubr.f32.mxu0 0.0
  %6434 = vmatmul.mubr.f32.gmra.mrb[0].mxu0 %v6230
  %v6435 = vpop.f32.mrb[0].mxu0
  %v6436 = vadd.f32 %v6161, %v6435
  %v6437 = vpop.f32.mrb[0].mxu0
  %6438 = vmatprep.mubr.f32.mxu0 0.0
  %6439 = vmatmul.mubr.f32.gmra.mrb[0].mxu0 %v6233
  %v6440 = vpop.f32.mrb[0].mxu0
  %v6441 = vadd.f32 %v6161, %v6440
  %v6442 = vpop.f32.mrb[0].mxu0
  %6443 = vmatprep.mubr.f32.mxu0 0.0
  %6444 = vmatmul.mubr.f32.gmra.mrb[0].mxu0 %v6236
  %v6445 = vpop.f32.mrb[0].mxu0
  %v6446 = vadd.f32 %v6161, %v6445
  %v6447 = vpop.f32.mrb[0].mxu0
  %6448 = vmatprep.mubr.f32.mxu0 0.0
  %6449 = vmatmul.mubr.f32.gmra.mrb[0].mxu0 %v6239
  %v6450 = vpop.f32.mrb[0].mxu0
  %v6451 = vadd.f32 %v6161, %v6450
  %v6452 = vpop.f32.mrb[0].mxu0
  %6453 = vmatprep.mubr.f32.mxu0 0.0
  %6454 = vmatmul.mubr.f32.gmra.mrb[0].mxu0 %v6242
  %v6455 = vpop.f32.mrb[0].mxu0
  %v6456 = vadd.f32 %v6161, %v6455
  %v6457 = vpop.f32.mrb[0].mxu0
  %6458 = vmatprep.mubr.f32.mxu0 0.0
  %6459 = vmatmul.mubr.f32.gmra.mrb[0].mxu0 %v6245
  %v6460 = vpop.f32.mrb[0].mxu0
  %v6461 = vadd.f32 %v6161, %v6460
  %v6462 = vpop.f32.mrb[0].mxu0
  %6463 = vmatprep.mubr.f32.mxu0 0.0
  %6464 = vmatmul.mubr.f32.gmra.mrb[0].mxu0 %v6248
  %v6465 = vpop.f32.mrb[0].mxu0
  %v6466 = vadd.f32 %v6161, %v6465
  %v6467 = vpop.f32.mrb[0].mxu0
  %6468 = vmatprep.mubr.f32.mxu0 0.0
  %6469 = vmatmul.mubr.f32.gmra.mrb[0].mxu0 %v6251
  %v6470 = vpop.f32.mrb[0].mxu0
  %v6471 = vadd.f32 %v6161, %v6470
  %v6472 = vpop.f32.mrb[0].mxu0
  %6473 = vmatprep.mubr.f32.mxu0 0.0
  %6474 = vmatmul.mubr.f32.gmra.mrb[0].mxu0 %v6254
  %v6475 = vpop.f32.mrb[0].mxu0
  %v6476 = vadd.f32 %v6161, %v6475
  %v6477 = vpop.f32.mrb[0].mxu0
  %6478 = vmatprep.mubr.f32.mxu0 0.0
  %6479 = vmatmul.mubr.f32.gmra.mrb[0].mxu0 %v6257
  %v6480 = vpop.f32.mrb[0].mxu0
  %v6481 = vadd.f32 %v6161, %v6480
  %v6482 = vpop.f32.mrb[0].mxu0
  %6483 = vdwg.mxu0
  %v6484 = vld [vmem:[#allocation7] sm:$0xff]
  %v6485 = vld [vmem:[#allocation7 + $0x8] sm:$0xff]
  %v6486 = vld [vmem:[#allocation7 + $0x10] sm:$0xff]
  %v6487 = vld [vmem:[#allocation7 + $0x18] sm:$0xff]
  %v6488 = vld [vmem:[#allocation7 + $0x20] sm:$0xff]
  %v6489 = vld [vmem:[#allocation7 + $0x28] sm:$0xff]
  %v6490 = vld [vmem:[#allocation7 + $0x30] sm:$0xff]
  %v6491 = vld [vmem:[#allocation7 + $0x38] sm:$0xff]
  %v6492 = vld [vmem:[#allocation7 + $0x40] sm:$0xff]
  %v6493 = vld [vmem:[#allocation7 + $0x48] sm:$0xff]
  %v6494 = vld [vmem:[#allocation7 + $0x50] sm:$0xff]
  %v6495 = vld [vmem:[#allocation7 + $0x58] sm:$0xff]
  %v6496 = vld [vmem:[#allocation7 + $0x60] sm:$0xff]
  %v6497 = vld [vmem:[#allocation7 + $0x68] sm:$0xff]
  %v6498 = vld [vmem:[#allocation7 + $0x70] sm:$0xff]
  %v6499 = vld [vmem:[#allocation7 + $0x78] sm:$0xff]
  %v6500 = vld [vmem:[#allocation7 + $0x80] sm:$0xff]
  %v6501 = vld [vmem:[#allocation7 + $0x88] sm:$0xff]
  %v6502 = vld [vmem:[#allocation7 + $0x90] sm:$0xff]
  %v6503 = vld [vmem:[#allocation7 + $0x98] sm:$0xff]
  %v6504 = vld [vmem:[#allocation7 + $0xa0] sm:$0xff]
  %v6505 = vld [vmem:[#allocation7 + $0xa8] sm:$0xff]
  %v6506 = vld [vmem:[#allocation7 + $0xb0] sm:$0xff]
  %v6507 = vld [vmem:[#allocation7 + $0xb8] sm:$0xff]
  %v6508 = vld [vmem:[#allocation7 + $0xc0] sm:$0xff]
  %v6509 = vld [vmem:[#allocation7 + $0xc8] sm:$0xff]
  %v6510 = vld [vmem:[#allocation7 + $0xd0] sm:$0xff]
  %v6511 = vld [vmem:[#allocation7 + $0xd8] sm:$0xff]
  %v6512 = vld [vmem:[#allocation7 + $0xe0] sm:$0xff]
  %v6513 = vld [vmem:[#allocation7 + $0xe8] sm:$0xff]
  %v6514 = vld [vmem:[#allocation7 + $0xf0] sm:$0xff]
  %v6515 = vld [vmem:[#allocation7 + $0xf8] sm:$0xff]
  %v6516 = vld [vmem:[%s16] sm:$0x1]
  %v6517 = vld [vmem:[%s17] sm:$0x1]
  %v6518 = vsel %vm65, %v6326, 0.0
  %6519 = vadd.xlane.f32.xlu0 %v6518
  %v6520 = vpop.xlane.xlu0 %6519
  %v6521 = vsel %vm65, %v6331, 0.0
  %6522 = vadd.xlane.f32.xlu0 %v6521
  %v6523 = vpop.xlane.xlu0 %6522
  %v6524 = vsel %vm65, %v6336, 0.0
  %6525 = vadd.xlane.f32.xlu0 %v6524
  %v6526 = vpop.xlane.xlu0 %6525
  %v6527 = vsel %vm65, %v6341, 0.0
  %6528 = vadd.xlane.f32.xlu0 %v6527
  %v6529 = vpop.xlane.xlu0 %6528
  %v6530 = vsel %vm65, %v6346, 0.0
  %6531 = vadd.xlane.f32.xlu0 %v6530
  %v6532 = vpop.xlane.xlu0 %6531
  %v6533 = vsel %vm65, %v6351, 0.0
  %6534 = vadd.xlane.f32.xlu0 %v6533
  %v6535 = vpop.xlane.xlu0 %6534
  %v6536 = vsel %vm65, %v6356, 0.0
  %6537 = vadd.xlane.f32.xlu0 %v6536
  %v6538 = vpop.xlane.xlu0 %6537
  %v6539 = vsel %vm65, %v6361, 0.0
  %6540 = vadd.xlane.f32.xlu0 %v6539
  %v6541 = vpop.xlane.xlu0 %6540
  %v6542 = vsel %vm65, %v6366, 0.0
  %6543 = vadd.xlane.f32.xlu0 %v6542
  %v6544 = vpop.xlane.xlu0 %6543
  %v6545 = vsel %vm65, %v6371, 0.0
  %6546 = vadd.xlane.f32.xlu0 %v6545
  %v6547 = vpop.xlane.xlu0 %6546
  %v6548 = vsel %vm65, %v6376, 0.0
  %6549 = vadd.xlane.f32.xlu0 %v6548
  %v6550 = vpop.xlane.xlu0 %6549
  %v6551 = vsel %vm65, %v6381, 0.0
  %6552 = vadd.xlane.f32.xlu0 %v6551
  %v6553 = vpop.xlane.xlu0 %6552
  %v6554 = vsel %vm65, %v6386, 0.0
  %6555 = vadd.xlane.f32.xlu0 %v6554
  %v6556 = vpop.xlane.xlu0 %6555
  %v6557 = vsel %vm65, %v6391, 0.0
  %6558 = vadd.xlane.f32.xlu0 %v6557
  %v6559 = vpop.xlane.xlu0 %6558
  %v6560 = vsel %vm65, %v6396, 0.0
  %6561 = vadd.xlane.f32.xlu0 %v6560
  %v6562 = vpop.xlane.xlu0 %6561
  %v6563 = vsel %vm65, %v6401, 0.0
  %6564 = vadd.xlane.f32.xlu0 %v6563
  %v6565 = vpop.xlane.xlu0 %6564
  %v6566 = vsel %vm65, %v6406, 0.0
  %6567 = vadd.xlane.f32.xlu0 %v6566
  %v6568 = vpop.xlane.xlu0 %6567
  %v6569 = vsel %vm65, %v6411, 0.0
  %6570 = vadd.xlane.f32.xlu0 %v6569
  %v6571 = vpop.xlane.xlu0 %6570
  %v6572 = vsel %vm65, %v6416, 0.0
  %6573 = vadd.xlane.f32.xlu0 %v6572
  %v6574 = vpop.xlane.xlu0 %6573
  %v6575 = vsel %vm65, %v6421, 0.0
  %6576 = vadd.xlane.f32.xlu0 %v6575
  %v6577 = vpop.xlane.xlu0 %6576
  %v6578 = vsel %vm65, %v6426, 0.0
  %6579 = vadd.xlane.f32.xlu0 %v6578
  %v6580 = vpop.xlane.xlu0 %6579
  %v6581 = vsel %vm65, %v6431, 0.0
  %6582 = vadd.xlane.f32.xlu0 %v6581
  %v6583 = vpop.xlane.xlu0 %6582
  %v6584 = vsel %vm65, %v6436, 0.0
  %6585 = vadd.xlane.f32.xlu0 %v6584
  %v6586 = vpop.xlane.xlu0 %6585
  %v6587 = vsel %vm65, %v6441, 0.0
  %6588 = vadd.xlane.f32.xlu0 %v6587
  %v6589 = vpop.xlane.xlu0 %6588
  %v6590 = vsel %vm65, %v6446, 0.0
  %6591 = vadd.xlane.f32.xlu0 %v6590
  %v6592 = vpop.xlane.xlu0 %6591
  %v6593 = vsel %vm65, %v6451, 0.0
  %6594 = vadd.xlane.f32.xlu0 %v6593
  %v6595 = vpop.xlane.xlu0 %6594
  %v6596 = vsel %vm65, %v6456, 0.0
  %6597 = vadd.xlane.f32.xlu0 %v6596
  %v6598 = vpop.xlane.xlu0 %6597
  %v6599 = vsel %vm65, %v6461, 0.0
  %6600 = vadd.xlane.f32.xlu0 %v6599
  %v6601 = vpop.xlane.xlu0 %6600
  %v6602 = vsel %vm65, %v6466, 0.0
  %6603 = vadd.xlane.f32.xlu0 %v6602
  %v6604 = vpop.xlane.xlu0 %6603
  %v6605 = vsel %vm65, %v6471, 0.0
  %6606 = vadd.xlane.f32.xlu0 %v6605
  %v6607 = vpop.xlane.xlu0 %6606
  %v6608 = vsel %vm65, %v6476, 0.0
  %6609 = vadd.xlane.f32.xlu0 %v6608
  %v6610 = vpop.xlane.xlu0 %6609
  %v6611 = vsel %vm65, %v6481, 0.0
  %6612 = vadd.xlane.f32.xlu0 %v6611
  %v6613 = vpop.xlane.xlu0 %6612
  %v6614 = vmul.f32 %v6520, %v3376
  %v6615 = vmul.f32 %v6523, %v3376
  %v6616 = vmul.f32 %v6526, %v3376
  %v6617 = vmul.f32 %v6529, %v3376
  %v6618 = vmul.f32 %v6532, %v3376
  %v6619 = vmul.f32 %v6535, %v3376
  %v6620 = vmul.f32 %v6538, %v3376
  %v6621 = vmul.f32 %v6541, %v3376
  %v6622 = vmul.f32 %v6544, %v3376
  %v6623 = vmul.f32 %v6547, %v3376
  %v6624 = vmul.f32 %v6550, %v3376
  %v6625 = vmul.f32 %v6553, %v3376
  %v6626 = vmul.f32 %v6556, %v3376
  %v6627 = vmul.f32 %v6559, %v3376
  %v6628 = vmul.f32 %v6562, %v3376
  %v6629 = vmul.f32 %v6565, %v3376
  %v6630 = vmul.f32 %v6568, %v3376
  %v6631 = vmul.f32 %v6571, %v3376
  %v6632 = vmul.f32 %v6574, %v3376
  %v6633 = vmul.f32 %v6577, %v3376
  %v6634 = vmul.f32 %v6580, %v3376
  %v6635 = vmul.f32 %v6583, %v3376
  %v6636 = vmul.f32 %v6586, %v3376
  %v6637 = vmul.f32 %v6589, %v3376
  %v6638 = vmul.f32 %v6592, %v3376
  %v6639 = vmul.f32 %v6595, %v3376
  %v6640 = vmul.f32 %v6598, %v3376
  %v6641 = vmul.f32 %v6601, %v3376
  %v6642 = vmul.f32 %v6604, %v3376
  %v6643 = vmul.f32 %v6607, %v3376
  %v6644 = vmul.f32 %v6610, %v3376
  %v6645 = vmul.f32 %v6613, %v3376
  %v6646 = vsub.f32 %v6326, %v6614
  %v6647 = vsub.f32 %v6331, %v6615
  %v6648 = vsub.f32 %v6336, %v6616
  %v6649 = vsub.f32 %v6341, %v6617
  %v6650 = vsub.f32 %v6346, %v6618
  %v6651 = vsub.f32 %v6351, %v6619
  %v6652 = vsub.f32 %v6356, %v6620
  %v6653 = vsub.f32 %v6361, %v6621
  %v6654 = vsub.f32 %v6366, %v6622
  %v6655 = vsub.f32 %v6371, %v6623
  %v6656 = vsub.f32 %v6376, %v6624
  %v6657 = vsub.f32 %v6381, %v6625
  %v6658 = vsub.f32 %v6386, %v6626
  %v6659 = vsub.f32 %v6391, %v6627
  %v6660 = vsub.f32 %v6396, %v6628
  %v6661 = vsub.f32 %v6401, %v6629
  %v6662 = vsub.f32 %v6406, %v6630
  %v6663 = vsub.f32 %v6411, %v6631
  %v6664 = vsub.f32 %v6416, %v6632
  %v6665 = vsub.f32 %v6421, %v6633
  %v6666 = vsub.f32 %v6426, %v6634
  %v6667 = vsub.f32 %v6431, %v6635
  %v6668 = vsub.f32 %v6436, %v6636
  %v6669 = vsub.f32 %v6441, %v6637
  %v6670 = vsub.f32 %v6446, %v6638
  %v6671 = vsub.f32 %v6451, %v6639
  %v6672 = vsub.f32 %v6456, %v6640
  %v6673 = vsub.f32 %v6461, %v6641
  %v6674 = vsub.f32 %v6466, %v6642
  %v6675 = vsub.f32 %v6471, %v6643
  %v6676 = vsub.f32 %v6476, %v6644
  %v6677 = vsub.f32 %v6481, %v6645
  %v6678 = vmul.f32 %v6646, %v6646
  %v6679 = vmul.f32 %v6647, %v6647
  %v6680 = vmul.f32 %v6648, %v6648
  %v6681 = vmul.f32 %v6649, %v6649
  %v6682 = vmul.f32 %v6650, %v6650
  %v6683 = vmul.f32 %v6651, %v6651
  %v6684 = vmul.f32 %v6652, %v6652
  %v6685 = vmul.f32 %v6653, %v6653
  %v6686 = vmul.f32 %v6654, %v6654
  %v6687 = vmul.f32 %v6655, %v6655
  %v6688 = vmul.f32 %v6656, %v6656
  %v6689 = vmul.f32 %v6657, %v6657
  %v6690 = vmul.f32 %v6658, %v6658
  %v6691 = vmul.f32 %v6659, %v6659
  %v6692 = vmul.f32 %v6660, %v6660
  %v6693 = vmul.f32 %v6661, %v6661
  %v6694 = vmul.f32 %v6662, %v6662
  %v6695 = vmul.f32 %v6663, %v6663
  %v6696 = vmul.f32 %v6664, %v6664
  %v6697 = vmul.f32 %v6665, %v6665
  %v6698 = vmul.f32 %v6666, %v6666
  %v6699 = vmul.f32 %v6667, %v6667
  %v6700 = vmul.f32 %v6668, %v6668
  %v6701 = vmul.f32 %v6669, %v6669
  %v6702 = vmul.f32 %v6670, %v6670
  %v6703 = vmul.f32 %v6671, %v6671
  %v6704 = vmul.f32 %v6672, %v6672
  %v6705 = vmul.f32 %v6673, %v6673
  %v6706 = vmul.f32 %v6674, %v6674
  %v6707 = vmul.f32 %v6675, %v6675
  %v6708 = vmul.f32 %v6676, %v6676
  %v6709 = vmul.f32 %v6677, %v6677
  %v6710 = vsel %vm65, %v6678, 0.0
  %6711 = vadd.xlane.f32.xlu0 %v6710
  %v6712 = vpop.xlane.xlu0 %6711
  %v6713 = vsel %vm65, %v6679, 0.0
  %6714 = vadd.xlane.f32.xlu0 %v6713
  %v6715 = vpop.xlane.xlu0 %6714
  %v6716 = vsel %vm65, %v6680, 0.0
  %6717 = vadd.xlane.f32.xlu0 %v6716
  %v6718 = vpop.xlane.xlu0 %6717
  %v6719 = vsel %vm65, %v6681, 0.0
  %6720 = vadd.xlane.f32.xlu0 %v6719
  %v6721 = vpop.xlane.xlu0 %6720
  %v6722 = vsel %vm65, %v6682, 0.0
  %6723 = vadd.xlane.f32.xlu0 %v6722
  %v6724 = vpop.xlane.xlu0 %6723
  %v6725 = vsel %vm65, %v6683, 0.0
  %6726 = vadd.xlane.f32.xlu0 %v6725
  %v6727 = vpop.xlane.xlu0 %6726
  %v6728 = vsel %vm65, %v6684, 0.0
  %6729 = vadd.xlane.f32.xlu0 %v6728
  %v6730 = vpop.xlane.xlu0 %6729
  %v6731 = vsel %vm65, %v6685, 0.0
  %6732 = vadd.xlane.f32.xlu0 %v6731
  %v6733 = vpop.xlane.xlu0 %6732
  %v6734 = vsel %vm65, %v6686, 0.0
  %6735 = vadd.xlane.f32.xlu0 %v6734
  %v6736 = vpop.xlane.xlu0 %6735
  %v6737 = vsel %vm65, %v6687, 0.0
  %6738 = vadd.xlane.f32.xlu0 %v6737
  %v6739 = vpop.xlane.xlu0 %6738
  %v6740 = vsel %vm65, %v6688, 0.0
  %6741 = vadd.xlane.f32.xlu0 %v6740
  %v6742 = vpop.xlane.xlu0 %6741
  %v6743 = vsel %vm65, %v6689, 0.0
  %6744 = vadd.xlane.f32.xlu0 %v6743
  %v6745 = vpop.xlane.xlu0 %6744
  %v6746 = vsel %vm65, %v6690, 0.0
  %6747 = vadd.xlane.f32.xlu0 %v6746
  %v6748 = vpop.xlane.xlu0 %6747
  %v6749 = vsel %vm65, %v6691, 0.0
  %6750 = vadd.xlane.f32.xlu0 %v6749
  %v6751 = vpop.xlane.xlu0 %6750
  %v6752 = vsel %vm65, %v6692, 0.0
  %6753 = vadd.xlane.f32.xlu0 %v6752
  %v6754 = vpop.xlane.xlu0 %6753
  %v6755 = vsel %vm65, %v6693, 0.0
  %6756 = vadd.xlane.f32.xlu0 %v6755
  %v6757 = vpop.xlane.xlu0 %6756
  %v6758 = vsel %vm65, %v6694, 0.0
  %6759 = vadd.xlane.f32.xlu0 %v6758
  %v6760 = vpop.xlane.xlu0 %6759
  %v6761 = vsel %vm65, %v6695, 0.0
  %6762 = vadd.xlane.f32.xlu0 %v6761
  %v6763 = vpop.xlane.xlu0 %6762
  %v6764 = vsel %vm65, %v6696, 0.0
  %6765 = vadd.xlane.f32.xlu0 %v6764
  %v6766 = vpop.xlane.xlu0 %6765
  %v6767 = vsel %vm65, %v6697, 0.0
  %6768 = vadd.xlane.f32.xlu0 %v6767
  %v6769 = vpop.xlane.xlu0 %6768
  %v6770 = vsel %vm65, %v6698, 0.0
  %6771 = vadd.xlane.f32.xlu0 %v6770
  %v6772 = vpop.xlane.xlu0 %6771
  %v6773 = vsel %vm65, %v6699, 0.0
  %6774 = vadd.xlane.f32.xlu0 %v6773
  %v6775 = vpop.xlane.xlu0 %6774
  %v6776 = vsel %vm65, %v6700, 0.0
  %6777 = vadd.xlane.f32.xlu0 %v6776
  %v6778 = vpop.xlane.xlu0 %6777
  %v6779 = vsel %vm65, %v6701, 0.0
  %6780 = vadd.xlane.f32.xlu0 %v6779
  %v6781 = vpop.xlane.xlu0 %6780
  %v6782 = vsel %vm65, %v6702, 0.0
  %6783 = vadd.xlane.f32.xlu0 %v6782
  %v6784 = vpop.xlane.xlu0 %6783
  %v6785 = vsel %vm65, %v6703, 0.0
  %6786 = vadd.xlane.f32.xlu0 %v6785
  %v6787 = vpop.xlane.xlu0 %6786
  %v6788 = vsel %vm65, %v6704, 0.0
  %6789 = vadd.xlane.f32.xlu0 %v6788
  %v6790 = vpop.xlane.xlu0 %6789
  %v6791 = vsel %vm65, %v6705, 0.0
  %6792 = vadd.xlane.f32.xlu0 %v6791
  %v6793 = vpop.xlane.xlu0 %6792
  %v6794 = vsel %vm65, %v6706, 0.0
  %6795 = vadd.xlane.f32.xlu0 %v6794
  %v6796 = vpop.xlane.xlu0 %6795
  %v6797 = vsel %vm65, %v6707, 0.0
  %6798 = vadd.xlane.f32.xlu0 %v6797
  %v6799 = vpop.xlane.xlu0 %6798
  %v6800 = vsel %vm65, %v6708, 0.0
  %6801 = vadd.xlane.f32.xlu0 %v6800
  %v6802 = vpop.xlane.xlu0 %6801
  %v6803 = vsel %vm65, %v6709, 0.0
  %6804 = vadd.xlane.f32.xlu0 %v6803
  %v6805 = vpop.xlane.xlu0 %6804
  %v6806 = vmul.f32 %v6712, %v3376
  %v6807 = vmul.f32 %v6715, %v3376
  %v6808 = vmul.f32 %v6718, %v3376
  %v6809 = vmul.f32 %v6721, %v3376
  %v6810 = vmul.f32 %v6724, %v3376
  %v6811 = vmul.f32 %v6727, %v3376
  %v6812 = vmul.f32 %v6730, %v3376
  %v6813 = vmul.f32 %v6733, %v3376
  %v6814 = vmul.f32 %v6736, %v3376
  %v6815 = vmul.f32 %v6739, %v3376
  %v6816 = vmul.f32 %v6742, %v3376
  %v6817 = vmul.f32 %v6745, %v3376
  %v6818 = vmul.f32 %v6748, %v3376
  %v6819 = vmul.f32 %v6751, %v3376
  %v6820 = vmul.f32 %v6754, %v3376
  %v6821 = vmul.f32 %v6757, %v3376
  %v6822 = vmul.f32 %v6760, %v3376
  %v6823 = vmul.f32 %v6763, %v3376
  %v6824 = vmul.f32 %v6766, %v3376
  %v6825 = vmul.f32 %v6769, %v3376
  %v6826 = vmul.f32 %v6772, %v3376
  %v6827 = vmul.f32 %v6775, %v3376
  %v6828 = vmul.f32 %v6778, %v3376
  %v6829 = vmul.f32 %v6781, %v3376
  %v6830 = vmul.f32 %v6784, %v3376
  %v6831 = vmul.f32 %v6787, %v3376
  %v6832 = vmul.f32 %v6790, %v3376
  %v6833 = vmul.f32 %v6793, %v3376
  %v6834 = vmul.f32 %v6796, %v3376
  %v6835 = vmul.f32 %v6799, %v3376
  %v6836 = vmul.f32 %v6802, %v3376
  %v6837 = vmul.f32 %v6805, %v3376
  %v6838 = vadd.f32 %v6806, 1e-08
  %v6839 = vadd.f32 %v6807, 1e-08
  %v6840 = vadd.f32 %v6808, 1e-08
  %v6841 = vadd.f32 %v6809, 1e-08
  %v6842 = vadd.f32 %v6810, 1e-08
  %v6843 = vadd.f32 %v6811, 1e-08
  %v6844 = vadd.f32 %v6812, 1e-08
  %v6845 = vadd.f32 %v6813, 1e-08
  %v6846 = vadd.f32 %v6814, 1e-08
  %v6847 = vadd.f32 %v6815, 1e-08
  %v6848 = vadd.f32 %v6816, 1e-08
  %v6849 = vadd.f32 %v6817, 1e-08
  %v6850 = vadd.f32 %v6818, 1e-08
  %v6851 = vadd.f32 %v6819, 1e-08
  %v6852 = vadd.f32 %v6820, 1e-08
  %v6853 = vadd.f32 %v6821, 1e-08
  %v6854 = vadd.f32 %v6822, 1e-08
  %v6855 = vadd.f32 %v6823, 1e-08
  %v6856 = vadd.f32 %v6824, 1e-08
  %v6857 = vadd.f32 %v6825, 1e-08
  %v6858 = vadd.f32 %v6826, 1e-08
  %v6859 = vadd.f32 %v6827, 1e-08
  %v6860 = vadd.f32 %v6828, 1e-08
  %v6861 = vadd.f32 %v6829, 1e-08
  %v6862 = vadd.f32 %v6830, 1e-08
  %v6863 = vadd.f32 %v6831, 1e-08
  %v6864 = vadd.f32 %v6832, 1e-08
  %v6865 = vadd.f32 %v6833, 1e-08
  %v6866 = vadd.f32 %v6834, 1e-08
  %v6867 = vadd.f32 %v6835, 1e-08
  %v6868 = vadd.f32 %v6836, 1e-08
  %v6869 = vadd.f32 %v6837, 1e-08
  %v6870 = vrsqrt.pop %v6838
  %v6871 = vrsqrt.pop %v6839
  %v6872 = vrsqrt.pop %v6840
  %v6873 = vrsqrt.pop %v6841
  %v6874 = vrsqrt.pop %v6842
  %v6875 = vrsqrt.pop %v6843
  %v6876 = vrsqrt.pop %v6844
  %v6877 = vrsqrt.pop %v6845
  %v6878 = vrsqrt.pop %v6846
  %v6879 = vrsqrt.pop %v6847
  %v6880 = vrsqrt.pop %v6848
  %v6881 = vrsqrt.pop %v6849
  %v6882 = vrsqrt.pop %v6850
  %v6883 = vrsqrt.pop %v6851
  %v6884 = vrsqrt.pop %v6852
  %v6885 = vrsqrt.pop %v6853
  %v6886 = vrsqrt.pop %v6854
  %v6887 = vrsqrt.pop %v6855
  %v6888 = vrsqrt.pop %v6856
  %v6889 = vrsqrt.pop %v6857
  %v6890 = vrsqrt.pop %v6858
  %v6891 = vrsqrt.pop %v6859
  %v6892 = vrsqrt.pop %v6860
  %v6893 = vrsqrt.pop %v6861
  %v6894 = vrsqrt.pop %v6862
  %v6895 = vrsqrt.pop %v6863
  %v6896 = vrsqrt.pop %v6864
  %v6897 = vrsqrt.pop %v6865
  %v6898 = vrsqrt.pop %v6866
  %v6899 = vrsqrt.pop %v6867
  %v6900 = vrsqrt.pop %v6868
  %v6901 = vrsqrt.pop %v6869
  %v6902 = vmul.f32 %v6646, %v6870
  %v6903 = vmul.f32 %v6647, %v6871
  %v6904 = vmul.f32 %v6648, %v6872
  %v6905 = vmul.f32 %v6649, %v6873
  %v6906 = vmul.f32 %v6650, %v6874
  %v6907 = vmul.f32 %v6651, %v6875
  %v6908 = vmul.f32 %v6652, %v6876
  %v6909 = vmul.f32 %v6653, %v6877
  %v6910 = vmul.f32 %v6654, %v6878
  %v6911 = vmul.f32 %v6655, %v6879
  %v6912 = vmul.f32 %v6656, %v6880
  %v6913 = vmul.f32 %v6657, %v6881
  %v6914 = vmul.f32 %v6658, %v6882
  %v6915 = vmul.f32 %v6659, %v6883
  %v6916 = vmul.f32 %v6660, %v6884
  %v6917 = vmul.f32 %v6661, %v6885
  %v6918 = vmul.f32 %v6662, %v6886
  %v6919 = vmul.f32 %v6663, %v6887
  %v6920 = vmul.f32 %v6664, %v6888
  %v6921 = vmul.f32 %v6665, %v6889
  %v6922 = vmul.f32 %v6666, %v6890
  %v6923 = vmul.f32 %v6667, %v6891
  %v6924 = vmul.f32 %v6668, %v6892
  %v6925 = vmul.f32 %v6669, %v6893
  %v6926 = vmul.f32 %v6670, %v6894
  %v6927 = vmul.f32 %v6671, %v6895
  %v6928 = vmul.f32 %v6672, %v6896
  %v6929 = vmul.f32 %v6673, %v6897
  %v6930 = vmul.f32 %v6674, %v6898
  %v6931 = vmul.f32 %v6675, %v6899
  %v6932 = vmul.f32 %v6676, %v6900
  %v6933 = vmul.f32 %v6677, %v6901
  %v6935 = vlaneseq
  %v6936 = vshrl.u32 %v6935, 7
  %v6937 = vsub.s32 0, %v6936
  %v6938 = vrot.slane %v6516, %v6937
  %v6940 = vmul.f32 %v6902, %v6938
  %v6941 = vmul.f32 %v6903, %v6938
  %v6942 = vmul.f32 %v6904, %v6938
  %v6943 = vmul.f32 %v6905, %v6938
  %v6944 = vmul.f32 %v6906, %v6938
  %v6945 = vmul.f32 %v6907, %v6938
  %v6946 = vmul.f32 %v6908, %v6938
  %v6947 = vmul.f32 %v6909, %v6938
  %v6948 = vmul.f32 %v6910, %v6938
  %v6949 = vmul.f32 %v6911, %v6938
  %v6950 = vmul.f32 %v6912, %v6938
  %v6951 = vmul.f32 %v6913, %v6938
  %v6952 = vmul.f32 %v6914, %v6938
  %v6953 = vmul.f32 %v6915, %v6938
  %v6954 = vmul.f32 %v6916, %v6938
  %v6955 = vmul.f32 %v6917, %v6938
  %v6956 = vmul.f32 %v6918, %v6938
  %v6957 = vmul.f32 %v6919, %v6938
  %v6958 = vmul.f32 %v6920, %v6938
  %v6959 = vmul.f32 %v6921, %v6938
  %v6960 = vmul.f32 %v6922, %v6938
  %v6961 = vmul.f32 %v6923, %v6938
  %v6962 = vmul.f32 %v6924, %v6938
  %v6963 = vmul.f32 %v6925, %v6938
  %v6964 = vmul.f32 %v6926, %v6938
  %v6965 = vmul.f32 %v6927, %v6938
  %v6966 = vmul.f32 %v6928, %v6938
  %v6967 = vmul.f32 %v6929, %v6938
  %v6968 = vmul.f32 %v6930, %v6938
  %v6969 = vmul.f32 %v6931, %v6938
  %v6970 = vmul.f32 %v6932, %v6938
  %v6971 = vmul.f32 %v6933, %v6938
  %v6973 = vlaneseq
  %v6974 = vshrl.u32 %v6973, 7
  %v6975 = vsub.s32 0, %v6974
  %v6976 = vrot.slane %v6517, %v6975
  %v6978 = vadd.f32 %v6940, %v6976
  %v6979 = vadd.f32 %v6941, %v6976
  %v6980 = vadd.f32 %v6942, %v6976
  %v6981 = vadd.f32 %v6943, %v6976
  %v6982 = vadd.f32 %v6944, %v6976
  %v6983 = vadd.f32 %v6945, %v6976
  %v6984 = vadd.f32 %v6946, %v6976
  %v6985 = vadd.f32 %v6947, %v6976
  %v6986 = vadd.f32 %v6948, %v6976
  %v6987 = vadd.f32 %v6949, %v6976
  %v6988 = vadd.f32 %v6950, %v6976
  %v6989 = vadd.f32 %v6951, %v6976
  %v6990 = vadd.f32 %v6952, %v6976
  %v6991 = vadd.f32 %v6953, %v6976
  %v6992 = vadd.f32 %v6954, %v6976
  %v6993 = vadd.f32 %v6955, %v6976
  %v6994 = vadd.f32 %v6956, %v6976
  %v6995 = vadd.f32 %v6957, %v6976
  %v6996 = vadd.f32 %v6958, %v6976
  %v6997 = vadd.f32 %v6959, %v6976
  %v6998 = vadd.f32 %v6960, %v6976
  %v6999 = vadd.f32 %v6961, %v6976
  %v7000 = vadd.f32 %v6962, %v6976
  %v7001 = vadd.f32 %v6963, %v6976
  %v7002 = vadd.f32 %v6964, %v6976
  %v7003 = vadd.f32 %v6965, %v6976
  %v7004 = vadd.f32 %v6966, %v6976
  %v7005 = vadd.f32 %v6967, %v6976
  %v7006 = vadd.f32 %v6968, %v6976
  %v7007 = vadd.f32 %v6969, %v6976
  %v7008 = vadd.f32 %v6970, %v6976
  %v7009 = vadd.f32 %v6971, %v6976
  %v7010 = vadd.f32 %v6484, %v6978
  %v7011 = vadd.f32 %v6485, %v6979
  %v7012 = vadd.f32 %v6486, %v6980
  %v7013 = vadd.f32 %v6487, %v6981
  %v7014 = vadd.f32 %v6488, %v6982
  %v7015 = vadd.f32 %v6489, %v6983
  %v7016 = vadd.f32 %v6490, %v6984
  %v7017 = vadd.f32 %v6491, %v6985
  %v7018 = vadd.f32 %v6492, %v6986
  %v7019 = vadd.f32 %v6493, %v6987
  %v7020 = vadd.f32 %v6494, %v6988
  %v7021 = vadd.f32 %v6495, %v6989
  %v7022 = vadd.f32 %v6496, %v6990
  %v7023 = vadd.f32 %v6497, %v6991
  %v7024 = vadd.f32 %v6498, %v6992
  %v7025 = vadd.f32 %v6499, %v6993
  %v7026 = vadd.f32 %v6500, %v6994
  %v7027 = vadd.f32 %v6501, %v6995
  %v7028 = vadd.f32 %v6502, %v6996
  %v7029 = vadd.f32 %v6503, %v6997
  %v7030 = vadd.f32 %v6504, %v6998
  %v7031 = vadd.f32 %v6505, %v6999
  %v7032 = vadd.f32 %v6506, %v7000
  %v7033 = vadd.f32 %v6507, %v7001
  %v7034 = vadd.f32 %v6508, %v7002
  %v7035 = vadd.f32 %v6509, %v7003
  %v7036 = vadd.f32 %v6510, %v7004
  %v7037 = vadd.f32 %v6511, %v7005
  %v7038 = vadd.f32 %v6512, %v7006
  %v7039 = vadd.f32 %v6513, %v7007
  %v7040 = vadd.f32 %v6514, %v7008
  %v7041 = vadd.f32 %v6515, %v7009
  %7042 = vst.msk [vmem:[%s18] sm:$0xff] %vm65, %v7010
  %7043 = vst.msk [vmem:[%s18 + $0x8] sm:$0xff] %vm65, %v7011
  %7044 = vst.msk [vmem:[%s18 + $0x10] sm:$0xff] %vm65, %v7012
  %7045 = vst.msk [vmem:[%s18 + $0x18] sm:$0xff] %vm65, %v7013
  %7046 = vst.msk [vmem:[%s18 + $0x20] sm:$0xff] %vm65, %v7014
  %7047 = vst.msk [vmem:[%s18 + $0x28] sm:$0xff] %vm65, %v7015
  %7048 = vst.msk [vmem:[%s18 + $0x30] sm:$0xff] %vm65, %v7016
  %7049 = vst.msk [vmem:[%s18 + $0x38] sm:$0xff] %vm65, %v7017
  %7050 = vst.msk [vmem:[%s18 + $0x40] sm:$0xff] %vm65, %v7018
  %7051 = vst.msk [vmem:[%s18 + $0x48] sm:$0xff] %vm65, %v7019
  %7052 = vst.msk [vmem:[%s18 + $0x50] sm:$0xff] %vm65, %v7020
  %7053 = vst.msk [vmem:[%s18 + $0x58] sm:$0xff] %vm65, %v7021
  %7054 = vst.msk [vmem:[%s18 + $0x60] sm:$0xff] %vm65, %v7022
  %7055 = vst.msk [vmem:[%s18 + $0x68] sm:$0xff] %vm65, %v7023
  %7056 = vst.msk [vmem:[%s18 + $0x70] sm:$0xff] %vm65, %v7024
  %7057 = vst.msk [vmem:[%s18 + $0x78] sm:$0xff] %vm65, %v7025
  %7058 = vst.msk [vmem:[%s18 + $0x80] sm:$0xff] %vm65, %v7026
  %7059 = vst.msk [vmem:[%s18 + $0x88] sm:$0xff] %vm65, %v7027
  %7060 = vst.msk [vmem:[%s18 + $0x90] sm:$0xff] %vm65, %v7028
  %7061 = vst.msk [vmem:[%s18 + $0x98] sm:$0xff] %vm65, %v7029
  %7062 = vst.msk [vmem:[%s18 + $0xa0] sm:$0xff] %vm65, %v7030
  %7063 = vst.msk [vmem:[%s18 + $0xa8] sm:$0xff] %vm65, %v7031
  %7064 = vst.msk [vmem:[%s18 + $0xb0] sm:$0xff] %vm65, %v7032
  %7065 = vst.msk [vmem:[%s18 + $0xb8] sm:$0xff] %vm65, %v7033
  %7066 = vst.msk [vmem:[%s18 + $0xc0] sm:$0xff] %vm65, %v7034
  %7067 = vst.msk [vmem:[%s18 + $0xc8] sm:$0xff] %vm65, %v7035
  %7068 = vst.msk [vmem:[%s18 + $0xd0] sm:$0xff] %vm65, %v7036
  %7069 = vst.msk [vmem:[%s18 + $0xd8] sm:$0xff] %vm65, %v7037
  %7070 = vst.msk [vmem:[%s18 + $0xe0] sm:$0xff] %vm65, %v7038
  %7071 = vst.msk [vmem:[%s18 + $0xe8] sm:$0xff] %vm65, %v7039
  %7072 = vst.msk [vmem:[%s18 + $0xf0] sm:$0xff] %vm65, %v7040
  %7073 = vst.msk [vmem:[%s18 + $0xf8] sm:$0xff] %vm65, %v7041
  %7074 = vst.msk [vmem:[%s19] sm:$0xff] %vm958, %v6105
  %7075 = vst.msk [vmem:[%s19 + $0x8] sm:$0xff] %vm958, %v6107
  %7076 = vst.msk [vmem:[%s19 + $0x10] sm:$0xff] %vm958, %v6109
  %7077 = vst.msk [vmem:[%s19 + $0x18] sm:$0xff] %vm958, %v6111
  // Predicated region
  $region74: #{dprnn_block.1} parent=0 // pred_check
    _
  $region75: #{dprnn_block.1} parent=0 // pred_check_branch
    %7079 = sbr.rel (0) target = $region77
  $region76: #{dprnn_block.1} parent=0 // pred_region
    _
  $region77: #{dprnn_block.1} parent=0 // pred_fallthru
    _
  // Predicated region
  $region78: #{dprnn_block.1} parent=0 // pred_check
    _
  $region79: #{dprnn_block.1} parent=0 // pred_check_branch
    %7081 = sbr.rel (0) target = $region81
  $region80: #{dprnn_block.1} parent=0 // pred_region
    _
  $region81: #{dprnn_block.1} parent=0 // pred_fallthru
    _
  // Predicated region
  $region82: #{dprnn_block.1} parent=0 // pred_check
    _
  $region83: #{dprnn_block.1} parent=0 // pred_check_branch
    %7083 = sbr.rel (0) target = $region85
  $region84: #{dprnn_block.1} parent=0 // pred_region
    _
  $region85: #{dprnn_block.1} parent=0 // pred_fallthru
    _
  // Predicated region
  $region86: #{dprnn_block.1} parent=0 // pred_check
    _
  $region87: #{dprnn_block.1} parent=0 // pred_check_branch
    %7085 = sbr.rel (0) target = $region89
  $region88: #{dprnn_block.1} parent=0 // pred_region
    _
  $region89: #{dprnn_block.1} parent=0 // pred_fallthru
    _

</llo_original>
